<compile_context>
chip_gen: v7x
topology: tpu7x:2x2x1
jax: 0.10.0
libtpu: 0.0.40
codegen_flags: <defaults>
</compile_context>

<pallas_src>
import jax
import jax.numpy as jnp
from jax.experimental import pallas as pl
from jax.experimental.pallas import tpu as pltpu

# ---------------- problem sizes (small, deterministic) ----------------
N, H, W = 2, 16, 16          # NHWC here == PyTorch NCHW input (2, CIN, 16, 16)
CIN = 32                     # in_channel
C7 = 64                      # channels_7x7
COUT = 192                   # per-branch output channels (fixed by the module)
EPS = 1e-5
C1 = COUT + 2 * C7           # width of the fused 1x1-head output


# ---------------- Pallas kernel (one batch element per grid step) ----------
def makec_kernel(x_ref, wcat1_ref, bcat1_ref,
                 w2b_ref, w2c_ref, w3b_ref, w3c_ref, w3d_ref, w3e_ref,
                 w4_ref, bc7_ref, b192_ref, out_ref):
    # x_ref:   (1, H+2, W+2, CIN)  input pre-padded by 1 (avg-pool halo)
    # wcat1:   (CIN, 192+2*C7)     fused 1x1 weights [out1 | out2 head | out3 head]
    # w2b/w3c/w3e: (7*C, Cout)     (1,7) convs, taps along W (im2col rows = tap*C+ci)
    # w2c/w3b/w3d: (7*C, Cout)     (7,1) convs, taps along H
    # w4:      (CIN, 192)          1x1 after avg-pool
    # bcat1:   (1, 1, 192+2*C7);  bc7: (4,1,1,C7);  b192: (3,1,1,192)
    # out_ref: (1, H, W, 768)
    h, w = out_ref.shape[1], out_ref.shape[2]
    dn = (((2,), (0,)), ((), ()))

    xp = x_ref[0]                        # (H+2, W+2, CIN)
    x = xp[1:1 + h, 1:1 + w, :]          # (H, W, CIN) un-padded center

    def matmul(a, w_ref):
        return jax.lax.dot_general(a, w_ref[...], dimension_numbers=dn,
                                   preferred_element_type=jnp.float32)

    def conv7(a, w_ref, axis, bias):
        # 7-tap separable conv (pad 3, stride 1) along `axis` (0=H, 1=W),
        # + bias + ReLU.  Single matmul: 7 shifted taps concatenated along
        # the channel (contraction) axis.
        if axis == 0:
            zeros = jnp.zeros((3, a.shape[1], a.shape[2]), jnp.float32)
            ap = jnp.concatenate([zeros, a, zeros], axis=0)       # (H+6, W, C)
            taps = [ap[t:t + h, :, :] for t in range(7)]
        else:
            zeros = jnp.zeros((a.shape[0], 3, a.shape[2]), jnp.float32)
            ap = jnp.concatenate([zeros, a, zeros], axis=1)       # (H, W+6, C)
            taps = [ap[:, t:t + w, :] for t in range(7)]
        patches = jnp.concatenate(taps, axis=2)                   # (H, W, 7*C)
        y = jax.lax.dot_general(patches, w_ref[...], dimension_numbers=dn,
                                preferred_element_type=jnp.float32)
        return jnp.maximum(y + bias, 0.0)

    # ---- fused 1x1 heads: [out1 | out2 head | out3 head] ----
    y = jnp.maximum(matmul(x, wcat1_ref) + bcat1_ref[...], 0.0)   # (H, W, C1)
    o1 = y[:, :, :COUT]
    t2 = y[:, :, COUT:COUT + C7]
    t3 = y[:, :, COUT + C7:COUT + 2 * C7]

    # ---- branch 2: (1,7) then (7,1) ----
    h2 = conv7(t2, w2b_ref, 1, bc7_ref[0])
    o2 = conv7(h2, w2c_ref, 0, b192_ref[0])

    # ---- branch 3: (7,1), (1,7), (7,1), (1,7) ----
    h3 = conv7(t3, w3b_ref, 0, bc7_ref[1])
    h3 = conv7(h3, w3c_ref, 1, bc7_ref[2])
    h3 = conv7(h3, w3d_ref, 0, bc7_ref[3])
    o3 = conv7(h3, w3e_ref, 1, b192_ref[1])

    # ---- branch 4: 3x3 avg-pool (stride 1, pad 1, count_include_pad) + 1x1 ----
    pool = jnp.zeros((h, w, xp.shape[2]), jnp.float32)
    for dh in range(3):
        for dw in range(3):
            pool = pool + xp[dh:dh + h, dw:dw + w, :]
    pool = pool * (1.0 / 9.0)
    o4 = jnp.maximum(matmul(pool, w4_ref) + b192_ref[2], 0.0)

    # ---- channel concat -> single lane-dense 768-wide store ----
    out_ref[0] = jnp.concatenate([o1, o2, o3, o4], axis=2).astype(out_ref.dtype)


# ---------------- BN folding helpers (wrapper-side) ----------------
def _fold_1x1(q):
    w = q["w"].reshape(q["w"].shape[2], q["w"].shape[3]) * q["scale"]
    return w.astype(jnp.float32), q["bias"]


def _fold_7tap(q):
    kh, kw, cin, cout = q["w"].shape
    w = (q["w"] * q["scale"]).reshape(kh * kw * cin, cout)   # rows: tap-major, ci-minor
    return w.astype(jnp.float32), q["bias"]


def makec_pallas(x_nhwc, p):
    # spatial pad by 1 (avg-pool halo) is glue; all compute is in the kernel
    x_pad = jnp.pad(x_nhwc, ((0, 0), (1, 1), (1, 1), (0, 0)))

    w1, b1 = _fold_1x1(p["b1"])
    w2a, b2a = _fold_1x1(p["b2a"])
    w3a, b3a = _fold_1x1(p["b3a"])
    w4, b4 = _fold_1x1(p["b4"])
    w2b, b2b = _fold_7tap(p["b2b"])
    w2c, b2c = _fold_7tap(p["b2c"])
    w3b, b3b = _fold_7tap(p["b3b"])
    w3c, b3c = _fold_7tap(p["b3c"])
    w3d, b3d = _fold_7tap(p["b3d"])
    w3e, b3e = _fold_7tap(p["b3e"])

    # fuse the three 1x1 convs that consume x directly
    wcat1 = jnp.concatenate([w1, w2a, w3a], axis=1)              # (CIN, C1)
    bcat1 = jnp.concatenate([b1, b2a, b3a]).reshape(1, 1, C1)
    bc7 = jnp.stack([b2b, b3b, b3c, b3d]).reshape(4, 1, 1, C7)
    b192 = jnp.stack([b2c, b3e, b4]).reshape(3, 1, 1, COUT)

    full = lambda shape: pl.BlockSpec(shape, lambda b: (0,) * len(shape))

    return pl.pallas_call(
        makec_kernel,
        out_shape=jax.ShapeDtypeStruct((N, H, W, 4 * COUT), jnp.float32),
        grid_spec=pltpu.PrefetchScalarGridSpec(
            num_scalar_prefetch=0,
            grid=(N,),
            in_specs=[
                pl.BlockSpec((1, H + 2, W + 2, CIN), lambda b: (b, 0, 0, 0)),
                full((CIN, C1)),            # wcat1
                full((1, 1, C1)),           # bcat1
                full((7 * C7, C7)),         # w2b  (1,7)
                full((7 * C7, COUT)),       # w2c  (7,1)
                full((7 * C7, C7)),         # w3b  (7,1)
                full((7 * C7, C7)),         # w3c  (1,7)
                full((7 * C7, C7)),         # w3d  (7,1)
                full((7 * C7, COUT)),       # w3e  (1,7)
                full((CIN, COUT)),          # w4
                full((4, 1, 1, C7)),        # bc7
                full((3, 1, 1, COUT)),      # b192
            ],
            out_specs=pl.BlockSpec((1, H, W, 4 * COUT), lambda b: (b, 0, 0, 0)),
        ),
        compiler_params=pltpu.CompilerParams(
            dimension_semantics=("parallel",)),   # v7x: shard N=2 over both TCs
    )(x_pad, wcat1, bcat1, w2b, w2c, w3b, w3c, w3d, w3e, w4, bc7, b192)


# ---------------- reference (plain JAX, eval-mode BN) ----------------
def _unit_ref(x, q, pad):
    y = jax.lax.conv_general_dilated(
        x, q["w"], (1, 1), pad,
        dimension_numbers=("NHWC", "HWIO", "NHWC"),
        precision=jax.lax.Precision.HIGHEST)
    return jnp.maximum(y * q["scale"] + q["bias"], 0.0)


def makec_ref(x, p):
    same = ((0, 0), (0, 0))
    pw = ((0, 0), (3, 3))     # (1,7) conv padding
    ph = ((3, 3), (0, 0))     # (7,1) conv padding
    o1 = _unit_ref(x, p["b1"], same)

    t = _unit_ref(x, p["b2a"], same)
    t = _unit_ref(t, p["b2b"], pw)
    o2 = _unit_ref(t, p["b2c"], ph)

    t = _unit_ref(x, p["b3a"], same)
    t = _unit_ref(t, p["b3b"], ph)
    t = _unit_ref(t, p["b3c"], pw)
    t = _unit_ref(t, p["b3d"], ph)
    o3 = _unit_ref(t, p["b3e"], pw)

    pooled = jax.lax.reduce_window(
        x, 0.0, jax.lax.add, (1, 3, 3, 1), (1, 1, 1, 1),
        ((0, 0), (1, 1), (1, 1), (0, 0))) / 9.0     # count_include_pad=True
    o4 = _unit_ref(pooled, p["b4"], same)

    return jnp.concatenate([o1, o2, o3, o4], axis=-1)


# ---------------- deterministic parameter init ----------------
def make_params(key):
    keys = iter(jax.random.split(key, 64))

    def conv_bn(kh, kw, cin, cout):
        fan_in = kh * kw * cin
        w = jax.random.normal(next(keys), (kh, kw, cin, cout),
                              jnp.float32) / jnp.sqrt(float(fan_in))
        gamma = 1.0 + 0.1 * jax.random.normal(next(keys), (cout,), jnp.float32)
        beta = 0.1 * jax.random.normal(next(keys), (cout,), jnp.float32)
        mean = 0.1 * jax.random.normal(next(keys), (cout,), jnp.float32)
        var = jnp.abs(jax.random.normal(next(keys), (cout,), jnp.float32)) + 0.5
        scale = gamma * jax.lax.rsqrt(var + EPS)     # eval-mode BN fold
        bias = beta - mean * scale
        return dict(w=w, scale=scale, bias=bias)

    return dict(
        b1=conv_bn(1, 1, CIN, COUT),
        b2a=conv_bn(1, 1, CIN, C7), b2b=conv_bn(1, 7, C7, C7),
        b2c=conv_bn(7, 1, C7, COUT),
        b3a=conv_bn(1, 1, CIN, C7), b3b=conv_bn(7, 1, C7, C7),
        b3c=conv_bn(1, 7, C7, C7), b3d=conv_bn(7, 1, C7, C7),
        b3e=conv_bn(1, 7, C7, COUT),
        b4=conv_bn(1, 1, CIN, COUT),
    )


if __name__ == "__main__":
    key = jax.random.PRNGKey(0)
    kx, kp = jax.random.split(key)
    x = jax.random.normal(kx, (N, H, W, CIN), jnp.float32)  # NHWC (== NCHW [2,32,16,16])
    params = make_params(kp)

    out = jax.block_until_ready(makec_pallas(x, params))
    ref = makec_ref(x, params)

    assert out.shape == (N, H, W, 4 * COUT)
    assert jnp.allclose(out, ref, atol=2e-3, rtol=2e-3), (
        "mismatch vs reference, max abs err "
        f"{float(jnp.max(jnp.abs(out - ref)))}")
    print("KERNEL_OK")
</pallas_src>

<mosaic_0001>
module attributes {stable_mosaic.version = 11 : i64} {
  func.func @makec_kernel(%arg0: i32, %arg1: memref<1x18x18x32xf32, #tpu.memory_space<vmem>>, %arg2: memref<32x320xf32, #tpu.memory_space<vmem>>, %arg3: memref<1x1x320xf32, #tpu.memory_space<vmem>>, %arg4: memref<448x64xf32, #tpu.memory_space<vmem>>, %arg5: memref<448x192xf32, #tpu.memory_space<vmem>>, %arg6: memref<448x64xf32, #tpu.memory_space<vmem>>, %arg7: memref<448x64xf32, #tpu.memory_space<vmem>>, %arg8: memref<448x64xf32, #tpu.memory_space<vmem>>, %arg9: memref<448x192xf32, #tpu.memory_space<vmem>>, %arg10: memref<32x192xf32, #tpu.memory_space<vmem>>, %arg11: memref<4x1x1x64xf32, #tpu.memory_space<vmem>>, %arg12: memref<3x1x1x192xf32, #tpu.memory_space<vmem>>, %arg13: memref<1x16x16x768xf32, #tpu.memory_space<vmem>>) attributes {dimension_semantics = [#tpu.dimension_semantics<parallel>], iteration_bounds = array<i64: 2>, scalar_prefetch = 0 : i64, scratch_operands = 0 : i64, tpu.core_type = #tpu.core_type<tc>, window_params = [{transform_indices = @transform_0, window_bounds = array<i64: 1, 18, 18, 32>}, {pipeline_mode = #tpu.pipeline_mode<synchronous>, transform_indices = @transform_1, window_bounds = array<i64: 32, 320>}, {pipeline_mode = #tpu.pipeline_mode<synchronous>, transform_indices = @transform_2, window_bounds = array<i64: 1, 1, 320>}, {pipeline_mode = #tpu.pipeline_mode<synchronous>, transform_indices = @transform_3, window_bounds = array<i64: 448, 64>}, {pipeline_mode = #tpu.pipeline_mode<synchronous>, transform_indices = @transform_4, window_bounds = array<i64: 448, 192>}, {pipeline_mode = #tpu.pipeline_mode<synchronous>, transform_indices = @transform_5, window_bounds = array<i64: 448, 64>}, {pipeline_mode = #tpu.pipeline_mode<synchronous>, transform_indices = @transform_6, window_bounds = array<i64: 448, 64>}, {pipeline_mode = #tpu.pipeline_mode<synchronous>, transform_indices = @transform_7, window_bounds = array<i64: 448, 64>}, {pipeline_mode = #tpu.pipeline_mode<synchronous>, transform_indices = @transform_8, window_bounds = array<i64: 448, 192>}, {pipeline_mode = #tpu.pipeline_mode<synchronous>, transform_indices = @transform_9, window_bounds = array<i64: 32, 192>}, {pipeline_mode = #tpu.pipeline_mode<synchronous>, transform_indices = @transform_10, window_bounds = array<i64: 4, 1, 1, 64>}, {pipeline_mode = #tpu.pipeline_mode<synchronous>, transform_indices = @transform_11, window_bounds = array<i64: 3, 1, 1, 192>}, {transform_indices = @transform_12, window_bounds = array<i64: 1, 16, 16, 768>}]} {
    %c0 = arith.constant 0 : index
    %c0_0 = arith.constant 0 : index
    %c0_1 = arith.constant 0 : index
    %c0_2 = arith.constant 0 : index
    %0 = vector.load %arg1[%c0, %c0_0, %c0_1, %c0_2] : memref<1x18x18x32xf32, #tpu.memory_space<vmem>>, vector<1x18x18x32xf32>
    %1 = vector.shape_cast %0 : vector<1x18x18x32xf32> to vector<18x18x32xf32>
    %2 = vector.extract_strided_slice %1 {offsets = [1, 1, 0], sizes = [16, 16, 32], strides = [1, 1, 1]} : vector<18x18x32xf32> to vector<16x16x32xf32>
    %c0_3 = arith.constant 0 : index
    %c0_4 = arith.constant 0 : index
    %3 = vector.load %arg2[%c0_3, %c0_4] : memref<32x320xf32, #tpu.memory_space<vmem>>, vector<32x320xf32>
    %cst = arith.constant dense<0.000000e+00> : vector<16x16x320xf32>
    %4 = tpu.matmul %2, %3, %cst {dimension_numbers = #tpu.dot_dimension_numbers<[2], [0], [0, 1], [1], [0, 0, 0, 1, 1, 1], [], []>} : vector<16x16x32xf32>, vector<32x320xf32>, vector<16x16x320xf32> -> vector<16x16x320xf32>
    %c0_5 = arith.constant 0 : index
    %c0_6 = arith.constant 0 : index
    %c0_7 = arith.constant 0 : index
    %5 = vector.load %arg3[%c0_5, %c0_6, %c0_7] : memref<1x1x320xf32, #tpu.memory_space<vmem>>, vector<1x1x320xf32>
    %6 = vector.broadcast %5 : vector<1x1x320xf32> to vector<16x16x320xf32>
    %7 = arith.addf %4, %6 : vector<16x16x320xf32>
    %cst_8 = arith.constant 0.000000e+00 : f32
    %8 = vector.broadcast %cst_8 : f32 to vector<16x16x320xf32>
    %9 = arith.maximumf %7, %8 : vector<16x16x320xf32>
    %10 = vector.extract_strided_slice %9 {offsets = [0, 0, 0], sizes = [16, 16, 192], strides = [1, 1, 1]} : vector<16x16x320xf32> to vector<16x16x192xf32>
    %11 = vector.extract_strided_slice %9 {offsets = [0, 0, 192], sizes = [16, 16, 64], strides = [1, 1, 1]} : vector<16x16x320xf32> to vector<16x16x64xf32>
    %12 = vector.extract_strided_slice %9 {offsets = [0, 0, 256], sizes = [16, 16, 64], strides = [1, 1, 1]} : vector<16x16x320xf32> to vector<16x16x64xf32>
    %c0_9 = arith.constant 0 : index
    %c0_10 = arith.constant 0 : index
    %c0_11 = arith.constant 0 : index
    %c0_12 = arith.constant 0 : index
    %13 = vector.load %arg11[%c0_9, %c0_10, %c0_11, %c0_12] : memref<4x1x1x64xf32, #tpu.memory_space<vmem>>, vector<1x1x1x64xf32>
    %14 = vector.shape_cast %13 : vector<1x1x1x64xf32> to vector<1x1x64xf32>
    %cst_13 = arith.constant 0.000000e+00 : f32
    %15 = vector.broadcast %cst_13 : f32 to vector<16x3x64xf32>
    %16 = tpu.concatenate %15, %11, %15 in 1 : vector<16x3x64xf32>, vector<16x16x64xf32>, vector<16x3x64xf32> -> vector<16x22x64xf32>
    %17 = vector.extract_strided_slice %16 {offsets = [0, 0, 0], sizes = [16, 16, 64], strides = [1, 1, 1]} : vector<16x22x64xf32> to vector<16x16x64xf32>
    %18 = vector.extract_strided_slice %16 {offsets = [0, 1, 0], sizes = [16, 16, 64], strides = [1, 1, 1]} : vector<16x22x64xf32> to vector<16x16x64xf32>
    %19 = vector.extract_strided_slice %16 {offsets = [0, 2, 0], sizes = [16, 16, 64], strides = [1, 1, 1]} : vector<16x22x64xf32> to vector<16x16x64xf32>
    %20 = vector.extract_strided_slice %16 {offsets = [0, 3, 0], sizes = [16, 16, 64], strides = [1, 1, 1]} : vector<16x22x64xf32> to vector<16x16x64xf32>
    %21 = vector.extract_strided_slice %16 {offsets = [0, 4, 0], sizes = [16, 16, 64], strides = [1, 1, 1]} : vector<16x22x64xf32> to vector<16x16x64xf32>
    %22 = vector.extract_strided_slice %16 {offsets = [0, 5, 0], sizes = [16, 16, 64], strides = [1, 1, 1]} : vector<16x22x64xf32> to vector<16x16x64xf32>
    %23 = vector.extract_strided_slice %16 {offsets = [0, 6, 0], sizes = [16, 16, 64], strides = [1, 1, 1]} : vector<16x22x64xf32> to vector<16x16x64xf32>
    %24 = tpu.concatenate %17, %18, %19, %20, %21, %22, %23 in 2 : vector<16x16x64xf32>, vector<16x16x64xf32>, vector<16x16x64xf32>, vector<16x16x64xf32>, vector<16x16x64xf32>, vector<16x16x64xf32>, vector<16x16x64xf32> -> vector<16x16x448xf32>
    %c0_14 = arith.constant 0 : index
    %c0_15 = arith.constant 0 : index
    %25 = vector.load %arg4[%c0_14, %c0_15] : memref<448x64xf32, #tpu.memory_space<vmem>>, vector<448x64xf32>
    %cst_16 = arith.constant dense<0.000000e+00> : vector<16x16x64xf32>
    %26 = tpu.matmul %24, %25, %cst_16 {dimension_numbers = #tpu.dot_dimension_numbers<[2], [0], [0, 1], [1], [0, 0, 0, 1, 1, 1], [], []>} : vector<16x16x448xf32>, vector<448x64xf32>, vector<16x16x64xf32> -> vector<16x16x64xf32>
    %27 = vector.broadcast %14 : vector<1x1x64xf32> to vector<16x16x64xf32>
    %28 = arith.addf %26, %27 : vector<16x16x64xf32>
    %cst_17 = arith.constant 0.000000e+00 : f32
    %29 = vector.broadcast %cst_17 : f32 to vector<16x16x64xf32>
    %30 = arith.maximumf %28, %29 : vector<16x16x64xf32>
    %c0_18 = arith.constant 0 : index
    %c0_19 = arith.constant 0 : index
    %c0_20 = arith.constant 0 : index
    %c0_21 = arith.constant 0 : index
    %31 = vector.load %arg12[%c0_18, %c0_19, %c0_20, %c0_21] : memref<3x1x1x192xf32, #tpu.memory_space<vmem>>, vector<1x1x1x192xf32>
    %32 = vector.shape_cast %31 : vector<1x1x1x192xf32> to vector<1x1x192xf32>
    %cst_22 = arith.constant 0.000000e+00 : f32
    %33 = vector.broadcast %cst_22 : f32 to vector<3x16x64xf32>
    %34 = tpu.concatenate %33, %30, %33 in 0 : vector<3x16x64xf32>, vector<16x16x64xf32>, vector<3x16x64xf32> -> vector<22x16x64xf32>
    %35 = vector.extract_strided_slice %34 {offsets = [0, 0, 0], sizes = [16, 16, 64], strides = [1, 1, 1]} : vector<22x16x64xf32> to vector<16x16x64xf32>
    %36 = vector.extract_strided_slice %34 {offsets = [1, 0, 0], sizes = [16, 16, 64], strides = [1, 1, 1]} : vector<22x16x64xf32> to vector<16x16x64xf32>
    %37 = vector.extract_strided_slice %34 {offsets = [2, 0, 0], sizes = [16, 16, 64], strides = [1, 1, 1]} : vector<22x16x64xf32> to vector<16x16x64xf32>
    %38 = vector.extract_strided_slice %34 {offsets = [3, 0, 0], sizes = [16, 16, 64], strides = [1, 1, 1]} : vector<22x16x64xf32> to vector<16x16x64xf32>
    %39 = vector.extract_strided_slice %34 {offsets = [4, 0, 0], sizes = [16, 16, 64], strides = [1, 1, 1]} : vector<22x16x64xf32> to vector<16x16x64xf32>
    %40 = vector.extract_strided_slice %34 {offsets = [5, 0, 0], sizes = [16, 16, 64], strides = [1, 1, 1]} : vector<22x16x64xf32> to vector<16x16x64xf32>
    %41 = vector.extract_strided_slice %34 {offsets = [6, 0, 0], sizes = [16, 16, 64], strides = [1, 1, 1]} : vector<22x16x64xf32> to vector<16x16x64xf32>
    %42 = tpu.concatenate %35, %36, %37, %38, %39, %40, %41 in 2 : vector<16x16x64xf32>, vector<16x16x64xf32>, vector<16x16x64xf32>, vector<16x16x64xf32>, vector<16x16x64xf32>, vector<16x16x64xf32>, vector<16x16x64xf32> -> vector<16x16x448xf32>
    %c0_23 = arith.constant 0 : index
    %c0_24 = arith.constant 0 : index
    %43 = vector.load %arg5[%c0_23, %c0_24] : memref<448x192xf32, #tpu.memory_space<vmem>>, vector<448x192xf32>
    %cst_25 = arith.constant dense<0.000000e+00> : vector<16x16x192xf32>
    %44 = tpu.matmul %42, %43, %cst_25 {dimension_numbers = #tpu.dot_dimension_numbers<[2], [0], [0, 1], [1], [0, 0, 0, 1, 1, 1], [], []>} : vector<16x16x448xf32>, vector<448x192xf32>, vector<16x16x192xf32> -> vector<16x16x192xf32>
    %45 = vector.broadcast %32 : vector<1x1x192xf32> to vector<16x16x192xf32>
    %46 = arith.addf %44, %45 : vector<16x16x192xf32>
    %cst_26 = arith.constant 0.000000e+00 : f32
    %47 = vector.broadcast %cst_26 : f32 to vector<16x16x192xf32>
    %48 = arith.maximumf %46, %47 : vector<16x16x192xf32>
    %c1 = arith.constant 1 : index
    %c0_27 = arith.constant 0 : index
    %c0_28 = arith.constant 0 : index
    %c0_29 = arith.constant 0 : index
    %49 = vector.load %arg11[%c1, %c0_27, %c0_28, %c0_29] : memref<4x1x1x64xf32, #tpu.memory_space<vmem>>, vector<1x1x1x64xf32>
    %50 = vector.shape_cast %49 : vector<1x1x1x64xf32> to vector<1x1x64xf32>
    %cst_30 = arith.constant 0.000000e+00 : f32
    %51 = vector.broadcast %cst_30 : f32 to vector<3x16x64xf32>
    %52 = tpu.concatenate %51, %12, %51 in 0 : vector<3x16x64xf32>, vector<16x16x64xf32>, vector<3x16x64xf32> -> vector<22x16x64xf32>
    %53 = vector.extract_strided_slice %52 {offsets = [0, 0, 0], sizes = [16, 16, 64], strides = [1, 1, 1]} : vector<22x16x64xf32> to vector<16x16x64xf32>
    %54 = vector.extract_strided_slice %52 {offsets = [1, 0, 0], sizes = [16, 16, 64], strides = [1, 1, 1]} : vector<22x16x64xf32> to vector<16x16x64xf32>
    %55 = vector.extract_strided_slice %52 {offsets = [2, 0, 0], sizes = [16, 16, 64], strides = [1, 1, 1]} : vector<22x16x64xf32> to vector<16x16x64xf32>
    %56 = vector.extract_strided_slice %52 {offsets = [3, 0, 0], sizes = [16, 16, 64], strides = [1, 1, 1]} : vector<22x16x64xf32> to vector<16x16x64xf32>
    %57 = vector.extract_strided_slice %52 {offsets = [4, 0, 0], sizes = [16, 16, 64], strides = [1, 1, 1]} : vector<22x16x64xf32> to vector<16x16x64xf32>
    %58 = vector.extract_strided_slice %52 {offsets = [5, 0, 0], sizes = [16, 16, 64], strides = [1, 1, 1]} : vector<22x16x64xf32> to vector<16x16x64xf32>
    %59 = vector.extract_strided_slice %52 {offsets = [6, 0, 0], sizes = [16, 16, 64], strides = [1, 1, 1]} : vector<22x16x64xf32> to vector<16x16x64xf32>
    %60 = tpu.concatenate %53, %54, %55, %56, %57, %58, %59 in 2 : vector<16x16x64xf32>, vector<16x16x64xf32>, vector<16x16x64xf32>, vector<16x16x64xf32>, vector<16x16x64xf32>, vector<16x16x64xf32>, vector<16x16x64xf32> -> vector<16x16x448xf32>
    %c0_31 = arith.constant 0 : index
    %c0_32 = arith.constant 0 : index
    %61 = vector.load %arg6[%c0_31, %c0_32] : memref<448x64xf32, #tpu.memory_space<vmem>>, vector<448x64xf32>
    %cst_33 = arith.constant dense<0.000000e+00> : vector<16x16x64xf32>
    %62 = tpu.matmul %60, %61, %cst_33 {dimension_numbers = #tpu.dot_dimension_numbers<[2], [0], [0, 1], [1], [0, 0, 0, 1, 1, 1], [], []>} : vector<16x16x448xf32>, vector<448x64xf32>, vector<16x16x64xf32> -> vector<16x16x64xf32>
    %63 = vector.broadcast %50 : vector<1x1x64xf32> to vector<16x16x64xf32>
    %64 = arith.addf %62, %63 : vector<16x16x64xf32>
    %cst_34 = arith.constant 0.000000e+00 : f32
    %65 = vector.broadcast %cst_34 : f32 to vector<16x16x64xf32>
    %66 = arith.maximumf %64, %65 : vector<16x16x64xf32>
    %c2 = arith.constant 2 : index
    %c0_35 = arith.constant 0 : index
    %c0_36 = arith.constant 0 : index
    %c0_37 = arith.constant 0 : index
    %67 = vector.load %arg11[%c2, %c0_35, %c0_36, %c0_37] : memref<4x1x1x64xf32, #tpu.memory_space<vmem>>, vector<1x1x1x64xf32>
    %68 = vector.shape_cast %67 : vector<1x1x1x64xf32> to vector<1x1x64xf32>
    %cst_38 = arith.constant 0.000000e+00 : f32
    %69 = vector.broadcast %cst_38 : f32 to vector<16x3x64xf32>
    %70 = tpu.concatenate %69, %66, %69 in 1 : vector<16x3x64xf32>, vector<16x16x64xf32>, vector<16x3x64xf32> -> vector<16x22x64xf32>
    %71 = vector.extract_strided_slice %70 {offsets = [0, 0, 0], sizes = [16, 16, 64], strides = [1, 1, 1]} : vector<16x22x64xf32> to vector<16x16x64xf32>
    %72 = vector.extract_strided_slice %70 {offsets = [0, 1, 0], sizes = [16, 16, 64], strides = [1, 1, 1]} : vector<16x22x64xf32> to vector<16x16x64xf32>
    %73 = vector.extract_strided_slice %70 {offsets = [0, 2, 0], sizes = [16, 16, 64], strides = [1, 1, 1]} : vector<16x22x64xf32> to vector<16x16x64xf32>
    %74 = vector.extract_strided_slice %70 {offsets = [0, 3, 0], sizes = [16, 16, 64], strides = [1, 1, 1]} : vector<16x22x64xf32> to vector<16x16x64xf32>
    %75 = vector.extract_strided_slice %70 {offsets = [0, 4, 0], sizes = [16, 16, 64], strides = [1, 1, 1]} : vector<16x22x64xf32> to vector<16x16x64xf32>
    %76 = vector.extract_strided_slice %70 {offsets = [0, 5, 0], sizes = [16, 16, 64], strides = [1, 1, 1]} : vector<16x22x64xf32> to vector<16x16x64xf32>
    %77 = vector.extract_strided_slice %70 {offsets = [0, 6, 0], sizes = [16, 16, 64], strides = [1, 1, 1]} : vector<16x22x64xf32> to vector<16x16x64xf32>
    %78 = tpu.concatenate %71, %72, %73, %74, %75, %76, %77 in 2 : vector<16x16x64xf32>, vector<16x16x64xf32>, vector<16x16x64xf32>, vector<16x16x64xf32>, vector<16x16x64xf32>, vector<16x16x64xf32>, vector<16x16x64xf32> -> vector<16x16x448xf32>
    %c0_39 = arith.constant 0 : index
    %c0_40 = arith.constant 0 : index
    %79 = vector.load %arg7[%c0_39, %c0_40] : memref<448x64xf32, #tpu.memory_space<vmem>>, vector<448x64xf32>
    %cst_41 = arith.constant dense<0.000000e+00> : vector<16x16x64xf32>
    %80 = tpu.matmul %78, %79, %cst_41 {dimension_numbers = #tpu.dot_dimension_numbers<[2], [0], [0, 1], [1], [0, 0, 0, 1, 1, 1], [], []>} : vector<16x16x448xf32>, vector<448x64xf32>, vector<16x16x64xf32> -> vector<16x16x64xf32>
    %81 = vector.broadcast %68 : vector<1x1x64xf32> to vector<16x16x64xf32>
    %82 = arith.addf %80, %81 : vector<16x16x64xf32>
    %cst_42 = arith.constant 0.000000e+00 : f32
    %83 = vector.broadcast %cst_42 : f32 to vector<16x16x64xf32>
    %84 = arith.maximumf %82, %83 : vector<16x16x64xf32>
    %c3 = arith.constant 3 : index
    %c0_43 = arith.constant 0 : index
    %c0_44 = arith.constant 0 : index
    %c0_45 = arith.constant 0 : index
    %85 = vector.load %arg11[%c3, %c0_43, %c0_44, %c0_45] : memref<4x1x1x64xf32, #tpu.memory_space<vmem>>, vector<1x1x1x64xf32>
    %86 = vector.shape_cast %85 : vector<1x1x1x64xf32> to vector<1x1x64xf32>
    %cst_46 = arith.constant 0.000000e+00 : f32
    %87 = vector.broadcast %cst_46 : f32 to vector<3x16x64xf32>
    %88 = tpu.concatenate %87, %84, %87 in 0 : vector<3x16x64xf32>, vector<16x16x64xf32>, vector<3x16x64xf32> -> vector<22x16x64xf32>
    %89 = vector.extract_strided_slice %88 {offsets = [0, 0, 0], sizes = [16, 16, 64], strides = [1, 1, 1]} : vector<22x16x64xf32> to vector<16x16x64xf32>
    %90 = vector.extract_strided_slice %88 {offsets = [1, 0, 0], sizes = [16, 16, 64], strides = [1, 1, 1]} : vector<22x16x64xf32> to vector<16x16x64xf32>
    %91 = vector.extract_strided_slice %88 {offsets = [2, 0, 0], sizes = [16, 16, 64], strides = [1, 1, 1]} : vector<22x16x64xf32> to vector<16x16x64xf32>
    %92 = vector.extract_strided_slice %88 {offsets = [3, 0, 0], sizes = [16, 16, 64], strides = [1, 1, 1]} : vector<22x16x64xf32> to vector<16x16x64xf32>
    %93 = vector.extract_strided_slice %88 {offsets = [4, 0, 0], sizes = [16, 16, 64], strides = [1, 1, 1]} : vector<22x16x64xf32> to vector<16x16x64xf32>
    %94 = vector.extract_strided_slice %88 {offsets = [5, 0, 0], sizes = [16, 16, 64], strides = [1, 1, 1]} : vector<22x16x64xf32> to vector<16x16x64xf32>
    %95 = vector.extract_strided_slice %88 {offsets = [6, 0, 0], sizes = [16, 16, 64], strides = [1, 1, 1]} : vector<22x16x64xf32> to vector<16x16x64xf32>
    %96 = tpu.concatenate %89, %90, %91, %92, %93, %94, %95 in 2 : vector<16x16x64xf32>, vector<16x16x64xf32>, vector<16x16x64xf32>, vector<16x16x64xf32>, vector<16x16x64xf32>, vector<16x16x64xf32>, vector<16x16x64xf32> -> vector<16x16x448xf32>
    %c0_47 = arith.constant 0 : index
    %c0_48 = arith.constant 0 : index
    %97 = vector.load %arg8[%c0_47, %c0_48] : memref<448x64xf32, #tpu.memory_space<vmem>>, vector<448x64xf32>
    %cst_49 = arith.constant dense<0.000000e+00> : vector<16x16x64xf32>
    %98 = tpu.matmul %96, %97, %cst_49 {dimension_numbers = #tpu.dot_dimension_numbers<[2], [0], [0, 1], [1], [0, 0, 0, 1, 1, 1], [], []>} : vector<16x16x448xf32>, vector<448x64xf32>, vector<16x16x64xf32> -> vector<16x16x64xf32>
    %99 = vector.broadcast %86 : vector<1x1x64xf32> to vector<16x16x64xf32>
    %100 = arith.addf %98, %99 : vector<16x16x64xf32>
    %cst_50 = arith.constant 0.000000e+00 : f32
    %101 = vector.broadcast %cst_50 : f32 to vector<16x16x64xf32>
    %102 = arith.maximumf %100, %101 : vector<16x16x64xf32>
    %c1_51 = arith.constant 1 : index
    %c0_52 = arith.constant 0 : index
    %c0_53 = arith.constant 0 : index
    %c0_54 = arith.constant 0 : index
    %103 = vector.load %arg12[%c1_51, %c0_52, %c0_53, %c0_54] : memref<3x1x1x192xf32, #tpu.memory_space<vmem>>, vector<1x1x1x192xf32>
    %104 = vector.shape_cast %103 : vector<1x1x1x192xf32> to vector<1x1x192xf32>
    %cst_55 = arith.constant 0.000000e+00 : f32
    %105 = vector.broadcast %cst_55 : f32 to vector<16x3x64xf32>
    %106 = tpu.concatenate %105, %102, %105 in 1 : vector<16x3x64xf32>, vector<16x16x64xf32>, vector<16x3x64xf32> -> vector<16x22x64xf32>
    %107 = vector.extract_strided_slice %106 {offsets = [0, 0, 0], sizes = [16, 16, 64], strides = [1, 1, 1]} : vector<16x22x64xf32> to vector<16x16x64xf32>
    %108 = vector.extract_strided_slice %106 {offsets = [0, 1, 0], sizes = [16, 16, 64], strides = [1, 1, 1]} : vector<16x22x64xf32> to vector<16x16x64xf32>
    %109 = vector.extract_strided_slice %106 {offsets = [0, 2, 0], sizes = [16, 16, 64], strides = [1, 1, 1]} : vector<16x22x64xf32> to vector<16x16x64xf32>
    %110 = vector.extract_strided_slice %106 {offsets = [0, 3, 0], sizes = [16, 16, 64], strides = [1, 1, 1]} : vector<16x22x64xf32> to vector<16x16x64xf32>
    %111 = vector.extract_strided_slice %106 {offsets = [0, 4, 0], sizes = [16, 16, 64], strides = [1, 1, 1]} : vector<16x22x64xf32> to vector<16x16x64xf32>
    %112 = vector.extract_strided_slice %106 {offsets = [0, 5, 0], sizes = [16, 16, 64], strides = [1, 1, 1]} : vector<16x22x64xf32> to vector<16x16x64xf32>
    %113 = vector.extract_strided_slice %106 {offsets = [0, 6, 0], sizes = [16, 16, 64], strides = [1, 1, 1]} : vector<16x22x64xf32> to vector<16x16x64xf32>
    %114 = tpu.concatenate %107, %108, %109, %110, %111, %112, %113 in 2 : vector<16x16x64xf32>, vector<16x16x64xf32>, vector<16x16x64xf32>, vector<16x16x64xf32>, vector<16x16x64xf32>, vector<16x16x64xf32>, vector<16x16x64xf32> -> vector<16x16x448xf32>
    %c0_56 = arith.constant 0 : index
    %c0_57 = arith.constant 0 : index
    %115 = vector.load %arg9[%c0_56, %c0_57] : memref<448x192xf32, #tpu.memory_space<vmem>>, vector<448x192xf32>
    %cst_58 = arith.constant dense<0.000000e+00> : vector<16x16x192xf32>
    %116 = tpu.matmul %114, %115, %cst_58 {dimension_numbers = #tpu.dot_dimension_numbers<[2], [0], [0, 1], [1], [0, 0, 0, 1, 1, 1], [], []>} : vector<16x16x448xf32>, vector<448x192xf32>, vector<16x16x192xf32> -> vector<16x16x192xf32>
    %117 = vector.broadcast %104 : vector<1x1x192xf32> to vector<16x16x192xf32>
    %118 = arith.addf %116, %117 : vector<16x16x192xf32>
    %cst_59 = arith.constant 0.000000e+00 : f32
    %119 = vector.broadcast %cst_59 : f32 to vector<16x16x192xf32>
    %120 = arith.maximumf %118, %119 : vector<16x16x192xf32>
    %cst_60 = arith.constant 0.000000e+00 : f32
    %121 = vector.broadcast %cst_60 : f32 to vector<16x16x32xf32>
    %122 = vector.extract_strided_slice %1 {offsets = [0, 0, 0], sizes = [16, 16, 32], strides = [1, 1, 1]} : vector<18x18x32xf32> to vector<16x16x32xf32>
    %123 = arith.addf %121, %122 : vector<16x16x32xf32>
    %124 = vector.extract_strided_slice %1 {offsets = [0, 1, 0], sizes = [16, 16, 32], strides = [1, 1, 1]} : vector<18x18x32xf32> to vector<16x16x32xf32>
    %125 = arith.addf %123, %124 : vector<16x16x32xf32>
    %126 = vector.extract_strided_slice %1 {offsets = [0, 2, 0], sizes = [16, 16, 32], strides = [1, 1, 1]} : vector<18x18x32xf32> to vector<16x16x32xf32>
    %127 = arith.addf %125, %126 : vector<16x16x32xf32>
    %128 = vector.extract_strided_slice %1 {offsets = [1, 0, 0], sizes = [16, 16, 32], strides = [1, 1, 1]} : vector<18x18x32xf32> to vector<16x16x32xf32>
    %129 = arith.addf %127, %128 : vector<16x16x32xf32>
    %130 = vector.extract_strided_slice %1 {offsets = [1, 1, 0], sizes = [16, 16, 32], strides = [1, 1, 1]} : vector<18x18x32xf32> to vector<16x16x32xf32>
    %131 = arith.addf %129, %130 : vector<16x16x32xf32>
    %132 = vector.extract_strided_slice %1 {offsets = [1, 2, 0], sizes = [16, 16, 32], strides = [1, 1, 1]} : vector<18x18x32xf32> to vector<16x16x32xf32>
    %133 = arith.addf %131, %132 : vector<16x16x32xf32>
    %134 = vector.extract_strided_slice %1 {offsets = [2, 0, 0], sizes = [16, 16, 32], strides = [1, 1, 1]} : vector<18x18x32xf32> to vector<16x16x32xf32>
    %135 = arith.addf %133, %134 : vector<16x16x32xf32>
    %136 = vector.extract_strided_slice %1 {offsets = [2, 1, 0], sizes = [16, 16, 32], strides = [1, 1, 1]} : vector<18x18x32xf32> to vector<16x16x32xf32>
    %137 = arith.addf %135, %136 : vector<16x16x32xf32>
    %138 = vector.extract_strided_slice %1 {offsets = [2, 2, 0], sizes = [16, 16, 32], strides = [1, 1, 1]} : vector<18x18x32xf32> to vector<16x16x32xf32>
    %139 = arith.addf %137, %138 : vector<16x16x32xf32>
    %cst_61 = arith.constant 0.111111112 : f32
    %140 = vector.broadcast %cst_61 : f32 to vector<16x16x32xf32>
    %141 = arith.mulf %139, %140 : vector<16x16x32xf32>
    %c0_62 = arith.constant 0 : index
    %c0_63 = arith.constant 0 : index
    %142 = vector.load %arg10[%c0_62, %c0_63] : memref<32x192xf32, #tpu.memory_space<vmem>>, vector<32x192xf32>
    %cst_64 = arith.constant dense<0.000000e+00> : vector<16x16x192xf32>
    %143 = tpu.matmul %141, %142, %cst_64 {dimension_numbers = #tpu.dot_dimension_numbers<[2], [0], [0, 1], [1], [0, 0, 0, 1, 1, 1], [], []>} : vector<16x16x32xf32>, vector<32x192xf32>, vector<16x16x192xf32> -> vector<16x16x192xf32>
    %c2_65 = arith.constant 2 : index
    %c0_66 = arith.constant 0 : index
    %c0_67 = arith.constant 0 : index
    %c0_68 = arith.constant 0 : index
    %144 = vector.load %arg12[%c2_65, %c0_66, %c0_67, %c0_68] : memref<3x1x1x192xf32, #tpu.memory_space<vmem>>, vector<1x1x1x192xf32>
    %145 = vector.shape_cast %144 : vector<1x1x1x192xf32> to vector<1x1x192xf32>
    %146 = vector.broadcast %145 : vector<1x1x192xf32> to vector<16x16x192xf32>
    %147 = arith.addf %143, %146 : vector<16x16x192xf32>
    %cst_69 = arith.constant 0.000000e+00 : f32
    %148 = vector.broadcast %cst_69 : f32 to vector<16x16x192xf32>
    %149 = arith.maximumf %147, %148 : vector<16x16x192xf32>
    %150 = tpu.concatenate %10, %48, %120, %149 in 2 : vector<16x16x192xf32>, vector<16x16x192xf32>, vector<16x16x192xf32>, vector<16x16x192xf32> -> vector<16x16x768xf32>
    %c0_70 = arith.constant 0 : index
    %c0_71 = arith.constant 0 : index
    %c0_72 = arith.constant 0 : index
    %c0_73 = arith.constant 0 : index
    %151 = vector.load %arg13[%c0_70, %c0_71, %c0_72, %c0_73] : memref<1x16x16x768xf32, #tpu.memory_space<vmem>>, vector<1x16x16x768xf32>
    %152 = vector.shape_cast %151 : vector<1x16x16x768xf32> to vector<16x16x768xf32>
    %153 = vector.shape_cast %150 : vector<16x16x768xf32> to vector<1x16x16x768xf32>
    tpu.vector_store %arg13[%c0_70, %c0_71, %c0_72, %c0_73], %153 {strides = array<i32>} : memref<1x16x16x768xf32, #tpu.memory_space<vmem>>, vector<1x16x16x768xf32>,
    return
  }
  func.func @transform_0(%arg0: i32) -> (i32, i32, i32, i32) {
    %c0_i32 = arith.constant 0 : i32
    %c0_i32_0 = arith.constant 0 : i32
    %c0_i32_1 = arith.constant 0 : i32
    %c0_i32_2 = arith.constant 0 : i32
    return %arg0, %c0_i32, %c0_i32_0, %c0_i32_1 : i32, i32, i32, i32
  }
  func.func @transform_1(%arg0: i32) -> (i32, i32) {
    %c0_i32 = arith.constant 0 : i32
    %c0_i32_0 = arith.constant 0 : i32
    %c0_i32_1 = arith.constant 0 : i32
    return %c0_i32, %c0_i32_0 : i32, i32
  }
  func.func @transform_2(%arg0: i32) -> (i32, i32, i32) {
    %c0_i32 = arith.constant 0 : i32
    %c0_i32_0 = arith.constant 0 : i32
    %c0_i32_1 = arith.constant 0 : i32
    %c0_i32_2 = arith.constant 0 : i32
    return %c0_i32, %c0_i32_0, %c0_i32_1 : i32, i32, i32
  }
  func.func @transform_3(%arg0: i32) -> (i32, i32) {
    %c0_i32 = arith.constant 0 : i32
    %c0_i32_0 = arith.constant 0 : i32
    %c0_i32_1 = arith.constant 0 : i32
    return %c0_i32, %c0_i32_0 : i32, i32
  }
  func.func @transform_4(%arg0: i32) -> (i32, i32) {
    %c0_i32 = arith.constant 0 : i32
    %c0_i32_0 = arith.constant 0 : i32
    %c0_i32_1 = arith.constant 0 : i32
    return %c0_i32, %c0_i32_0 : i32, i32
  }
  func.func @transform_5(%arg0: i32) -> (i32, i32) {
    %c0_i32 = arith.constant 0 : i32
    %c0_i32_0 = arith.constant 0 : i32
    %c0_i32_1 = arith.constant 0 : i32
    return %c0_i32, %c0_i32_0 : i32, i32
  }
  func.func @transform_6(%arg0: i32) -> (i32, i32) {
    %c0_i32 = arith.constant 0 : i32
    %c0_i32_0 = arith.constant 0 : i32
    %c0_i32_1 = arith.constant 0 : i32
    return %c0_i32, %c0_i32_0 : i32, i32
  }
  func.func @transform_7(%arg0: i32) -> (i32, i32) {
    %c0_i32 = arith.constant 0 : i32
    %c0_i32_0 = arith.constant 0 : i32
    %c0_i32_1 = arith.constant 0 : i32
    return %c0_i32, %c0_i32_0 : i32, i32
  }
  func.func @transform_8(%arg0: i32) -> (i32, i32) {
    %c0_i32 = arith.constant 0 : i32
    %c0_i32_0 = arith.constant 0 : i32
    %c0_i32_1 = arith.constant 0 : i32
    return %c0_i32, %c0_i32_0 : i32, i32
  }
  func.func @transform_9(%arg0: i32) -> (i32, i32) {
    %c0_i32 = arith.constant 0 : i32
    %c0_i32_0 = arith.constant 0 : i32
    %c0_i32_1 = arith.constant 0 : i32
    return %c0_i32, %c0_i32_0 : i32, i32
  }
  func.func @transform_10(%arg0: i32) -> (i32, i32, i32, i32) {
    %c0_i32 = arith.constant 0 : i32
    %c0_i32_0 = arith.constant 0 : i32
    %c0_i32_1 = arith.constant 0 : i32
    %c0_i32_2 = arith.constant 0 : i32
    %c0_i32_3 = arith.constant 0 : i32
    return %c0_i32, %c0_i32_0, %c0_i32_1, %c0_i32_2 : i32, i32, i32, i32
  }
  func.func @transform_11(%arg0: i32) -> (i32, i32, i32, i32) {
    %c0_i32 = arith.constant 0 : i32
    %c0_i32_0 = arith.constant 0 : i32
    %c0_i32_1 = arith.constant 0 : i32
    %c0_i32_2 = arith.constant 0 : i32
    %c0_i32_3 = arith.constant 0 : i32
    return %c0_i32, %c0_i32_0, %c0_i32_1, %c0_i32_2 : i32, i32, i32, i32
  }
  func.func @transform_12(%arg0: i32) -> (i32, i32, i32, i32) {
    %c0_i32 = arith.constant 0 : i32
    %c0_i32_0 = arith.constant 0 : i32
    %c0_i32_1 = arith.constant 0 : i32
    %c0_i32_2 = arith.constant 0 : i32
    return %arg0, %c0_i32, %c0_i32_0, %c0_i32_1 : i32, i32, i32, i32
  }
}

</mosaic_0001>

<llo_original>
// kernel: tpu_custom_call.1
$region0: #{tpu_custom_call.1}
  #allocation0 [shape = 'u32[]', space=smem, size = 0x4, offset = 0x4, fixed_abs, tag = 'smem constant byte address 0x4 - core index']
  #allocation1 [shape = 'u32[144,128]{1,0:T(1,128)}', space=vmem, size = 0x12000, scoped, tag = 'internal scratch']
  %s0 = inlined_call_operand.vmem [shape: f32[2,18,18,32], index: 0, kind: input, shape index: {}]
  %s1 = inlined_call_operand.vmem [shape: f32[32,320], index: 1, kind: input, shape index: {}]
  %s2 = inlined_call_operand.vmem [shape: f32[1,1,320], index: 2, kind: input, shape index: {}]
  %s3 = inlined_call_operand.vmem [shape: f32[448,64], index: 3, kind: input, shape index: {}]
  %s4 = inlined_call_operand.vmem [shape: f32[448,192], index: 4, kind: input, shape index: {}]
  %s5 = inlined_call_operand.vmem [shape: f32[448,64], index: 5, kind: input, shape index: {}]
  %s6 = inlined_call_operand.vmem [shape: f32[448,64], index: 6, kind: input, shape index: {}]
  %s7 = inlined_call_operand.vmem [shape: f32[448,64], index: 7, kind: input, shape index: {}]
  %s8 = inlined_call_operand.vmem [shape: f32[448,192], index: 8, kind: input, shape index: {}]
  %s9 = inlined_call_operand.vmem [shape: f32[32,192], index: 9, kind: input, shape index: {}]
  %s10 = inlined_call_operand.vmem [shape: f32[4,1,1,64], index: 10, kind: input, shape index: {}]
  %s11 = inlined_call_operand.vmem [shape: f32[3,1,1,192], index: 11, kind: input, shape index: {}]
  %s12 = inlined_call_operand.hbm [shape: f32[2,16,16,768], index: 12, kind: output, shape index: {}]
  %s13 = sld [smem:[#allocation0]]
  $region81: #{tpu_custom_call.1} parent=0
    _
  %s15 = ssub.s32 1, %s13
  %s16 = scalar_select 0, %s15, %s13
  $region1: #{tpu_custom_call.1} parent=0
    #allocation2 [shape = 'u8[1572864]{0}', space=vmem, size = 0x180000, scoped, tag = 'output window, operand 0']
    #allocation3 [shape = 's32[2]{0}', space=sflag, size = 0x8, scoped, tag = 'scoped memory for tpu_custom_call.1']
    %17 = vsyncpa [#allocation3], 0
    %s18 = scalar_lea.sflag [#allocation3], 1
    %19 = vsyncpa %s18, 0
    loop: start=0, step=1, limit=4
    $region2: #{tpu_custom_call.1} parent=1 // loop_pre_header
      _
    $region3: #{tpu_custom_call.1} parent=1 // loop_header
      %s21 = sphi 0, %s25
      %p22 = scmp.ge.s32.totalorder %s21, 4
      %s31 = sphi 0, %s33
      %s34 = sphi 0, %s31
      %s35 = sphi 0, %s34
      %s51 = sphi 0, %s35
      %s55 = sphi 0, %s55
      %s57 = sphi 0, %s55
      %s58 = sphi 0, %s57
      %s72 = sphi 0, %s58
      %s76 = sphi 0, %s76
      %s78 = sphi 0, %s76
      %s79 = sphi 0, %s78
      %s93 = sphi 0, %s79
      %s97 = sphi 0, %s97
      %s99 = sphi 0, %s97
      %s100 = sphi 0, %s99
      %s114 = sphi 0, %s100
      %s118 = sphi 0, %s118
      %s120 = sphi 0, %s118
      %s121 = sphi 0, %s120
      %s135 = sphi 0, %s121
      %s139 = sphi 0, %s139
      %s141 = sphi 0, %s139
      %s142 = sphi 0, %s141
      %s156 = sphi 0, %s142
      %s160 = sphi 0, %s160
      %s162 = sphi 0, %s160
      %s163 = sphi 0, %s162
      %s177 = sphi 0, %s163
      %s181 = sphi 0, %s181
      %s183 = sphi 0, %s181
      %s184 = sphi 0, %s183
      %s198 = sphi 0, %s184
      %s202 = sphi 0, %s202
      %s204 = sphi 0, %s202
      %s205 = sphi 0, %s204
      %s219 = sphi 0, %s205
      %s223 = sphi 0, %s223
      %s225 = sphi 0, %s223
      %s226 = sphi 0, %s225
      %s240 = sphi 0, %s226
      %s244 = sphi 0, %s244
      %s246 = sphi 0, %s244
      %s247 = sphi 0, %s246
      %s261 = sphi 0, %s247
      %s265 = sphi 0, %s265
      %s267 = sphi 0, %s265
      %s268 = sphi 0, %s267
      %s282 = sphi 0, %s268
      %s288 = sphi 0, %s290
      %s291 = sphi 0, %s288
      %s292 = sphi 0, %s291
      %s308 = sphi 0, %s292
    $region4: #{tpu_custom_call.1} parent=1 // loop_header_branch
      %24 = sbr.rel (%p22) target = $region8
    $region5: #{tpu_custom_call.1} parent=1 // loop_body
      %s26 = ssub.s32 %s21, 1
      %s27 = ssub.s32 %s21, 2
      %s28 = sadd.s32 %s21, 1
      %s29 = ssub.s32 %s21, %s28
      %p30 = scmp.eq.s32.totalorder %s29, 0
      %s32 = sadd.s32 %s31, 1
      %s33 = scalar_select %p30, %s31, %s32
      %p36 = pneg %p30
      %p37 = scmp.eq.s32.totalorder %s21, 1
      %p38 = por %p36, %p37
      %p39 = scmp.ne.s32.totalorder %s31, %s34
      %p40 = scmp.eq.s32.totalorder %s21, 0
      %p41 = por %p39, %p40
      %p42 = scmp.ne.s32.totalorder %s31, %s34
      %p43 = scmp.eq.s32.totalorder %s26, 1
      %p44 = por %p42, %p43
      %p45 = scmp.ne.s32.totalorder %s34, %s35
      %p46 = scmp.eq.s32.totalorder %s26, 0
      %p47 = por %p45, %p46
      %p48 = scmp.ne.s32.totalorder %s34, %s35
      %p49 = scmp.eq.s32.totalorder %s27, 1
      %p50 = por %p48, %p49
      %p52 = scmp.ne.s32.totalorder %s35, %s51
      %p53 = scmp.eq.s32.totalorder %s27, 0
      %p54 = por %p52, %p53
      %s56 = sadd.s32 %s55, 1
      %p59 = scmp.eq.s32.totalorder %s21, 1
      %p60 = scmp.ne.s32.totalorder %s55, %s57
      %p61 = scmp.eq.s32.totalorder %s21, 0
      %p62 = por %p60, %p61
      %p63 = scmp.ne.s32.totalorder %s55, %s57
      %p64 = scmp.eq.s32.totalorder %s26, 1
      %p65 = por %p63, %p64
      %p66 = scmp.ne.s32.totalorder %s57, %s58
      %p67 = scmp.eq.s32.totalorder %s26, 0
      %p68 = por %p66, %p67
      %p69 = scmp.ne.s32.totalorder %s57, %s58
      %p70 = scmp.eq.s32.totalorder %s27, 1
      %p71 = por %p69, %p70
      %p73 = scmp.ne.s32.totalorder %s58, %s72
      %p74 = scmp.eq.s32.totalorder %s27, 0
      %p75 = por %p73, %p74
      %s77 = sadd.s32 %s76, 1
      %p80 = scmp.eq.s32.totalorder %s21, 1
      %p81 = scmp.ne.s32.totalorder %s76, %s78
      %p82 = scmp.eq.s32.totalorder %s21, 0
      %p83 = por %p81, %p82
      %p84 = scmp.ne.s32.totalorder %s76, %s78
      %p85 = scmp.eq.s32.totalorder %s26, 1
      %p86 = por %p84, %p85
      %p87 = scmp.ne.s32.totalorder %s78, %s79
      %p88 = scmp.eq.s32.totalorder %s26, 0
      %p89 = por %p87, %p88
      %p90 = scmp.ne.s32.totalorder %s78, %s79
      %p91 = scmp.eq.s32.totalorder %s27, 1
      %p92 = por %p90, %p91
      %p94 = scmp.ne.s32.totalorder %s79, %s93
      %p95 = scmp.eq.s32.totalorder %s27, 0
      %p96 = por %p94, %p95
      %s98 = sadd.s32 %s97, 1
      %p101 = scmp.eq.s32.totalorder %s21, 1
      %p102 = scmp.ne.s32.totalorder %s97, %s99
      %p103 = scmp.eq.s32.totalorder %s21, 0
      %p104 = por %p102, %p103
      %p105 = scmp.ne.s32.totalorder %s97, %s99
      %p106 = scmp.eq.s32.totalorder %s26, 1
      %p107 = por %p105, %p106
      %p108 = scmp.ne.s32.totalorder %s99, %s100
      %p109 = scmp.eq.s32.totalorder %s26, 0
      %p110 = por %p108, %p109
      %p111 = scmp.ne.s32.totalorder %s99, %s100
      %p112 = scmp.eq.s32.totalorder %s27, 1
      %p113 = por %p111, %p112
      %p115 = scmp.ne.s32.totalorder %s100, %s114
      %p116 = scmp.eq.s32.totalorder %s27, 0
      %p117 = por %p115, %p116
      %s119 = sadd.s32 %s118, 1
      %p122 = scmp.eq.s32.totalorder %s21, 1
      %p123 = scmp.ne.s32.totalorder %s118, %s120
      %p124 = scmp.eq.s32.totalorder %s21, 0
      %p125 = por %p123, %p124
      %p126 = scmp.ne.s32.totalorder %s118, %s120
      %p127 = scmp.eq.s32.totalorder %s26, 1
      %p128 = por %p126, %p127
      %p129 = scmp.ne.s32.totalorder %s120, %s121
      %p130 = scmp.eq.s32.totalorder %s26, 0
      %p131 = por %p129, %p130
      %p132 = scmp.ne.s32.totalorder %s120, %s121
      %p133 = scmp.eq.s32.totalorder %s27, 1
      %p134 = por %p132, %p133
      %p136 = scmp.ne.s32.totalorder %s121, %s135
      %p137 = scmp.eq.s32.totalorder %s27, 0
      %p138 = por %p136, %p137
      %s140 = sadd.s32 %s139, 1
      %p143 = scmp.eq.s32.totalorder %s21, 1
      %p144 = scmp.ne.s32.totalorder %s139, %s141
      %p145 = scmp.eq.s32.totalorder %s21, 0
      %p146 = por %p144, %p145
      %p147 = scmp.ne.s32.totalorder %s139, %s141
      %p148 = scmp.eq.s32.totalorder %s26, 1
      %p149 = por %p147, %p148
      %p150 = scmp.ne.s32.totalorder %s141, %s142
      %p151 = scmp.eq.s32.totalorder %s26, 0
      %p152 = por %p150, %p151
      %p153 = scmp.ne.s32.totalorder %s141, %s142
      %p154 = scmp.eq.s32.totalorder %s27, 1
      %p155 = por %p153, %p154
      %p157 = scmp.ne.s32.totalorder %s142, %s156
      %p158 = scmp.eq.s32.totalorder %s27, 0
      %p159 = por %p157, %p158
      %s161 = sadd.s32 %s160, 1
      %p164 = scmp.eq.s32.totalorder %s21, 1
      %p165 = scmp.ne.s32.totalorder %s160, %s162
      %p166 = scmp.eq.s32.totalorder %s21, 0
      %p167 = por %p165, %p166
      %p168 = scmp.ne.s32.totalorder %s160, %s162
      %p169 = scmp.eq.s32.totalorder %s26, 1
      %p170 = por %p168, %p169
      %p171 = scmp.ne.s32.totalorder %s162, %s163
      %p172 = scmp.eq.s32.totalorder %s26, 0
      %p173 = por %p171, %p172
      %p174 = scmp.ne.s32.totalorder %s162, %s163
      %p175 = scmp.eq.s32.totalorder %s27, 1
      %p176 = por %p174, %p175
      %p178 = scmp.ne.s32.totalorder %s163, %s177
      %p179 = scmp.eq.s32.totalorder %s27, 0
      %p180 = por %p178, %p179
      %s182 = sadd.s32 %s181, 1
      %p185 = scmp.eq.s32.totalorder %s21, 1
      %p186 = scmp.ne.s32.totalorder %s181, %s183
      %p187 = scmp.eq.s32.totalorder %s21, 0
      %p188 = por %p186, %p187
      %p189 = scmp.ne.s32.totalorder %s181, %s183
      %p190 = scmp.eq.s32.totalorder %s26, 1
      %p191 = por %p189, %p190
      %p192 = scmp.ne.s32.totalorder %s183, %s184
      %p193 = scmp.eq.s32.totalorder %s26, 0
      %p194 = por %p192, %p193
      %p195 = scmp.ne.s32.totalorder %s183, %s184
      %p196 = scmp.eq.s32.totalorder %s27, 1
      %p197 = por %p195, %p196
      %p199 = scmp.ne.s32.totalorder %s184, %s198
      %p200 = scmp.eq.s32.totalorder %s27, 0
      %p201 = por %p199, %p200
      %s203 = sadd.s32 %s202, 1
      %p206 = scmp.eq.s32.totalorder %s21, 1
      %p207 = scmp.ne.s32.totalorder %s202, %s204
      %p208 = scmp.eq.s32.totalorder %s21, 0
      %p209 = por %p207, %p208
      %p210 = scmp.ne.s32.totalorder %s202, %s204
      %p211 = scmp.eq.s32.totalorder %s26, 1
      %p212 = por %p210, %p211
      %p213 = scmp.ne.s32.totalorder %s204, %s205
      %p214 = scmp.eq.s32.totalorder %s26, 0
      %p215 = por %p213, %p214
      %p216 = scmp.ne.s32.totalorder %s204, %s205
      %p217 = scmp.eq.s32.totalorder %s27, 1
      %p218 = por %p216, %p217
      %p220 = scmp.ne.s32.totalorder %s205, %s219
      %p221 = scmp.eq.s32.totalorder %s27, 0
      %p222 = por %p220, %p221
      %s224 = sadd.s32 %s223, 1
      %p227 = scmp.eq.s32.totalorder %s21, 1
      %p228 = scmp.ne.s32.totalorder %s223, %s225
      %p229 = scmp.eq.s32.totalorder %s21, 0
      %p230 = por %p228, %p229
      %p231 = scmp.ne.s32.totalorder %s223, %s225
      %p232 = scmp.eq.s32.totalorder %s26, 1
      %p233 = por %p231, %p232
      %p234 = scmp.ne.s32.totalorder %s225, %s226
      %p235 = scmp.eq.s32.totalorder %s26, 0
      %p236 = por %p234, %p235
      %p237 = scmp.ne.s32.totalorder %s225, %s226
      %p238 = scmp.eq.s32.totalorder %s27, 1
      %p239 = por %p237, %p238
      %p241 = scmp.ne.s32.totalorder %s226, %s240
      %p242 = scmp.eq.s32.totalorder %s27, 0
      %p243 = por %p241, %p242
      %s245 = sadd.s32 %s244, 1
      %p248 = scmp.eq.s32.totalorder %s21, 1
      %p249 = scmp.ne.s32.totalorder %s244, %s246
      %p250 = scmp.eq.s32.totalorder %s21, 0
      %p251 = por %p249, %p250
      %p252 = scmp.ne.s32.totalorder %s244, %s246
      %p253 = scmp.eq.s32.totalorder %s26, 1
      %p254 = por %p252, %p253
      %p255 = scmp.ne.s32.totalorder %s246, %s247
      %p256 = scmp.eq.s32.totalorder %s26, 0
      %p257 = por %p255, %p256
      %p258 = scmp.ne.s32.totalorder %s246, %s247
      %p259 = scmp.eq.s32.totalorder %s27, 1
      %p260 = por %p258, %p259
      %p262 = scmp.ne.s32.totalorder %s247, %s261
      %p263 = scmp.eq.s32.totalorder %s27, 0
      %p264 = por %p262, %p263
      %s266 = sadd.s32 %s265, 1
      %p269 = scmp.eq.s32.totalorder %s21, 1
      %p270 = scmp.ne.s32.totalorder %s265, %s267
      %p271 = scmp.eq.s32.totalorder %s21, 0
      %p272 = por %p270, %p271
      %p273 = scmp.ne.s32.totalorder %s265, %s267
      %p274 = scmp.eq.s32.totalorder %s26, 1
      %p275 = por %p273, %p274
      %p276 = scmp.ne.s32.totalorder %s267, %s268
      %p277 = scmp.eq.s32.totalorder %s26, 0
      %p278 = por %p276, %p277
      %p279 = scmp.ne.s32.totalorder %s267, %s268
      %p280 = scmp.eq.s32.totalorder %s27, 1
      %p281 = por %p279, %p280
      %p283 = scmp.ne.s32.totalorder %s268, %s282
      %p284 = scmp.eq.s32.totalorder %s27, 0
      %p285 = por %p283, %p284
      %s286 = ssub.s32 %s21, %s28
      %p287 = scmp.eq.s32.totalorder %s286, 0
      %s289 = sadd.s32 %s288, 1
      %s290 = scalar_select %p287, %s288, %s289
      %p293 = pneg %p287
      %p294 = scmp.eq.s32.totalorder %s21, 1
      %p295 = por %p293, %p294
      %p296 = scmp.ne.s32.totalorder %s288, %s291
      %p297 = scmp.eq.s32.totalorder %s21, 0
      %p298 = por %p296, %p297
      %p299 = scmp.ne.s32.totalorder %s288, %s291
      %p300 = scmp.eq.s32.totalorder %s26, 1
      %p301 = por %p299, %p300
      %p302 = scmp.ne.s32.totalorder %s291, %s292
      %p303 = scmp.eq.s32.totalorder %s26, 0
      %p304 = por %p302, %p303
      %p305 = scmp.ne.s32.totalorder %s291, %s292
      %p306 = scmp.eq.s32.totalorder %s27, 1
      %p307 = por %p305, %p306
      %p309 = scmp.ne.s32.totalorder %s292, %s308
      %p310 = scmp.eq.s32.totalorder %s27, 0
      %p311 = por %p309, %p310
      %p312 = scmp.le.s32.totalorder 1, %s21
      %p313 = scmp.lt.s32.totalorder %s21, 3
      %p314 = pnand %p312, %p313
      %p315 = pneg %p314
      // Predicated region
      $region9: #{tpu_custom_call.1} parent=5 // pred_check
        _
      $region10: #{tpu_custom_call.1} parent=5 // pred_check_branch
        %317 = sbr.rel (%p314) target = $region12
      $region11: #{tpu_custom_call.1} parent=5 // pred_region
        %s318 = ssub.s32 %s21, 1
        // Predicated region
        $region13: #{tpu_custom_call.1} parent=11 // pred_check
          %p319 = pneg %p68
        $region14: #{tpu_custom_call.1} parent=11 // pred_check_branch
          %321 = sbr.rel (%p319) target = $region16
        $region15: #{tpu_custom_call.1} parent=11 // pred_region
          _
        $region16: #{tpu_custom_call.1} parent=11 // pred_fallthru
          _
        // Predicated region
        $region17: #{tpu_custom_call.1} parent=11 // pred_check
          %p322 = pneg %p89
        $region18: #{tpu_custom_call.1} parent=11 // pred_check_branch
          %324 = sbr.rel (%p322) target = $region20
        $region19: #{tpu_custom_call.1} parent=11 // pred_region
          _
        $region20: #{tpu_custom_call.1} parent=11 // pred_fallthru
          _
        // Predicated region
        $region21: #{tpu_custom_call.1} parent=11 // pred_check
          %p325 = pneg %p110
        $region22: #{tpu_custom_call.1} parent=11 // pred_check_branch
          %327 = sbr.rel (%p325) target = $region24
        $region23: #{tpu_custom_call.1} parent=11 // pred_region
          _
        $region24: #{tpu_custom_call.1} parent=11 // pred_fallthru
          _
        // Predicated region
        $region25: #{tpu_custom_call.1} parent=11 // pred_check
          %p328 = pneg %p131
        $region26: #{tpu_custom_call.1} parent=11 // pred_check_branch
          %330 = sbr.rel (%p328) target = $region28
        $region27: #{tpu_custom_call.1} parent=11 // pred_region
          _
        $region28: #{tpu_custom_call.1} parent=11 // pred_fallthru
          _
        // Predicated region
        $region29: #{tpu_custom_call.1} parent=11 // pred_check
          %p331 = pneg %p152
        $region30: #{tpu_custom_call.1} parent=11 // pred_check_branch
          %333 = sbr.rel (%p331) target = $region32
        $region31: #{tpu_custom_call.1} parent=11 // pred_region
          _
        $region32: #{tpu_custom_call.1} parent=11 // pred_fallthru
          _
        // Predicated region
        $region33: #{tpu_custom_call.1} parent=11 // pred_check
          %p334 = pneg %p173
        $region34: #{tpu_custom_call.1} parent=11 // pred_check_branch
          %336 = sbr.rel (%p334) target = $region36
        $region35: #{tpu_custom_call.1} parent=11 // pred_region
          _
        $region36: #{tpu_custom_call.1} parent=11 // pred_fallthru
          _
        // Predicated region
        $region37: #{tpu_custom_call.1} parent=11 // pred_check
          %p337 = pneg %p194
        $region38: #{tpu_custom_call.1} parent=11 // pred_check_branch
          %339 = sbr.rel (%p337) target = $region40
        $region39: #{tpu_custom_call.1} parent=11 // pred_region
          _
        $region40: #{tpu_custom_call.1} parent=11 // pred_fallthru
          _
        // Predicated region
        $region41: #{tpu_custom_call.1} parent=11 // pred_check
          %p340 = pneg %p215
        $region42: #{tpu_custom_call.1} parent=11 // pred_check_branch
          %342 = sbr.rel (%p340) target = $region44
        $region43: #{tpu_custom_call.1} parent=11 // pred_region
          _
        $region44: #{tpu_custom_call.1} parent=11 // pred_fallthru
          _
        // Predicated region
        $region45: #{tpu_custom_call.1} parent=11 // pred_check
          %p343 = pneg %p236
        $region46: #{tpu_custom_call.1} parent=11 // pred_check_branch
          %345 = sbr.rel (%p343) target = $region48
        $region47: #{tpu_custom_call.1} parent=11 // pred_region
          _
        $region48: #{tpu_custom_call.1} parent=11 // pred_fallthru
          _
        // Predicated region
        $region49: #{tpu_custom_call.1} parent=11 // pred_check
          %p346 = pneg %p257
        $region50: #{tpu_custom_call.1} parent=11 // pred_check_branch
          %348 = sbr.rel (%p346) target = $region52
        $region51: #{tpu_custom_call.1} parent=11 // pred_region
          _
        $region52: #{tpu_custom_call.1} parent=11 // pred_fallthru
          _
        // Predicated region
        $region53: #{tpu_custom_call.1} parent=11 // pred_check
          %p349 = pneg %p278
        $region54: #{tpu_custom_call.1} parent=11 // pred_check_branch
          %351 = sbr.rel (%p349) target = $region56
        $region55: #{tpu_custom_call.1} parent=11 // pred_region
          _
        $region56: #{tpu_custom_call.1} parent=11 // pred_fallthru
          _
      $region12: #{tpu_custom_call.1} parent=5 // pred_fallthru
        _
      %p352 = scmp.lt.s32.totalorder %s21, 2
      // Predicated region
      $region57: #{tpu_custom_call.1} parent=5 // pred_check
        %p353 = pneg %p352
      $region58: #{tpu_custom_call.1} parent=5 // pred_check_branch
        %355 = sbr.rel (%p353) target = $region60
      $region59: #{tpu_custom_call.1} parent=5 // pred_region
        // Predicated region
        $region61: #{tpu_custom_call.1} parent=59 // pred_check
          %p356 = pneg %p41
        $region62: #{tpu_custom_call.1} parent=59 // pred_check_branch
          %358 = sbr.rel (%p356) target = $region64
        $region63: #{tpu_custom_call.1} parent=59 // pred_region
          %p359 = scmp.lt.s32.totalorder %s21, 1
          %s360 = scalar_select %p359, %s21, 1
          %s361 = smul.addr %s360, 54
          %s362 = smul.addr %s361, 8
          %s363 = scalar_lea.vmem %s0, %s362
        $region64: #{tpu_custom_call.1} parent=59 // pred_fallthru
          _
      $region60: #{tpu_custom_call.1} parent=5 // pred_fallthru
        _
      %p364 = scmp.le.s32.totalorder 1, %s21
      %p365 = scmp.lt.s32.totalorder %s21, 3
      %p366 = pnand %p364, %p365
      %p367 = pneg %p366
      // Predicated region
      $region65: #{tpu_custom_call.1} parent=5 // pred_check
        _
      $region66: #{tpu_custom_call.1} parent=5 // pred_check_branch
        %369 = sbr.rel (%p366) target = $region68
      $region67: #{tpu_custom_call.1} parent=5 // pred_region
        %s370 = ssub.s32 %s21, 1
        %p371 = scmp.lt.s32.totalorder %s26, 1
        %s372 = scalar_select %p371, %s26, 1
        %s373 = smul.addr %s372, 54
        %s374 = smul.addr %s373, 8
        %s375 = scalar_lea.vmem %s0, %s374
        %p376 = pneg %p47
        %p377 = pneg %p44
        %p378 = pneg %p68
        %p379 = pneg %p65
        %p380 = pneg %p89
        %p381 = pneg %p86
        %p382 = pneg %p110
        %p383 = pneg %p107
        %p384 = pneg %p131
        %p385 = pneg %p128
        %p386 = pneg %p152
        %p387 = pneg %p149
        %p388 = pneg %p173
        %p389 = pneg %p170
        %p390 = pneg %p194
        %p391 = pneg %p191
        %p392 = pneg %p215
        %p393 = pneg %p212
        %p394 = pneg %p236
        %p395 = pneg %p233
        %p396 = pneg %p257
        %p397 = pneg %p254
        %p398 = pneg %p278
        %p399 = pneg %p275
        %p400 = pneg %p304
        %p401 = pneg %p301
        %s402 = sand.u32 %s291, 1
        %s403 = scalar_lea.sflag [#allocation3], %s402
        %s404 = sand.u32 %s291, 1
        %s405 = smul.addr %s404, 1536
        %s406 = scalar_lea.vmem [#allocation2], %s405
        %p407 = scmp.lt.s32.totalorder %s26, 1
        %s408 = scalar_select %p407, %s26, 1
        %s409 = smul.addr %s408, 54
        %s410 = smul.addr %s409, 8
        %s411 = scalar_lea.vmem %s0, %s410
        %v412 = vld [vmem:[%s411] sm:$0xff]
        %v413 = vld [vmem:[%s411 + $0x8] sm:$0xff]
        %v414 = vld [vmem:[%s411 + $0x10] sm:$0x3]
        %v415 = vld [vmem:[%s411 + $0x18] sm:$0xff]
        %v416 = vld [vmem:[%s411 + $0x20] sm:$0xff]
        %v417 = vld [vmem:[%s411 + $0x28] sm:$0x3]
        %v418 = vld [vmem:[%s411 + $0x30] sm:$0xff]
        %v419 = vld [vmem:[%s411 + $0x38] sm:$0xff]
        %v420 = vld [vmem:[%s411 + $0x40] sm:$0x3]
        %v421 = vld [vmem:[%s411 + $0x48] sm:$0xff]
        %v422 = vld [vmem:[%s411 + $0x50] sm:$0xff]
        %v423 = vld [vmem:[%s411 + $0x58] sm:$0x3]
        %v424 = vld [vmem:[%s411 + $0x60] sm:$0xff]
        %v425 = vld [vmem:[%s411 + $0x68] sm:$0xff]
        %v426 = vld [vmem:[%s411 + $0x70] sm:$0x3]
        %v427 = vld [vmem:[%s411 + $0x78] sm:$0xff]
        %v428 = vld [vmem:[%s411 + $0x80] sm:$0xff]
        %v429 = vld [vmem:[%s411 + $0x88] sm:$0x3]
        %v430 = vld [vmem:[%s411 + $0x90] sm:$0xff]
        %v431 = vld [vmem:[%s411 + $0x98] sm:$0xff]
        %v432 = vld [vmem:[%s411 + $0xa0] sm:$0x3]
        %v433 = vld [vmem:[%s411 + $0xa8] sm:$0xff]
        %v434 = vld [vmem:[%s411 + $0xb0] sm:$0xff]
        %v435 = vld [vmem:[%s411 + $0xb8] sm:$0x3]
        %v436 = vld [vmem:[%s411 + $0xc0] sm:$0xff]
        %v437 = vld [vmem:[%s411 + $0xc8] sm:$0xff]
        %v438 = vld [vmem:[%s411 + $0xd0] sm:$0x3]
        %v439 = vld [vmem:[%s411 + $0xd8] sm:$0xff]
        %v440 = vld [vmem:[%s411 + $0xe0] sm:$0xff]
        %v441 = vld [vmem:[%s411 + $0xe8] sm:$0x3]
        %v442 = vld [vmem:[%s411 + $0xf0] sm:$0xff]
        %v443 = vld [vmem:[%s411 + $0xf8] sm:$0xff]
        %v444 = vld [vmem:[%s411 + $0x100] sm:$0x3]
        %v445 = vld [vmem:[%s411 + $0x108] sm:$0xff]
        %v446 = vld [vmem:[%s411 + $0x110] sm:$0xff]
        %v447 = vld [vmem:[%s411 + $0x118] sm:$0x3]
        %v448 = vld [vmem:[%s411 + $0x120] sm:$0xff]
        %v449 = vld [vmem:[%s411 + $0x128] sm:$0xff]
        %v450 = vld [vmem:[%s411 + $0x130] sm:$0x3]
        %v451 = vld [vmem:[%s411 + $0x138] sm:$0xff]
        %v452 = vld [vmem:[%s411 + $0x140] sm:$0xff]
        %v453 = vld [vmem:[%s411 + $0x148] sm:$0x3]
        %v454 = vld [vmem:[%s411 + $0x150] sm:$0xff]
        %v455 = vld [vmem:[%s411 + $0x158] sm:$0xff]
        %v456 = vld [vmem:[%s411 + $0x160] sm:$0x3]
        %v457 = vld [vmem:[%s411 + $0x168] sm:$0xff]
        %v458 = vld [vmem:[%s411 + $0x170] sm:$0xff]
        %v459 = vld [vmem:[%s411 + $0x178] sm:$0x3]
        %v460 = vld [vmem:[%s411 + $0x180] sm:$0xff]
        %v461 = vld [vmem:[%s411 + $0x188] sm:$0xff]
        %v462 = vld [vmem:[%s411 + $0x190] sm:$0x3]
        %v463 = vld [vmem:[%s411 + $0x198] sm:$0xff]
        %v464 = vld [vmem:[%s411 + $0x1a0] sm:$0xff]
        %v465 = vld [vmem:[%s411 + $0x1a8] sm:$0x3]
        %v466 = vld [vmem:[%s1] sm:$0xff]
        %v467 = vld [vmem:[%s1 + $0x8] sm:$0xff]
        %v468 = vld [vmem:[%s1 + $0x10] sm:$0xff]
        %v469 = vld [vmem:[%s1 + $0x18] sm:$0xff]
        %v470 = vld [vmem:[%s1 + $0x20] sm:$0xff]
        %v471 = vld [vmem:[%s1 + $0x28] sm:$0xff]
        %v472 = vld [vmem:[%s1 + $0x30] sm:$0xff]
        %v473 = vld [vmem:[%s1 + $0x38] sm:$0xff]
        %v474 = vld [vmem:[%s1 + $0x40] sm:$0xff]
        %v475 = vld [vmem:[%s1 + $0x48] sm:$0xff]
        %v476 = vld [vmem:[%s1 + $0x50] sm:$0xff]
        %v477 = vld [vmem:[%s1 + $0x58] sm:$0xff]
        %v478 = vld [vmem:[%s2] sm:$0x7]
        %v480 = vlaneseq
        %v481 = vshrl.u32 %v480, 7
        %v482 = vsub.s32 0, %v481
        %v483 = vrot.slane %v478, %v482
        %v484 = vlaneseq
        %v485 = vshrl.u32 %v484, 7
        %v486 = vsub.s32 1, %v485
        %v487 = vrot.slane %v478, %v486
        %v488 = vlaneseq
        %v489 = vshrl.u32 %v488, 7
        %v490 = vsub.s32 2, %v489
        %v491 = vrot.slane %v478, %v490
        %vm543 = vcmask 1046528
        %v544 = vrot.slane %v415, 1
        %v545 = vrot.slane %v416, 1
        %v546 = vsel %vm543, %v544, %v545
        %v547 = vrot.slane %v417, 1
        %v548 = vsel %vm543, %v545, %v547
        %v549 = vrot.slane %v418, 1
        %v550 = vrot.slane %v419, 1
        %v551 = vsel %vm543, %v549, %v550
        %v552 = vrot.slane %v420, 1
        %v553 = vsel %vm543, %v550, %v552
        %v554 = vrot.slane %v421, 1
        %v555 = vrot.slane %v422, 1
        %v556 = vsel %vm543, %v554, %v555
        %v557 = vrot.slane %v423, 1
        %v558 = vsel %vm543, %v555, %v557
        %v559 = vrot.slane %v424, 1
        %v560 = vrot.slane %v425, 1
        %v561 = vsel %vm543, %v559, %v560
        %v562 = vrot.slane %v426, 1
        %v563 = vsel %vm543, %v560, %v562
        %v564 = vrot.slane %v427, 1
        %v565 = vrot.slane %v428, 1
        %v566 = vsel %vm543, %v564, %v565
        %v567 = vrot.slane %v429, 1
        %v568 = vsel %vm543, %v565, %v567
        %v569 = vrot.slane %v430, 1
        %v570 = vrot.slane %v431, 1
        %v571 = vsel %vm543, %v569, %v570
        %v572 = vrot.slane %v432, 1
        %v573 = vsel %vm543, %v570, %v572
        %v574 = vrot.slane %v433, 1
        %v575 = vrot.slane %v434, 1
        %v576 = vsel %vm543, %v574, %v575
        %v577 = vrot.slane %v435, 1
        %v578 = vsel %vm543, %v575, %v577
        %v579 = vrot.slane %v436, 1
        %v580 = vrot.slane %v437, 1
        %v581 = vsel %vm543, %v579, %v580
        %v582 = vrot.slane %v438, 1
        %v583 = vsel %vm543, %v580, %v582
        %v584 = vrot.slane %v439, 1
        %v585 = vrot.slane %v440, 1
        %v586 = vsel %vm543, %v584, %v585
        %v587 = vrot.slane %v441, 1
        %v588 = vsel %vm543, %v585, %v587
        %v589 = vrot.slane %v442, 1
        %v590 = vrot.slane %v443, 1
        %v591 = vsel %vm543, %v589, %v590
        %v592 = vrot.slane %v444, 1
        %v593 = vsel %vm543, %v590, %v592
        %v594 = vrot.slane %v445, 1
        %v595 = vrot.slane %v446, 1
        %v596 = vsel %vm543, %v594, %v595
        %v597 = vrot.slane %v447, 1
        %v598 = vsel %vm543, %v595, %v597
        %v599 = vrot.slane %v448, 1
        %v600 = vrot.slane %v449, 1
        %v601 = vsel %vm543, %v599, %v600
        %v602 = vrot.slane %v450, 1
        %v603 = vsel %vm543, %v600, %v602
        %v604 = vrot.slane %v451, 1
        %v605 = vrot.slane %v452, 1
        %v606 = vsel %vm543, %v604, %v605
        %v607 = vrot.slane %v453, 1
        %v608 = vsel %vm543, %v605, %v607
        %v609 = vrot.slane %v454, 1
        %v610 = vrot.slane %v455, 1
        %v611 = vsel %vm543, %v609, %v610
        %v612 = vrot.slane %v456, 1
        %v613 = vsel %vm543, %v610, %v612
        %v614 = vrot.slane %v457, 1
        %v615 = vrot.slane %v458, 1
        %v616 = vsel %vm543, %v614, %v615
        %v617 = vrot.slane %v459, 1
        %v618 = vsel %vm543, %v615, %v617
        %v619 = vrot.slane %v460, 1
        %v620 = vrot.slane %v461, 1
        %v621 = vsel %vm543, %v619, %v620
        %v622 = vrot.slane %v462, 1
        %v623 = vsel %vm543, %v620, %v622
        %vm624 = vcmask 261120
        %v625 = vsel %vm624, %v546, 0
        %v627 = vsel %vm624, %v548, 0
        %v629 = vsel %vm624, %v551, 0
        %v631 = vsel %vm624, %v553, 0
        %v633 = vsel %vm624, %v556, 0
        %v635 = vsel %vm624, %v558, 0
        %v637 = vsel %vm624, %v561, 0
        %v639 = vsel %vm624, %v563, 0
        %v641 = vsel %vm624, %v566, 0
        %v643 = vsel %vm624, %v568, 0
        %v645 = vsel %vm624, %v571, 0
        %v647 = vsel %vm624, %v573, 0
        %v649 = vsel %vm624, %v576, 0
        %v651 = vsel %vm624, %v578, 0
        %v653 = vsel %vm624, %v581, 0
        %v655 = vsel %vm624, %v583, 0
        %v657 = vsel %vm624, %v586, 0
        %v659 = vsel %vm624, %v588, 0
        %v661 = vsel %vm624, %v591, 0
        %v663 = vsel %vm624, %v593, 0
        %v665 = vsel %vm624, %v596, 0
        %v667 = vsel %vm624, %v598, 0
        %v669 = vsel %vm624, %v601, 0
        %v671 = vsel %vm624, %v603, 0
        %v673 = vsel %vm624, %v606, 0
        %v675 = vsel %vm624, %v608, 0
        %v677 = vsel %vm624, %v611, 0
        %v679 = vsel %vm624, %v613, 0
        %v681 = vsel %vm624, %v616, 0
        %v683 = vsel %vm624, %v618, 0
        %v685 = vsel %vm624, %v621, 0
        %v687 = vsel %vm624, %v623, 0
        %689 = vmatprep.subr.mxu0 %v467
        %690 = vmatpush1.msra.mxu0 %v466
        %691 = vmatprep.subr.mxu0 %v470
        %692 = vmatpush1.msra.mxu0 %v469
        %693 = vmatprep.subr.mxu0 %v473
        %694 = vmatpush1.msra.mxu0 %v472
        %695 = vmatprep.subr.mxu0 %v476
        %696 = vmatpush1.msra.mxu0 %v475
        %697 = vmatprep.subr.mxu0 0.0
        %698 = vmatpush1.msra.mxu0 0.0
        %699 = vmatprep.subr.mxu0 0.0
        %700 = vmatpush1.msra.mxu0 0.0
        %701 = vmatprep.subr.mxu0 0.0
        %702 = vmatpush1.msra.mxu0 0.0
        %703 = vmatprep.subr.mxu0 0.0
        %704 = vmatpush1.msra.mxu0 0.0
        %705 = vmatprep.subr.mxu0 0.0
        %706 = vmatpush1.msra.mxu0 0.0
        %707 = vmatprep.subr.mxu0 0.0
        %708 = vmatpush1.msra.mxu0 0.0
        %709 = vmatprep.subr.mxu0 0.0
        %710 = vmatpush1.msra.mxu0 0.0
        %711 = vmatprep.subr.mxu0 0.0
        %712 = vmatpush1.msra.mxu0 0.0
        %713 = vmatprep.subr.mxu0 0.0
        %714 = vmatpush1.msra.mxu0 0.0
        %715 = vmatprep.subr.mxu0 0.0
        %716 = vmatpush1.msra.mxu0 0.0
        %717 = vmatprep.subr.mxu0 0.0
        %718 = vmatpush1.msra.mxu0 0.0
        %719 = vmatprep.subr.mxu0 0.0
        %720 = vmatpush1.msra.mxu0 0.0
        %721 = vmatprep.subr.mxu0 0.0
        %722 = vmatpush1.msra.mxu0 0.0
        %723 = vmatprep.subr.mxu0 0.0
        %724 = vmatpush1.msra.mxu0 0.0
        %725 = vmatprep.subr.mxu0 0.0
        %726 = vmatpush1.msra.mxu0 0.0
        %727 = vmatprep.subr.mxu0 0.0
        %728 = vmatpush1.msra.mxu0 0.0
        %729 = vmatprep.subr.mxu0 0.0
        %730 = vmatpush1.msra.mxu0 0.0
        %731 = vmatprep.subr.mxu0 0.0
        %732 = vmatpush1.msra.mxu0 0.0
        %733 = vmatprep.subr.mxu0 0.0
        %734 = vmatpush1.msra.mxu0 0.0
        %735 = vmatprep.subr.mxu0 0.0
        %736 = vmatpush1.msra.mxu0 0.0
        %737 = vmatprep.subr.mxu0 0.0
        %738 = vmatpush1.msra.mxu0 0.0
        %739 = vmatprep.subr.mxu0 0.0
        %740 = vmatpush1.msra.mxu0 0.0
        %741 = vmatprep.subr.mxu0 0.0
        %742 = vmatpush1.msra.mxu0 0.0
        %743 = vmatprep.subr.mxu0 0.0
        %744 = vmatpush1.msra.mxu0 0.0
        %745 = vmatprep.subr.mxu0 0.0
        %746 = vmatpush1.msra.mxu0 0.0
        %747 = vmatprep.subr.mxu0 0.0
        %748 = vmatpush1.msra.mxu0 0.0
        %749 = vmatprep.subr.mxu0 0.0
        %750 = vmatpush1.msra.mxu0 0.0
        %751 = vmatprep.subr.mxu0 0.0
        %752 = vmatpush1.msra.mxu0 0.0
        %753 = vmatprep.mubr.f32.mxu0 0.0
        %754 = vmatmul.mubr.f32.gmra.mrb[0].mxu0 %v625
        %v755 = vpop.f32.mrb[0].mxu0
        %v756 = vadd.f32 %v483, %v755
        %v757 = vpop.f32.mrb[0].mxu0
        %v758 = vadd.f32 %v487, %v757
        %759 = vmatprep.mubr.f32.mxu0 0.0
        %760 = vmatmul.mubr.f32.gmra.mrb[0].mxu0 %v627
        %v761 = vpop.f32.mrb[0].mxu0
        %v762 = vadd.f32 %v483, %v761
        %v763 = vpop.f32.mrb[0].mxu0
        %v764 = vadd.f32 %v487, %v763
        %765 = vmatprep.mubr.f32.mxu0 0.0
        %766 = vmatmul.mubr.f32.gmra.mrb[0].mxu0 %v629
        %v767 = vpop.f32.mrb[0].mxu0
        %v768 = vadd.f32 %v483, %v767
        %v769 = vpop.f32.mrb[0].mxu0
        %v770 = vadd.f32 %v487, %v769
        %771 = vmatprep.mubr.f32.mxu0 0.0
        %772 = vmatmul.mubr.f32.gmra.mrb[0].mxu0 %v631
        %v773 = vpop.f32.mrb[0].mxu0
        %v774 = vadd.f32 %v483, %v773
        %v775 = vpop.f32.mrb[0].mxu0
        %v776 = vadd.f32 %v487, %v775
        %777 = vmatprep.mubr.f32.mxu0 0.0
        %778 = vmatmul.mubr.f32.gmra.mrb[0].mxu0 %v633
        %v779 = vpop.f32.mrb[0].mxu0
        %v780 = vadd.f32 %v483, %v779
        %v781 = vpop.f32.mrb[0].mxu0
        %v782 = vadd.f32 %v487, %v781
        %783 = vmatprep.mubr.f32.mxu0 0.0
        %784 = vmatmul.mubr.f32.gmra.mrb[0].mxu0 %v635
        %v785 = vpop.f32.mrb[0].mxu0
        %v786 = vadd.f32 %v483, %v785
        %v787 = vpop.f32.mrb[0].mxu0
        %v788 = vadd.f32 %v487, %v787
        %789 = vmatprep.mubr.f32.mxu0 0.0
        %790 = vmatmul.mubr.f32.gmra.mrb[0].mxu0 %v637
        %v791 = vpop.f32.mrb[0].mxu0
        %v792 = vadd.f32 %v483, %v791
        %v793 = vpop.f32.mrb[0].mxu0
        %v794 = vadd.f32 %v487, %v793
        %795 = vmatprep.mubr.f32.mxu0 0.0
        %796 = vmatmul.mubr.f32.gmra.mrb[0].mxu0 %v639
        %v797 = vpop.f32.mrb[0].mxu0
        %v798 = vadd.f32 %v483, %v797
        %v799 = vpop.f32.mrb[0].mxu0
        %v800 = vadd.f32 %v487, %v799
        %801 = vmatprep.mubr.f32.mxu0 0.0
        %802 = vmatmul.mubr.f32.gmra.mrb[0].mxu0 %v641
        %v803 = vpop.f32.mrb[0].mxu0
        %v804 = vadd.f32 %v483, %v803
        %v805 = vpop.f32.mrb[0].mxu0
        %v806 = vadd.f32 %v487, %v805
        %807 = vmatprep.mubr.f32.mxu0 0.0
        %808 = vmatmul.mubr.f32.gmra.mrb[0].mxu0 %v643
        %v809 = vpop.f32.mrb[0].mxu0
        %v810 = vadd.f32 %v483, %v809
        %v811 = vpop.f32.mrb[0].mxu0
        %v812 = vadd.f32 %v487, %v811
        %813 = vmatprep.mubr.f32.mxu0 0.0
        %814 = vmatmul.mubr.f32.gmra.mrb[0].mxu0 %v645
        %v815 = vpop.f32.mrb[0].mxu0
        %v816 = vadd.f32 %v483, %v815
        %v817 = vpop.f32.mrb[0].mxu0
        %v818 = vadd.f32 %v487, %v817
        %819 = vmatprep.mubr.f32.mxu0 0.0
        %820 = vmatmul.mubr.f32.gmra.mrb[0].mxu0 %v647
        %v821 = vpop.f32.mrb[0].mxu0
        %v822 = vadd.f32 %v483, %v821
        %v823 = vpop.f32.mrb[0].mxu0
        %v824 = vadd.f32 %v487, %v823
        %825 = vmatprep.mubr.f32.mxu0 0.0
        %826 = vmatmul.mubr.f32.gmra.mrb[0].mxu0 %v649
        %v827 = vpop.f32.mrb[0].mxu0
        %v828 = vadd.f32 %v483, %v827
        %v829 = vpop.f32.mrb[0].mxu0
        %v830 = vadd.f32 %v487, %v829
        %831 = vmatprep.mubr.f32.mxu0 0.0
        %832 = vmatmul.mubr.f32.gmra.mrb[0].mxu0 %v651
        %v833 = vpop.f32.mrb[0].mxu0
        %v834 = vadd.f32 %v483, %v833
        %v835 = vpop.f32.mrb[0].mxu0
        %v836 = vadd.f32 %v487, %v835
        %837 = vmatprep.mubr.f32.mxu0 0.0
        %838 = vmatmul.mubr.f32.gmra.mrb[0].mxu0 %v653
        %v839 = vpop.f32.mrb[0].mxu0
        %v840 = vadd.f32 %v483, %v839
        %v841 = vpop.f32.mrb[0].mxu0
        %v842 = vadd.f32 %v487, %v841
        %843 = vmatprep.mubr.f32.mxu0 0.0
        %844 = vmatmul.mubr.f32.gmra.mrb[0].mxu0 %v655
        %v845 = vpop.f32.mrb[0].mxu0
        %v846 = vadd.f32 %v483, %v845
        %v847 = vpop.f32.mrb[0].mxu0
        %v848 = vadd.f32 %v487, %v847
        %849 = vmatprep.mubr.f32.mxu0 0.0
        %850 = vmatmul.mubr.f32.gmra.mrb[0].mxu0 %v657
        %v851 = vpop.f32.mrb[0].mxu0
        %v852 = vadd.f32 %v483, %v851
        %v853 = vpop.f32.mrb[0].mxu0
        %v854 = vadd.f32 %v487, %v853
        %855 = vmatprep.mubr.f32.mxu0 0.0
        %856 = vmatmul.mubr.f32.gmra.mrb[0].mxu0 %v659
        %v857 = vpop.f32.mrb[0].mxu0
        %v858 = vadd.f32 %v483, %v857
        %v859 = vpop.f32.mrb[0].mxu0
        %v860 = vadd.f32 %v487, %v859
        %861 = vmatprep.mubr.f32.mxu0 0.0
        %862 = vmatmul.mubr.f32.gmra.mrb[0].mxu0 %v661
        %v863 = vpop.f32.mrb[0].mxu0
        %v864 = vadd.f32 %v483, %v863
        %v865 = vpop.f32.mrb[0].mxu0
        %v866 = vadd.f32 %v487, %v865
        %867 = vmatprep.mubr.f32.mxu0 0.0
        %868 = vmatmul.mubr.f32.gmra.mrb[0].mxu0 %v663
        %v869 = vpop.f32.mrb[0].mxu0
        %v870 = vadd.f32 %v483, %v869
        %v871 = vpop.f32.mrb[0].mxu0
        %v872 = vadd.f32 %v487, %v871
        %873 = vmatprep.mubr.f32.mxu0 0.0
        %874 = vmatmul.mubr.f32.gmra.mrb[0].mxu0 %v665
        %v875 = vpop.f32.mrb[0].mxu0
        %v876 = vadd.f32 %v483, %v875
        %v877 = vpop.f32.mrb[0].mxu0
        %v878 = vadd.f32 %v487, %v877
        %879 = vmatprep.mubr.f32.mxu0 0.0
        %880 = vmatmul.mubr.f32.gmra.mrb[0].mxu0 %v667
        %v881 = vpop.f32.mrb[0].mxu0
        %v882 = vadd.f32 %v483, %v881
        %v883 = vpop.f32.mrb[0].mxu0
        %v884 = vadd.f32 %v487, %v883
        %885 = vmatprep.mubr.f32.mxu0 0.0
        %886 = vmatmul.mubr.f32.gmra.mrb[0].mxu0 %v669
        %v887 = vpop.f32.mrb[0].mxu0
        %v888 = vadd.f32 %v483, %v887
        %v889 = vpop.f32.mrb[0].mxu0
        %v890 = vadd.f32 %v487, %v889
        %891 = vmatprep.mubr.f32.mxu0 0.0
        %892 = vmatmul.mubr.f32.gmra.mrb[0].mxu0 %v671
        %v893 = vpop.f32.mrb[0].mxu0
        %v894 = vadd.f32 %v483, %v893
        %v895 = vpop.f32.mrb[0].mxu0
        %v896 = vadd.f32 %v487, %v895
        %897 = vmatprep.mubr.f32.mxu0 0.0
        %898 = vmatmul.mubr.f32.gmra.mrb[0].mxu0 %v673
        %v899 = vpop.f32.mrb[0].mxu0
        %v900 = vadd.f32 %v483, %v899
        %v901 = vpop.f32.mrb[0].mxu0
        %v902 = vadd.f32 %v487, %v901
        %903 = vmatprep.mubr.f32.mxu0 0.0
        %904 = vmatmul.mubr.f32.gmra.mrb[0].mxu0 %v675
        %v905 = vpop.f32.mrb[0].mxu0
        %v906 = vadd.f32 %v483, %v905
        %v907 = vpop.f32.mrb[0].mxu0
        %v908 = vadd.f32 %v487, %v907
        %909 = vmatprep.mubr.f32.mxu0 0.0
        %910 = vmatmul.mubr.f32.gmra.mrb[0].mxu0 %v677
        %v911 = vpop.f32.mrb[0].mxu0
        %v912 = vadd.f32 %v483, %v911
        %v913 = vpop.f32.mrb[0].mxu0
        %v914 = vadd.f32 %v487, %v913
        %915 = vmatprep.mubr.f32.mxu0 0.0
        %916 = vmatmul.mubr.f32.gmra.mrb[0].mxu0 %v679
        %v917 = vpop.f32.mrb[0].mxu0
        %v918 = vadd.f32 %v483, %v917
        %v919 = vpop.f32.mrb[0].mxu0
        %v920 = vadd.f32 %v487, %v919
        %921 = vmatprep.mubr.f32.mxu0 0.0
        %922 = vmatmul.mubr.f32.gmra.mrb[0].mxu0 %v681
        %v923 = vpop.f32.mrb[0].mxu0
        %v924 = vadd.f32 %v483, %v923
        %v925 = vpop.f32.mrb[0].mxu0
        %v926 = vadd.f32 %v487, %v925
        %927 = vmatprep.mubr.f32.mxu0 0.0
        %928 = vmatmul.mubr.f32.gmra.mrb[0].mxu0 %v683
        %v929 = vpop.f32.mrb[0].mxu0
        %v930 = vadd.f32 %v483, %v929
        %v931 = vpop.f32.mrb[0].mxu0
        %v932 = vadd.f32 %v487, %v931
        %933 = vmatprep.mubr.f32.mxu0 0.0
        %934 = vmatmul.mubr.f32.gmra.mrb[0].mxu0 %v685
        %v935 = vpop.f32.mrb[0].mxu0
        %v936 = vadd.f32 %v483, %v935
        %v937 = vpop.f32.mrb[0].mxu0
        %v938 = vadd.f32 %v487, %v937
        %939 = vmatprep.mubr.f32.mxu0 0.0
        %940 = vmatmul.mubr.f32.gmra.mrb[0].mxu0 %v687
        %v941 = vpop.f32.mrb[0].mxu0
        %v942 = vadd.f32 %v483, %v941
        %v943 = vpop.f32.mrb[0].mxu0
        %v944 = vadd.f32 %v487, %v943
        %945 = vdwg.mxu0
        %946 = vmatprep.subr.mxu0 0.0
        %947 = vmatpush1.msra.mxu0 %v468
        %948 = vmatprep.subr.mxu0 0.0
        %949 = vmatpush1.msra.mxu0 %v471
        %950 = vmatprep.subr.mxu0 0.0
        %951 = vmatpush1.msra.mxu0 %v474
        %952 = vmatprep.subr.mxu0 0.0
        %953 = vmatpush1.msra.mxu0 %v477
        %954 = vmatprep.subr.mxu0 0.0
        %955 = vmatpush1.msra.mxu0 0.0
        %956 = vmatprep.subr.mxu0 0.0
        %957 = vmatpush1.msra.mxu0 0.0
        %958 = vmatprep.subr.mxu0 0.0
        %959 = vmatpush1.msra.mxu0 0.0
        %960 = vmatprep.subr.mxu0 0.0
        %961 = vmatpush1.msra.mxu0 0.0
        %962 = vmatprep.subr.mxu0 0.0
        %963 = vmatpush1.msra.mxu0 0.0
        %964 = vmatprep.subr.mxu0 0.0
        %965 = vmatpush1.msra.mxu0 0.0
        %966 = vmatprep.subr.mxu0 0.0
        %967 = vmatpush1.msra.mxu0 0.0
        %968 = vmatprep.subr.mxu0 0.0
        %969 = vmatpush1.msra.mxu0 0.0
        %970 = vmatprep.subr.mxu0 0.0
        %971 = vmatpush1.msra.mxu0 0.0
        %972 = vmatprep.subr.mxu0 0.0
        %973 = vmatpush1.msra.mxu0 0.0
        %974 = vmatprep.subr.mxu0 0.0
        %975 = vmatpush1.msra.mxu0 0.0
        %976 = vmatprep.subr.mxu0 0.0
        %977 = vmatpush1.msra.mxu0 0.0
        %978 = vmatprep.subr.mxu0 0.0
        %979 = vmatpush1.msra.mxu0 0.0
        %980 = vmatprep.subr.mxu0 0.0
        %981 = vmatpush1.msra.mxu0 0.0
        %982 = vmatprep.subr.mxu0 0.0
        %983 = vmatpush1.msra.mxu0 0.0
        %984 = vmatprep.subr.mxu0 0.0
        %985 = vmatpush1.msra.mxu0 0.0
        %986 = vmatprep.subr.mxu0 0.0
        %987 = vmatpush1.msra.mxu0 0.0
        %988 = vmatprep.subr.mxu0 0.0
        %989 = vmatpush1.msra.mxu0 0.0
        %990 = vmatprep.subr.mxu0 0.0
        %991 = vmatpush1.msra.mxu0 0.0
        %992 = vmatprep.subr.mxu0 0.0
        %993 = vmatpush1.msra.mxu0 0.0
        %994 = vmatprep.subr.mxu0 0.0
        %995 = vmatpush1.msra.mxu0 0.0
        %996 = vmatprep.subr.mxu0 0.0
        %997 = vmatpush1.msra.mxu0 0.0
        %998 = vmatprep.subr.mxu0 0.0
        %999 = vmatpush1.msra.mxu0 0.0
        %1000 = vmatprep.subr.mxu0 0.0
        %1001 = vmatpush1.msra.mxu0 0.0
        %1002 = vmatprep.subr.mxu0 0.0
        %1003 = vmatpush1.msra.mxu0 0.0
        %1004 = vmatprep.subr.mxu0 0.0
        %1005 = vmatpush1.msra.mxu0 0.0
        %1006 = vmatprep.subr.mxu0 0.0
        %1007 = vmatpush1.msra.mxu0 0.0
        %1008 = vmatprep.subr.mxu0 0.0
        %1009 = vmatpush1.msra.mxu0 0.0
        %1010 = vmatprep.mubr.f32.mxu0 0.0
        %1011 = vmatmul.mubr.f32.gmra.mrb[0].mxu0 %v625
        %v1012 = vpop.f32.mrb[0].mxu0
        %v1013 = vadd.f32 %v491, %v1012
        %v1014 = vpop.f32.mrb[0].mxu0
        %1015 = vmatprep.mubr.f32.mxu0 0.0
        %1016 = vmatmul.mubr.f32.gmra.mrb[0].mxu0 %v627
        %v1017 = vpop.f32.mrb[0].mxu0
        %v1018 = vadd.f32 %v491, %v1017
        %v1019 = vpop.f32.mrb[0].mxu0
        %1020 = vmatprep.mubr.f32.mxu0 0.0
        %1021 = vmatmul.mubr.f32.gmra.mrb[0].mxu0 %v629
        %v1022 = vpop.f32.mrb[0].mxu0
        %v1023 = vadd.f32 %v491, %v1022
        %v1024 = vpop.f32.mrb[0].mxu0
        %1025 = vmatprep.mubr.f32.mxu0 0.0
        %1026 = vmatmul.mubr.f32.gmra.mrb[0].mxu0 %v631
        %v1027 = vpop.f32.mrb[0].mxu0
        %v1028 = vadd.f32 %v491, %v1027
        %v1029 = vpop.f32.mrb[0].mxu0
        %1030 = vmatprep.mubr.f32.mxu0 0.0
        %1031 = vmatmul.mubr.f32.gmra.mrb[0].mxu0 %v633
        %v1032 = vpop.f32.mrb[0].mxu0
        %v1033 = vadd.f32 %v491, %v1032
        %v1034 = vpop.f32.mrb[0].mxu0
        %1035 = vmatprep.mubr.f32.mxu0 0.0
        %1036 = vmatmul.mubr.f32.gmra.mrb[0].mxu0 %v635
        %v1037 = vpop.f32.mrb[0].mxu0
        %v1038 = vadd.f32 %v491, %v1037
        %v1039 = vpop.f32.mrb[0].mxu0
        %1040 = vmatprep.mubr.f32.mxu0 0.0
        %1041 = vmatmul.mubr.f32.gmra.mrb[0].mxu0 %v637
        %v1042 = vpop.f32.mrb[0].mxu0
        %v1043 = vadd.f32 %v491, %v1042
        %v1044 = vpop.f32.mrb[0].mxu0
        %1045 = vmatprep.mubr.f32.mxu0 0.0
        %1046 = vmatmul.mubr.f32.gmra.mrb[0].mxu0 %v639
        %v1047 = vpop.f32.mrb[0].mxu0
        %v1048 = vadd.f32 %v491, %v1047
        %v1049 = vpop.f32.mrb[0].mxu0
        %1050 = vmatprep.mubr.f32.mxu0 0.0
        %1051 = vmatmul.mubr.f32.gmra.mrb[0].mxu0 %v641
        %v1052 = vpop.f32.mrb[0].mxu0
        %v1053 = vadd.f32 %v491, %v1052
        %v1054 = vpop.f32.mrb[0].mxu0
        %1055 = vmatprep.mubr.f32.mxu0 0.0
        %1056 = vmatmul.mubr.f32.gmra.mrb[0].mxu0 %v643
        %v1057 = vpop.f32.mrb[0].mxu0
        %v1058 = vadd.f32 %v491, %v1057
        %v1059 = vpop.f32.mrb[0].mxu0
        %1060 = vmatprep.mubr.f32.mxu0 0.0
        %1061 = vmatmul.mubr.f32.gmra.mrb[0].mxu0 %v645
        %v1062 = vpop.f32.mrb[0].mxu0
        %v1063 = vadd.f32 %v491, %v1062
        %v1064 = vpop.f32.mrb[0].mxu0
        %1065 = vmatprep.mubr.f32.mxu0 0.0
        %1066 = vmatmul.mubr.f32.gmra.mrb[0].mxu0 %v647
        %v1067 = vpop.f32.mrb[0].mxu0
        %v1068 = vadd.f32 %v491, %v1067
        %v1069 = vpop.f32.mrb[0].mxu0
        %1070 = vmatprep.mubr.f32.mxu0 0.0
        %1071 = vmatmul.mubr.f32.gmra.mrb[0].mxu0 %v649
        %v1072 = vpop.f32.mrb[0].mxu0
        %v1073 = vadd.f32 %v491, %v1072
        %v1074 = vpop.f32.mrb[0].mxu0
        %1075 = vmatprep.mubr.f32.mxu0 0.0
        %1076 = vmatmul.mubr.f32.gmra.mrb[0].mxu0 %v651
        %v1077 = vpop.f32.mrb[0].mxu0
        %v1078 = vadd.f32 %v491, %v1077
        %v1079 = vpop.f32.mrb[0].mxu0
        %1080 = vmatprep.mubr.f32.mxu0 0.0
        %1081 = vmatmul.mubr.f32.gmra.mrb[0].mxu0 %v653
        %v1082 = vpop.f32.mrb[0].mxu0
        %v1083 = vadd.f32 %v491, %v1082
        %v1084 = vpop.f32.mrb[0].mxu0
        %1085 = vmatprep.mubr.f32.mxu0 0.0
        %1086 = vmatmul.mubr.f32.gmra.mrb[0].mxu0 %v655
        %v1087 = vpop.f32.mrb[0].mxu0
        %v1088 = vadd.f32 %v491, %v1087
        %v1089 = vpop.f32.mrb[0].mxu0
        %1090 = vmatprep.mubr.f32.mxu0 0.0
        %1091 = vmatmul.mubr.f32.gmra.mrb[0].mxu0 %v657
        %v1092 = vpop.f32.mrb[0].mxu0
        %v1093 = vadd.f32 %v491, %v1092
        %v1094 = vpop.f32.mrb[0].mxu0
        %1095 = vmatprep.mubr.f32.mxu0 0.0
        %1096 = vmatmul.mubr.f32.gmra.mrb[0].mxu0 %v659
        %v1097 = vpop.f32.mrb[0].mxu0
        %v1098 = vadd.f32 %v491, %v1097
        %v1099 = vpop.f32.mrb[0].mxu0
        %1100 = vmatprep.mubr.f32.mxu0 0.0
        %1101 = vmatmul.mubr.f32.gmra.mrb[0].mxu0 %v661
        %v1102 = vpop.f32.mrb[0].mxu0
        %v1103 = vadd.f32 %v491, %v1102
        %v1104 = vpop.f32.mrb[0].mxu0
        %1105 = vmatprep.mubr.f32.mxu0 0.0
        %1106 = vmatmul.mubr.f32.gmra.mrb[0].mxu0 %v663
        %v1107 = vpop.f32.mrb[0].mxu0
        %v1108 = vadd.f32 %v491, %v1107
        %v1109 = vpop.f32.mrb[0].mxu0
        %1110 = vmatprep.mubr.f32.mxu0 0.0
        %1111 = vmatmul.mubr.f32.gmra.mrb[0].mxu0 %v665
        %v1112 = vpop.f32.mrb[0].mxu0
        %v1113 = vadd.f32 %v491, %v1112
        %v1114 = vpop.f32.mrb[0].mxu0
        %1115 = vmatprep.mubr.f32.mxu0 0.0
        %1116 = vmatmul.mubr.f32.gmra.mrb[0].mxu0 %v667
        %v1117 = vpop.f32.mrb[0].mxu0
        %v1118 = vadd.f32 %v491, %v1117
        %v1119 = vpop.f32.mrb[0].mxu0
        %1120 = vmatprep.mubr.f32.mxu0 0.0
        %1121 = vmatmul.mubr.f32.gmra.mrb[0].mxu0 %v669
        %v1122 = vpop.f32.mrb[0].mxu0
        %v1123 = vadd.f32 %v491, %v1122
        %v1124 = vpop.f32.mrb[0].mxu0
        %1125 = vmatprep.mubr.f32.mxu0 0.0
        %1126 = vmatmul.mubr.f32.gmra.mrb[0].mxu0 %v671
        %v1127 = vpop.f32.mrb[0].mxu0
        %v1128 = vadd.f32 %v491, %v1127
        %v1129 = vpop.f32.mrb[0].mxu0
        %1130 = vmatprep.mubr.f32.mxu0 0.0
        %1131 = vmatmul.mubr.f32.gmra.mrb[0].mxu0 %v673
        %v1132 = vpop.f32.mrb[0].mxu0
        %v1133 = vadd.f32 %v491, %v1132
        %v1134 = vpop.f32.mrb[0].mxu0
        %1135 = vmatprep.mubr.f32.mxu0 0.0
        %1136 = vmatmul.mubr.f32.gmra.mrb[0].mxu0 %v675
        %v1137 = vpop.f32.mrb[0].mxu0
        %v1138 = vadd.f32 %v491, %v1137
        %v1139 = vpop.f32.mrb[0].mxu0
        %1140 = vmatprep.mubr.f32.mxu0 0.0
        %1141 = vmatmul.mubr.f32.gmra.mrb[0].mxu0 %v677
        %v1142 = vpop.f32.mrb[0].mxu0
        %v1143 = vadd.f32 %v491, %v1142
        %v1144 = vpop.f32.mrb[0].mxu0
        %1145 = vmatprep.mubr.f32.mxu0 0.0
        %1146 = vmatmul.mubr.f32.gmra.mrb[0].mxu0 %v679
        %v1147 = vpop.f32.mrb[0].mxu0
        %v1148 = vadd.f32 %v491, %v1147
        %v1149 = vpop.f32.mrb[0].mxu0
        %1150 = vmatprep.mubr.f32.mxu0 0.0
        %1151 = vmatmul.mubr.f32.gmra.mrb[0].mxu0 %v681
        %v1152 = vpop.f32.mrb[0].mxu0
        %v1153 = vadd.f32 %v491, %v1152
        %v1154 = vpop.f32.mrb[0].mxu0
        %1155 = vmatprep.mubr.f32.mxu0 0.0
        %1156 = vmatmul.mubr.f32.gmra.mrb[0].mxu0 %v683
        %v1157 = vpop.f32.mrb[0].mxu0
        %v1158 = vadd.f32 %v491, %v1157
        %v1159 = vpop.f32.mrb[0].mxu0
        %1160 = vmatprep.mubr.f32.mxu0 0.0
        %1161 = vmatmul.mubr.f32.gmra.mrb[0].mxu0 %v685
        %v1162 = vpop.f32.mrb[0].mxu0
        %v1163 = vadd.f32 %v491, %v1162
        %v1164 = vpop.f32.mrb[0].mxu0
        %1165 = vmatprep.mubr.f32.mxu0 0.0
        %1166 = vmatmul.mubr.f32.gmra.mrb[0].mxu0 %v687
        %v1167 = vpop.f32.mrb[0].mxu0
        %v1168 = vadd.f32 %v491, %v1167
        %v1169 = vpop.f32.mrb[0].mxu0
        %1170 = vdwg.mxu0
        %v1171 = vmax.f32 %v756, 0.0
        %v1172 = vmax.f32 %v758, 0.0
        %v1173 = vmax.f32 %v1013, 0.0
        %v1174 = vmax.f32 %v762, 0.0
        %v1175 = vmax.f32 %v764, 0.0
        %v1176 = vmax.f32 %v1018, 0.0
        %v1177 = vmax.f32 %v768, 0.0
        %v1178 = vmax.f32 %v770, 0.0
        %v1179 = vmax.f32 %v1023, 0.0
        %v1180 = vmax.f32 %v774, 0.0
        %v1181 = vmax.f32 %v776, 0.0
        %v1182 = vmax.f32 %v1028, 0.0
        %v1183 = vmax.f32 %v780, 0.0
        %v1184 = vmax.f32 %v782, 0.0
        %v1185 = vmax.f32 %v1033, 0.0
        %v1186 = vmax.f32 %v786, 0.0
        %v1187 = vmax.f32 %v788, 0.0
        %v1188 = vmax.f32 %v1038, 0.0
        %v1189 = vmax.f32 %v792, 0.0
        %v1190 = vmax.f32 %v794, 0.0
        %v1191 = vmax.f32 %v1043, 0.0
        %v1192 = vmax.f32 %v798, 0.0
        %v1193 = vmax.f32 %v800, 0.0
        %v1194 = vmax.f32 %v1048, 0.0
        %v1195 = vmax.f32 %v804, 0.0
        %v1196 = vmax.f32 %v806, 0.0
        %v1197 = vmax.f32 %v1053, 0.0
        %v1198 = vmax.f32 %v810, 0.0
        %v1199 = vmax.f32 %v812, 0.0
        %v1200 = vmax.f32 %v1058, 0.0
        %v1201 = vmax.f32 %v816, 0.0
        %v1202 = vmax.f32 %v818, 0.0
        %v1203 = vmax.f32 %v1063, 0.0
        %v1204 = vmax.f32 %v822, 0.0
        %v1205 = vmax.f32 %v824, 0.0
        %v1206 = vmax.f32 %v1068, 0.0
        %v1207 = vmax.f32 %v828, 0.0
        %v1208 = vmax.f32 %v830, 0.0
        %v1209 = vmax.f32 %v1073, 0.0
        %v1210 = vmax.f32 %v834, 0.0
        %v1211 = vmax.f32 %v836, 0.0
        %v1212 = vmax.f32 %v1078, 0.0
        %v1213 = vmax.f32 %v840, 0.0
        %v1214 = vmax.f32 %v842, 0.0
        %v1215 = vmax.f32 %v1083, 0.0
        %v1216 = vmax.f32 %v846, 0.0
        %v1217 = vmax.f32 %v848, 0.0
        %v1218 = vmax.f32 %v1088, 0.0
        %v1219 = vmax.f32 %v852, 0.0
        %v1220 = vmax.f32 %v854, 0.0
        %v1221 = vmax.f32 %v1093, 0.0
        %v1222 = vmax.f32 %v858, 0.0
        %v1223 = vmax.f32 %v860, 0.0
        %v1224 = vmax.f32 %v1098, 0.0
        %v1225 = vmax.f32 %v864, 0.0
        %v1226 = vmax.f32 %v866, 0.0
        %v1227 = vmax.f32 %v1103, 0.0
        %v1228 = vmax.f32 %v870, 0.0
        %v1229 = vmax.f32 %v872, 0.0
        %v1230 = vmax.f32 %v1108, 0.0
        %v1231 = vmax.f32 %v876, 0.0
        %v1232 = vmax.f32 %v878, 0.0
        %v1233 = vmax.f32 %v1113, 0.0
        %v1234 = vmax.f32 %v882, 0.0
        %v1235 = vmax.f32 %v884, 0.0
        %v1236 = vmax.f32 %v1118, 0.0
        %v1237 = vmax.f32 %v888, 0.0
        %v1238 = vmax.f32 %v890, 0.0
        %v1239 = vmax.f32 %v1123, 0.0
        %v1240 = vmax.f32 %v894, 0.0
        %v1241 = vmax.f32 %v896, 0.0
        %v1242 = vmax.f32 %v1128, 0.0
        %v1243 = vmax.f32 %v900, 0.0
        %v1244 = vmax.f32 %v902, 0.0
        %v1245 = vmax.f32 %v1133, 0.0
        %v1246 = vmax.f32 %v906, 0.0
        %v1247 = vmax.f32 %v908, 0.0
        %v1248 = vmax.f32 %v1138, 0.0
        %v1249 = vmax.f32 %v912, 0.0
        %v1250 = vmax.f32 %v914, 0.0
        %v1251 = vmax.f32 %v1143, 0.0
        %v1252 = vmax.f32 %v918, 0.0
        %v1253 = vmax.f32 %v920, 0.0
        %v1254 = vmax.f32 %v1148, 0.0
        %v1255 = vmax.f32 %v924, 0.0
        %v1256 = vmax.f32 %v926, 0.0
        %v1257 = vmax.f32 %v1153, 0.0
        %v1258 = vmax.f32 %v930, 0.0
        %v1259 = vmax.f32 %v932, 0.0
        %v1260 = vmax.f32 %v1158, 0.0
        %v1261 = vmax.f32 %v936, 0.0
        %v1262 = vmax.f32 %v938, 0.0
        %v1263 = vmax.f32 %v1163, 0.0
        %v1264 = vmax.f32 %v942, 0.0
        %v1265 = vmax.f32 %v944, 0.0
        %v1266 = vmax.f32 %v1168, 0.0
        %v1267 = vld [vmem:[%s10] sm:$0x1]
        %vm1300 = vcmask 1042432
        %v1301 = vrot.slane %v1172, 5
        %v1302 = vrot.slane %v1175, 5
        %v1303 = vsel %vm1300, %v1301, %v1302
        %v1304 = vrot.slane %v1178, 5
        %v1305 = vrot.slane %v1181, 5
        %v1306 = vsel %vm1300, %v1304, %v1305
        %v1307 = vrot.slane %v1184, 5
        %v1308 = vrot.slane %v1187, 5
        %v1309 = vsel %vm1300, %v1307, %v1308
        %v1310 = vrot.slane %v1190, 5
        %v1311 = vrot.slane %v1193, 5
        %v1312 = vsel %vm1300, %v1310, %v1311
        %v1313 = vrot.slane %v1196, 5
        %v1314 = vrot.slane %v1199, 5
        %v1315 = vsel %vm1300, %v1313, %v1314
        %v1316 = vrot.slane %v1202, 5
        %v1317 = vrot.slane %v1205, 5
        %v1318 = vsel %vm1300, %v1316, %v1317
        %v1319 = vrot.slane %v1208, 5
        %v1320 = vrot.slane %v1211, 5
        %v1321 = vsel %vm1300, %v1319, %v1320
        %v1322 = vrot.slane %v1214, 5
        %v1323 = vrot.slane %v1217, 5
        %v1324 = vsel %vm1300, %v1322, %v1323
        %v1325 = vrot.slane %v1220, 5
        %v1326 = vrot.slane %v1223, 5
        %v1327 = vsel %vm1300, %v1325, %v1326
        %v1328 = vrot.slane %v1226, 5
        %v1329 = vrot.slane %v1229, 5
        %v1330 = vsel %vm1300, %v1328, %v1329
        %v1331 = vrot.slane %v1232, 5
        %v1332 = vrot.slane %v1235, 5
        %v1333 = vsel %vm1300, %v1331, %v1332
        %v1334 = vrot.slane %v1238, 5
        %v1335 = vrot.slane %v1241, 5
        %v1336 = vsel %vm1300, %v1334, %v1335
        %v1337 = vrot.slane %v1244, 5
        %v1338 = vrot.slane %v1247, 5
        %v1339 = vsel %vm1300, %v1337, %v1338
        %v1340 = vrot.slane %v1250, 5
        %v1341 = vrot.slane %v1253, 5
        %v1342 = vsel %vm1300, %v1340, %v1341
        %v1343 = vrot.slane %v1256, 5
        %v1344 = vrot.slane %v1259, 5
        %v1345 = vsel %vm1300, %v1343, %v1344
        %v1346 = vrot.slane %v1262, 5
        %v1347 = vrot.slane %v1265, 5
        %v1348 = vsel %vm1300, %v1346, %v1347
        %1349 = vrot.lane.b32.xlu0 %v1301, 64
        %v1350 = vpop.permute.xlu0 %1349
        %1351 = vrot.lane.b32.xlu0 %v1303, 64
        %v1352 = vpop.permute.xlu0 %1351
        %1353 = vrot.lane.b32.xlu0 %v1302, 64
        %v1354 = vpop.permute.xlu0 %1353
        %1355 = vrot.lane.b32.xlu0 %v1304, 64
        %v1356 = vpop.permute.xlu0 %1355
        %1357 = vrot.lane.b32.xlu0 %v1306, 64
        %v1358 = vpop.permute.xlu0 %1357
        %1359 = vrot.lane.b32.xlu0 %v1305, 64
        %v1360 = vpop.permute.xlu0 %1359
        %1361 = vrot.lane.b32.xlu0 %v1307, 64
        %v1362 = vpop.permute.xlu0 %1361
        %1363 = vrot.lane.b32.xlu0 %v1309, 64
        %v1364 = vpop.permute.xlu0 %1363
        %1365 = vrot.lane.b32.xlu0 %v1308, 64
        %v1366 = vpop.permute.xlu0 %1365
        %1367 = vrot.lane.b32.xlu0 %v1310, 64
        %v1368 = vpop.permute.xlu0 %1367
        %1369 = vrot.lane.b32.xlu0 %v1312, 64
        %v1370 = vpop.permute.xlu0 %1369
        %1371 = vrot.lane.b32.xlu0 %v1311, 64
        %v1372 = vpop.permute.xlu0 %1371
        %1373 = vrot.lane.b32.xlu0 %v1313, 64
        %v1374 = vpop.permute.xlu0 %1373
        %1375 = vrot.lane.b32.xlu0 %v1315, 64
        %v1376 = vpop.permute.xlu0 %1375
        %1377 = vrot.lane.b32.xlu0 %v1314, 64
        %v1378 = vpop.permute.xlu0 %1377
        %1379 = vrot.lane.b32.xlu0 %v1316, 64
        %v1380 = vpop.permute.xlu0 %1379
        %1381 = vrot.lane.b32.xlu0 %v1318, 64
        %v1382 = vpop.permute.xlu0 %1381
        %1383 = vrot.lane.b32.xlu0 %v1317, 64
        %v1384 = vpop.permute.xlu0 %1383
        %1385 = vrot.lane.b32.xlu0 %v1319, 64
        %v1386 = vpop.permute.xlu0 %1385
        %1387 = vrot.lane.b32.xlu0 %v1321, 64
        %v1388 = vpop.permute.xlu0 %1387
        %1389 = vrot.lane.b32.xlu0 %v1320, 64
        %v1390 = vpop.permute.xlu0 %1389
        %1391 = vrot.lane.b32.xlu0 %v1322, 64
        %v1392 = vpop.permute.xlu0 %1391
        %1393 = vrot.lane.b32.xlu0 %v1324, 64
        %v1394 = vpop.permute.xlu0 %1393
        %1395 = vrot.lane.b32.xlu0 %v1323, 64
        %v1396 = vpop.permute.xlu0 %1395
        %1397 = vrot.lane.b32.xlu0 %v1325, 64
        %v1398 = vpop.permute.xlu0 %1397
        %1399 = vrot.lane.b32.xlu0 %v1327, 64
        %v1400 = vpop.permute.xlu0 %1399
        %1401 = vrot.lane.b32.xlu0 %v1326, 64
        %v1402 = vpop.permute.xlu0 %1401
        %1403 = vrot.lane.b32.xlu0 %v1328, 64
        %v1404 = vpop.permute.xlu0 %1403
        %1405 = vrot.lane.b32.xlu0 %v1330, 64
        %v1406 = vpop.permute.xlu0 %1405
        %1407 = vrot.lane.b32.xlu0 %v1329, 64
        %v1408 = vpop.permute.xlu0 %1407
        %1409 = vrot.lane.b32.xlu0 %v1331, 64
        %v1410 = vpop.permute.xlu0 %1409
        %1411 = vrot.lane.b32.xlu0 %v1333, 64
        %v1412 = vpop.permute.xlu0 %1411
        %1413 = vrot.lane.b32.xlu0 %v1332, 64
        %v1414 = vpop.permute.xlu0 %1413
        %1415 = vrot.lane.b32.xlu0 %v1334, 64
        %v1416 = vpop.permute.xlu0 %1415
        %1417 = vrot.lane.b32.xlu0 %v1336, 64
        %v1418 = vpop.permute.xlu0 %1417
        %1419 = vrot.lane.b32.xlu0 %v1335, 64
        %v1420 = vpop.permute.xlu0 %1419
        %1421 = vrot.lane.b32.xlu0 %v1337, 64
        %v1422 = vpop.permute.xlu0 %1421
        %1423 = vrot.lane.b32.xlu0 %v1339, 64
        %v1424 = vpop.permute.xlu0 %1423
        %1425 = vrot.lane.b32.xlu0 %v1338, 64
        %v1426 = vpop.permute.xlu0 %1425
        %1427 = vrot.lane.b32.xlu0 %v1340, 64
        %v1428 = vpop.permute.xlu0 %1427
        %1429 = vrot.lane.b32.xlu0 %v1342, 64
        %v1430 = vpop.permute.xlu0 %1429
        %1431 = vrot.lane.b32.xlu0 %v1341, 64
        %v1432 = vpop.permute.xlu0 %1431
        %1433 = vrot.lane.b32.xlu0 %v1343, 64
        %v1434 = vpop.permute.xlu0 %1433
        %1435 = vrot.lane.b32.xlu0 %v1345, 64
        %v1436 = vpop.permute.xlu0 %1435
        %1437 = vrot.lane.b32.xlu0 %v1344, 64
        %v1438 = vpop.permute.xlu0 %1437
        %1439 = vrot.lane.b32.xlu0 %v1346, 64
        %v1440 = vpop.permute.xlu0 %1439
        %1441 = vrot.lane.b32.xlu0 %v1348, 64
        %v1442 = vpop.permute.xlu0 %1441
        %1443 = vrot.lane.b32.xlu0 %v1347, 64
        %v1444 = vpop.permute.xlu0 %1443
        %v1493 = vsel %vm1300, 0.0, %v1350
        %v1494 = vsel %vm1300, 0.0, %v1356
        %v1495 = vsel %vm1300, 0.0, %v1362
        %v1496 = vsel %vm1300, 0.0, %v1368
        %v1497 = vsel %vm1300, 0.0, %v1374
        %v1498 = vsel %vm1300, 0.0, %v1380
        %v1499 = vsel %vm1300, 0.0, %v1386
        %v1500 = vsel %vm1300, 0.0, %v1392
        %v1501 = vsel %vm1300, 0.0, %v1398
        %v1502 = vsel %vm1300, 0.0, %v1404
        %v1503 = vsel %vm1300, 0.0, %v1410
        %v1504 = vsel %vm1300, 0.0, %v1416
        %v1505 = vsel %vm1300, 0.0, %v1422
        %v1506 = vsel %vm1300, 0.0, %v1428
        %v1507 = vsel %vm1300, 0.0, %v1434
        %v1508 = vsel %vm1300, 0.0, %v1440
        %v1509 = vsel %vm1300, %v1354, 0.0
        %v1510 = vsel %vm1300, %v1360, 0.0
        %v1511 = vsel %vm1300, %v1366, 0.0
        %v1512 = vsel %vm1300, %v1372, 0.0
        %v1513 = vsel %vm1300, %v1378, 0.0
        %v1514 = vsel %vm1300, %v1384, 0.0
        %v1515 = vsel %vm1300, %v1390, 0.0
        %v1516 = vsel %vm1300, %v1396, 0.0
        %v1517 = vsel %vm1300, %v1402, 0.0
        %v1518 = vsel %vm1300, %v1408, 0.0
        %v1519 = vsel %vm1300, %v1414, 0.0
        %v1520 = vsel %vm1300, %v1420, 0.0
        %v1521 = vsel %vm1300, %v1426, 0.0
        %v1522 = vsel %vm1300, %v1432, 0.0
        %v1523 = vsel %vm1300, %v1438, 0.0
        %v1524 = vsel %vm1300, %v1444, 0.0
        %v1557 = vrot.slane %v1493, 1
        %v1558 = vrot.slane %v1352, 1
        %v1559 = vsel %vm543, %v1557, %v1558
        %v1560 = vrot.slane %v1509, 1
        %v1561 = vsel %vm543, %v1558, %v1560
        %v1562 = vrot.slane %v1494, 1
        %v1563 = vrot.slane %v1358, 1
        %v1564 = vsel %vm543, %v1562, %v1563
        %v1565 = vrot.slane %v1510, 1
        %v1566 = vsel %vm543, %v1563, %v1565
        %v1567 = vrot.slane %v1495, 1
        %v1568 = vrot.slane %v1364, 1
        %v1569 = vsel %vm543, %v1567, %v1568
        %v1570 = vrot.slane %v1511, 1
        %v1571 = vsel %vm543, %v1568, %v1570
        %v1572 = vrot.slane %v1496, 1
        %v1573 = vrot.slane %v1370, 1
        %v1574 = vsel %vm543, %v1572, %v1573
        %v1575 = vrot.slane %v1512, 1
        %v1576 = vsel %vm543, %v1573, %v1575
        %v1577 = vrot.slane %v1497, 1
        %v1578 = vrot.slane %v1376, 1
        %v1579 = vsel %vm543, %v1577, %v1578
        %v1580 = vrot.slane %v1513, 1
        %v1581 = vsel %vm543, %v1578, %v1580
        %v1582 = vrot.slane %v1498, 1
        %v1583 = vrot.slane %v1382, 1
        %v1584 = vsel %vm543, %v1582, %v1583
        %v1585 = vrot.slane %v1514, 1
        %v1586 = vsel %vm543, %v1583, %v1585
        %v1587 = vrot.slane %v1499, 1
        %v1588 = vrot.slane %v1388, 1
        %v1589 = vsel %vm543, %v1587, %v1588
        %v1590 = vrot.slane %v1515, 1
        %v1591 = vsel %vm543, %v1588, %v1590
        %v1592 = vrot.slane %v1500, 1
        %v1593 = vrot.slane %v1394, 1
        %v1594 = vsel %vm543, %v1592, %v1593
        %v1595 = vrot.slane %v1516, 1
        %v1596 = vsel %vm543, %v1593, %v1595
        %v1597 = vrot.slane %v1501, 1
        %v1598 = vrot.slane %v1400, 1
        %v1599 = vsel %vm543, %v1597, %v1598
        %v1600 = vrot.slane %v1517, 1
        %v1601 = vsel %vm543, %v1598, %v1600
        %v1602 = vrot.slane %v1502, 1
        %v1603 = vrot.slane %v1406, 1
        %v1604 = vsel %vm543, %v1602, %v1603
        %v1605 = vrot.slane %v1518, 1
        %v1606 = vsel %vm543, %v1603, %v1605
        %v1607 = vrot.slane %v1503, 1
        %v1608 = vrot.slane %v1412, 1
        %v1609 = vsel %vm543, %v1607, %v1608
        %v1610 = vrot.slane %v1519, 1
        %v1611 = vsel %vm543, %v1608, %v1610
        %v1612 = vrot.slane %v1504, 1
        %v1613 = vrot.slane %v1418, 1
        %v1614 = vsel %vm543, %v1612, %v1613
        %v1615 = vrot.slane %v1520, 1
        %v1616 = vsel %vm543, %v1613, %v1615
        %v1617 = vrot.slane %v1505, 1
        %v1618 = vrot.slane %v1424, 1
        %v1619 = vsel %vm543, %v1617, %v1618
        %v1620 = vrot.slane %v1521, 1
        %v1621 = vsel %vm543, %v1618, %v1620
        %v1622 = vrot.slane %v1506, 1
        %v1623 = vrot.slane %v1430, 1
        %v1624 = vsel %vm543, %v1622, %v1623
        %v1625 = vrot.slane %v1522, 1
        %v1626 = vsel %vm543, %v1623, %v1625
        %v1627 = vrot.slane %v1507, 1
        %v1628 = vrot.slane %v1436, 1
        %v1629 = vsel %vm543, %v1627, %v1628
        %v1630 = vrot.slane %v1523, 1
        %v1631 = vsel %vm543, %v1628, %v1630
        %v1632 = vrot.slane %v1508, 1
        %v1633 = vrot.slane %v1442, 1
        %v1634 = vsel %vm543, %v1632, %v1633
        %v1635 = vrot.slane %v1524, 1
        %v1636 = vsel %vm543, %v1633, %v1635
        %1637 = vrot.lane.b32.xlu0 %v1559, 64
        %v1638 = vpop.permute.xlu0 %1637
        %1639 = vrot.lane.b32.xlu0 %v1561, 64
        %v1640 = vpop.permute.xlu0 %1639
        %1641 = vrot.lane.b32.xlu0 %v1564, 64
        %v1642 = vpop.permute.xlu0 %1641
        %1643 = vrot.lane.b32.xlu0 %v1566, 64
        %v1644 = vpop.permute.xlu0 %1643
        %1645 = vrot.lane.b32.xlu0 %v1569, 64
        %v1646 = vpop.permute.xlu0 %1645
        %1647 = vrot.lane.b32.xlu0 %v1571, 64
        %v1648 = vpop.permute.xlu0 %1647
        %1649 = vrot.lane.b32.xlu0 %v1574, 64
        %v1650 = vpop.permute.xlu0 %1649
        %1651 = vrot.lane.b32.xlu0 %v1576, 64
        %v1652 = vpop.permute.xlu0 %1651
        %1653 = vrot.lane.b32.xlu0 %v1579, 64
        %v1654 = vpop.permute.xlu0 %1653
        %1655 = vrot.lane.b32.xlu0 %v1581, 64
        %v1656 = vpop.permute.xlu0 %1655
        %1657 = vrot.lane.b32.xlu0 %v1584, 64
        %v1658 = vpop.permute.xlu0 %1657
        %1659 = vrot.lane.b32.xlu0 %v1586, 64
        %v1660 = vpop.permute.xlu0 %1659
        %1661 = vrot.lane.b32.xlu0 %v1589, 64
        %v1662 = vpop.permute.xlu0 %1661
        %1663 = vrot.lane.b32.xlu0 %v1591, 64
        %v1664 = vpop.permute.xlu0 %1663
        %1665 = vrot.lane.b32.xlu0 %v1594, 64
        %v1666 = vpop.permute.xlu0 %1665
        %1667 = vrot.lane.b32.xlu0 %v1596, 64
        %v1668 = vpop.permute.xlu0 %1667
        %1669 = vrot.lane.b32.xlu0 %v1599, 64
        %v1670 = vpop.permute.xlu0 %1669
        %1671 = vrot.lane.b32.xlu0 %v1601, 64
        %v1672 = vpop.permute.xlu0 %1671
        %1673 = vrot.lane.b32.xlu0 %v1604, 64
        %v1674 = vpop.permute.xlu0 %1673
        %1675 = vrot.lane.b32.xlu0 %v1606, 64
        %v1676 = vpop.permute.xlu0 %1675
        %1677 = vrot.lane.b32.xlu0 %v1609, 64
        %v1678 = vpop.permute.xlu0 %1677
        %1679 = vrot.lane.b32.xlu0 %v1611, 64
        %v1680 = vpop.permute.xlu0 %1679
        %1681 = vrot.lane.b32.xlu0 %v1614, 64
        %v1682 = vpop.permute.xlu0 %1681
        %1683 = vrot.lane.b32.xlu0 %v1616, 64
        %v1684 = vpop.permute.xlu0 %1683
        %1685 = vrot.lane.b32.xlu0 %v1619, 64
        %v1686 = vpop.permute.xlu0 %1685
        %1687 = vrot.lane.b32.xlu0 %v1621, 64
        %v1688 = vpop.permute.xlu0 %1687
        %1689 = vrot.lane.b32.xlu0 %v1624, 64
        %v1690 = vpop.permute.xlu0 %1689
        %1691 = vrot.lane.b32.xlu0 %v1626, 64
        %v1692 = vpop.permute.xlu0 %1691
        %1693 = vrot.lane.b32.xlu0 %v1629, 64
        %v1694 = vpop.permute.xlu0 %1693
        %1695 = vrot.lane.b32.xlu0 %v1631, 64
        %v1696 = vpop.permute.xlu0 %1695
        %1697 = vrot.lane.b32.xlu0 %v1634, 64
        %v1698 = vpop.permute.xlu0 %1697
        %1699 = vrot.lane.b32.xlu0 %v1636, 64
        %v1700 = vpop.permute.xlu0 %1699
        %vm1733 = vcmask 1045504
        %v1734 = vrot.slane %v1493, 2
        %v1735 = vrot.slane %v1352, 2
        %v1736 = vsel %vm1733, %v1734, %v1735
        %v1737 = vrot.slane %v1509, 2
        %v1738 = vsel %vm1733, %v1735, %v1737
        %v1739 = vrot.slane %v1494, 2
        %v1740 = vrot.slane %v1358, 2
        %v1741 = vsel %vm1733, %v1739, %v1740
        %v1742 = vrot.slane %v1510, 2
        %v1743 = vsel %vm1733, %v1740, %v1742
        %v1744 = vrot.slane %v1495, 2
        %v1745 = vrot.slane %v1364, 2
        %v1746 = vsel %vm1733, %v1744, %v1745
        %v1747 = vrot.slane %v1511, 2
        %v1748 = vsel %vm1733, %v1745, %v1747
        %v1749 = vrot.slane %v1496, 2
        %v1750 = vrot.slane %v1370, 2
        %v1751 = vsel %vm1733, %v1749, %v1750
        %v1752 = vrot.slane %v1512, 2
        %v1753 = vsel %vm1733, %v1750, %v1752
        %v1754 = vrot.slane %v1497, 2
        %v1755 = vrot.slane %v1376, 2
        %v1756 = vsel %vm1733, %v1754, %v1755
        %v1757 = vrot.slane %v1513, 2
        %v1758 = vsel %vm1733, %v1755, %v1757
        %v1759 = vrot.slane %v1498, 2
        %v1760 = vrot.slane %v1382, 2
        %v1761 = vsel %vm1733, %v1759, %v1760
        %v1762 = vrot.slane %v1514, 2
        %v1763 = vsel %vm1733, %v1760, %v1762
        %v1764 = vrot.slane %v1499, 2
        %v1765 = vrot.slane %v1388, 2
        %v1766 = vsel %vm1733, %v1764, %v1765
        %v1767 = vrot.slane %v1515, 2
        %v1768 = vsel %vm1733, %v1765, %v1767
        %v1769 = vrot.slane %v1500, 2
        %v1770 = vrot.slane %v1394, 2
        %v1771 = vsel %vm1733, %v1769, %v1770
        %v1772 = vrot.slane %v1516, 2
        %v1773 = vsel %vm1733, %v1770, %v1772
        %v1774 = vrot.slane %v1501, 2
        %v1775 = vrot.slane %v1400, 2
        %v1776 = vsel %vm1733, %v1774, %v1775
        %v1777 = vrot.slane %v1517, 2
        %v1778 = vsel %vm1733, %v1775, %v1777
        %v1779 = vrot.slane %v1502, 2
        %v1780 = vrot.slane %v1406, 2
        %v1781 = vsel %vm1733, %v1779, %v1780
        %v1782 = vrot.slane %v1518, 2
        %v1783 = vsel %vm1733, %v1780, %v1782
        %v1784 = vrot.slane %v1503, 2
        %v1785 = vrot.slane %v1412, 2
        %v1786 = vsel %vm1733, %v1784, %v1785
        %v1787 = vrot.slane %v1519, 2
        %v1788 = vsel %vm1733, %v1785, %v1787
        %v1789 = vrot.slane %v1504, 2
        %v1790 = vrot.slane %v1418, 2
        %v1791 = vsel %vm1733, %v1789, %v1790
        %v1792 = vrot.slane %v1520, 2
        %v1793 = vsel %vm1733, %v1790, %v1792
        %v1794 = vrot.slane %v1505, 2
        %v1795 = vrot.slane %v1424, 2
        %v1796 = vsel %vm1733, %v1794, %v1795
        %v1797 = vrot.slane %v1521, 2
        %v1798 = vsel %vm1733, %v1795, %v1797
        %v1799 = vrot.slane %v1506, 2
        %v1800 = vrot.slane %v1430, 2
        %v1801 = vsel %vm1733, %v1799, %v1800
        %v1802 = vrot.slane %v1522, 2
        %v1803 = vsel %vm1733, %v1800, %v1802
        %v1804 = vrot.slane %v1507, 2
        %v1805 = vrot.slane %v1436, 2
        %v1806 = vsel %vm1733, %v1804, %v1805
        %v1807 = vrot.slane %v1523, 2
        %v1808 = vsel %vm1733, %v1805, %v1807
        %v1809 = vrot.slane %v1508, 2
        %v1810 = vrot.slane %v1442, 2
        %v1811 = vsel %vm1733, %v1809, %v1810
        %v1812 = vrot.slane %v1524, 2
        %v1813 = vsel %vm1733, %v1810, %v1812
        %vm1846 = vcmask 1044480
        %v1847 = vrot.slane %v1493, 3
        %v1848 = vrot.slane %v1352, 3
        %v1849 = vsel %vm1846, %v1847, %v1848
        %v1850 = vrot.slane %v1509, 3
        %v1851 = vsel %vm1846, %v1848, %v1850
        %v1852 = vrot.slane %v1494, 3
        %v1853 = vrot.slane %v1358, 3
        %v1854 = vsel %vm1846, %v1852, %v1853
        %v1855 = vrot.slane %v1510, 3
        %v1856 = vsel %vm1846, %v1853, %v1855
        %v1857 = vrot.slane %v1495, 3
        %v1858 = vrot.slane %v1364, 3
        %v1859 = vsel %vm1846, %v1857, %v1858
        %v1860 = vrot.slane %v1511, 3
        %v1861 = vsel %vm1846, %v1858, %v1860
        %v1862 = vrot.slane %v1496, 3
        %v1863 = vrot.slane %v1370, 3
        %v1864 = vsel %vm1846, %v1862, %v1863
        %v1865 = vrot.slane %v1512, 3
        %v1866 = vsel %vm1846, %v1863, %v1865
        %v1867 = vrot.slane %v1497, 3
        %v1868 = vrot.slane %v1376, 3
        %v1869 = vsel %vm1846, %v1867, %v1868
        %v1870 = vrot.slane %v1513, 3
        %v1871 = vsel %vm1846, %v1868, %v1870
        %v1872 = vrot.slane %v1498, 3
        %v1873 = vrot.slane %v1382, 3
        %v1874 = vsel %vm1846, %v1872, %v1873
        %v1875 = vrot.slane %v1514, 3
        %v1876 = vsel %vm1846, %v1873, %v1875
        %v1877 = vrot.slane %v1499, 3
        %v1878 = vrot.slane %v1388, 3
        %v1879 = vsel %vm1846, %v1877, %v1878
        %v1880 = vrot.slane %v1515, 3
        %v1881 = vsel %vm1846, %v1878, %v1880
        %v1882 = vrot.slane %v1500, 3
        %v1883 = vrot.slane %v1394, 3
        %v1884 = vsel %vm1846, %v1882, %v1883
        %v1885 = vrot.slane %v1516, 3
        %v1886 = vsel %vm1846, %v1883, %v1885
        %v1887 = vrot.slane %v1501, 3
        %v1888 = vrot.slane %v1400, 3
        %v1889 = vsel %vm1846, %v1887, %v1888
        %v1890 = vrot.slane %v1517, 3
        %v1891 = vsel %vm1846, %v1888, %v1890
        %v1892 = vrot.slane %v1502, 3
        %v1893 = vrot.slane %v1406, 3
        %v1894 = vsel %vm1846, %v1892, %v1893
        %v1895 = vrot.slane %v1518, 3
        %v1896 = vsel %vm1846, %v1893, %v1895
        %v1897 = vrot.slane %v1503, 3
        %v1898 = vrot.slane %v1412, 3
        %v1899 = vsel %vm1846, %v1897, %v1898
        %v1900 = vrot.slane %v1519, 3
        %v1901 = vsel %vm1846, %v1898, %v1900
        %v1902 = vrot.slane %v1504, 3
        %v1903 = vrot.slane %v1418, 3
        %v1904 = vsel %vm1846, %v1902, %v1903
        %v1905 = vrot.slane %v1520, 3
        %v1906 = vsel %vm1846, %v1903, %v1905
        %v1907 = vrot.slane %v1505, 3
        %v1908 = vrot.slane %v1424, 3
        %v1909 = vsel %vm1846, %v1907, %v1908
        %v1910 = vrot.slane %v1521, 3
        %v1911 = vsel %vm1846, %v1908, %v1910
        %v1912 = vrot.slane %v1506, 3
        %v1913 = vrot.slane %v1430, 3
        %v1914 = vsel %vm1846, %v1912, %v1913
        %v1915 = vrot.slane %v1522, 3
        %v1916 = vsel %vm1846, %v1913, %v1915
        %v1917 = vrot.slane %v1507, 3
        %v1918 = vrot.slane %v1436, 3
        %v1919 = vsel %vm1846, %v1917, %v1918
        %v1920 = vrot.slane %v1523, 3
        %v1921 = vsel %vm1846, %v1918, %v1920
        %v1922 = vrot.slane %v1508, 3
        %v1923 = vrot.slane %v1442, 3
        %v1924 = vsel %vm1846, %v1922, %v1923
        %v1925 = vrot.slane %v1524, 3
        %v1926 = vsel %vm1846, %v1923, %v1925
        %1927 = vrot.lane.b32.xlu0 %v1849, 64
        %v1928 = vpop.permute.xlu0 %1927
        %1929 = vrot.lane.b32.xlu0 %v1851, 64
        %v1930 = vpop.permute.xlu0 %1929
        %1931 = vrot.lane.b32.xlu0 %v1854, 64
        %v1932 = vpop.permute.xlu0 %1931
        %1933 = vrot.lane.b32.xlu0 %v1856, 64
        %v1934 = vpop.permute.xlu0 %1933
        %1935 = vrot.lane.b32.xlu0 %v1859, 64
        %v1936 = vpop.permute.xlu0 %1935
        %1937 = vrot.lane.b32.xlu0 %v1861, 64
        %v1938 = vpop.permute.xlu0 %1937
        %1939 = vrot.lane.b32.xlu0 %v1864, 64
        %v1940 = vpop.permute.xlu0 %1939
        %1941 = vrot.lane.b32.xlu0 %v1866, 64
        %v1942 = vpop.permute.xlu0 %1941
        %1943 = vrot.lane.b32.xlu0 %v1869, 64
        %v1944 = vpop.permute.xlu0 %1943
        %1945 = vrot.lane.b32.xlu0 %v1871, 64
        %v1946 = vpop.permute.xlu0 %1945
        %1947 = vrot.lane.b32.xlu0 %v1874, 64
        %v1948 = vpop.permute.xlu0 %1947
        %1949 = vrot.lane.b32.xlu0 %v1876, 64
        %v1950 = vpop.permute.xlu0 %1949
        %1951 = vrot.lane.b32.xlu0 %v1879, 64
        %v1952 = vpop.permute.xlu0 %1951
        %1953 = vrot.lane.b32.xlu0 %v1881, 64
        %v1954 = vpop.permute.xlu0 %1953
        %1955 = vrot.lane.b32.xlu0 %v1884, 64
        %v1956 = vpop.permute.xlu0 %1955
        %1957 = vrot.lane.b32.xlu0 %v1886, 64
        %v1958 = vpop.permute.xlu0 %1957
        %1959 = vrot.lane.b32.xlu0 %v1889, 64
        %v1960 = vpop.permute.xlu0 %1959
        %1961 = vrot.lane.b32.xlu0 %v1891, 64
        %v1962 = vpop.permute.xlu0 %1961
        %1963 = vrot.lane.b32.xlu0 %v1894, 64
        %v1964 = vpop.permute.xlu0 %1963
        %1965 = vrot.lane.b32.xlu0 %v1896, 64
        %v1966 = vpop.permute.xlu0 %1965
        %1967 = vrot.lane.b32.xlu0 %v1899, 64
        %v1968 = vpop.permute.xlu0 %1967
        %1969 = vrot.lane.b32.xlu0 %v1901, 64
        %v1970 = vpop.permute.xlu0 %1969
        %1971 = vrot.lane.b32.xlu0 %v1904, 64
        %v1972 = vpop.permute.xlu0 %1971
        %1973 = vrot.lane.b32.xlu0 %v1906, 64
        %v1974 = vpop.permute.xlu0 %1973
        %1975 = vrot.lane.b32.xlu0 %v1909, 64
        %v1976 = vpop.permute.xlu0 %1975
        %1977 = vrot.lane.b32.xlu0 %v1911, 64
        %v1978 = vpop.permute.xlu0 %1977
        %1979 = vrot.lane.b32.xlu0 %v1914, 64
        %v1980 = vpop.permute.xlu0 %1979
        %1981 = vrot.lane.b32.xlu0 %v1916, 64
        %v1982 = vpop.permute.xlu0 %1981
        %1983 = vrot.lane.b32.xlu0 %v1919, 64
        %v1984 = vpop.permute.xlu0 %1983
        %1985 = vrot.lane.b32.xlu0 %v1921, 64
        %v1986 = vpop.permute.xlu0 %1985
        %1987 = vrot.lane.b32.xlu0 %v1924, 64
        %v1988 = vpop.permute.xlu0 %1987
        %1989 = vrot.lane.b32.xlu0 %v1926, 64
        %v1990 = vpop.permute.xlu0 %1989
        %vm2023 = vcmask 1043456
        %v2024 = vrot.slane %v1493, 4
        %v2025 = vrot.slane %v1352, 4
        %v2026 = vsel %vm2023, %v2024, %v2025
        %v2027 = vrot.slane %v1509, 4
        %v2028 = vsel %vm2023, %v2025, %v2027
        %v2029 = vrot.slane %v1494, 4
        %v2030 = vrot.slane %v1358, 4
        %v2031 = vsel %vm2023, %v2029, %v2030
        %v2032 = vrot.slane %v1510, 4
        %v2033 = vsel %vm2023, %v2030, %v2032
        %v2034 = vrot.slane %v1495, 4
        %v2035 = vrot.slane %v1364, 4
        %v2036 = vsel %vm2023, %v2034, %v2035
        %v2037 = vrot.slane %v1511, 4
        %v2038 = vsel %vm2023, %v2035, %v2037
        %v2039 = vrot.slane %v1496, 4
        %v2040 = vrot.slane %v1370, 4
        %v2041 = vsel %vm2023, %v2039, %v2040
        %v2042 = vrot.slane %v1512, 4
        %v2043 = vsel %vm2023, %v2040, %v2042
        %v2044 = vrot.slane %v1497, 4
        %v2045 = vrot.slane %v1376, 4
        %v2046 = vsel %vm2023, %v2044, %v2045
        %v2047 = vrot.slane %v1513, 4
        %v2048 = vsel %vm2023, %v2045, %v2047
        %v2049 = vrot.slane %v1498, 4
        %v2050 = vrot.slane %v1382, 4
        %v2051 = vsel %vm2023, %v2049, %v2050
        %v2052 = vrot.slane %v1514, 4
        %v2053 = vsel %vm2023, %v2050, %v2052
        %v2054 = vrot.slane %v1499, 4
        %v2055 = vrot.slane %v1388, 4
        %v2056 = vsel %vm2023, %v2054, %v2055
        %v2057 = vrot.slane %v1515, 4
        %v2058 = vsel %vm2023, %v2055, %v2057
        %v2059 = vrot.slane %v1500, 4
        %v2060 = vrot.slane %v1394, 4
        %v2061 = vsel %vm2023, %v2059, %v2060
        %v2062 = vrot.slane %v1516, 4
        %v2063 = vsel %vm2023, %v2060, %v2062
        %v2064 = vrot.slane %v1501, 4
        %v2065 = vrot.slane %v1400, 4
        %v2066 = vsel %vm2023, %v2064, %v2065
        %v2067 = vrot.slane %v1517, 4
        %v2068 = vsel %vm2023, %v2065, %v2067
        %v2069 = vrot.slane %v1502, 4
        %v2070 = vrot.slane %v1406, 4
        %v2071 = vsel %vm2023, %v2069, %v2070
        %v2072 = vrot.slane %v1518, 4
        %v2073 = vsel %vm2023, %v2070, %v2072
        %v2074 = vrot.slane %v1503, 4
        %v2075 = vrot.slane %v1412, 4
        %v2076 = vsel %vm2023, %v2074, %v2075
        %v2077 = vrot.slane %v1519, 4
        %v2078 = vsel %vm2023, %v2075, %v2077
        %v2079 = vrot.slane %v1504, 4
        %v2080 = vrot.slane %v1418, 4
        %v2081 = vsel %vm2023, %v2079, %v2080
        %v2082 = vrot.slane %v1520, 4
        %v2083 = vsel %vm2023, %v2080, %v2082
        %v2084 = vrot.slane %v1505, 4
        %v2085 = vrot.slane %v1424, 4
        %v2086 = vsel %vm2023, %v2084, %v2085
        %v2087 = vrot.slane %v1521, 4
        %v2088 = vsel %vm2023, %v2085, %v2087
        %v2089 = vrot.slane %v1506, 4
        %v2090 = vrot.slane %v1430, 4
        %v2091 = vsel %vm2023, %v2089, %v2090
        %v2092 = vrot.slane %v1522, 4
        %v2093 = vsel %vm2023, %v2090, %v2092
        %v2094 = vrot.slane %v1507, 4
        %v2095 = vrot.slane %v1436, 4
        %v2096 = vsel %vm2023, %v2094, %v2095
        %v2097 = vrot.slane %v1523, 4
        %v2098 = vsel %vm2023, %v2095, %v2097
        %v2099 = vrot.slane %v1508, 4
        %v2100 = vrot.slane %v1442, 4
        %v2101 = vsel %vm2023, %v2099, %v2100
        %v2102 = vrot.slane %v1524, 4
        %v2103 = vsel %vm2023, %v2100, %v2102
        %v2136 = vrot.slane %v1493, 5
        %v2137 = vrot.slane %v1352, 5
        %v2138 = vsel %vm1300, %v2136, %v2137
        %v2139 = vrot.slane %v1509, 5
        %v2140 = vsel %vm1300, %v2137, %v2139
        %v2141 = vrot.slane %v1494, 5
        %v2142 = vrot.slane %v1358, 5
        %v2143 = vsel %vm1300, %v2141, %v2142
        %v2144 = vrot.slane %v1510, 5
        %v2145 = vsel %vm1300, %v2142, %v2144
        %v2146 = vrot.slane %v1495, 5
        %v2147 = vrot.slane %v1364, 5
        %v2148 = vsel %vm1300, %v2146, %v2147
        %v2149 = vrot.slane %v1511, 5
        %v2150 = vsel %vm1300, %v2147, %v2149
        %v2151 = vrot.slane %v1496, 5
        %v2152 = vrot.slane %v1370, 5
        %v2153 = vsel %vm1300, %v2151, %v2152
        %v2154 = vrot.slane %v1512, 5
        %v2155 = vsel %vm1300, %v2152, %v2154
        %v2156 = vrot.slane %v1497, 5
        %v2157 = vrot.slane %v1376, 5
        %v2158 = vsel %vm1300, %v2156, %v2157
        %v2159 = vrot.slane %v1513, 5
        %v2160 = vsel %vm1300, %v2157, %v2159
        %v2161 = vrot.slane %v1498, 5
        %v2162 = vrot.slane %v1382, 5
        %v2163 = vsel %vm1300, %v2161, %v2162
        %v2164 = vrot.slane %v1514, 5
        %v2165 = vsel %vm1300, %v2162, %v2164
        %v2166 = vrot.slane %v1499, 5
        %v2167 = vrot.slane %v1388, 5
        %v2168 = vsel %vm1300, %v2166, %v2167
        %v2169 = vrot.slane %v1515, 5
        %v2170 = vsel %vm1300, %v2167, %v2169
        %v2171 = vrot.slane %v1500, 5
        %v2172 = vrot.slane %v1394, 5
        %v2173 = vsel %vm1300, %v2171, %v2172
        %v2174 = vrot.slane %v1516, 5
        %v2175 = vsel %vm1300, %v2172, %v2174
        %v2176 = vrot.slane %v1501, 5
        %v2177 = vrot.slane %v1400, 5
        %v2178 = vsel %vm1300, %v2176, %v2177
        %v2179 = vrot.slane %v1517, 5
        %v2180 = vsel %vm1300, %v2177, %v2179
        %v2181 = vrot.slane %v1502, 5
        %v2182 = vrot.slane %v1406, 5
        %v2183 = vsel %vm1300, %v2181, %v2182
        %v2184 = vrot.slane %v1518, 5
        %v2185 = vsel %vm1300, %v2182, %v2184
        %v2186 = vrot.slane %v1503, 5
        %v2187 = vrot.slane %v1412, 5
        %v2188 = vsel %vm1300, %v2186, %v2187
        %v2189 = vrot.slane %v1519, 5
        %v2190 = vsel %vm1300, %v2187, %v2189
        %v2191 = vrot.slane %v1504, 5
        %v2192 = vrot.slane %v1418, 5
        %v2193 = vsel %vm1300, %v2191, %v2192
        %v2194 = vrot.slane %v1520, 5
        %v2195 = vsel %vm1300, %v2192, %v2194
        %v2196 = vrot.slane %v1505, 5
        %v2197 = vrot.slane %v1424, 5
        %v2198 = vsel %vm1300, %v2196, %v2197
        %v2199 = vrot.slane %v1521, 5
        %v2200 = vsel %vm1300, %v2197, %v2199
        %v2201 = vrot.slane %v1506, 5
        %v2202 = vrot.slane %v1430, 5
        %v2203 = vsel %vm1300, %v2201, %v2202
        %v2204 = vrot.slane %v1522, 5
        %v2205 = vsel %vm1300, %v2202, %v2204
        %v2206 = vrot.slane %v1507, 5
        %v2207 = vrot.slane %v1436, 5
        %v2208 = vsel %vm1300, %v2206, %v2207
        %v2209 = vrot.slane %v1523, 5
        %v2210 = vsel %vm1300, %v2207, %v2209
        %v2211 = vrot.slane %v1508, 5
        %v2212 = vrot.slane %v1442, 5
        %v2213 = vsel %vm1300, %v2211, %v2212
        %v2214 = vrot.slane %v1524, 5
        %v2215 = vsel %vm1300, %v2212, %v2214
        %2216 = vrot.lane.b32.xlu0 %v2138, 64
        %v2217 = vpop.permute.xlu0 %2216
        %2218 = vrot.lane.b32.xlu0 %v2140, 64
        %v2219 = vpop.permute.xlu0 %2218
        %2220 = vrot.lane.b32.xlu0 %v2143, 64
        %v2221 = vpop.permute.xlu0 %2220
        %2222 = vrot.lane.b32.xlu0 %v2145, 64
        %v2223 = vpop.permute.xlu0 %2222
        %2224 = vrot.lane.b32.xlu0 %v2148, 64
        %v2225 = vpop.permute.xlu0 %2224
        %2226 = vrot.lane.b32.xlu0 %v2150, 64
        %v2227 = vpop.permute.xlu0 %2226
        %2228 = vrot.lane.b32.xlu0 %v2153, 64
        %v2229 = vpop.permute.xlu0 %2228
        %2230 = vrot.lane.b32.xlu0 %v2155, 64
        %v2231 = vpop.permute.xlu0 %2230
        %2232 = vrot.lane.b32.xlu0 %v2158, 64
        %v2233 = vpop.permute.xlu0 %2232
        %2234 = vrot.lane.b32.xlu0 %v2160, 64
        %v2235 = vpop.permute.xlu0 %2234
        %2236 = vrot.lane.b32.xlu0 %v2163, 64
        %v2237 = vpop.permute.xlu0 %2236
        %2238 = vrot.lane.b32.xlu0 %v2165, 64
        %v2239 = vpop.permute.xlu0 %2238
        %2240 = vrot.lane.b32.xlu0 %v2168, 64
        %v2241 = vpop.permute.xlu0 %2240
        %2242 = vrot.lane.b32.xlu0 %v2170, 64
        %v2243 = vpop.permute.xlu0 %2242
        %2244 = vrot.lane.b32.xlu0 %v2173, 64
        %v2245 = vpop.permute.xlu0 %2244
        %2246 = vrot.lane.b32.xlu0 %v2175, 64
        %v2247 = vpop.permute.xlu0 %2246
        %2248 = vrot.lane.b32.xlu0 %v2178, 64
        %v2249 = vpop.permute.xlu0 %2248
        %2250 = vrot.lane.b32.xlu0 %v2180, 64
        %v2251 = vpop.permute.xlu0 %2250
        %2252 = vrot.lane.b32.xlu0 %v2183, 64
        %v2253 = vpop.permute.xlu0 %2252
        %2254 = vrot.lane.b32.xlu0 %v2185, 64
        %v2255 = vpop.permute.xlu0 %2254
        %2256 = vrot.lane.b32.xlu0 %v2188, 64
        %v2257 = vpop.permute.xlu0 %2256
        %2258 = vrot.lane.b32.xlu0 %v2190, 64
        %v2259 = vpop.permute.xlu0 %2258
        %2260 = vrot.lane.b32.xlu0 %v2193, 64
        %v2261 = vpop.permute.xlu0 %2260
        %2262 = vrot.lane.b32.xlu0 %v2195, 64
        %v2263 = vpop.permute.xlu0 %2262
        %2264 = vrot.lane.b32.xlu0 %v2198, 64
        %v2265 = vpop.permute.xlu0 %2264
        %2266 = vrot.lane.b32.xlu0 %v2200, 64
        %v2267 = vpop.permute.xlu0 %2266
        %2268 = vrot.lane.b32.xlu0 %v2203, 64
        %v2269 = vpop.permute.xlu0 %2268
        %2270 = vrot.lane.b32.xlu0 %v2205, 64
        %v2271 = vpop.permute.xlu0 %2270
        %2272 = vrot.lane.b32.xlu0 %v2208, 64
        %v2273 = vpop.permute.xlu0 %2272
        %2274 = vrot.lane.b32.xlu0 %v2210, 64
        %v2275 = vpop.permute.xlu0 %2274
        %2276 = vrot.lane.b32.xlu0 %v2213, 64
        %v2277 = vpop.permute.xlu0 %2276
        %2278 = vrot.lane.b32.xlu0 %v2215, 64
        %v2279 = vpop.permute.xlu0 %2278
        %vm2312 = vcmask 1041408
        %v2313 = vrot.slane %v1493, 6
        %v2314 = vrot.slane %v1352, 6
        %v2315 = vsel %vm2312, %v2313, %v2314
        %v2316 = vrot.slane %v1509, 6
        %v2317 = vsel %vm2312, %v2314, %v2316
        %v2318 = vrot.slane %v1494, 6
        %v2319 = vrot.slane %v1358, 6
        %v2320 = vsel %vm2312, %v2318, %v2319
        %v2321 = vrot.slane %v1510, 6
        %v2322 = vsel %vm2312, %v2319, %v2321
        %v2323 = vrot.slane %v1495, 6
        %v2324 = vrot.slane %v1364, 6
        %v2325 = vsel %vm2312, %v2323, %v2324
        %v2326 = vrot.slane %v1511, 6
        %v2327 = vsel %vm2312, %v2324, %v2326
        %v2328 = vrot.slane %v1496, 6
        %v2329 = vrot.slane %v1370, 6
        %v2330 = vsel %vm2312, %v2328, %v2329
        %v2331 = vrot.slane %v1512, 6
        %v2332 = vsel %vm2312, %v2329, %v2331
        %v2333 = vrot.slane %v1497, 6
        %v2334 = vrot.slane %v1376, 6
        %v2335 = vsel %vm2312, %v2333, %v2334
        %v2336 = vrot.slane %v1513, 6
        %v2337 = vsel %vm2312, %v2334, %v2336
        %v2338 = vrot.slane %v1498, 6
        %v2339 = vrot.slane %v1382, 6
        %v2340 = vsel %vm2312, %v2338, %v2339
        %v2341 = vrot.slane %v1514, 6
        %v2342 = vsel %vm2312, %v2339, %v2341
        %v2343 = vrot.slane %v1499, 6
        %v2344 = vrot.slane %v1388, 6
        %v2345 = vsel %vm2312, %v2343, %v2344
        %v2346 = vrot.slane %v1515, 6
        %v2347 = vsel %vm2312, %v2344, %v2346
        %v2348 = vrot.slane %v1500, 6
        %v2349 = vrot.slane %v1394, 6
        %v2350 = vsel %vm2312, %v2348, %v2349
        %v2351 = vrot.slane %v1516, 6
        %v2352 = vsel %vm2312, %v2349, %v2351
        %v2353 = vrot.slane %v1501, 6
        %v2354 = vrot.slane %v1400, 6
        %v2355 = vsel %vm2312, %v2353, %v2354
        %v2356 = vrot.slane %v1517, 6
        %v2357 = vsel %vm2312, %v2354, %v2356
        %v2358 = vrot.slane %v1502, 6
        %v2359 = vrot.slane %v1406, 6
        %v2360 = vsel %vm2312, %v2358, %v2359
        %v2361 = vrot.slane %v1518, 6
        %v2362 = vsel %vm2312, %v2359, %v2361
        %v2363 = vrot.slane %v1503, 6
        %v2364 = vrot.slane %v1412, 6
        %v2365 = vsel %vm2312, %v2363, %v2364
        %v2366 = vrot.slane %v1519, 6
        %v2367 = vsel %vm2312, %v2364, %v2366
        %v2368 = vrot.slane %v1504, 6
        %v2369 = vrot.slane %v1418, 6
        %v2370 = vsel %vm2312, %v2368, %v2369
        %v2371 = vrot.slane %v1520, 6
        %v2372 = vsel %vm2312, %v2369, %v2371
        %v2373 = vrot.slane %v1505, 6
        %v2374 = vrot.slane %v1424, 6
        %v2375 = vsel %vm2312, %v2373, %v2374
        %v2376 = vrot.slane %v1521, 6
        %v2377 = vsel %vm2312, %v2374, %v2376
        %v2378 = vrot.slane %v1506, 6
        %v2379 = vrot.slane %v1430, 6
        %v2380 = vsel %vm2312, %v2378, %v2379
        %v2381 = vrot.slane %v1522, 6
        %v2382 = vsel %vm2312, %v2379, %v2381
        %v2383 = vrot.slane %v1507, 6
        %v2384 = vrot.slane %v1436, 6
        %v2385 = vsel %vm2312, %v2383, %v2384
        %v2386 = vrot.slane %v1523, 6
        %v2387 = vsel %vm2312, %v2384, %v2386
        %v2388 = vrot.slane %v1508, 6
        %v2389 = vrot.slane %v1442, 6
        %v2390 = vsel %vm2312, %v2388, %v2389
        %v2391 = vrot.slane %v1524, 6
        %v2392 = vsel %vm2312, %v2389, %v2391
        %vm2393 = vcmask 523264
        %v2394 = vsel %vm2393, %v1493, %v1638
        %v2395 = vsel %vm2393, %v1352, %v1640
        %v2396 = vsel %vm2393, %v1494, %v1642
        %v2397 = vsel %vm2393, %v1358, %v1644
        %v2398 = vsel %vm2393, %v1495, %v1646
        %v2399 = vsel %vm2393, %v1364, %v1648
        %v2400 = vsel %vm2393, %v1496, %v1650
        %v2401 = vsel %vm2393, %v1370, %v1652
        %v2402 = vsel %vm2393, %v1497, %v1654
        %v2403 = vsel %vm2393, %v1376, %v1656
        %v2404 = vsel %vm2393, %v1498, %v1658
        %v2405 = vsel %vm2393, %v1382, %v1660
        %v2406 = vsel %vm2393, %v1499, %v1662
        %v2407 = vsel %vm2393, %v1388, %v1664
        %v2408 = vsel %vm2393, %v1500, %v1666
        %v2409 = vsel %vm2393, %v1394, %v1668
        %v2410 = vsel %vm2393, %v1501, %v1670
        %v2411 = vsel %vm2393, %v1400, %v1672
        %v2412 = vsel %vm2393, %v1502, %v1674
        %v2413 = vsel %vm2393, %v1406, %v1676
        %v2414 = vsel %vm2393, %v1503, %v1678
        %v2415 = vsel %vm2393, %v1412, %v1680
        %v2416 = vsel %vm2393, %v1504, %v1682
        %v2417 = vsel %vm2393, %v1418, %v1684
        %v2418 = vsel %vm2393, %v1505, %v1686
        %v2419 = vsel %vm2393, %v1424, %v1688
        %v2420 = vsel %vm2393, %v1506, %v1690
        %v2421 = vsel %vm2393, %v1430, %v1692
        %v2422 = vsel %vm2393, %v1507, %v1694
        %v2423 = vsel %vm2393, %v1436, %v1696
        %v2424 = vsel %vm2393, %v1508, %v1698
        %v2425 = vsel %vm2393, %v1442, %v1700
        %v2426 = vsel %vm2393, %v1736, %v1928
        %v2427 = vsel %vm2393, %v1738, %v1930
        %v2428 = vsel %vm2393, %v1741, %v1932
        %v2429 = vsel %vm2393, %v1743, %v1934
        %v2430 = vsel %vm2393, %v1746, %v1936
        %v2431 = vsel %vm2393, %v1748, %v1938
        %v2432 = vsel %vm2393, %v1751, %v1940
        %v2433 = vsel %vm2393, %v1753, %v1942
        %v2434 = vsel %vm2393, %v1756, %v1944
        %v2435 = vsel %vm2393, %v1758, %v1946
        %v2436 = vsel %vm2393, %v1761, %v1948
        %v2437 = vsel %vm2393, %v1763, %v1950
        %v2438 = vsel %vm2393, %v1766, %v1952
        %v2439 = vsel %vm2393, %v1768, %v1954
        %v2440 = vsel %vm2393, %v1771, %v1956
        %v2441 = vsel %vm2393, %v1773, %v1958
        %v2442 = vsel %vm2393, %v1776, %v1960
        %v2443 = vsel %vm2393, %v1778, %v1962
        %v2444 = vsel %vm2393, %v1781, %v1964
        %v2445 = vsel %vm2393, %v1783, %v1966
        %v2446 = vsel %vm2393, %v1786, %v1968
        %v2447 = vsel %vm2393, %v1788, %v1970
        %v2448 = vsel %vm2393, %v1791, %v1972
        %v2449 = vsel %vm2393, %v1793, %v1974
        %v2450 = vsel %vm2393, %v1796, %v1976
        %v2451 = vsel %vm2393, %v1798, %v1978
        %v2452 = vsel %vm2393, %v1801, %v1980
        %v2453 = vsel %vm2393, %v1803, %v1982
        %v2454 = vsel %vm2393, %v1806, %v1984
        %v2455 = vsel %vm2393, %v1808, %v1986
        %v2456 = vsel %vm2393, %v1811, %v1988
        %v2457 = vsel %vm2393, %v1813, %v1990
        %v2458 = vsel %vm2393, %v2026, %v2217
        %v2459 = vsel %vm2393, %v2028, %v2219
        %v2460 = vsel %vm2393, %v2031, %v2221
        %v2461 = vsel %vm2393, %v2033, %v2223
        %v2462 = vsel %vm2393, %v2036, %v2225
        %v2463 = vsel %vm2393, %v2038, %v2227
        %v2464 = vsel %vm2393, %v2041, %v2229
        %v2465 = vsel %vm2393, %v2043, %v2231
        %v2466 = vsel %vm2393, %v2046, %v2233
        %v2467 = vsel %vm2393, %v2048, %v2235
        %v2468 = vsel %vm2393, %v2051, %v2237
        %v2469 = vsel %vm2393, %v2053, %v2239
        %v2470 = vsel %vm2393, %v2056, %v2241
        %v2471 = vsel %vm2393, %v2058, %v2243
        %v2472 = vsel %vm2393, %v2061, %v2245
        %v2473 = vsel %vm2393, %v2063, %v2247
        %v2474 = vsel %vm2393, %v2066, %v2249
        %v2475 = vsel %vm2393, %v2068, %v2251
        %v2476 = vsel %vm2393, %v2071, %v2253
        %v2477 = vsel %vm2393, %v2073, %v2255
        %v2478 = vsel %vm2393, %v2076, %v2257
        %v2479 = vsel %vm2393, %v2078, %v2259
        %v2480 = vsel %vm2393, %v2081, %v2261
        %v2481 = vsel %vm2393, %v2083, %v2263
        %v2482 = vsel %vm2393, %v2086, %v2265
        %v2483 = vsel %vm2393, %v2088, %v2267
        %v2484 = vsel %vm2393, %v2091, %v2269
        %v2485 = vsel %vm2393, %v2093, %v2271
        %v2486 = vsel %vm2393, %v2096, %v2273
        %v2487 = vsel %vm2393, %v2098, %v2275
        %v2488 = vsel %vm2393, %v2101, %v2277
        %v2489 = vsel %vm2393, %v2103, %v2279
        %v2490 = vld [vmem:[%s3] sm:$0xff]
        %v2491 = vld [vmem:[%s3 + $0x8] sm:$0xff]
        %v2492 = vld [vmem:[%s3 + $0x10] sm:$0xff]
        %v2493 = vld [vmem:[%s3 + $0x18] sm:$0xff]
        %v2494 = vld [vmem:[%s3 + $0x20] sm:$0xff]
        %v2495 = vld [vmem:[%s3 + $0x28] sm:$0xff]
        %v2496 = vld [vmem:[%s3 + $0x30] sm:$0xff]
        %v2497 = vld [vmem:[%s3 + $0x38] sm:$0xff]
        %v2498 = vld [vmem:[%s3 + $0x40] sm:$0xff]
        %v2499 = vld [vmem:[%s3 + $0x48] sm:$0xff]
        %v2500 = vld [vmem:[%s3 + $0x50] sm:$0xff]
        %v2501 = vld [vmem:[%s3 + $0x58] sm:$0xff]
        %v2502 = vld [vmem:[%s3 + $0x60] sm:$0xff]
        %v2503 = vld [vmem:[%s3 + $0x68] sm:$0xff]
        %v2504 = vld [vmem:[%s3 + $0x70] sm:$0xff]
        %v2505 = vld [vmem:[%s3 + $0x78] sm:$0xff]
        %v2506 = vld [vmem:[%s3 + $0x80] sm:$0xff]
        %v2507 = vld [vmem:[%s3 + $0x88] sm:$0xff]
        %v2508 = vld [vmem:[%s3 + $0x90] sm:$0xff]
        %v2509 = vld [vmem:[%s3 + $0x98] sm:$0xff]
        %v2510 = vld [vmem:[%s3 + $0xa0] sm:$0xff]
        %v2511 = vld [vmem:[%s3 + $0xa8] sm:$0xff]
        %v2512 = vld [vmem:[%s3 + $0xb0] sm:$0xff]
        %v2513 = vld [vmem:[%s3 + $0xb8] sm:$0xff]
        %v2514 = vld [vmem:[%s3 + $0xc0] sm:$0xff]
        %v2515 = vld [vmem:[%s3 + $0xc8] sm:$0xff]
        %v2516 = vld [vmem:[%s3 + $0xd0] sm:$0xff]
        %v2517 = vld [vmem:[%s3 + $0xd8] sm:$0xff]
        %v2518 = vld [vmem:[%s3 + $0xe0] sm:$0xff]
        %v2519 = vld [vmem:[%s3 + $0xe8] sm:$0xff]
        %v2520 = vld [vmem:[%s3 + $0xf0] sm:$0xff]
        %v2521 = vld [vmem:[%s3 + $0xf8] sm:$0xff]
        %v2522 = vld [vmem:[%s3 + $0x100] sm:$0xff]
        %v2523 = vld [vmem:[%s3 + $0x108] sm:$0xff]
        %v2524 = vld [vmem:[%s3 + $0x110] sm:$0xff]
        %v2525 = vld [vmem:[%s3 + $0x118] sm:$0xff]
        %v2526 = vld [vmem:[%s3 + $0x120] sm:$0xff]
        %v2527 = vld [vmem:[%s3 + $0x128] sm:$0xff]
        %v2528 = vld [vmem:[%s3 + $0x130] sm:$0xff]
        %v2529 = vld [vmem:[%s3 + $0x138] sm:$0xff]
        %v2530 = vld [vmem:[%s3 + $0x140] sm:$0xff]
        %v2531 = vld [vmem:[%s3 + $0x148] sm:$0xff]
        %v2532 = vld [vmem:[%s3 + $0x150] sm:$0xff]
        %v2533 = vld [vmem:[%s3 + $0x158] sm:$0xff]
        %v2534 = vld [vmem:[%s3 + $0x160] sm:$0xff]
        %v2535 = vld [vmem:[%s3 + $0x168] sm:$0xff]
        %v2536 = vld [vmem:[%s3 + $0x170] sm:$0xff]
        %v2537 = vld [vmem:[%s3 + $0x178] sm:$0xff]
        %v2538 = vld [vmem:[%s3 + $0x180] sm:$0xff]
        %v2539 = vld [vmem:[%s3 + $0x188] sm:$0xff]
        %v2540 = vld [vmem:[%s3 + $0x190] sm:$0xff]
        %v2541 = vld [vmem:[%s3 + $0x198] sm:$0xff]
        %v2542 = vld [vmem:[%s3 + $0x1a0] sm:$0xff]
        %v2543 = vld [vmem:[%s3 + $0x1a8] sm:$0xff]
        %v2544 = vld [vmem:[%s3 + $0x1b0] sm:$0xff]
        %v2545 = vld [vmem:[%s3 + $0x1b8] sm:$0xff]
        %v2547 = vlaneseq
        %v2548 = vshrl.u32 %v2547, 7
        %v2549 = vsub.s32 0, %v2548
        %v2550 = vrot.slane %v1267, %v2549
        %v2552 = vsel %vm2393, %v2315, 0
        %v2554 = vsel %vm2393, %v2317, 0
        %v2556 = vsel %vm2393, %v2320, 0
        %v2558 = vsel %vm2393, %v2322, 0
        %v2560 = vsel %vm2393, %v2325, 0
        %v2562 = vsel %vm2393, %v2327, 0
        %v2564 = vsel %vm2393, %v2330, 0
        %v2566 = vsel %vm2393, %v2332, 0
        %v2568 = vsel %vm2393, %v2335, 0
        %v2570 = vsel %vm2393, %v2337, 0
        %v2572 = vsel %vm2393, %v2340, 0
        %v2574 = vsel %vm2393, %v2342, 0
        %v2576 = vsel %vm2393, %v2345, 0
        %v2578 = vsel %vm2393, %v2347, 0
        %v2580 = vsel %vm2393, %v2350, 0
        %v2582 = vsel %vm2393, %v2352, 0
        %v2584 = vsel %vm2393, %v2355, 0
        %v2586 = vsel %vm2393, %v2357, 0
        %v2588 = vsel %vm2393, %v2360, 0
        %v2590 = vsel %vm2393, %v2362, 0
        %v2592 = vsel %vm2393, %v2365, 0
        %v2594 = vsel %vm2393, %v2367, 0
        %v2596 = vsel %vm2393, %v2370, 0
        %v2598 = vsel %vm2393, %v2372, 0
        %v2600 = vsel %vm2393, %v2375, 0
        %v2602 = vsel %vm2393, %v2377, 0
        %v2604 = vsel %vm2393, %v2380, 0
        %v2606 = vsel %vm2393, %v2382, 0
        %v2608 = vsel %vm2393, %v2385, 0
        %v2610 = vsel %vm2393, %v2387, 0
        %v2612 = vsel %vm2393, %v2390, 0
        %v2614 = vsel %vm2393, %v2392, 0
        %2616 = vmatprep.subr.mxu0 0.0
        %2617 = vmatpush1.msra.mxu0 %v2490
        %2618 = vmatprep.subr.mxu0 0.0
        %2619 = vmatpush1.msra.mxu0 %v2491
        %2620 = vmatprep.subr.mxu0 0.0
        %2621 = vmatpush1.msra.mxu0 %v2492
        %2622 = vmatprep.subr.mxu0 0.0
        %2623 = vmatpush1.msra.mxu0 %v2493
        %2624 = vmatprep.subr.mxu0 0.0
        %2625 = vmatpush1.msra.mxu0 %v2494
        %2626 = vmatprep.subr.mxu0 0.0
        %2627 = vmatpush1.msra.mxu0 %v2495
        %2628 = vmatprep.subr.mxu0 0.0
        %2629 = vmatpush1.msra.mxu0 %v2496
        %2630 = vmatprep.subr.mxu0 0.0
        %2631 = vmatpush1.msra.mxu0 %v2497
        %2632 = vmatprep.subr.mxu0 0.0
        %2633 = vmatpush1.msra.mxu0 %v2498
        %2634 = vmatprep.subr.mxu0 0.0
        %2635 = vmatpush1.msra.mxu0 %v2499
        %2636 = vmatprep.subr.mxu0 0.0
        %2637 = vmatpush1.msra.mxu0 %v2500
        %2638 = vmatprep.subr.mxu0 0.0
        %2639 = vmatpush1.msra.mxu0 %v2501
        %2640 = vmatprep.subr.mxu0 0.0
        %2641 = vmatpush1.msra.mxu0 %v2502
        %2642 = vmatprep.subr.mxu0 0.0
        %2643 = vmatpush1.msra.mxu0 %v2503
        %2644 = vmatprep.subr.mxu0 0.0
        %2645 = vmatpush1.msra.mxu0 %v2504
        %2646 = vmatprep.subr.mxu0 0.0
        %2647 = vmatpush1.msra.mxu0 %v2505
        %2648 = vmatprep.subr.mxu0 0.0
        %2649 = vmatpush1.msra.mxu0 %v2506
        %2650 = vmatprep.subr.mxu0 0.0
        %2651 = vmatpush1.msra.mxu0 %v2507
        %2652 = vmatprep.subr.mxu0 0.0
        %2653 = vmatpush1.msra.mxu0 %v2508
        %2654 = vmatprep.subr.mxu0 0.0
        %2655 = vmatpush1.msra.mxu0 %v2509
        %2656 = vmatprep.subr.mxu0 0.0
        %2657 = vmatpush1.msra.mxu0 %v2510
        %2658 = vmatprep.subr.mxu0 0.0
        %2659 = vmatpush1.msra.mxu0 %v2511
        %2660 = vmatprep.subr.mxu0 0.0
        %2661 = vmatpush1.msra.mxu0 %v2512
        %2662 = vmatprep.subr.mxu0 0.0
        %2663 = vmatpush1.msra.mxu0 %v2513
        %2664 = vmatprep.subr.mxu0 0.0
        %2665 = vmatpush1.msra.mxu0 %v2514
        %2666 = vmatprep.subr.mxu0 0.0
        %2667 = vmatpush1.msra.mxu0 %v2515
        %2668 = vmatprep.subr.mxu0 0.0
        %2669 = vmatpush1.msra.mxu0 %v2516
        %2670 = vmatprep.subr.mxu0 0.0
        %2671 = vmatpush1.msra.mxu0 %v2517
        %2672 = vmatprep.subr.mxu0 0.0
        %2673 = vmatpush1.msra.mxu0 %v2518
        %2674 = vmatprep.subr.mxu0 0.0
        %2675 = vmatpush1.msra.mxu0 %v2519
        %2676 = vmatprep.subr.mxu0 0.0
        %2677 = vmatpush1.msra.mxu0 %v2520
        %2678 = vmatprep.subr.mxu0 0.0
        %2679 = vmatpush1.msra.mxu0 %v2521
        %2680 = vmatprep.mubr.f32.mxu0 %v2426
        %2681 = vmatmul.mubr.f32.gmra.mrb[0].mxu0 %v2394
        %v2682 = vpop.f32.mrb[0].mxu0
        %v2683 = vadd.f32 %v2550, %v2682
        %v2684 = vpop.f32.mrb[0].mxu0
        %2685 = vmatprep.mubr.f32.mxu0 %v2427
        %2686 = vmatmul.mubr.f32.gmra.mrb[0].mxu0 %v2395
        %v2687 = vpop.f32.mrb[0].mxu0
        %v2688 = vadd.f32 %v2550, %v2687
        %v2689 = vpop.f32.mrb[0].mxu0
        %2690 = vmatprep.mubr.f32.mxu0 %v2428
        %2691 = vmatmul.mubr.f32.gmra.mrb[0].mxu0 %v2396
        %v2692 = vpop.f32.mrb[0].mxu0
        %v2693 = vadd.f32 %v2550, %v2692
        %v2694 = vpop.f32.mrb[0].mxu0
        %2695 = vmatprep.mubr.f32.mxu0 %v2429
        %2696 = vmatmul.mubr.f32.gmra.mrb[0].mxu0 %v2397
        %v2697 = vpop.f32.mrb[0].mxu0
        %v2698 = vadd.f32 %v2550, %v2697
        %v2699 = vpop.f32.mrb[0].mxu0
        %2700 = vmatprep.mubr.f32.mxu0 %v2430
        %2701 = vmatmul.mubr.f32.gmra.mrb[0].mxu0 %v2398
        %v2702 = vpop.f32.mrb[0].mxu0
        %v2703 = vadd.f32 %v2550, %v2702
        %v2704 = vpop.f32.mrb[0].mxu0
        %2705 = vmatprep.mubr.f32.mxu0 %v2431
        %2706 = vmatmul.mubr.f32.gmra.mrb[0].mxu0 %v2399
        %v2707 = vpop.f32.mrb[0].mxu0
        %v2708 = vadd.f32 %v2550, %v2707
        %v2709 = vpop.f32.mrb[0].mxu0
        %2710 = vmatprep.mubr.f32.mxu0 %v2432
        %2711 = vmatmul.mubr.f32.gmra.mrb[0].mxu0 %v2400
        %v2712 = vpop.f32.mrb[0].mxu0
        %v2713 = vadd.f32 %v2550, %v2712
        %v2714 = vpop.f32.mrb[0].mxu0
        %2715 = vmatprep.mubr.f32.mxu0 %v2433
        %2716 = vmatmul.mubr.f32.gmra.mrb[0].mxu0 %v2401
        %v2717 = vpop.f32.mrb[0].mxu0
        %v2718 = vadd.f32 %v2550, %v2717
        %v2719 = vpop.f32.mrb[0].mxu0
        %2720 = vmatprep.mubr.f32.mxu0 %v2434
        %2721 = vmatmul.mubr.f32.gmra.mrb[0].mxu0 %v2402
        %v2722 = vpop.f32.mrb[0].mxu0
        %v2723 = vadd.f32 %v2550, %v2722
        %v2724 = vpop.f32.mrb[0].mxu0
        %2725 = vmatprep.mubr.f32.mxu0 %v2435
        %2726 = vmatmul.mubr.f32.gmra.mrb[0].mxu0 %v2403
        %v2727 = vpop.f32.mrb[0].mxu0
        %v2728 = vadd.f32 %v2550, %v2727
        %v2729 = vpop.f32.mrb[0].mxu0
        %2730 = vmatprep.mubr.f32.mxu0 %v2436
        %2731 = vmatmul.mubr.f32.gmra.mrb[0].mxu0 %v2404
        %v2732 = vpop.f32.mrb[0].mxu0
        %v2733 = vadd.f32 %v2550, %v2732
        %v2734 = vpop.f32.mrb[0].mxu0
        %2735 = vmatprep.mubr.f32.mxu0 %v2437
        %2736 = vmatmul.mubr.f32.gmra.mrb[0].mxu0 %v2405
        %v2737 = vpop.f32.mrb[0].mxu0
        %v2738 = vadd.f32 %v2550, %v2737
        %v2739 = vpop.f32.mrb[0].mxu0
        %2740 = vmatprep.mubr.f32.mxu0 %v2438
        %2741 = vmatmul.mubr.f32.gmra.mrb[0].mxu0 %v2406
        %v2742 = vpop.f32.mrb[0].mxu0
        %v2743 = vadd.f32 %v2550, %v2742
        %v2744 = vpop.f32.mrb[0].mxu0
        %2745 = vmatprep.mubr.f32.mxu0 %v2439
        %2746 = vmatmul.mubr.f32.gmra.mrb[0].mxu0 %v2407
        %v2747 = vpop.f32.mrb[0].mxu0
        %v2748 = vadd.f32 %v2550, %v2747
        %v2749 = vpop.f32.mrb[0].mxu0
        %2750 = vmatprep.mubr.f32.mxu0 %v2440
        %2751 = vmatmul.mubr.f32.gmra.mrb[0].mxu0 %v2408
        %v2752 = vpop.f32.mrb[0].mxu0
        %v2753 = vadd.f32 %v2550, %v2752
        %v2754 = vpop.f32.mrb[0].mxu0
        %2755 = vmatprep.mubr.f32.mxu0 %v2441
        %2756 = vmatmul.mubr.f32.gmra.mrb[0].mxu0 %v2409
        %v2757 = vpop.f32.mrb[0].mxu0
        %v2758 = vadd.f32 %v2550, %v2757
        %v2759 = vpop.f32.mrb[0].mxu0
        %2760 = vmatprep.mubr.f32.mxu0 %v2442
        %2761 = vmatmul.mubr.f32.gmra.mrb[0].mxu0 %v2410
        %v2762 = vpop.f32.mrb[0].mxu0
        %v2763 = vadd.f32 %v2550, %v2762
        %v2764 = vpop.f32.mrb[0].mxu0
        %2765 = vmatprep.mubr.f32.mxu0 %v2443
        %2766 = vmatmul.mubr.f32.gmra.mrb[0].mxu0 %v2411
        %v2767 = vpop.f32.mrb[0].mxu0
        %v2768 = vadd.f32 %v2550, %v2767
        %v2769 = vpop.f32.mrb[0].mxu0
        %2770 = vmatprep.mubr.f32.mxu0 %v2444
        %2771 = vmatmul.mubr.f32.gmra.mrb[0].mxu0 %v2412
        %v2772 = vpop.f32.mrb[0].mxu0
        %v2773 = vadd.f32 %v2550, %v2772
        %v2774 = vpop.f32.mrb[0].mxu0
        %2775 = vmatprep.mubr.f32.mxu0 %v2445
        %2776 = vmatmul.mubr.f32.gmra.mrb[0].mxu0 %v2413
        %v2777 = vpop.f32.mrb[0].mxu0
        %v2778 = vadd.f32 %v2550, %v2777
        %v2779 = vpop.f32.mrb[0].mxu0
        %2780 = vmatprep.mubr.f32.mxu0 %v2446
        %2781 = vmatmul.mubr.f32.gmra.mrb[0].mxu0 %v2414
        %v2782 = vpop.f32.mrb[0].mxu0
        %v2783 = vadd.f32 %v2550, %v2782
        %v2784 = vpop.f32.mrb[0].mxu0
        %2785 = vmatprep.mubr.f32.mxu0 %v2447
        %2786 = vmatmul.mubr.f32.gmra.mrb[0].mxu0 %v2415
        %v2787 = vpop.f32.mrb[0].mxu0
        %v2788 = vadd.f32 %v2550, %v2787
        %v2789 = vpop.f32.mrb[0].mxu0
        %2790 = vmatprep.mubr.f32.mxu0 %v2448
        %2791 = vmatmul.mubr.f32.gmra.mrb[0].mxu0 %v2416
        %v2792 = vpop.f32.mrb[0].mxu0
        %v2793 = vadd.f32 %v2550, %v2792
        %v2794 = vpop.f32.mrb[0].mxu0
        %2795 = vmatprep.mubr.f32.mxu0 %v2449
        %2796 = vmatmul.mubr.f32.gmra.mrb[0].mxu0 %v2417
        %v2797 = vpop.f32.mrb[0].mxu0
        %v2798 = vadd.f32 %v2550, %v2797
        %v2799 = vpop.f32.mrb[0].mxu0
        %2800 = vmatprep.mubr.f32.mxu0 %v2450
        %2801 = vmatmul.mubr.f32.gmra.mrb[0].mxu0 %v2418
        %v2802 = vpop.f32.mrb[0].mxu0
        %v2803 = vadd.f32 %v2550, %v2802
        %v2804 = vpop.f32.mrb[0].mxu0
        %2805 = vmatprep.mubr.f32.mxu0 %v2451
        %2806 = vmatmul.mubr.f32.gmra.mrb[0].mxu0 %v2419
        %v2807 = vpop.f32.mrb[0].mxu0
        %v2808 = vadd.f32 %v2550, %v2807
        %v2809 = vpop.f32.mrb[0].mxu0
        %2810 = vmatprep.mubr.f32.mxu0 %v2452
        %2811 = vmatmul.mubr.f32.gmra.mrb[0].mxu0 %v2420
        %v2812 = vpop.f32.mrb[0].mxu0
        %v2813 = vadd.f32 %v2550, %v2812
        %v2814 = vpop.f32.mrb[0].mxu0
        %2815 = vmatprep.mubr.f32.mxu0 %v2453
        %2816 = vmatmul.mubr.f32.gmra.mrb[0].mxu0 %v2421
        %v2817 = vpop.f32.mrb[0].mxu0
        %v2818 = vadd.f32 %v2550, %v2817
        %v2819 = vpop.f32.mrb[0].mxu0
        %2820 = vmatprep.mubr.f32.mxu0 %v2454
        %2821 = vmatmul.mubr.f32.gmra.mrb[0].mxu0 %v2422
        %v2822 = vpop.f32.mrb[0].mxu0
        %v2823 = vadd.f32 %v2550, %v2822
        %v2824 = vpop.f32.mrb[0].mxu0
        %2825 = vmatprep.mubr.f32.mxu0 %v2455
        %2826 = vmatmul.mubr.f32.gmra.mrb[0].mxu0 %v2423
        %v2827 = vpop.f32.mrb[0].mxu0
        %v2828 = vadd.f32 %v2550, %v2827
        %v2829 = vpop.f32.mrb[0].mxu0
        %2830 = vmatprep.mubr.f32.mxu0 %v2456
        %2831 = vmatmul.mubr.f32.gmra.mrb[0].mxu0 %v2424
        %v2832 = vpop.f32.mrb[0].mxu0
        %v2833 = vadd.f32 %v2550, %v2832
        %v2834 = vpop.f32.mrb[0].mxu0
        %2835 = vmatprep.mubr.f32.mxu0 %v2457
        %2836 = vmatmul.mubr.f32.gmra.mrb[0].mxu0 %v2425
        %v2837 = vpop.f32.mrb[0].mxu0
        %v2838 = vadd.f32 %v2550, %v2837
        %v2839 = vpop.f32.mrb[0].mxu0
        %2840 = vdwg.mxu0
        %2841 = vmatprep.subr.mxu0 0.0
        %2842 = vmatpush1.msra.mxu0 %v2522
        %2843 = vmatprep.subr.mxu0 0.0
        %2844 = vmatpush1.msra.mxu0 %v2523
        %2845 = vmatprep.subr.mxu0 0.0
        %2846 = vmatpush1.msra.mxu0 %v2524
        %2847 = vmatprep.subr.mxu0 0.0
        %2848 = vmatpush1.msra.mxu0 %v2525
        %2849 = vmatprep.subr.mxu0 0.0
        %2850 = vmatpush1.msra.mxu0 %v2526
        %2851 = vmatprep.subr.mxu0 0.0
        %2852 = vmatpush1.msra.mxu0 %v2527
        %2853 = vmatprep.subr.mxu0 0.0
        %2854 = vmatpush1.msra.mxu0 %v2528
        %2855 = vmatprep.subr.mxu0 0.0
        %2856 = vmatpush1.msra.mxu0 %v2529
        %2857 = vmatprep.subr.mxu0 0.0
        %2858 = vmatpush1.msra.mxu0 %v2530
        %2859 = vmatprep.subr.mxu0 0.0
        %2860 = vmatpush1.msra.mxu0 %v2531
        %2861 = vmatprep.subr.mxu0 0.0
        %2862 = vmatpush1.msra.mxu0 %v2532
        %2863 = vmatprep.subr.mxu0 0.0
        %2864 = vmatpush1.msra.mxu0 %v2533
        %2865 = vmatprep.subr.mxu0 0.0
        %2866 = vmatpush1.msra.mxu0 %v2534
        %2867 = vmatprep.subr.mxu0 0.0
        %2868 = vmatpush1.msra.mxu0 %v2535
        %2869 = vmatprep.subr.mxu0 0.0
        %2870 = vmatpush1.msra.mxu0 %v2536
        %2871 = vmatprep.subr.mxu0 0.0
        %2872 = vmatpush1.msra.mxu0 %v2537
        %2873 = vmatprep.subr.mxu0 0.0
        %2874 = vmatpush1.msra.mxu0 %v2538
        %2875 = vmatprep.subr.mxu0 0.0
        %2876 = vmatpush1.msra.mxu0 %v2539
        %2877 = vmatprep.subr.mxu0 0.0
        %2878 = vmatpush1.msra.mxu0 %v2540
        %2879 = vmatprep.subr.mxu0 0.0
        %2880 = vmatpush1.msra.mxu0 %v2541
        %2881 = vmatprep.subr.mxu0 0.0
        %2882 = vmatpush1.msra.mxu0 %v2542
        %2883 = vmatprep.subr.mxu0 0.0
        %2884 = vmatpush1.msra.mxu0 %v2543
        %2885 = vmatprep.subr.mxu0 0.0
        %2886 = vmatpush1.msra.mxu0 %v2544
        %2887 = vmatprep.subr.mxu0 0.0
        %2888 = vmatpush1.msra.mxu0 %v2545
        %2889 = vmatprep.subr.mxu0 0.0
        %2890 = vmatpush1.msra.mxu0 0.0
        %2891 = vmatprep.subr.mxu0 0.0
        %2892 = vmatpush1.msra.mxu0 0.0
        %2893 = vmatprep.subr.mxu0 0.0
        %2894 = vmatpush1.msra.mxu0 0.0
        %2895 = vmatprep.subr.mxu0 0.0
        %2896 = vmatpush1.msra.mxu0 0.0
        %2897 = vmatprep.subr.mxu0 0.0
        %2898 = vmatpush1.msra.mxu0 0.0
        %2899 = vmatprep.subr.mxu0 0.0
        %2900 = vmatpush1.msra.mxu0 0.0
        %2901 = vmatprep.subr.mxu0 0.0
        %2902 = vmatpush1.msra.mxu0 0.0
        %2903 = vmatprep.subr.mxu0 0.0
        %2904 = vmatpush1.msra.mxu0 0.0
        %2905 = vmatprep.mubr.f32.mxu0 %v2552
        %2906 = vmatmul.mubr.f32.gmra.mrb[0].mxu0 %v2458
        %v2907 = vpop.f32.mrb[0].mxu0
        %v2908 = vadd.f32 %v2683, %v2907
        %v2909 = vpop.f32.mrb[0].mxu0
        %2910 = vmatprep.mubr.f32.mxu0 %v2554
        %2911 = vmatmul.mubr.f32.gmra.mrb[0].mxu0 %v2459
        %v2912 = vpop.f32.mrb[0].mxu0
        %v2913 = vadd.f32 %v2688, %v2912
        %v2914 = vpop.f32.mrb[0].mxu0
        %2915 = vmatprep.mubr.f32.mxu0 %v2556
        %2916 = vmatmul.mubr.f32.gmra.mrb[0].mxu0 %v2460
        %v2917 = vpop.f32.mrb[0].mxu0
        %v2918 = vadd.f32 %v2693, %v2917
        %v2919 = vpop.f32.mrb[0].mxu0
        %2920 = vmatprep.mubr.f32.mxu0 %v2558
        %2921 = vmatmul.mubr.f32.gmra.mrb[0].mxu0 %v2461
        %v2922 = vpop.f32.mrb[0].mxu0
        %v2923 = vadd.f32 %v2698, %v2922
        %v2924 = vpop.f32.mrb[0].mxu0
        %2925 = vmatprep.mubr.f32.mxu0 %v2560
        %2926 = vmatmul.mubr.f32.gmra.mrb[0].mxu0 %v2462
        %v2927 = vpop.f32.mrb[0].mxu0
        %v2928 = vadd.f32 %v2703, %v2927
        %v2929 = vpop.f32.mrb[0].mxu0
        %2930 = vmatprep.mubr.f32.mxu0 %v2562
        %2931 = vmatmul.mubr.f32.gmra.mrb[0].mxu0 %v2463
        %v2932 = vpop.f32.mrb[0].mxu0
        %v2933 = vadd.f32 %v2708, %v2932
        %v2934 = vpop.f32.mrb[0].mxu0
        %2935 = vmatprep.mubr.f32.mxu0 %v2564
        %2936 = vmatmul.mubr.f32.gmra.mrb[0].mxu0 %v2464
        %v2937 = vpop.f32.mrb[0].mxu0
        %v2938 = vadd.f32 %v2713, %v2937
        %v2939 = vpop.f32.mrb[0].mxu0
        %2940 = vmatprep.mubr.f32.mxu0 %v2566
        %2941 = vmatmul.mubr.f32.gmra.mrb[0].mxu0 %v2465
        %v2942 = vpop.f32.mrb[0].mxu0
        %v2943 = vadd.f32 %v2718, %v2942
        %v2944 = vpop.f32.mrb[0].mxu0
        %2945 = vmatprep.mubr.f32.mxu0 %v2568
        %2946 = vmatmul.mubr.f32.gmra.mrb[0].mxu0 %v2466
        %v2947 = vpop.f32.mrb[0].mxu0
        %v2948 = vadd.f32 %v2723, %v2947
        %v2949 = vpop.f32.mrb[0].mxu0
        %2950 = vmatprep.mubr.f32.mxu0 %v2570
        %2951 = vmatmul.mubr.f32.gmra.mrb[0].mxu0 %v2467
        %v2952 = vpop.f32.mrb[0].mxu0
        %v2953 = vadd.f32 %v2728, %v2952
        %v2954 = vpop.f32.mrb[0].mxu0
        %2955 = vmatprep.mubr.f32.mxu0 %v2572
        %2956 = vmatmul.mubr.f32.gmra.mrb[0].mxu0 %v2468
        %v2957 = vpop.f32.mrb[0].mxu0
        %v2958 = vadd.f32 %v2733, %v2957
        %v2959 = vpop.f32.mrb[0].mxu0
        %2960 = vmatprep.mubr.f32.mxu0 %v2574
        %2961 = vmatmul.mubr.f32.gmra.mrb[0].mxu0 %v2469
        %v2962 = vpop.f32.mrb[0].mxu0
        %v2963 = vadd.f32 %v2738, %v2962
        %v2964 = vpop.f32.mrb[0].mxu0
        %2965 = vmatprep.mubr.f32.mxu0 %v2576
        %2966 = vmatmul.mubr.f32.gmra.mrb[0].mxu0 %v2470
        %v2967 = vpop.f32.mrb[0].mxu0
        %v2968 = vadd.f32 %v2743, %v2967
        %v2969 = vpop.f32.mrb[0].mxu0
        %2970 = vmatprep.mubr.f32.mxu0 %v2578
        %2971 = vmatmul.mubr.f32.gmra.mrb[0].mxu0 %v2471
        %v2972 = vpop.f32.mrb[0].mxu0
        %v2973 = vadd.f32 %v2748, %v2972
        %v2974 = vpop.f32.mrb[0].mxu0
        %2975 = vmatprep.mubr.f32.mxu0 %v2580
        %2976 = vmatmul.mubr.f32.gmra.mrb[0].mxu0 %v2472
        %v2977 = vpop.f32.mrb[0].mxu0
        %v2978 = vadd.f32 %v2753, %v2977
        %v2979 = vpop.f32.mrb[0].mxu0
        %2980 = vmatprep.mubr.f32.mxu0 %v2582
        %2981 = vmatmul.mubr.f32.gmra.mrb[0].mxu0 %v2473
        %v2982 = vpop.f32.mrb[0].mxu0
        %v2983 = vadd.f32 %v2758, %v2982
        %v2984 = vpop.f32.mrb[0].mxu0
        %2985 = vmatprep.mubr.f32.mxu0 %v2584
        %2986 = vmatmul.mubr.f32.gmra.mrb[0].mxu0 %v2474
        %v2987 = vpop.f32.mrb[0].mxu0
        %v2988 = vadd.f32 %v2763, %v2987
        %v2989 = vpop.f32.mrb[0].mxu0
        %2990 = vmatprep.mubr.f32.mxu0 %v2586
        %2991 = vmatmul.mubr.f32.gmra.mrb[0].mxu0 %v2475
        %v2992 = vpop.f32.mrb[0].mxu0
        %v2993 = vadd.f32 %v2768, %v2992
        %v2994 = vpop.f32.mrb[0].mxu0
        %2995 = vmatprep.mubr.f32.mxu0 %v2588
        %2996 = vmatmul.mubr.f32.gmra.mrb[0].mxu0 %v2476
        %v2997 = vpop.f32.mrb[0].mxu0
        %v2998 = vadd.f32 %v2773, %v2997
        %v2999 = vpop.f32.mrb[0].mxu0
        %3000 = vmatprep.mubr.f32.mxu0 %v2590
        %3001 = vmatmul.mubr.f32.gmra.mrb[0].mxu0 %v2477
        %v3002 = vpop.f32.mrb[0].mxu0
        %v3003 = vadd.f32 %v2778, %v3002
        %v3004 = vpop.f32.mrb[0].mxu0
        %3005 = vmatprep.mubr.f32.mxu0 %v2592
        %3006 = vmatmul.mubr.f32.gmra.mrb[0].mxu0 %v2478
        %v3007 = vpop.f32.mrb[0].mxu0
        %v3008 = vadd.f32 %v2783, %v3007
        %v3009 = vpop.f32.mrb[0].mxu0
        %3010 = vmatprep.mubr.f32.mxu0 %v2594
        %3011 = vmatmul.mubr.f32.gmra.mrb[0].mxu0 %v2479
        %v3012 = vpop.f32.mrb[0].mxu0
        %v3013 = vadd.f32 %v2788, %v3012
        %v3014 = vpop.f32.mrb[0].mxu0
        %3015 = vmatprep.mubr.f32.mxu0 %v2596
        %3016 = vmatmul.mubr.f32.gmra.mrb[0].mxu0 %v2480
        %v3017 = vpop.f32.mrb[0].mxu0
        %v3018 = vadd.f32 %v2793, %v3017
        %v3019 = vpop.f32.mrb[0].mxu0
        %3020 = vmatprep.mubr.f32.mxu0 %v2598
        %3021 = vmatmul.mubr.f32.gmra.mrb[0].mxu0 %v2481
        %v3022 = vpop.f32.mrb[0].mxu0
        %v3023 = vadd.f32 %v2798, %v3022
        %v3024 = vpop.f32.mrb[0].mxu0
        %3025 = vmatprep.mubr.f32.mxu0 %v2600
        %3026 = vmatmul.mubr.f32.gmra.mrb[0].mxu0 %v2482
        %v3027 = vpop.f32.mrb[0].mxu0
        %v3028 = vadd.f32 %v2803, %v3027
        %v3029 = vpop.f32.mrb[0].mxu0
        %3030 = vmatprep.mubr.f32.mxu0 %v2602
        %3031 = vmatmul.mubr.f32.gmra.mrb[0].mxu0 %v2483
        %v3032 = vpop.f32.mrb[0].mxu0
        %v3033 = vadd.f32 %v2808, %v3032
        %v3034 = vpop.f32.mrb[0].mxu0
        %3035 = vmatprep.mubr.f32.mxu0 %v2604
        %3036 = vmatmul.mubr.f32.gmra.mrb[0].mxu0 %v2484
        %v3037 = vpop.f32.mrb[0].mxu0
        %v3038 = vadd.f32 %v2813, %v3037
        %v3039 = vpop.f32.mrb[0].mxu0
        %3040 = vmatprep.mubr.f32.mxu0 %v2606
        %3041 = vmatmul.mubr.f32.gmra.mrb[0].mxu0 %v2485
        %v3042 = vpop.f32.mrb[0].mxu0
        %v3043 = vadd.f32 %v2818, %v3042
        %v3044 = vpop.f32.mrb[0].mxu0
        %3045 = vmatprep.mubr.f32.mxu0 %v2608
        %3046 = vmatmul.mubr.f32.gmra.mrb[0].mxu0 %v2486
        %v3047 = vpop.f32.mrb[0].mxu0
        %v3048 = vadd.f32 %v2823, %v3047
        %v3049 = vpop.f32.mrb[0].mxu0
        %3050 = vmatprep.mubr.f32.mxu0 %v2610
        %3051 = vmatmul.mubr.f32.gmra.mrb[0].mxu0 %v2487
        %v3052 = vpop.f32.mrb[0].mxu0
        %v3053 = vadd.f32 %v2828, %v3052
        %v3054 = vpop.f32.mrb[0].mxu0
        %3055 = vmatprep.mubr.f32.mxu0 %v2612
        %3056 = vmatmul.mubr.f32.gmra.mrb[0].mxu0 %v2488
        %v3057 = vpop.f32.mrb[0].mxu0
        %v3058 = vadd.f32 %v2833, %v3057
        %v3059 = vpop.f32.mrb[0].mxu0
        %3060 = vmatprep.mubr.f32.mxu0 %v2614
        %3061 = vmatmul.mubr.f32.gmra.mrb[0].mxu0 %v2489
        %v3062 = vpop.f32.mrb[0].mxu0
        %v3063 = vadd.f32 %v2838, %v3062
        %v3064 = vpop.f32.mrb[0].mxu0
        %3065 = vdwg.mxu0
        %v3066 = vmax.f32 %v2908, 0.0
        %v3067 = vmax.f32 %v2913, 0.0
        %v3068 = vmax.f32 %v2918, 0.0
        %v3069 = vmax.f32 %v2923, 0.0
        %v3070 = vmax.f32 %v2928, 0.0
        %v3071 = vmax.f32 %v2933, 0.0
        %v3072 = vmax.f32 %v2938, 0.0
        %v3073 = vmax.f32 %v2943, 0.0
        %v3074 = vmax.f32 %v2948, 0.0
        %v3075 = vmax.f32 %v2953, 0.0
        %v3076 = vmax.f32 %v2958, 0.0
        %v3077 = vmax.f32 %v2963, 0.0
        %v3078 = vmax.f32 %v2968, 0.0
        %v3079 = vmax.f32 %v2973, 0.0
        %v3080 = vmax.f32 %v2978, 0.0
        %v3081 = vmax.f32 %v2983, 0.0
        %v3082 = vmax.f32 %v2988, 0.0
        %v3083 = vmax.f32 %v2993, 0.0
        %v3084 = vmax.f32 %v2998, 0.0
        %v3085 = vmax.f32 %v3003, 0.0
        %v3086 = vmax.f32 %v3008, 0.0
        %v3087 = vmax.f32 %v3013, 0.0
        %v3088 = vmax.f32 %v3018, 0.0
        %v3089 = vmax.f32 %v3023, 0.0
        %v3090 = vmax.f32 %v3028, 0.0
        %v3091 = vmax.f32 %v3033, 0.0
        %v3092 = vmax.f32 %v3038, 0.0
        %v3093 = vmax.f32 %v3043, 0.0
        %v3094 = vmax.f32 %v3048, 0.0
        %v3095 = vmax.f32 %v3053, 0.0
        %v3096 = vmax.f32 %v3058, 0.0
        %v3097 = vmax.f32 %v3063, 0.0
        %v3098 = vld [vmem:[%s11] sm:$0x3]
        %3128 = vrot.lane.b32.xlu0 0.0, 64
        %v3129 = vpop.permute.xlu0 %3128
        %3130 = vrot.lane.b32.xlu0 %v3066, 64
        %v3131 = vpop.permute.xlu0 %3130
        %3132 = vrot.lane.b32.xlu0 %v3067, 64
        %v3133 = vpop.permute.xlu0 %3132
        %3134 = vrot.lane.b32.xlu0 %v3068, 64
        %v3135 = vpop.permute.xlu0 %3134
        %3136 = vrot.lane.b32.xlu0 %v3069, 64
        %v3137 = vpop.permute.xlu0 %3136
        %3138 = vrot.lane.b32.xlu0 %v3070, 64
        %v3139 = vpop.permute.xlu0 %3138
        %3140 = vrot.lane.b32.xlu0 %v3071, 64
        %v3141 = vpop.permute.xlu0 %3140
        %3142 = vrot.lane.b32.xlu0 %v3072, 64
        %v3143 = vpop.permute.xlu0 %3142
        %3144 = vrot.lane.b32.xlu0 %v3073, 64
        %v3145 = vpop.permute.xlu0 %3144
        %3146 = vrot.lane.b32.xlu0 %v3074, 64
        %v3147 = vpop.permute.xlu0 %3146
        %3148 = vrot.lane.b32.xlu0 %v3075, 64
        %v3149 = vpop.permute.xlu0 %3148
        %3150 = vrot.lane.b32.xlu0 %v3076, 64
        %v3151 = vpop.permute.xlu0 %3150
        %3152 = vrot.lane.b32.xlu0 %v3077, 64
        %v3153 = vpop.permute.xlu0 %3152
        %3154 = vrot.lane.b32.xlu0 %v3078, 64
        %v3155 = vpop.permute.xlu0 %3154
        %3156 = vrot.lane.b32.xlu0 %v3079, 64
        %v3157 = vpop.permute.xlu0 %3156
        %3158 = vrot.lane.b32.xlu0 %v3080, 64
        %v3159 = vpop.permute.xlu0 %3158
        %3160 = vrot.lane.b32.xlu0 %v3081, 64
        %v3161 = vpop.permute.xlu0 %3160
        %3162 = vrot.lane.b32.xlu0 %v3082, 64
        %v3163 = vpop.permute.xlu0 %3162
        %3164 = vrot.lane.b32.xlu0 %v3083, 64
        %v3165 = vpop.permute.xlu0 %3164
        %3166 = vrot.lane.b32.xlu0 %v3084, 64
        %v3167 = vpop.permute.xlu0 %3166
        %3168 = vrot.lane.b32.xlu0 %v3085, 64
        %v3169 = vpop.permute.xlu0 %3168
        %3170 = vrot.lane.b32.xlu0 %v3086, 64
        %v3171 = vpop.permute.xlu0 %3170
        %3172 = vrot.lane.b32.xlu0 %v3087, 64
        %v3173 = vpop.permute.xlu0 %3172
        %3174 = vrot.lane.b32.xlu0 %v3088, 64
        %v3175 = vpop.permute.xlu0 %3174
        %3176 = vrot.lane.b32.xlu0 %v3089, 64
        %v3177 = vpop.permute.xlu0 %3176
        %3178 = vrot.lane.b32.xlu0 %v3090, 64
        %v3179 = vpop.permute.xlu0 %3178
        %3180 = vrot.lane.b32.xlu0 %v3091, 64
        %v3181 = vpop.permute.xlu0 %3180
        %3182 = vrot.lane.b32.xlu0 %v3092, 64
        %v3183 = vpop.permute.xlu0 %3182
        %3184 = vrot.lane.b32.xlu0 %v3093, 64
        %v3185 = vpop.permute.xlu0 %3184
        %3219 = vrot.lane.b32.xlu0 %v3094, 64
        %v3220 = vpop.permute.xlu0 %3219
        %3221 = vrot.lane.b32.xlu0 %v3095, 64
        %v3222 = vpop.permute.xlu0 %3221
        %3223 = vrot.lane.b32.xlu0 %v3096, 64
        %v3224 = vpop.permute.xlu0 %3223
        %3225 = vrot.lane.b32.xlu0 %v3097, 64
        %v3226 = vpop.permute.xlu0 %3225
        %v3231 = vsel %vm2393, 0.0, %v3129
        %v3232 = vsel %vm2393, 0.0, %v3131
        %v3233 = vsel %vm2393, 0.0, %v3133
        %v3234 = vsel %vm2393, %v3066, %v3135
        %v3235 = vsel %vm2393, %v3067, %v3137
        %v3236 = vsel %vm2393, %v3068, %v3139
        %v3237 = vsel %vm2393, %v3069, %v3141
        %v3238 = vsel %vm2393, %v3070, %v3143
        %v3239 = vsel %vm2393, %v3071, %v3145
        %v3240 = vsel %vm2393, %v3072, %v3147
        %v3241 = vsel %vm2393, %v3073, %v3149
        %v3242 = vsel %vm2393, %v3074, %v3151
        %v3243 = vsel %vm2393, %v3075, %v3153
        %v3244 = vsel %vm2393, %v3076, %v3155
        %v3245 = vsel %vm2393, %v3077, %v3157
        %v3246 = vsel %vm2393, %v3078, %v3159
        %v3247 = vsel %vm2393, %v3079, %v3161
        %v3248 = vsel %vm2393, %v3080, %v3163
        %v3249 = vsel %vm2393, %v3081, %v3165
        %v3250 = vsel %vm2393, %v3082, %v3167
        %v3251 = vsel %vm2393, %v3083, %v3169
        %v3252 = vsel %vm2393, %v3084, %v3171
        %v3253 = vsel %vm2393, %v3085, %v3173
        %v3254 = vsel %vm2393, %v3086, %v3175
        %v3255 = vsel %vm2393, %v3087, %v3177
        %v3256 = vsel %vm2393, %v3088, %v3179
        %v3257 = vsel %vm2393, %v3089, %v3181
        %v3258 = vsel %vm2393, %v3090, %v3183
        %v3259 = vsel %vm2393, %v3091, %v3185
        %v3260 = vsel %vm2393, %v3092, %v3220
        %v3261 = vsel %vm2393, %v3093, %v3222
        %v3262 = vsel %vm2393, %v3094, %v3224
        %v3263 = vsel %vm2393, %v3095, %v3226
        %v3264 = vsel %vm2393, %v3096, %v3129
        %v3265 = vsel %vm2393, %v3097, %v3129
        %v3266 = vld [vmem:[%s4] sm:$0xff]
        %v3267 = vld [vmem:[%s4 + $0x8] sm:$0xff]
        %v3268 = vld [vmem:[%s4 + $0x10] sm:$0xff]
        %v3269 = vld [vmem:[%s4 + $0x18] sm:$0xff]
        %v3270 = vld [vmem:[%s4 + $0x20] sm:$0xff]
        %v3271 = vld [vmem:[%s4 + $0x28] sm:$0xff]
        %v3272 = vld [vmem:[%s4 + $0x30] sm:$0xff]
        %v3273 = vld [vmem:[%s4 + $0x38] sm:$0xff]
        %v3274 = vld [vmem:[%s4 + $0x40] sm:$0xff]
        %v3275 = vld [vmem:[%s4 + $0x48] sm:$0xff]
        %v3276 = vld [vmem:[%s4 + $0x50] sm:$0xff]
        %v3277 = vld [vmem:[%s4 + $0x58] sm:$0xff]
        %v3278 = vld [vmem:[%s4 + $0x60] sm:$0xff]
        %v3279 = vld [vmem:[%s4 + $0x68] sm:$0xff]
        %v3280 = vld [vmem:[%s4 + $0x70] sm:$0xff]
        %v3281 = vld [vmem:[%s4 + $0x78] sm:$0xff]
        %v3282 = vld [vmem:[%s4 + $0x80] sm:$0xff]
        %v3283 = vld [vmem:[%s4 + $0x88] sm:$0xff]
        %v3284 = vld [vmem:[%s4 + $0x90] sm:$0xff]
        %v3285 = vld [vmem:[%s4 + $0x98] sm:$0xff]
        %v3286 = vld [vmem:[%s4 + $0xa0] sm:$0xff]
        %v3287 = vld [vmem:[%s4 + $0xa8] sm:$0xff]
        %v3288 = vld [vmem:[%s4 + $0xb0] sm:$0xff]
        %v3289 = vld [vmem:[%s4 + $0xb8] sm:$0xff]
        %v3290 = vld [vmem:[%s4 + $0xc0] sm:$0xff]
        %v3291 = vld [vmem:[%s4 + $0xc8] sm:$0xff]
        %v3292 = vld [vmem:[%s4 + $0xd0] sm:$0xff]
        %v3293 = vld [vmem:[%s4 + $0xd8] sm:$0xff]
        %v3294 = vld [vmem:[%s4 + $0xe0] sm:$0xff]
        %v3295 = vld [vmem:[%s4 + $0xe8] sm:$0xff]
        %v3296 = vld [vmem:[%s4 + $0xf0] sm:$0xff]
        %v3297 = vld [vmem:[%s4 + $0xf8] sm:$0xff]
        %v3298 = vld [vmem:[%s4 + $0x100] sm:$0xff]
        %v3299 = vld [vmem:[%s4 + $0x108] sm:$0xff]
        %v3300 = vld [vmem:[%s4 + $0x110] sm:$0xff]
        %v3301 = vld [vmem:[%s4 + $0x118] sm:$0xff]
        %v3302 = vld [vmem:[%s4 + $0x120] sm:$0xff]
        %v3303 = vld [vmem:[%s4 + $0x128] sm:$0xff]
        %v3304 = vld [vmem:[%s4 + $0x130] sm:$0xff]
        %v3305 = vld [vmem:[%s4 + $0x138] sm:$0xff]
        %v3306 = vld [vmem:[%s4 + $0x140] sm:$0xff]
        %v3307 = vld [vmem:[%s4 + $0x148] sm:$0xff]
        %v3308 = vld [vmem:[%s4 + $0x150] sm:$0xff]
        %v3309 = vld [vmem:[%s4 + $0x158] sm:$0xff]
        %v3310 = vld [vmem:[%s4 + $0x160] sm:$0xff]
        %v3311 = vld [vmem:[%s4 + $0x168] sm:$0xff]
        %v3312 = vld [vmem:[%s4 + $0x170] sm:$0xff]
        %v3313 = vld [vmem:[%s4 + $0x178] sm:$0xff]
        %v3314 = vld [vmem:[%s4 + $0x180] sm:$0xff]
        %v3315 = vld [vmem:[%s4 + $0x188] sm:$0xff]
        %v3316 = vld [vmem:[%s4 + $0x190] sm:$0xff]
        %v3317 = vld [vmem:[%s4 + $0x198] sm:$0xff]
        %v3318 = vld [vmem:[%s4 + $0x1a0] sm:$0xff]
        %v3319 = vld [vmem:[%s4 + $0x1a8] sm:$0xff]
        %v3320 = vld [vmem:[%s4 + $0x1b0] sm:$0xff]
        %v3321 = vld [vmem:[%s4 + $0x1b8] sm:$0xff]
        %v3322 = vld [vmem:[%s4 + $0x1c0] sm:$0xff]
        %v3323 = vld [vmem:[%s4 + $0x1c8] sm:$0xff]
        %v3324 = vld [vmem:[%s4 + $0x1d0] sm:$0xff]
        %v3325 = vld [vmem:[%s4 + $0x1d8] sm:$0xff]
        %v3326 = vld [vmem:[%s4 + $0x1e0] sm:$0xff]
        %v3327 = vld [vmem:[%s4 + $0x1e8] sm:$0xff]
        %v3328 = vld [vmem:[%s4 + $0x1f0] sm:$0xff]
        %v3329 = vld [vmem:[%s4 + $0x1f8] sm:$0xff]
        %v3330 = vld [vmem:[%s4 + $0x200] sm:$0xff]
        %v3331 = vld [vmem:[%s4 + $0x208] sm:$0xff]
        %v3332 = vld [vmem:[%s4 + $0x210] sm:$0xff]
        %v3333 = vld [vmem:[%s4 + $0x218] sm:$0xff]
        %v3334 = vld [vmem:[%s4 + $0x220] sm:$0xff]
        %v3335 = vld [vmem:[%s4 + $0x228] sm:$0xff]
        %v3336 = vld [vmem:[%s4 + $0x230] sm:$0xff]
        %v3337 = vld [vmem:[%s4 + $0x238] sm:$0xff]
        %v3338 = vld [vmem:[%s4 + $0x240] sm:$0xff]
        %v3339 = vld [vmem:[%s4 + $0x248] sm:$0xff]
        %v3340 = vld [vmem:[%s4 + $0x250] sm:$0xff]
        %v3341 = vld [vmem:[%s4 + $0x258] sm:$0xff]
        %v3342 = vld [vmem:[%s4 + $0x260] sm:$0xff]
        %v3343 = vld [vmem:[%s4 + $0x268] sm:$0xff]
        %v3344 = vld [vmem:[%s4 + $0x270] sm:$0xff]
        %v3345 = vld [vmem:[%s4 + $0x278] sm:$0xff]
        %v3346 = vld [vmem:[%s4 + $0x280] sm:$0xff]
        %v3347 = vld [vmem:[%s4 + $0x288] sm:$0xff]
        %v3348 = vld [vmem:[%s4 + $0x290] sm:$0xff]
        %v3349 = vld [vmem:[%s4 + $0x298] sm:$0xff]
        %v3350 = vld [vmem:[%s4 + $0x2a0] sm:$0xff]
        %v3351 = vld [vmem:[%s4 + $0x2a8] sm:$0xff]
        %v3352 = vld [vmem:[%s4 + $0x2b0] sm:$0xff]
        %v3353 = vld [vmem:[%s4 + $0x2b8] sm:$0xff]
        %v3354 = vld [vmem:[%s4 + $0x2c0] sm:$0xff]
        %v3355 = vld [vmem:[%s4 + $0x2c8] sm:$0xff]
        %v3356 = vld [vmem:[%s4 + $0x2d0] sm:$0xff]
        %v3357 = vld [vmem:[%s4 + $0x2d8] sm:$0xff]
        %v3358 = vld [vmem:[%s4 + $0x2e0] sm:$0xff]
        %v3359 = vld [vmem:[%s4 + $0x2e8] sm:$0xff]
        %v3360 = vld [vmem:[%s4 + $0x2f0] sm:$0xff]
        %v3361 = vld [vmem:[%s4 + $0x2f8] sm:$0xff]
        %v3362 = vld [vmem:[%s4 + $0x300] sm:$0xff]
        %v3363 = vld [vmem:[%s4 + $0x308] sm:$0xff]
        %v3364 = vld [vmem:[%s4 + $0x310] sm:$0xff]
        %v3365 = vld [vmem:[%s4 + $0x318] sm:$0xff]
        %v3366 = vld [vmem:[%s4 + $0x320] sm:$0xff]
        %v3367 = vld [vmem:[%s4 + $0x328] sm:$0xff]
        %v3368 = vld [vmem:[%s4 + $0x330] sm:$0xff]
        %v3369 = vld [vmem:[%s4 + $0x338] sm:$0xff]
        %v3370 = vld [vmem:[%s4 + $0x340] sm:$0xff]
        %v3371 = vld [vmem:[%s4 + $0x348] sm:$0xff]
        %v3372 = vld [vmem:[%s4 + $0x350] sm:$0xff]
        %v3373 = vld [vmem:[%s4 + $0x358] sm:$0xff]
        %v3374 = vld [vmem:[%s4 + $0x360] sm:$0xff]
        %v3375 = vld [vmem:[%s4 + $0x368] sm:$0xff]
        %v3376 = vld [vmem:[%s4 + $0x370] sm:$0xff]
        %v3377 = vld [vmem:[%s4 + $0x378] sm:$0xff]
        %v3379 = vlaneseq
        %v3380 = vshrl.u32 %v3379, 7
        %v3381 = vsub.s32 0, %v3380
        %v3382 = vrot.slane %v3098, %v3381
        %v3383 = vlaneseq
        %v3384 = vshrl.u32 %v3383, 7
        %v3385 = vsub.s32 1, %v3384
        %v3386 = vrot.slane %v3098, %v3385
        %v3389 = vsel %vm2393, %v3072, 0
        %v3391 = vsel %vm2393, %v3073, 0
        %v3393 = vsel %vm2393, %v3074, 0
        %v3395 = vsel %vm2393, %v3075, 0
        %v3397 = vsel %vm2393, %v3076, 0
        %v3399 = vsel %vm2393, %v3077, 0
        %v3401 = vsel %vm2393, %v3078, 0
        %v3403 = vsel %vm2393, %v3079, 0
        %v3405 = vsel %vm2393, %v3080, 0
        %v3407 = vsel %vm2393, %v3081, 0
        %v3409 = vsel %vm2393, %v3082, 0
        %v3411 = vsel %vm2393, %v3083, 0
        %v3413 = vsel %vm2393, %v3084, 0
        %v3415 = vsel %vm2393, %v3085, 0
        %v3417 = vsel %vm2393, %v3086, 0
        %v3419 = vsel %vm2393, %v3087, 0
        %v3421 = vsel %vm2393, %v3088, 0
        %v3423 = vsel %vm2393, %v3089, 0
        %v3425 = vsel %vm2393, %v3090, 0
        %v3427 = vsel %vm2393, %v3091, 0
        %v3429 = vsel %vm2393, %v3092, 0
        %v3431 = vsel %vm2393, %v3093, 0
        %v3433 = vsel %vm2393, %v3094, 0
        %v3435 = vsel %vm2393, %v3095, 0
        %v3437 = vsel %vm2393, %v3096, 0
        %v3439 = vsel %vm2393, %v3097, 0
        %v3441 = vsel %vm2393, 0.0, 0
        %3443 = vmatprep.subr.mxu0 %v3267
        %3444 = vmatpush1.msra.mxu0 %v3266
        %3445 = vmatprep.subr.mxu0 %v3269
        %3446 = vmatpush1.msra.mxu0 %v3268
        %3447 = vmatprep.subr.mxu0 %v3271
        %3448 = vmatpush1.msra.mxu0 %v3270
        %3449 = vmatprep.subr.mxu0 %v3273
        %3450 = vmatpush1.msra.mxu0 %v3272
        %3451 = vmatprep.subr.mxu0 %v3275
        %3452 = vmatpush1.msra.mxu0 %v3274
        %3453 = vmatprep.subr.mxu0 %v3277
        %3454 = vmatpush1.msra.mxu0 %v3276
        %3455 = vmatprep.subr.mxu0 %v3279
        %3456 = vmatpush1.msra.mxu0 %v3278
        %3457 = vmatprep.subr.mxu0 %v3281
        %3458 = vmatpush1.msra.mxu0 %v3280
        %3459 = vmatprep.subr.mxu0 %v3283
        %3460 = vmatpush1.msra.mxu0 %v3282
        %3461 = vmatprep.subr.mxu0 %v3285
        %3462 = vmatpush1.msra.mxu0 %v3284
        %3463 = vmatprep.subr.mxu0 %v3287
        %3464 = vmatpush1.msra.mxu0 %v3286
        %3465 = vmatprep.subr.mxu0 %v3289
        %3466 = vmatpush1.msra.mxu0 %v3288
        %3467 = vmatprep.subr.mxu0 %v3291
        %3468 = vmatpush1.msra.mxu0 %v3290
        %3469 = vmatprep.subr.mxu0 %v3293
        %3470 = vmatpush1.msra.mxu0 %v3292
        %3471 = vmatprep.subr.mxu0 %v3295
        %3472 = vmatpush1.msra.mxu0 %v3294
        %3473 = vmatprep.subr.mxu0 %v3297
        %3474 = vmatpush1.msra.mxu0 %v3296
        %3475 = vmatprep.subr.mxu0 %v3299
        %3476 = vmatpush1.msra.mxu0 %v3298
        %3477 = vmatprep.subr.mxu0 %v3301
        %3478 = vmatpush1.msra.mxu0 %v3300
        %3479 = vmatprep.subr.mxu0 %v3303
        %3480 = vmatpush1.msra.mxu0 %v3302
        %3481 = vmatprep.subr.mxu0 %v3305
        %3482 = vmatpush1.msra.mxu0 %v3304
        %3483 = vmatprep.subr.mxu0 %v3307
        %3484 = vmatpush1.msra.mxu0 %v3306
        %3485 = vmatprep.subr.mxu0 %v3309
        %3486 = vmatpush1.msra.mxu0 %v3308
        %3487 = vmatprep.subr.mxu0 %v3311
        %3488 = vmatpush1.msra.mxu0 %v3310
        %3489 = vmatprep.subr.mxu0 %v3313
        %3490 = vmatpush1.msra.mxu0 %v3312
        %3491 = vmatprep.subr.mxu0 %v3315
        %3492 = vmatpush1.msra.mxu0 %v3314
        %3493 = vmatprep.subr.mxu0 %v3317
        %3494 = vmatpush1.msra.mxu0 %v3316
        %3495 = vmatprep.subr.mxu0 %v3319
        %3496 = vmatpush1.msra.mxu0 %v3318
        %3497 = vmatprep.subr.mxu0 %v3321
        %3498 = vmatpush1.msra.mxu0 %v3320
        %3499 = vmatprep.subr.mxu0 %v3323
        %3500 = vmatpush1.msra.mxu0 %v3322
        %3501 = vmatprep.subr.mxu0 %v3325
        %3502 = vmatpush1.msra.mxu0 %v3324
        %3503 = vmatprep.subr.mxu0 %v3327
        %3504 = vmatpush1.msra.mxu0 %v3326
        %3505 = vmatprep.subr.mxu0 %v3329
        %3506 = vmatpush1.msra.mxu0 %v3328
        %3507 = vmatprep.mubr.f32.mxu0 %v3232
        %3508 = vmatmul.mubr.f32.gmra.mrb[0].mxu0 %v3231
        %v3509 = vpop.f32.mrb[0].mxu0
        %v3510 = vadd.f32 %v3382, %v3509
        %v3511 = vpop.f32.mrb[0].mxu0
        %v3512 = vadd.f32 %v3386, %v3511
        %3513 = vmatprep.mubr.f32.mxu0 %v3233
        %3514 = vmatmul.mubr.f32.gmra.mrb[0].mxu0 %v3231
        %v3515 = vpop.f32.mrb[0].mxu0
        %v3516 = vadd.f32 %v3382, %v3515
        %v3517 = vpop.f32.mrb[0].mxu0
        %v3518 = vadd.f32 %v3386, %v3517
        %3519 = vmatprep.mubr.f32.mxu0 %v3234
        %3520 = vmatmul.mubr.f32.gmra.mrb[0].mxu0 %v3231
        %v3521 = vpop.f32.mrb[0].mxu0
        %v3522 = vadd.f32 %v3382, %v3521
        %v3523 = vpop.f32.mrb[0].mxu0
        %v3524 = vadd.f32 %v3386, %v3523
        %3525 = vmatprep.mubr.f32.mxu0 %v3235
        %3526 = vmatmul.mubr.f32.gmra.mrb[0].mxu0 %v3231
        %v3527 = vpop.f32.mrb[0].mxu0
        %v3528 = vadd.f32 %v3382, %v3527
        %v3529 = vpop.f32.mrb[0].mxu0
        %v3530 = vadd.f32 %v3386, %v3529
        %3531 = vmatprep.mubr.f32.mxu0 %v3236
        %3532 = vmatmul.mubr.f32.gmra.mrb[0].mxu0 %v3232
        %v3533 = vpop.f32.mrb[0].mxu0
        %v3534 = vadd.f32 %v3382, %v3533
        %v3535 = vpop.f32.mrb[0].mxu0
        %v3536 = vadd.f32 %v3386, %v3535
        %3537 = vmatprep.mubr.f32.mxu0 %v3237
        %3538 = vmatmul.mubr.f32.gmra.mrb[0].mxu0 %v3233
        %v3539 = vpop.f32.mrb[0].mxu0
        %v3540 = vadd.f32 %v3382, %v3539
        %v3541 = vpop.f32.mrb[0].mxu0
        %v3542 = vadd.f32 %v3386, %v3541
        %3543 = vmatprep.mubr.f32.mxu0 %v3238
        %3544 = vmatmul.mubr.f32.gmra.mrb[0].mxu0 %v3234
        %v3545 = vpop.f32.mrb[0].mxu0
        %v3546 = vadd.f32 %v3382, %v3545
        %v3547 = vpop.f32.mrb[0].mxu0
        %v3548 = vadd.f32 %v3386, %v3547
        %3549 = vmatprep.mubr.f32.mxu0 %v3239
        %3550 = vmatmul.mubr.f32.gmra.mrb[0].mxu0 %v3235
        %v3551 = vpop.f32.mrb[0].mxu0
        %v3552 = vadd.f32 %v3382, %v3551
        %v3553 = vpop.f32.mrb[0].mxu0
        %v3554 = vadd.f32 %v3386, %v3553
        %3555 = vmatprep.mubr.f32.mxu0 %v3240
        %3556 = vmatmul.mubr.f32.gmra.mrb[0].mxu0 %v3236
        %v3557 = vpop.f32.mrb[0].mxu0
        %v3558 = vadd.f32 %v3382, %v3557
        %v3559 = vpop.f32.mrb[0].mxu0
        %v3560 = vadd.f32 %v3386, %v3559
        %3561 = vmatprep.mubr.f32.mxu0 %v3241
        %3562 = vmatmul.mubr.f32.gmra.mrb[0].mxu0 %v3237
        %v3563 = vpop.f32.mrb[0].mxu0
        %v3564 = vadd.f32 %v3382, %v3563
        %v3565 = vpop.f32.mrb[0].mxu0
        %v3566 = vadd.f32 %v3386, %v3565
        %3567 = vmatprep.mubr.f32.mxu0 %v3242
        %3568 = vmatmul.mubr.f32.gmra.mrb[0].mxu0 %v3238
        %v3569 = vpop.f32.mrb[0].mxu0
        %v3570 = vadd.f32 %v3382, %v3569
        %v3571 = vpop.f32.mrb[0].mxu0
        %v3572 = vadd.f32 %v3386, %v3571
        %3573 = vmatprep.mubr.f32.mxu0 %v3243
        %3574 = vmatmul.mubr.f32.gmra.mrb[0].mxu0 %v3239
        %v3575 = vpop.f32.mrb[0].mxu0
        %v3576 = vadd.f32 %v3382, %v3575
        %v3577 = vpop.f32.mrb[0].mxu0
        %v3578 = vadd.f32 %v3386, %v3577
        %3579 = vmatprep.mubr.f32.mxu0 %v3244
        %3580 = vmatmul.mubr.f32.gmra.mrb[0].mxu0 %v3240
        %v3581 = vpop.f32.mrb[0].mxu0
        %v3582 = vadd.f32 %v3382, %v3581
        %v3583 = vpop.f32.mrb[0].mxu0
        %v3584 = vadd.f32 %v3386, %v3583
        %3585 = vmatprep.mubr.f32.mxu0 %v3245
        %3586 = vmatmul.mubr.f32.gmra.mrb[0].mxu0 %v3241
        %v3587 = vpop.f32.mrb[0].mxu0
        %v3588 = vadd.f32 %v3382, %v3587
        %v3589 = vpop.f32.mrb[0].mxu0
        %v3590 = vadd.f32 %v3386, %v3589
        %3591 = vmatprep.mubr.f32.mxu0 %v3246
        %3592 = vmatmul.mubr.f32.gmra.mrb[0].mxu0 %v3242
        %v3593 = vpop.f32.mrb[0].mxu0
        %v3594 = vadd.f32 %v3382, %v3593
        %v3595 = vpop.f32.mrb[0].mxu0
        %v3596 = vadd.f32 %v3386, %v3595
        %3597 = vmatprep.mubr.f32.mxu0 %v3247
        %3598 = vmatmul.mubr.f32.gmra.mrb[0].mxu0 %v3243
        %v3599 = vpop.f32.mrb[0].mxu0
        %v3600 = vadd.f32 %v3382, %v3599
        %v3601 = vpop.f32.mrb[0].mxu0
        %v3602 = vadd.f32 %v3386, %v3601
        %3603 = vmatprep.mubr.f32.mxu0 %v3248
        %3604 = vmatmul.mubr.f32.gmra.mrb[0].mxu0 %v3244
        %v3605 = vpop.f32.mrb[0].mxu0
        %v3606 = vadd.f32 %v3382, %v3605
        %v3607 = vpop.f32.mrb[0].mxu0
        %v3608 = vadd.f32 %v3386, %v3607
        %3609 = vmatprep.mubr.f32.mxu0 %v3249
        %3610 = vmatmul.mubr.f32.gmra.mrb[0].mxu0 %v3245
        %v3611 = vpop.f32.mrb[0].mxu0
        %v3612 = vadd.f32 %v3382, %v3611
        %v3613 = vpop.f32.mrb[0].mxu0
        %v3614 = vadd.f32 %v3386, %v3613
        %3615 = vmatprep.mubr.f32.mxu0 %v3250
        %3616 = vmatmul.mubr.f32.gmra.mrb[0].mxu0 %v3246
        %v3617 = vpop.f32.mrb[0].mxu0
        %v3618 = vadd.f32 %v3382, %v3617
        %v3619 = vpop.f32.mrb[0].mxu0
        %v3620 = vadd.f32 %v3386, %v3619
        %3621 = vmatprep.mubr.f32.mxu0 %v3251
        %3622 = vmatmul.mubr.f32.gmra.mrb[0].mxu0 %v3247
        %v3623 = vpop.f32.mrb[0].mxu0
        %v3624 = vadd.f32 %v3382, %v3623
        %v3625 = vpop.f32.mrb[0].mxu0
        %v3626 = vadd.f32 %v3386, %v3625
        %3627 = vmatprep.mubr.f32.mxu0 %v3252
        %3628 = vmatmul.mubr.f32.gmra.mrb[0].mxu0 %v3248
        %v3629 = vpop.f32.mrb[0].mxu0
        %v3630 = vadd.f32 %v3382, %v3629
        %v3631 = vpop.f32.mrb[0].mxu0
        %v3632 = vadd.f32 %v3386, %v3631
        %3633 = vmatprep.mubr.f32.mxu0 %v3253
        %3634 = vmatmul.mubr.f32.gmra.mrb[0].mxu0 %v3249
        %v3635 = vpop.f32.mrb[0].mxu0
        %v3636 = vadd.f32 %v3382, %v3635
        %v3637 = vpop.f32.mrb[0].mxu0
        %v3638 = vadd.f32 %v3386, %v3637
        %3639 = vmatprep.mubr.f32.mxu0 %v3254
        %3640 = vmatmul.mubr.f32.gmra.mrb[0].mxu0 %v3250
        %v3641 = vpop.f32.mrb[0].mxu0
        %v3642 = vadd.f32 %v3382, %v3641
        %v3643 = vpop.f32.mrb[0].mxu0
        %v3644 = vadd.f32 %v3386, %v3643
        %3645 = vmatprep.mubr.f32.mxu0 %v3255
        %3646 = vmatmul.mubr.f32.gmra.mrb[0].mxu0 %v3251
        %v3647 = vpop.f32.mrb[0].mxu0
        %v3648 = vadd.f32 %v3382, %v3647
        %v3649 = vpop.f32.mrb[0].mxu0
        %v3650 = vadd.f32 %v3386, %v3649
        %3651 = vmatprep.mubr.f32.mxu0 %v3256
        %3652 = vmatmul.mubr.f32.gmra.mrb[0].mxu0 %v3252
        %v3653 = vpop.f32.mrb[0].mxu0
        %v3654 = vadd.f32 %v3382, %v3653
        %v3655 = vpop.f32.mrb[0].mxu0
        %v3656 = vadd.f32 %v3386, %v3655
        %3657 = vmatprep.mubr.f32.mxu0 %v3257
        %3658 = vmatmul.mubr.f32.gmra.mrb[0].mxu0 %v3253
        %v3659 = vpop.f32.mrb[0].mxu0
        %v3660 = vadd.f32 %v3382, %v3659
        %v3661 = vpop.f32.mrb[0].mxu0
        %v3662 = vadd.f32 %v3386, %v3661
        %3663 = vmatprep.mubr.f32.mxu0 %v3258
        %3664 = vmatmul.mubr.f32.gmra.mrb[0].mxu0 %v3254
        %v3665 = vpop.f32.mrb[0].mxu0
        %v3666 = vadd.f32 %v3382, %v3665
        %v3667 = vpop.f32.mrb[0].mxu0
        %v3668 = vadd.f32 %v3386, %v3667
        %3669 = vmatprep.mubr.f32.mxu0 %v3259
        %3670 = vmatmul.mubr.f32.gmra.mrb[0].mxu0 %v3255
        %v3671 = vpop.f32.mrb[0].mxu0
        %v3672 = vadd.f32 %v3382, %v3671
        %v3673 = vpop.f32.mrb[0].mxu0
        %v3674 = vadd.f32 %v3386, %v3673
        %3675 = vmatprep.mubr.f32.mxu0 %v3260
        %3676 = vmatmul.mubr.f32.gmra.mrb[0].mxu0 %v3256
        %v3677 = vpop.f32.mrb[0].mxu0
        %v3678 = vadd.f32 %v3382, %v3677
        %v3679 = vpop.f32.mrb[0].mxu0
        %v3680 = vadd.f32 %v3386, %v3679
        %3681 = vmatprep.mubr.f32.mxu0 %v3261
        %3682 = vmatmul.mubr.f32.gmra.mrb[0].mxu0 %v3257
        %v3683 = vpop.f32.mrb[0].mxu0
        %v3684 = vadd.f32 %v3382, %v3683
        %v3685 = vpop.f32.mrb[0].mxu0
        %v3686 = vadd.f32 %v3386, %v3685
        %3687 = vmatprep.mubr.f32.mxu0 %v3262
        %3688 = vmatmul.mubr.f32.gmra.mrb[0].mxu0 %v3258
        %v3689 = vpop.f32.mrb[0].mxu0
        %v3690 = vadd.f32 %v3382, %v3689
        %v3691 = vpop.f32.mrb[0].mxu0
        %v3692 = vadd.f32 %v3386, %v3691
        %3693 = vmatprep.mubr.f32.mxu0 %v3263
        %3694 = vmatmul.mubr.f32.gmra.mrb[0].mxu0 %v3259
        %v3695 = vpop.f32.mrb[0].mxu0
        %v3696 = vadd.f32 %v3382, %v3695
        %v3697 = vpop.f32.mrb[0].mxu0
        %v3698 = vadd.f32 %v3386, %v3697
        %3699 = vdwg.mxu0
        %3700 = vmatprep.subr.mxu0 %v3331
        %3701 = vmatpush1.msra.mxu0 %v3330
        %3702 = vmatprep.subr.mxu0 %v3333
        %3703 = vmatpush1.msra.mxu0 %v3332
        %3704 = vmatprep.subr.mxu0 %v3335
        %3705 = vmatpush1.msra.mxu0 %v3334
        %3706 = vmatprep.subr.mxu0 %v3337
        %3707 = vmatpush1.msra.mxu0 %v3336
        %3708 = vmatprep.subr.mxu0 %v3339
        %3709 = vmatpush1.msra.mxu0 %v3338
        %3710 = vmatprep.subr.mxu0 %v3341
        %3711 = vmatpush1.msra.mxu0 %v3340
        %3712 = vmatprep.subr.mxu0 %v3343
        %3713 = vmatpush1.msra.mxu0 %v3342
        %3714 = vmatprep.subr.mxu0 %v3345
        %3715 = vmatpush1.msra.mxu0 %v3344
        %3716 = vmatprep.subr.mxu0 %v3347
        %3717 = vmatpush1.msra.mxu0 %v3346
        %3718 = vmatprep.subr.mxu0 %v3349
        %3719 = vmatpush1.msra.mxu0 %v3348
        %3720 = vmatprep.subr.mxu0 %v3351
        %3721 = vmatpush1.msra.mxu0 %v3350
        %3722 = vmatprep.subr.mxu0 %v3353
        %3723 = vmatpush1.msra.mxu0 %v3352
        %3724 = vmatprep.subr.mxu0 %v3355
        %3725 = vmatpush1.msra.mxu0 %v3354
        %3726 = vmatprep.subr.mxu0 %v3357
        %3727 = vmatpush1.msra.mxu0 %v3356
        %3728 = vmatprep.subr.mxu0 %v3359
        %3729 = vmatpush1.msra.mxu0 %v3358
        %3730 = vmatprep.subr.mxu0 %v3361
        %3731 = vmatpush1.msra.mxu0 %v3360
        %3732 = vmatprep.subr.mxu0 %v3363
        %3733 = vmatpush1.msra.mxu0 %v3362
        %3734 = vmatprep.subr.mxu0 %v3365
        %3735 = vmatpush1.msra.mxu0 %v3364
        %3736 = vmatprep.subr.mxu0 %v3367
        %3737 = vmatpush1.msra.mxu0 %v3366
        %3738 = vmatprep.subr.mxu0 %v3369
        %3739 = vmatpush1.msra.mxu0 %v3368
        %3740 = vmatprep.subr.mxu0 %v3371
        %3741 = vmatpush1.msra.mxu0 %v3370
        %3742 = vmatprep.subr.mxu0 %v3373
        %3743 = vmatpush1.msra.mxu0 %v3372
        %3744 = vmatprep.subr.mxu0 %v3375
        %3745 = vmatpush1.msra.mxu0 %v3374
        %3746 = vmatprep.subr.mxu0 %v3377
        %3747 = vmatpush1.msra.mxu0 %v3376
        %3748 = vmatprep.subr.mxu0 0.0
        %3749 = vmatpush1.msra.mxu0 0.0
        %3750 = vmatprep.subr.mxu0 0.0
        %3751 = vmatpush1.msra.mxu0 0.0
        %3752 = vmatprep.subr.mxu0 0.0
        %3753 = vmatpush1.msra.mxu0 0.0
        %3754 = vmatprep.subr.mxu0 0.0
        %3755 = vmatpush1.msra.mxu0 0.0
        %3756 = vmatprep.subr.mxu0 0.0
        %3757 = vmatpush1.msra.mxu0 0.0
        %3758 = vmatprep.subr.mxu0 0.0
        %3759 = vmatpush1.msra.mxu0 0.0
        %3760 = vmatprep.subr.mxu0 0.0
        %3761 = vmatpush1.msra.mxu0 0.0
        %3762 = vmatprep.subr.mxu0 0.0
        %3763 = vmatpush1.msra.mxu0 0.0
        %3764 = vmatprep.mubr.f32.mxu0 %v3389
        %3765 = vmatmul.mubr.f32.gmra.mrb[0].mxu0 %v3236
        %v3766 = vpop.f32.mrb[0].mxu0
        %v3767 = vadd.f32 %v3510, %v3766
        %v3768 = vpop.f32.mrb[0].mxu0
        %v3769 = vadd.f32 %v3512, %v3768
        %3770 = vmatprep.mubr.f32.mxu0 %v3391
        %3771 = vmatmul.mubr.f32.gmra.mrb[0].mxu0 %v3237
        %v3772 = vpop.f32.mrb[0].mxu0
        %v3773 = vadd.f32 %v3516, %v3772
        %v3774 = vpop.f32.mrb[0].mxu0
        %v3775 = vadd.f32 %v3518, %v3774
        %3776 = vmatprep.mubr.f32.mxu0 %v3393
        %3777 = vmatmul.mubr.f32.gmra.mrb[0].mxu0 %v3238
        %v3778 = vpop.f32.mrb[0].mxu0
        %v3779 = vadd.f32 %v3522, %v3778
        %v3780 = vpop.f32.mrb[0].mxu0
        %v3781 = vadd.f32 %v3524, %v3780
        %3782 = vmatprep.mubr.f32.mxu0 %v3395
        %3783 = vmatmul.mubr.f32.gmra.mrb[0].mxu0 %v3239
        %v3784 = vpop.f32.mrb[0].mxu0
        %v3785 = vadd.f32 %v3528, %v3784
        %v3786 = vpop.f32.mrb[0].mxu0
        %v3787 = vadd.f32 %v3530, %v3786
        %3788 = vmatprep.mubr.f32.mxu0 %v3397
        %3789 = vmatmul.mubr.f32.gmra.mrb[0].mxu0 %v3240
        %v3790 = vpop.f32.mrb[0].mxu0
        %v3791 = vadd.f32 %v3534, %v3790
        %v3792 = vpop.f32.mrb[0].mxu0
        %v3793 = vadd.f32 %v3536, %v3792
        %3794 = vmatprep.mubr.f32.mxu0 %v3399
        %3795 = vmatmul.mubr.f32.gmra.mrb[0].mxu0 %v3241
        %v3796 = vpop.f32.mrb[0].mxu0
        %v3797 = vadd.f32 %v3540, %v3796
        %v3798 = vpop.f32.mrb[0].mxu0
        %v3799 = vadd.f32 %v3542, %v3798
        %3800 = vmatprep.mubr.f32.mxu0 %v3401
        %3801 = vmatmul.mubr.f32.gmra.mrb[0].mxu0 %v3242
        %v3802 = vpop.f32.mrb[0].mxu0
        %v3803 = vadd.f32 %v3546, %v3802
        %v3804 = vpop.f32.mrb[0].mxu0
        %v3805 = vadd.f32 %v3548, %v3804
        %3806 = vmatprep.mubr.f32.mxu0 %v3403
        %3807 = vmatmul.mubr.f32.gmra.mrb[0].mxu0 %v3243
        %v3808 = vpop.f32.mrb[0].mxu0
        %v3809 = vadd.f32 %v3552, %v3808
        %v3810 = vpop.f32.mrb[0].mxu0
        %v3811 = vadd.f32 %v3554, %v3810
        %3812 = vmatprep.mubr.f32.mxu0 %v3405
        %3813 = vmatmul.mubr.f32.gmra.mrb[0].mxu0 %v3244
        %v3814 = vpop.f32.mrb[0].mxu0
        %v3815 = vadd.f32 %v3558, %v3814
        %v3816 = vpop.f32.mrb[0].mxu0
        %v3817 = vadd.f32 %v3560, %v3816
        %3818 = vmatprep.mubr.f32.mxu0 %v3407
        %3819 = vmatmul.mubr.f32.gmra.mrb[0].mxu0 %v3245
        %v3820 = vpop.f32.mrb[0].mxu0
        %v3821 = vadd.f32 %v3564, %v3820
        %v3822 = vpop.f32.mrb[0].mxu0
        %v3823 = vadd.f32 %v3566, %v3822
        %3824 = vmatprep.mubr.f32.mxu0 %v3409
        %3825 = vmatmul.mubr.f32.gmra.mrb[0].mxu0 %v3246
        %v3826 = vpop.f32.mrb[0].mxu0
        %v3827 = vadd.f32 %v3570, %v3826
        %v3828 = vpop.f32.mrb[0].mxu0
        %v3829 = vadd.f32 %v3572, %v3828
        %3830 = vmatprep.mubr.f32.mxu0 %v3411
        %3831 = vmatmul.mubr.f32.gmra.mrb[0].mxu0 %v3247
        %v3832 = vpop.f32.mrb[0].mxu0
        %v3833 = vadd.f32 %v3576, %v3832
        %v3834 = vpop.f32.mrb[0].mxu0
        %v3835 = vadd.f32 %v3578, %v3834
        %3836 = vmatprep.mubr.f32.mxu0 %v3413
        %3837 = vmatmul.mubr.f32.gmra.mrb[0].mxu0 %v3248
        %v3838 = vpop.f32.mrb[0].mxu0
        %v3839 = vadd.f32 %v3582, %v3838
        %v3840 = vpop.f32.mrb[0].mxu0
        %v3841 = vadd.f32 %v3584, %v3840
        %3842 = vmatprep.mubr.f32.mxu0 %v3415
        %3843 = vmatmul.mubr.f32.gmra.mrb[0].mxu0 %v3249
        %v3844 = vpop.f32.mrb[0].mxu0
        %v3845 = vadd.f32 %v3588, %v3844
        %v3846 = vpop.f32.mrb[0].mxu0
        %v3847 = vadd.f32 %v3590, %v3846
        %3848 = vmatprep.mubr.f32.mxu0 %v3417
        %3849 = vmatmul.mubr.f32.gmra.mrb[0].mxu0 %v3250
        %v3850 = vpop.f32.mrb[0].mxu0
        %v3851 = vadd.f32 %v3594, %v3850
        %v3852 = vpop.f32.mrb[0].mxu0
        %v3853 = vadd.f32 %v3596, %v3852
        %3854 = vmatprep.mubr.f32.mxu0 %v3419
        %3855 = vmatmul.mubr.f32.gmra.mrb[0].mxu0 %v3251
        %v3856 = vpop.f32.mrb[0].mxu0
        %v3857 = vadd.f32 %v3600, %v3856
        %v3858 = vpop.f32.mrb[0].mxu0
        %v3859 = vadd.f32 %v3602, %v3858
        %3860 = vmatprep.mubr.f32.mxu0 %v3421
        %3861 = vmatmul.mubr.f32.gmra.mrb[0].mxu0 %v3252
        %v3862 = vpop.f32.mrb[0].mxu0
        %v3863 = vadd.f32 %v3606, %v3862
        %v3864 = vpop.f32.mrb[0].mxu0
        %v3865 = vadd.f32 %v3608, %v3864
        %3866 = vmatprep.mubr.f32.mxu0 %v3423
        %3867 = vmatmul.mubr.f32.gmra.mrb[0].mxu0 %v3253
        %v3868 = vpop.f32.mrb[0].mxu0
        %v3869 = vadd.f32 %v3612, %v3868
        %v3870 = vpop.f32.mrb[0].mxu0
        %v3871 = vadd.f32 %v3614, %v3870
        %3872 = vmatprep.mubr.f32.mxu0 %v3425
        %3873 = vmatmul.mubr.f32.gmra.mrb[0].mxu0 %v3254
        %v3874 = vpop.f32.mrb[0].mxu0
        %v3875 = vadd.f32 %v3618, %v3874
        %v3876 = vpop.f32.mrb[0].mxu0
        %v3877 = vadd.f32 %v3620, %v3876
        %3878 = vmatprep.mubr.f32.mxu0 %v3427
        %3879 = vmatmul.mubr.f32.gmra.mrb[0].mxu0 %v3255
        %v3880 = vpop.f32.mrb[0].mxu0
        %v3881 = vadd.f32 %v3624, %v3880
        %v3882 = vpop.f32.mrb[0].mxu0
        %v3883 = vadd.f32 %v3626, %v3882
        %3884 = vmatprep.mubr.f32.mxu0 %v3429
        %3885 = vmatmul.mubr.f32.gmra.mrb[0].mxu0 %v3256
        %v3886 = vpop.f32.mrb[0].mxu0
        %v3887 = vadd.f32 %v3630, %v3886
        %v3888 = vpop.f32.mrb[0].mxu0
        %v3889 = vadd.f32 %v3632, %v3888
        %3890 = vmatprep.mubr.f32.mxu0 %v3431
        %3891 = vmatmul.mubr.f32.gmra.mrb[0].mxu0 %v3257
        %v3892 = vpop.f32.mrb[0].mxu0
        %v3893 = vadd.f32 %v3636, %v3892
        %v3894 = vpop.f32.mrb[0].mxu0
        %v3895 = vadd.f32 %v3638, %v3894
        %3896 = vmatprep.mubr.f32.mxu0 %v3433
        %3897 = vmatmul.mubr.f32.gmra.mrb[0].mxu0 %v3258
        %v3898 = vpop.f32.mrb[0].mxu0
        %v3899 = vadd.f32 %v3642, %v3898
        %v3900 = vpop.f32.mrb[0].mxu0
        %v3901 = vadd.f32 %v3644, %v3900
        %3902 = vmatprep.mubr.f32.mxu0 %v3435
        %3903 = vmatmul.mubr.f32.gmra.mrb[0].mxu0 %v3259
        %v3904 = vpop.f32.mrb[0].mxu0
        %v3905 = vadd.f32 %v3648, %v3904
        %v3906 = vpop.f32.mrb[0].mxu0
        %v3907 = vadd.f32 %v3650, %v3906
        %3908 = vmatprep.mubr.f32.mxu0 %v3437
        %3909 = vmatmul.mubr.f32.gmra.mrb[0].mxu0 %v3260
        %v3910 = vpop.f32.mrb[0].mxu0
        %v3911 = vadd.f32 %v3654, %v3910
        %v3912 = vpop.f32.mrb[0].mxu0
        %v3913 = vadd.f32 %v3656, %v3912
        %3914 = vmatprep.mubr.f32.mxu0 %v3439
        %3915 = vmatmul.mubr.f32.gmra.mrb[0].mxu0 %v3261
        %v3916 = vpop.f32.mrb[0].mxu0
        %v3917 = vadd.f32 %v3660, %v3916
        %v3918 = vpop.f32.mrb[0].mxu0
        %v3919 = vadd.f32 %v3662, %v3918
        %3920 = vmatprep.mubr.f32.mxu0 %v3441
        %3921 = vmatmul.mubr.f32.gmra.mrb[0].mxu0 %v3262
        %v3922 = vpop.f32.mrb[0].mxu0
        %v3923 = vadd.f32 %v3666, %v3922
        %v3924 = vpop.f32.mrb[0].mxu0
        %v3925 = vadd.f32 %v3668, %v3924
        %3926 = vmatprep.mubr.f32.mxu0 %v3441
        %3927 = vmatmul.mubr.f32.gmra.mrb[0].mxu0 %v3263
        %v3928 = vpop.f32.mrb[0].mxu0
        %v3929 = vadd.f32 %v3672, %v3928
        %v3930 = vpop.f32.mrb[0].mxu0
        %v3931 = vadd.f32 %v3674, %v3930
        %3932 = vmatprep.mubr.f32.mxu0 %v3441
        %3933 = vmatmul.mubr.f32.gmra.mrb[0].mxu0 %v3264
        %v3934 = vpop.f32.mrb[0].mxu0
        %v3935 = vadd.f32 %v3678, %v3934
        %v3936 = vpop.f32.mrb[0].mxu0
        %v3937 = vadd.f32 %v3680, %v3936
        %3938 = vmatprep.mubr.f32.mxu0 %v3441
        %3939 = vmatmul.mubr.f32.gmra.mrb[0].mxu0 %v3265
        %v3940 = vpop.f32.mrb[0].mxu0
        %v3941 = vadd.f32 %v3684, %v3940
        %v3942 = vpop.f32.mrb[0].mxu0
        %v3943 = vadd.f32 %v3686, %v3942
        %3944 = vmatprep.mubr.f32.mxu0 %v3441
        %3945 = vmatmul.mubr.f32.gmra.mrb[0].mxu0 %v3231
        %v3946 = vpop.f32.mrb[0].mxu0
        %v3947 = vadd.f32 %v3690, %v3946
        %v3948 = vpop.f32.mrb[0].mxu0
        %v3949 = vadd.f32 %v3692, %v3948
        %3950 = vmatprep.mubr.f32.mxu0 %v3441
        %3951 = vmatmul.mubr.f32.gmra.mrb[0].mxu0 %v3231
        %v3952 = vpop.f32.mrb[0].mxu0
        %v3953 = vadd.f32 %v3696, %v3952
        %v3954 = vpop.f32.mrb[0].mxu0
        %v3955 = vadd.f32 %v3698, %v3954
        %3956 = vdwg.mxu0
        %v3957 = vmax.f32 %v3767, 0.0
        %v3958 = vmax.f32 %v3769, 0.0
        %v3959 = vmax.f32 %v3773, 0.0
        %v3960 = vmax.f32 %v3775, 0.0
        %v3961 = vmax.f32 %v3779, 0.0
        %v3962 = vmax.f32 %v3781, 0.0
        %v3963 = vmax.f32 %v3785, 0.0
        %v3964 = vmax.f32 %v3787, 0.0
        %v3965 = vmax.f32 %v3791, 0.0
        %v3966 = vmax.f32 %v3793, 0.0
        %v3967 = vmax.f32 %v3797, 0.0
        %v3968 = vmax.f32 %v3799, 0.0
        %v3969 = vmax.f32 %v3803, 0.0
        %v3970 = vmax.f32 %v3805, 0.0
        %v3971 = vmax.f32 %v3809, 0.0
        %v3972 = vmax.f32 %v3811, 0.0
        %v3973 = vmax.f32 %v3815, 0.0
        %v3974 = vmax.f32 %v3817, 0.0
        %v3975 = vmax.f32 %v3821, 0.0
        %v3976 = vmax.f32 %v3823, 0.0
        %v3977 = vmax.f32 %v3827, 0.0
        %v3978 = vmax.f32 %v3829, 0.0
        %v3979 = vmax.f32 %v3833, 0.0
        %v3980 = vmax.f32 %v3835, 0.0
        %v3981 = vmax.f32 %v3839, 0.0
        %v3982 = vmax.f32 %v3841, 0.0
        %v3983 = vmax.f32 %v3845, 0.0
        %v3984 = vmax.f32 %v3847, 0.0
        %v3985 = vmax.f32 %v3851, 0.0
        %v3986 = vmax.f32 %v3853, 0.0
        %v3987 = vmax.f32 %v3857, 0.0
        %v3988 = vmax.f32 %v3859, 0.0
        %v3989 = vmax.f32 %v3863, 0.0
        %v3990 = vmax.f32 %v3865, 0.0
        %v3991 = vmax.f32 %v3869, 0.0
        %v3992 = vmax.f32 %v3871, 0.0
        %v3993 = vmax.f32 %v3875, 0.0
        %v3994 = vmax.f32 %v3877, 0.0
        %v3995 = vmax.f32 %v3881, 0.0
        %v3996 = vmax.f32 %v3883, 0.0
        %v3997 = vmax.f32 %v3887, 0.0
        %v3998 = vmax.f32 %v3889, 0.0
        %v3999 = vmax.f32 %v3893, 0.0
        %v4000 = vmax.f32 %v3895, 0.0
        %v4001 = vmax.f32 %v3899, 0.0
        %v4002 = vmax.f32 %v3901, 0.0
        %v4003 = vmax.f32 %v3905, 0.0
        %v4004 = vmax.f32 %v3907, 0.0
        %v4005 = vmax.f32 %v3911, 0.0
        %v4006 = vmax.f32 %v3913, 0.0
        %v4007 = vmax.f32 %v3917, 0.0
        %v4008 = vmax.f32 %v3919, 0.0
        %v4009 = vmax.f32 %v3923, 0.0
        %v4010 = vmax.f32 %v3925, 0.0
        %v4011 = vmax.f32 %v3929, 0.0
        %v4012 = vmax.f32 %v3931, 0.0
        %v4013 = vmax.f32 %v3935, 0.0
        %v4014 = vmax.f32 %v3937, 0.0
        %v4015 = vmax.f32 %v3941, 0.0
        %v4016 = vmax.f32 %v3943, 0.0
        %v4017 = vmax.f32 %v3947, 0.0
        %v4018 = vmax.f32 %v3949, 0.0
        %v4019 = vmax.f32 %v3953, 0.0
        %v4020 = vmax.f32 %v3955, 0.0
        %s4021 = scalar_lea.vmem %s10, 1
        %v4022 = vld [vmem:[%s4021] sm:$0x1]
        %4051 = vrot.lane.b32.xlu0 %v1173, 64
        %v4052 = vpop.permute.xlu0 %4051
        %4053 = vrot.lane.b32.xlu0 %v1176, 64
        %v4054 = vpop.permute.xlu0 %4053
        %4055 = vrot.lane.b32.xlu0 %v1179, 64
        %v4056 = vpop.permute.xlu0 %4055
        %4057 = vrot.lane.b32.xlu0 %v1182, 64
        %v4058 = vpop.permute.xlu0 %4057
        %4059 = vrot.lane.b32.xlu0 %v1185, 64
        %v4060 = vpop.permute.xlu0 %4059
        %4061 = vrot.lane.b32.xlu0 %v1188, 64
        %v4062 = vpop.permute.xlu0 %4061
        %4063 = vrot.lane.b32.xlu0 %v1191, 64
        %v4064 = vpop.permute.xlu0 %4063
        %4065 = vrot.lane.b32.xlu0 %v1194, 64
        %v4066 = vpop.permute.xlu0 %4065
        %4067 = vrot.lane.b32.xlu0 %v1197, 64
        %v4068 = vpop.permute.xlu0 %4067
        %4069 = vrot.lane.b32.xlu0 %v1200, 64
        %v4070 = vpop.permute.xlu0 %4069
        %4071 = vrot.lane.b32.xlu0 %v1203, 64
        %v4072 = vpop.permute.xlu0 %4071
        %4073 = vrot.lane.b32.xlu0 %v1206, 64
        %v4074 = vpop.permute.xlu0 %4073
        %4075 = vrot.lane.b32.xlu0 %v1209, 64
        %v4076 = vpop.permute.xlu0 %4075
        %4077 = vrot.lane.b32.xlu0 %v1212, 64
        %v4078 = vpop.permute.xlu0 %4077
        %4079 = vrot.lane.b32.xlu0 %v1215, 64
        %v4080 = vpop.permute.xlu0 %4079
        %4081 = vrot.lane.b32.xlu0 %v1218, 64
        %v4082 = vpop.permute.xlu0 %4081
        %4083 = vrot.lane.b32.xlu0 %v1221, 64
        %v4084 = vpop.permute.xlu0 %4083
        %4085 = vrot.lane.b32.xlu0 %v1224, 64
        %v4086 = vpop.permute.xlu0 %4085
        %4087 = vrot.lane.b32.xlu0 %v1227, 64
        %v4088 = vpop.permute.xlu0 %4087
        %4089 = vrot.lane.b32.xlu0 %v1230, 64
        %v4090 = vpop.permute.xlu0 %4089
        %4091 = vrot.lane.b32.xlu0 %v1233, 64
        %v4092 = vpop.permute.xlu0 %4091
        %4093 = vrot.lane.b32.xlu0 %v1236, 64
        %v4094 = vpop.permute.xlu0 %4093
        %4095 = vrot.lane.b32.xlu0 %v1239, 64
        %v4096 = vpop.permute.xlu0 %4095
        %4097 = vrot.lane.b32.xlu0 %v1242, 64
        %v4098 = vpop.permute.xlu0 %4097
        %4099 = vrot.lane.b32.xlu0 %v1245, 64
        %v4100 = vpop.permute.xlu0 %4099
        %4101 = vrot.lane.b32.xlu0 %v1248, 64
        %v4102 = vpop.permute.xlu0 %4101
        %4103 = vrot.lane.b32.xlu0 %v1251, 64
        %v4104 = vpop.permute.xlu0 %4103
        %4105 = vrot.lane.b32.xlu0 %v1254, 64
        %v4106 = vpop.permute.xlu0 %4105
        %4139 = vrot.lane.b32.xlu0 %v1257, 64
        %v4140 = vpop.permute.xlu0 %4139
        %4141 = vrot.lane.b32.xlu0 %v1260, 64
        %v4142 = vpop.permute.xlu0 %4141
        %4143 = vrot.lane.b32.xlu0 %v1263, 64
        %v4144 = vpop.permute.xlu0 %4143
        %4145 = vrot.lane.b32.xlu0 %v1266, 64
        %v4146 = vpop.permute.xlu0 %4145
        %v4151 = vsel %vm2393, 0.0, %v4052
        %v4152 = vsel %vm2393, 0.0, %v4054
        %v4153 = vsel %vm2393, %v1173, %v4056
        %v4154 = vsel %vm2393, %v1176, %v4058
        %v4155 = vsel %vm2393, %v1179, %v4060
        %v4156 = vsel %vm2393, %v1182, %v4062
        %v4157 = vsel %vm2393, %v1185, %v4064
        %v4158 = vsel %vm2393, %v1188, %v4066
        %v4159 = vsel %vm2393, %v1191, %v4068
        %v4160 = vsel %vm2393, %v1194, %v4070
        %v4161 = vsel %vm2393, %v1197, %v4072
        %v4162 = vsel %vm2393, %v1200, %v4074
        %v4163 = vsel %vm2393, %v1203, %v4076
        %v4164 = vsel %vm2393, %v1206, %v4078
        %v4165 = vsel %vm2393, %v1209, %v4080
        %v4166 = vsel %vm2393, %v1212, %v4082
        %v4167 = vsel %vm2393, %v1215, %v4084
        %v4168 = vsel %vm2393, %v1218, %v4086
        %v4169 = vsel %vm2393, %v1221, %v4088
        %v4170 = vsel %vm2393, %v1224, %v4090
        %v4171 = vsel %vm2393, %v1227, %v4092
        %v4172 = vsel %vm2393, %v1230, %v4094
        %v4173 = vsel %vm2393, %v1233, %v4096
        %v4174 = vsel %vm2393, %v1236, %v4098
        %v4175 = vsel %vm2393, %v1239, %v4100
        %v4176 = vsel %vm2393, %v1242, %v4102
        %v4177 = vsel %vm2393, %v1245, %v4104
        %v4178 = vsel %vm2393, %v1248, %v4106
        %v4179 = vsel %vm2393, %v1251, %v4140
        %v4180 = vsel %vm2393, %v1254, %v4142
        %v4181 = vsel %vm2393, %v1257, %v4144
        %v4182 = vsel %vm2393, %v1260, %v4146
        %v4183 = vsel %vm2393, %v1263, %v3129
        %v4184 = vsel %vm2393, %v1266, %v3129
        %v4185 = vld [vmem:[%s5] sm:$0xff]
        %v4186 = vld [vmem:[%s5 + $0x8] sm:$0xff]
        %v4187 = vld [vmem:[%s5 + $0x10] sm:$0xff]
        %v4188 = vld [vmem:[%s5 + $0x18] sm:$0xff]
        %v4189 = vld [vmem:[%s5 + $0x20] sm:$0xff]
        %v4190 = vld [vmem:[%s5 + $0x28] sm:$0xff]
        %v4191 = vld [vmem:[%s5 + $0x30] sm:$0xff]
        %v4192 = vld [vmem:[%s5 + $0x38] sm:$0xff]
        %v4193 = vld [vmem:[%s5 + $0x40] sm:$0xff]
        %v4194 = vld [vmem:[%s5 + $0x48] sm:$0xff]
        %v4195 = vld [vmem:[%s5 + $0x50] sm:$0xff]
        %v4196 = vld [vmem:[%s5 + $0x58] sm:$0xff]
        %v4197 = vld [vmem:[%s5 + $0x60] sm:$0xff]
        %v4198 = vld [vmem:[%s5 + $0x68] sm:$0xff]
        %v4199 = vld [vmem:[%s5 + $0x70] sm:$0xff]
        %v4200 = vld [vmem:[%s5 + $0x78] sm:$0xff]
        %v4201 = vld [vmem:[%s5 + $0x80] sm:$0xff]
        %v4202 = vld [vmem:[%s5 + $0x88] sm:$0xff]
        %v4203 = vld [vmem:[%s5 + $0x90] sm:$0xff]
        %v4204 = vld [vmem:[%s5 + $0x98] sm:$0xff]
        %v4205 = vld [vmem:[%s5 + $0xa0] sm:$0xff]
        %v4206 = vld [vmem:[%s5 + $0xa8] sm:$0xff]
        %v4207 = vld [vmem:[%s5 + $0xb0] sm:$0xff]
        %v4208 = vld [vmem:[%s5 + $0xb8] sm:$0xff]
        %v4209 = vld [vmem:[%s5 + $0xc0] sm:$0xff]
        %v4210 = vld [vmem:[%s5 + $0xc8] sm:$0xff]
        %v4211 = vld [vmem:[%s5 + $0xd0] sm:$0xff]
        %v4212 = vld [vmem:[%s5 + $0xd8] sm:$0xff]
        %v4213 = vld [vmem:[%s5 + $0xe0] sm:$0xff]
        %v4214 = vld [vmem:[%s5 + $0xe8] sm:$0xff]
        %v4215 = vld [vmem:[%s5 + $0xf0] sm:$0xff]
        %v4216 = vld [vmem:[%s5 + $0xf8] sm:$0xff]
        %v4217 = vld [vmem:[%s5 + $0x100] sm:$0xff]
        %v4218 = vld [vmem:[%s5 + $0x108] sm:$0xff]
        %v4219 = vld [vmem:[%s5 + $0x110] sm:$0xff]
        %v4220 = vld [vmem:[%s5 + $0x118] sm:$0xff]
        %v4221 = vld [vmem:[%s5 + $0x120] sm:$0xff]
        %v4222 = vld [vmem:[%s5 + $0x128] sm:$0xff]
        %v4223 = vld [vmem:[%s5 + $0x130] sm:$0xff]
        %v4224 = vld [vmem:[%s5 + $0x138] sm:$0xff]
        %v4225 = vld [vmem:[%s5 + $0x140] sm:$0xff]
        %v4226 = vld [vmem:[%s5 + $0x148] sm:$0xff]
        %v4227 = vld [vmem:[%s5 + $0x150] sm:$0xff]
        %v4228 = vld [vmem:[%s5 + $0x158] sm:$0xff]
        %v4229 = vld [vmem:[%s5 + $0x160] sm:$0xff]
        %v4230 = vld [vmem:[%s5 + $0x168] sm:$0xff]
        %v4231 = vld [vmem:[%s5 + $0x170] sm:$0xff]
        %v4232 = vld [vmem:[%s5 + $0x178] sm:$0xff]
        %v4233 = vld [vmem:[%s5 + $0x180] sm:$0xff]
        %v4234 = vld [vmem:[%s5 + $0x188] sm:$0xff]
        %v4235 = vld [vmem:[%s5 + $0x190] sm:$0xff]
        %v4236 = vld [vmem:[%s5 + $0x198] sm:$0xff]
        %v4237 = vld [vmem:[%s5 + $0x1a0] sm:$0xff]
        %v4238 = vld [vmem:[%s5 + $0x1a8] sm:$0xff]
        %v4239 = vld [vmem:[%s5 + $0x1b0] sm:$0xff]
        %v4240 = vld [vmem:[%s5 + $0x1b8] sm:$0xff]
        %v4242 = vlaneseq
        %v4243 = vshrl.u32 %v4242, 7
        %v4244 = vsub.s32 0, %v4243
        %v4245 = vrot.slane %v4022, %v4244
        %v4247 = vsel %vm2393, %v1191, 0
        %v4249 = vsel %vm2393, %v1194, 0
        %v4251 = vsel %vm2393, %v1197, 0
        %v4253 = vsel %vm2393, %v1200, 0
        %v4255 = vsel %vm2393, %v1203, 0
        %v4257 = vsel %vm2393, %v1206, 0
        %v4259 = vsel %vm2393, %v1209, 0
        %v4261 = vsel %vm2393, %v1212, 0
        %v4263 = vsel %vm2393, %v1215, 0
        %v4265 = vsel %vm2393, %v1218, 0
        %v4267 = vsel %vm2393, %v1221, 0
        %v4269 = vsel %vm2393, %v1224, 0
        %v4271 = vsel %vm2393, %v1227, 0
        %v4273 = vsel %vm2393, %v1230, 0
        %v4275 = vsel %vm2393, %v1233, 0
        %v4277 = vsel %vm2393, %v1236, 0
        %v4279 = vsel %vm2393, %v1239, 0
        %v4281 = vsel %vm2393, %v1242, 0
        %v4283 = vsel %vm2393, %v1245, 0
        %v4285 = vsel %vm2393, %v1248, 0
        %v4287 = vsel %vm2393, %v1251, 0
        %v4289 = vsel %vm2393, %v1254, 0
        %v4291 = vsel %vm2393, %v1257, 0
        %v4293 = vsel %vm2393, %v1260, 0
        %v4295 = vsel %vm2393, %v1263, 0
        %v4297 = vsel %vm2393, %v1266, 0
        %4299 = vmatprep.subr.mxu0 0.0
        %4300 = vmatpush1.msra.mxu0 %v4185
        %4301 = vmatprep.subr.mxu0 0.0
        %4302 = vmatpush1.msra.mxu0 %v4186
        %4303 = vmatprep.subr.mxu0 0.0
        %4304 = vmatpush1.msra.mxu0 %v4187
        %4305 = vmatprep.subr.mxu0 0.0
        %4306 = vmatpush1.msra.mxu0 %v4188
        %4307 = vmatprep.subr.mxu0 0.0
        %4308 = vmatpush1.msra.mxu0 %v4189
        %4309 = vmatprep.subr.mxu0 0.0
        %4310 = vmatpush1.msra.mxu0 %v4190
        %4311 = vmatprep.subr.mxu0 0.0
        %4312 = vmatpush1.msra.mxu0 %v4191
        %4313 = vmatprep.subr.mxu0 0.0
        %4314 = vmatpush1.msra.mxu0 %v4192
        %4315 = vmatprep.subr.mxu0 0.0
        %4316 = vmatpush1.msra.mxu0 %v4193
        %4317 = vmatprep.subr.mxu0 0.0
        %4318 = vmatpush1.msra.mxu0 %v4194
        %4319 = vmatprep.subr.mxu0 0.0
        %4320 = vmatpush1.msra.mxu0 %v4195
        %4321 = vmatprep.subr.mxu0 0.0
        %4322 = vmatpush1.msra.mxu0 %v4196
        %4323 = vmatprep.subr.mxu0 0.0
        %4324 = vmatpush1.msra.mxu0 %v4197
        %4325 = vmatprep.subr.mxu0 0.0
        %4326 = vmatpush1.msra.mxu0 %v4198
        %4327 = vmatprep.subr.mxu0 0.0
        %4328 = vmatpush1.msra.mxu0 %v4199
        %4329 = vmatprep.subr.mxu0 0.0
        %4330 = vmatpush1.msra.mxu0 %v4200
        %4331 = vmatprep.subr.mxu0 0.0
        %4332 = vmatpush1.msra.mxu0 %v4201
        %4333 = vmatprep.subr.mxu0 0.0
        %4334 = vmatpush1.msra.mxu0 %v4202
        %4335 = vmatprep.subr.mxu0 0.0
        %4336 = vmatpush1.msra.mxu0 %v4203
        %4337 = vmatprep.subr.mxu0 0.0
        %4338 = vmatpush1.msra.mxu0 %v4204
        %4339 = vmatprep.subr.mxu0 0.0
        %4340 = vmatpush1.msra.mxu0 %v4205
        %4341 = vmatprep.subr.mxu0 0.0
        %4342 = vmatpush1.msra.mxu0 %v4206
        %4343 = vmatprep.subr.mxu0 0.0
        %4344 = vmatpush1.msra.mxu0 %v4207
        %4345 = vmatprep.subr.mxu0 0.0
        %4346 = vmatpush1.msra.mxu0 %v4208
        %4347 = vmatprep.subr.mxu0 0.0
        %4348 = vmatpush1.msra.mxu0 %v4209
        %4349 = vmatprep.subr.mxu0 0.0
        %4350 = vmatpush1.msra.mxu0 %v4210
        %4351 = vmatprep.subr.mxu0 0.0
        %4352 = vmatpush1.msra.mxu0 %v4211
        %4353 = vmatprep.subr.mxu0 0.0
        %4354 = vmatpush1.msra.mxu0 %v4212
        %4355 = vmatprep.subr.mxu0 0.0
        %4356 = vmatpush1.msra.mxu0 %v4213
        %4357 = vmatprep.subr.mxu0 0.0
        %4358 = vmatpush1.msra.mxu0 %v4214
        %4359 = vmatprep.subr.mxu0 0.0
        %4360 = vmatpush1.msra.mxu0 %v4215
        %4361 = vmatprep.subr.mxu0 0.0
        %4362 = vmatpush1.msra.mxu0 %v4216
        %4363 = vmatprep.mubr.f32.mxu0 %v4151
        %4364 = vmatmul.mubr.f32.gmra.mrb[0].mxu0 %v3231
        %v4365 = vpop.f32.mrb[0].mxu0
        %v4366 = vadd.f32 %v4245, %v4365
        %v4367 = vpop.f32.mrb[0].mxu0
        %4368 = vmatprep.mubr.f32.mxu0 %v4152
        %4369 = vmatmul.mubr.f32.gmra.mrb[0].mxu0 %v3231
        %v4370 = vpop.f32.mrb[0].mxu0
        %v4371 = vadd.f32 %v4245, %v4370
        %v4372 = vpop.f32.mrb[0].mxu0
        %4373 = vmatprep.mubr.f32.mxu0 %v4153
        %4374 = vmatmul.mubr.f32.gmra.mrb[0].mxu0 %v3231
        %v4375 = vpop.f32.mrb[0].mxu0
        %v4376 = vadd.f32 %v4245, %v4375
        %v4377 = vpop.f32.mrb[0].mxu0
        %4378 = vmatprep.mubr.f32.mxu0 %v4154
        %4379 = vmatmul.mubr.f32.gmra.mrb[0].mxu0 %v3231
        %v4380 = vpop.f32.mrb[0].mxu0
        %v4381 = vadd.f32 %v4245, %v4380
        %v4382 = vpop.f32.mrb[0].mxu0
        %4383 = vmatprep.mubr.f32.mxu0 %v4155
        %4384 = vmatmul.mubr.f32.gmra.mrb[0].mxu0 %v4151
        %v4385 = vpop.f32.mrb[0].mxu0
        %v4386 = vadd.f32 %v4245, %v4385
        %v4387 = vpop.f32.mrb[0].mxu0
        %4388 = vmatprep.mubr.f32.mxu0 %v4156
        %4389 = vmatmul.mubr.f32.gmra.mrb[0].mxu0 %v4152
        %v4390 = vpop.f32.mrb[0].mxu0
        %v4391 = vadd.f32 %v4245, %v4390
        %v4392 = vpop.f32.mrb[0].mxu0
        %4393 = vmatprep.mubr.f32.mxu0 %v4157
        %4394 = vmatmul.mubr.f32.gmra.mrb[0].mxu0 %v4153
        %v4395 = vpop.f32.mrb[0].mxu0
        %v4396 = vadd.f32 %v4245, %v4395
        %v4397 = vpop.f32.mrb[0].mxu0
        %4398 = vmatprep.mubr.f32.mxu0 %v4158
        %4399 = vmatmul.mubr.f32.gmra.mrb[0].mxu0 %v4154
        %v4400 = vpop.f32.mrb[0].mxu0
        %v4401 = vadd.f32 %v4245, %v4400
        %v4402 = vpop.f32.mrb[0].mxu0
        %4403 = vmatprep.mubr.f32.mxu0 %v4159
        %4404 = vmatmul.mubr.f32.gmra.mrb[0].mxu0 %v4155
        %v4405 = vpop.f32.mrb[0].mxu0
        %v4406 = vadd.f32 %v4245, %v4405
        %v4407 = vpop.f32.mrb[0].mxu0
        %4408 = vmatprep.mubr.f32.mxu0 %v4160
        %4409 = vmatmul.mubr.f32.gmra.mrb[0].mxu0 %v4156
        %v4410 = vpop.f32.mrb[0].mxu0
        %v4411 = vadd.f32 %v4245, %v4410
        %v4412 = vpop.f32.mrb[0].mxu0
        %4413 = vmatprep.mubr.f32.mxu0 %v4161
        %4414 = vmatmul.mubr.f32.gmra.mrb[0].mxu0 %v4157
        %v4415 = vpop.f32.mrb[0].mxu0
        %v4416 = vadd.f32 %v4245, %v4415
        %v4417 = vpop.f32.mrb[0].mxu0
        %4418 = vmatprep.mubr.f32.mxu0 %v4162
        %4419 = vmatmul.mubr.f32.gmra.mrb[0].mxu0 %v4158
        %v4420 = vpop.f32.mrb[0].mxu0
        %v4421 = vadd.f32 %v4245, %v4420
        %v4422 = vpop.f32.mrb[0].mxu0
        %4423 = vmatprep.mubr.f32.mxu0 %v4163
        %4424 = vmatmul.mubr.f32.gmra.mrb[0].mxu0 %v4159
        %v4425 = vpop.f32.mrb[0].mxu0
        %v4426 = vadd.f32 %v4245, %v4425
        %v4427 = vpop.f32.mrb[0].mxu0
        %4428 = vmatprep.mubr.f32.mxu0 %v4164
        %4429 = vmatmul.mubr.f32.gmra.mrb[0].mxu0 %v4160
        %v4430 = vpop.f32.mrb[0].mxu0
        %v4431 = vadd.f32 %v4245, %v4430
        %v4432 = vpop.f32.mrb[0].mxu0
        %4433 = vmatprep.mubr.f32.mxu0 %v4165
        %4434 = vmatmul.mubr.f32.gmra.mrb[0].mxu0 %v4161
        %v4435 = vpop.f32.mrb[0].mxu0
        %v4436 = vadd.f32 %v4245, %v4435
        %v4437 = vpop.f32.mrb[0].mxu0
        %4438 = vmatprep.mubr.f32.mxu0 %v4166
        %4439 = vmatmul.mubr.f32.gmra.mrb[0].mxu0 %v4162
        %v4440 = vpop.f32.mrb[0].mxu0
        %v4441 = vadd.f32 %v4245, %v4440
        %v4442 = vpop.f32.mrb[0].mxu0
        %4443 = vmatprep.mubr.f32.mxu0 %v4167
        %4444 = vmatmul.mubr.f32.gmra.mrb[0].mxu0 %v4163
        %v4445 = vpop.f32.mrb[0].mxu0
        %v4446 = vadd.f32 %v4245, %v4445
        %v4447 = vpop.f32.mrb[0].mxu0
        %4448 = vmatprep.mubr.f32.mxu0 %v4168
        %4449 = vmatmul.mubr.f32.gmra.mrb[0].mxu0 %v4164
        %v4450 = vpop.f32.mrb[0].mxu0
        %v4451 = vadd.f32 %v4245, %v4450
        %v4452 = vpop.f32.mrb[0].mxu0
        %4453 = vmatprep.mubr.f32.mxu0 %v4169
        %4454 = vmatmul.mubr.f32.gmra.mrb[0].mxu0 %v4165
        %v4455 = vpop.f32.mrb[0].mxu0
        %v4456 = vadd.f32 %v4245, %v4455
        %v4457 = vpop.f32.mrb[0].mxu0
        %4458 = vmatprep.mubr.f32.mxu0 %v4170
        %4459 = vmatmul.mubr.f32.gmra.mrb[0].mxu0 %v4166
        %v4460 = vpop.f32.mrb[0].mxu0
        %v4461 = vadd.f32 %v4245, %v4460
        %v4462 = vpop.f32.mrb[0].mxu0
        %4463 = vmatprep.mubr.f32.mxu0 %v4171
        %4464 = vmatmul.mubr.f32.gmra.mrb[0].mxu0 %v4167
        %v4465 = vpop.f32.mrb[0].mxu0
        %v4466 = vadd.f32 %v4245, %v4465
        %v4467 = vpop.f32.mrb[0].mxu0
        %4468 = vmatprep.mubr.f32.mxu0 %v4172
        %4469 = vmatmul.mubr.f32.gmra.mrb[0].mxu0 %v4168
        %v4470 = vpop.f32.mrb[0].mxu0
        %v4471 = vadd.f32 %v4245, %v4470
        %v4472 = vpop.f32.mrb[0].mxu0
        %4473 = vmatprep.mubr.f32.mxu0 %v4173
        %4474 = vmatmul.mubr.f32.gmra.mrb[0].mxu0 %v4169
        %v4475 = vpop.f32.mrb[0].mxu0
        %v4476 = vadd.f32 %v4245, %v4475
        %v4477 = vpop.f32.mrb[0].mxu0
        %4478 = vmatprep.mubr.f32.mxu0 %v4174
        %4479 = vmatmul.mubr.f32.gmra.mrb[0].mxu0 %v4170
        %v4480 = vpop.f32.mrb[0].mxu0
        %v4481 = vadd.f32 %v4245, %v4480
        %v4482 = vpop.f32.mrb[0].mxu0
        %4483 = vmatprep.mubr.f32.mxu0 %v4175
        %4484 = vmatmul.mubr.f32.gmra.mrb[0].mxu0 %v4171
        %v4485 = vpop.f32.mrb[0].mxu0
        %v4486 = vadd.f32 %v4245, %v4485
        %v4487 = vpop.f32.mrb[0].mxu0
        %4488 = vmatprep.mubr.f32.mxu0 %v4176
        %4489 = vmatmul.mubr.f32.gmra.mrb[0].mxu0 %v4172
        %v4490 = vpop.f32.mrb[0].mxu0
        %v4491 = vadd.f32 %v4245, %v4490
        %v4492 = vpop.f32.mrb[0].mxu0
        %4493 = vmatprep.mubr.f32.mxu0 %v4177
        %4494 = vmatmul.mubr.f32.gmra.mrb[0].mxu0 %v4173
        %v4495 = vpop.f32.mrb[0].mxu0
        %v4496 = vadd.f32 %v4245, %v4495
        %v4497 = vpop.f32.mrb[0].mxu0
        %4498 = vmatprep.mubr.f32.mxu0 %v4178
        %4499 = vmatmul.mubr.f32.gmra.mrb[0].mxu0 %v4174
        %v4500 = vpop.f32.mrb[0].mxu0
        %v4501 = vadd.f32 %v4245, %v4500
        %v4502 = vpop.f32.mrb[0].mxu0
        %4503 = vmatprep.mubr.f32.mxu0 %v4179
        %4504 = vmatmul.mubr.f32.gmra.mrb[0].mxu0 %v4175
        %v4505 = vpop.f32.mrb[0].mxu0
        %v4506 = vadd.f32 %v4245, %v4505
        %v4507 = vpop.f32.mrb[0].mxu0
        %4508 = vmatprep.mubr.f32.mxu0 %v4180
        %4509 = vmatmul.mubr.f32.gmra.mrb[0].mxu0 %v4176
        %v4510 = vpop.f32.mrb[0].mxu0
        %v4511 = vadd.f32 %v4245, %v4510
        %v4512 = vpop.f32.mrb[0].mxu0
        %4513 = vmatprep.mubr.f32.mxu0 %v4181
        %4514 = vmatmul.mubr.f32.gmra.mrb[0].mxu0 %v4177
        %v4515 = vpop.f32.mrb[0].mxu0
        %v4516 = vadd.f32 %v4245, %v4515
        %v4517 = vpop.f32.mrb[0].mxu0
        %4518 = vmatprep.mubr.f32.mxu0 %v4182
        %4519 = vmatmul.mubr.f32.gmra.mrb[0].mxu0 %v4178
        %v4520 = vpop.f32.mrb[0].mxu0
        %v4521 = vadd.f32 %v4245, %v4520
        %v4522 = vpop.f32.mrb[0].mxu0
        %4523 = vdwg.mxu0
        %4524 = vmatprep.subr.mxu0 0.0
        %4525 = vmatpush1.msra.mxu0 %v4217
        %4526 = vmatprep.subr.mxu0 0.0
        %4527 = vmatpush1.msra.mxu0 %v4218
        %4528 = vmatprep.subr.mxu0 0.0
        %4529 = vmatpush1.msra.mxu0 %v4219
        %4530 = vmatprep.subr.mxu0 0.0
        %4531 = vmatpush1.msra.mxu0 %v4220
        %4532 = vmatprep.subr.mxu0 0.0
        %4533 = vmatpush1.msra.mxu0 %v4221
        %4534 = vmatprep.subr.mxu0 0.0
        %4535 = vmatpush1.msra.mxu0 %v4222
        %4536 = vmatprep.subr.mxu0 0.0
        %4537 = vmatpush1.msra.mxu0 %v4223
        %4538 = vmatprep.subr.mxu0 0.0
        %4539 = vmatpush1.msra.mxu0 %v4224
        %4540 = vmatprep.subr.mxu0 0.0
        %4541 = vmatpush1.msra.mxu0 %v4225
        %4542 = vmatprep.subr.mxu0 0.0
        %4543 = vmatpush1.msra.mxu0 %v4226
        %4544 = vmatprep.subr.mxu0 0.0
        %4545 = vmatpush1.msra.mxu0 %v4227
        %4546 = vmatprep.subr.mxu0 0.0
        %4547 = vmatpush1.msra.mxu0 %v4228
        %4548 = vmatprep.subr.mxu0 0.0
        %4549 = vmatpush1.msra.mxu0 %v4229
        %4550 = vmatprep.subr.mxu0 0.0
        %4551 = vmatpush1.msra.mxu0 %v4230
        %4552 = vmatprep.subr.mxu0 0.0
        %4553 = vmatpush1.msra.mxu0 %v4231
        %4554 = vmatprep.subr.mxu0 0.0
        %4555 = vmatpush1.msra.mxu0 %v4232
        %4556 = vmatprep.subr.mxu0 0.0
        %4557 = vmatpush1.msra.mxu0 %v4233
        %4558 = vmatprep.subr.mxu0 0.0
        %4559 = vmatpush1.msra.mxu0 %v4234
        %4560 = vmatprep.subr.mxu0 0.0
        %4561 = vmatpush1.msra.mxu0 %v4235
        %4562 = vmatprep.subr.mxu0 0.0
        %4563 = vmatpush1.msra.mxu0 %v4236
        %4564 = vmatprep.subr.mxu0 0.0
        %4565 = vmatpush1.msra.mxu0 %v4237
        %4566 = vmatprep.subr.mxu0 0.0
        %4567 = vmatpush1.msra.mxu0 %v4238
        %4568 = vmatprep.subr.mxu0 0.0
        %4569 = vmatpush1.msra.mxu0 %v4239
        %4570 = vmatprep.subr.mxu0 0.0
        %4571 = vmatpush1.msra.mxu0 %v4240
        %4572 = vmatprep.subr.mxu0 0.0
        %4573 = vmatpush1.msra.mxu0 0.0
        %4574 = vmatprep.subr.mxu0 0.0
        %4575 = vmatpush1.msra.mxu0 0.0
        %4576 = vmatprep.subr.mxu0 0.0
        %4577 = vmatpush1.msra.mxu0 0.0
        %4578 = vmatprep.subr.mxu0 0.0
        %4579 = vmatpush1.msra.mxu0 0.0
        %4580 = vmatprep.subr.mxu0 0.0
        %4581 = vmatpush1.msra.mxu0 0.0
        %4582 = vmatprep.subr.mxu0 0.0
        %4583 = vmatpush1.msra.mxu0 0.0
        %4584 = vmatprep.subr.mxu0 0.0
        %4585 = vmatpush1.msra.mxu0 0.0
        %4586 = vmatprep.subr.mxu0 0.0
        %4587 = vmatpush1.msra.mxu0 0.0
        %4588 = vmatprep.mubr.f32.mxu0 %v4247
        %4589 = vmatmul.mubr.f32.gmra.mrb[0].mxu0 %v4155
        %v4590 = vpop.f32.mrb[0].mxu0
        %v4591 = vadd.f32 %v4366, %v4590
        %v4592 = vpop.f32.mrb[0].mxu0
        %4593 = vmatprep.mubr.f32.mxu0 %v4249
        %4594 = vmatmul.mubr.f32.gmra.mrb[0].mxu0 %v4156
        %v4595 = vpop.f32.mrb[0].mxu0
        %v4596 = vadd.f32 %v4371, %v4595
        %v4597 = vpop.f32.mrb[0].mxu0
        %4598 = vmatprep.mubr.f32.mxu0 %v4251
        %4599 = vmatmul.mubr.f32.gmra.mrb[0].mxu0 %v4157
        %v4600 = vpop.f32.mrb[0].mxu0
        %v4601 = vadd.f32 %v4376, %v4600
        %v4602 = vpop.f32.mrb[0].mxu0
        %4603 = vmatprep.mubr.f32.mxu0 %v4253
        %4604 = vmatmul.mubr.f32.gmra.mrb[0].mxu0 %v4158
        %v4605 = vpop.f32.mrb[0].mxu0
        %v4606 = vadd.f32 %v4381, %v4605
        %v4607 = vpop.f32.mrb[0].mxu0
        %4608 = vmatprep.mubr.f32.mxu0 %v4255
        %4609 = vmatmul.mubr.f32.gmra.mrb[0].mxu0 %v4159
        %v4610 = vpop.f32.mrb[0].mxu0
        %v4611 = vadd.f32 %v4386, %v4610
        %v4612 = vpop.f32.mrb[0].mxu0
        %4613 = vmatprep.mubr.f32.mxu0 %v4257
        %4614 = vmatmul.mubr.f32.gmra.mrb[0].mxu0 %v4160
        %v4615 = vpop.f32.mrb[0].mxu0
        %v4616 = vadd.f32 %v4391, %v4615
        %v4617 = vpop.f32.mrb[0].mxu0
        %4618 = vmatprep.mubr.f32.mxu0 %v4259
        %4619 = vmatmul.mubr.f32.gmra.mrb[0].mxu0 %v4161
        %v4620 = vpop.f32.mrb[0].mxu0
        %v4621 = vadd.f32 %v4396, %v4620
        %v4622 = vpop.f32.mrb[0].mxu0
        %4623 = vmatprep.mubr.f32.mxu0 %v4261
        %4624 = vmatmul.mubr.f32.gmra.mrb[0].mxu0 %v4162
        %v4625 = vpop.f32.mrb[0].mxu0
        %v4626 = vadd.f32 %v4401, %v4625
        %v4627 = vpop.f32.mrb[0].mxu0
        %4628 = vmatprep.mubr.f32.mxu0 %v4263
        %4629 = vmatmul.mubr.f32.gmra.mrb[0].mxu0 %v4163
        %v4630 = vpop.f32.mrb[0].mxu0
        %v4631 = vadd.f32 %v4406, %v4630
        %v4632 = vpop.f32.mrb[0].mxu0
        %4633 = vmatprep.mubr.f32.mxu0 %v4265
        %4634 = vmatmul.mubr.f32.gmra.mrb[0].mxu0 %v4164
        %v4635 = vpop.f32.mrb[0].mxu0
        %v4636 = vadd.f32 %v4411, %v4635
        %v4637 = vpop.f32.mrb[0].mxu0
        %4638 = vmatprep.mubr.f32.mxu0 %v4267
        %4639 = vmatmul.mubr.f32.gmra.mrb[0].mxu0 %v4165
        %v4640 = vpop.f32.mrb[0].mxu0
        %v4641 = vadd.f32 %v4416, %v4640
        %v4642 = vpop.f32.mrb[0].mxu0
        %4643 = vmatprep.mubr.f32.mxu0 %v4269
        %4644 = vmatmul.mubr.f32.gmra.mrb[0].mxu0 %v4166
        %v4645 = vpop.f32.mrb[0].mxu0
        %v4646 = vadd.f32 %v4421, %v4645
        %v4647 = vpop.f32.mrb[0].mxu0
        %4648 = vmatprep.mubr.f32.mxu0 %v4271
        %4649 = vmatmul.mubr.f32.gmra.mrb[0].mxu0 %v4167
        %v4650 = vpop.f32.mrb[0].mxu0
        %v4651 = vadd.f32 %v4426, %v4650
        %v4652 = vpop.f32.mrb[0].mxu0
        %4653 = vmatprep.mubr.f32.mxu0 %v4273
        %4654 = vmatmul.mubr.f32.gmra.mrb[0].mxu0 %v4168
        %v4655 = vpop.f32.mrb[0].mxu0
        %v4656 = vadd.f32 %v4431, %v4655
        %v4657 = vpop.f32.mrb[0].mxu0
        %4658 = vmatprep.mubr.f32.mxu0 %v4275
        %4659 = vmatmul.mubr.f32.gmra.mrb[0].mxu0 %v4169
        %v4660 = vpop.f32.mrb[0].mxu0
        %v4661 = vadd.f32 %v4436, %v4660
        %v4662 = vpop.f32.mrb[0].mxu0
        %4663 = vmatprep.mubr.f32.mxu0 %v4277
        %4664 = vmatmul.mubr.f32.gmra.mrb[0].mxu0 %v4170
        %v4665 = vpop.f32.mrb[0].mxu0
        %v4666 = vadd.f32 %v4441, %v4665
        %v4667 = vpop.f32.mrb[0].mxu0
        %4668 = vmatprep.mubr.f32.mxu0 %v4279
        %4669 = vmatmul.mubr.f32.gmra.mrb[0].mxu0 %v4171
        %v4670 = vpop.f32.mrb[0].mxu0
        %v4671 = vadd.f32 %v4446, %v4670
        %v4672 = vpop.f32.mrb[0].mxu0
        %4673 = vmatprep.mubr.f32.mxu0 %v4281
        %4674 = vmatmul.mubr.f32.gmra.mrb[0].mxu0 %v4172
        %v4675 = vpop.f32.mrb[0].mxu0
        %v4676 = vadd.f32 %v4451, %v4675
        %v4677 = vpop.f32.mrb[0].mxu0
        %4678 = vmatprep.mubr.f32.mxu0 %v4283
        %4679 = vmatmul.mubr.f32.gmra.mrb[0].mxu0 %v4173
        %v4680 = vpop.f32.mrb[0].mxu0
        %v4681 = vadd.f32 %v4456, %v4680
        %v4682 = vpop.f32.mrb[0].mxu0
        %4683 = vmatprep.mubr.f32.mxu0 %v4285
        %4684 = vmatmul.mubr.f32.gmra.mrb[0].mxu0 %v4174
        %v4685 = vpop.f32.mrb[0].mxu0
        %v4686 = vadd.f32 %v4461, %v4685
        %v4687 = vpop.f32.mrb[0].mxu0
        %4688 = vmatprep.mubr.f32.mxu0 %v4287
        %4689 = vmatmul.mubr.f32.gmra.mrb[0].mxu0 %v4175
        %v4690 = vpop.f32.mrb[0].mxu0
        %v4691 = vadd.f32 %v4466, %v4690
        %v4692 = vpop.f32.mrb[0].mxu0
        %4693 = vmatprep.mubr.f32.mxu0 %v4289
        %4694 = vmatmul.mubr.f32.gmra.mrb[0].mxu0 %v4176
        %v4695 = vpop.f32.mrb[0].mxu0
        %v4696 = vadd.f32 %v4471, %v4695
        %v4697 = vpop.f32.mrb[0].mxu0
        %4698 = vmatprep.mubr.f32.mxu0 %v4291
        %4699 = vmatmul.mubr.f32.gmra.mrb[0].mxu0 %v4177
        %v4700 = vpop.f32.mrb[0].mxu0
        %v4701 = vadd.f32 %v4476, %v4700
        %v4702 = vpop.f32.mrb[0].mxu0
        %4703 = vmatprep.mubr.f32.mxu0 %v4293
        %4704 = vmatmul.mubr.f32.gmra.mrb[0].mxu0 %v4178
        %v4705 = vpop.f32.mrb[0].mxu0
        %v4706 = vadd.f32 %v4481, %v4705
        %v4707 = vpop.f32.mrb[0].mxu0
        %4708 = vmatprep.mubr.f32.mxu0 %v4295
        %4709 = vmatmul.mubr.f32.gmra.mrb[0].mxu0 %v4179
        %v4710 = vpop.f32.mrb[0].mxu0
        %v4711 = vadd.f32 %v4486, %v4710
        %v4712 = vpop.f32.mrb[0].mxu0
        %4713 = vmatprep.mubr.f32.mxu0 %v4297
        %4714 = vmatmul.mubr.f32.gmra.mrb[0].mxu0 %v4180
        %v4715 = vpop.f32.mrb[0].mxu0
        %v4716 = vadd.f32 %v4491, %v4715
        %v4717 = vpop.f32.mrb[0].mxu0
        %4718 = vmatprep.mubr.f32.mxu0 %v3441
        %4719 = vmatmul.mubr.f32.gmra.mrb[0].mxu0 %v4181
        %v4720 = vpop.f32.mrb[0].mxu0
        %v4721 = vadd.f32 %v4496, %v4720
        %v4722 = vpop.f32.mrb[0].mxu0
        %4723 = vmatprep.mubr.f32.mxu0 %v3441
        %4724 = vmatmul.mubr.f32.gmra.mrb[0].mxu0 %v4182
        %v4725 = vpop.f32.mrb[0].mxu0
        %v4726 = vadd.f32 %v4501, %v4725
        %v4727 = vpop.f32.mrb[0].mxu0
        %4728 = vmatprep.mubr.f32.mxu0 %v3441
        %4729 = vmatmul.mubr.f32.gmra.mrb[0].mxu0 %v4183
        %v4730 = vpop.f32.mrb[0].mxu0
        %v4731 = vadd.f32 %v4506, %v4730
        %v4732 = vpop.f32.mrb[0].mxu0
        %4733 = vmatprep.mubr.f32.mxu0 %v3441
        %4734 = vmatmul.mubr.f32.gmra.mrb[0].mxu0 %v4184
        %v4735 = vpop.f32.mrb[0].mxu0
        %v4736 = vadd.f32 %v4511, %v4735
        %v4737 = vpop.f32.mrb[0].mxu0
        %4738 = vmatprep.mubr.f32.mxu0 %v3441
        %4739 = vmatmul.mubr.f32.gmra.mrb[0].mxu0 %v3231
        %v4740 = vpop.f32.mrb[0].mxu0
        %v4741 = vadd.f32 %v4516, %v4740
        %v4742 = vpop.f32.mrb[0].mxu0
        %4743 = vmatprep.mubr.f32.mxu0 %v3441
        %4744 = vmatmul.mubr.f32.gmra.mrb[0].mxu0 %v3231
        %v4745 = vpop.f32.mrb[0].mxu0
        %v4746 = vadd.f32 %v4521, %v4745
        %v4747 = vpop.f32.mrb[0].mxu0
        %4748 = vdwg.mxu0
        %v4749 = vmax.f32 %v4591, 0.0
        %v4750 = vmax.f32 %v4596, 0.0
        %v4751 = vmax.f32 %v4601, 0.0
        %v4752 = vmax.f32 %v4606, 0.0
        %v4753 = vmax.f32 %v4611, 0.0
        %v4754 = vmax.f32 %v4616, 0.0
        %v4755 = vmax.f32 %v4621, 0.0
        %v4756 = vmax.f32 %v4626, 0.0
        %v4757 = vmax.f32 %v4631, 0.0
        %v4758 = vmax.f32 %v4636, 0.0
        %v4759 = vmax.f32 %v4641, 0.0
        %v4760 = vmax.f32 %v4646, 0.0
        %v4761 = vmax.f32 %v4651, 0.0
        %v4762 = vmax.f32 %v4656, 0.0
        %v4763 = vmax.f32 %v4661, 0.0
        %v4764 = vmax.f32 %v4666, 0.0
        %v4765 = vmax.f32 %v4671, 0.0
        %v4766 = vmax.f32 %v4676, 0.0
        %v4767 = vmax.f32 %v4681, 0.0
        %v4768 = vmax.f32 %v4686, 0.0
        %v4769 = vmax.f32 %v4691, 0.0
        %v4770 = vmax.f32 %v4696, 0.0
        %v4771 = vmax.f32 %v4701, 0.0
        %v4772 = vmax.f32 %v4706, 0.0
        %v4773 = vmax.f32 %v4711, 0.0
        %v4774 = vmax.f32 %v4716, 0.0
        %v4775 = vmax.f32 %v4721, 0.0
        %v4776 = vmax.f32 %v4726, 0.0
        %v4777 = vmax.f32 %v4731, 0.0
        %v4778 = vmax.f32 %v4736, 0.0
        %v4779 = vmax.f32 %v4741, 0.0
        %v4780 = vmax.f32 %v4746, 0.0
        %s4781 = scalar_lea.vmem %s10, 2
        %v4782 = vld [vmem:[%s4781] sm:$0x1]
        %v4815 = vrot.slane %v4749, 5
        %v4816 = vrot.slane %v4750, 5
        %v4817 = vsel %vm1300, %v4815, %v4816
        %v4818 = vrot.slane %v4751, 5
        %v4819 = vrot.slane %v4752, 5
        %v4820 = vsel %vm1300, %v4818, %v4819
        %v4821 = vrot.slane %v4753, 5
        %v4822 = vrot.slane %v4754, 5
        %v4823 = vsel %vm1300, %v4821, %v4822
        %v4824 = vrot.slane %v4755, 5
        %v4825 = vrot.slane %v4756, 5
        %v4826 = vsel %vm1300, %v4824, %v4825
        %v4827 = vrot.slane %v4757, 5
        %v4828 = vrot.slane %v4758, 5
        %v4829 = vsel %vm1300, %v4827, %v4828
        %v4830 = vrot.slane %v4759, 5
        %v4831 = vrot.slane %v4760, 5
        %v4832 = vsel %vm1300, %v4830, %v4831
        %v4833 = vrot.slane %v4761, 5
        %v4834 = vrot.slane %v4762, 5
        %v4835 = vsel %vm1300, %v4833, %v4834
        %v4836 = vrot.slane %v4763, 5
        %v4837 = vrot.slane %v4764, 5
        %v4838 = vsel %vm1300, %v4836, %v4837
        %v4839 = vrot.slane %v4765, 5
        %v4840 = vrot.slane %v4766, 5
        %v4841 = vsel %vm1300, %v4839, %v4840
        %v4842 = vrot.slane %v4767, 5
        %v4843 = vrot.slane %v4768, 5
        %v4844 = vsel %vm1300, %v4842, %v4843
        %v4845 = vrot.slane %v4769, 5
        %v4846 = vrot.slane %v4770, 5
        %v4847 = vsel %vm1300, %v4845, %v4846
        %v4848 = vrot.slane %v4771, 5
        %v4849 = vrot.slane %v4772, 5
        %v4850 = vsel %vm1300, %v4848, %v4849
        %v4851 = vrot.slane %v4773, 5
        %v4852 = vrot.slane %v4774, 5
        %v4853 = vsel %vm1300, %v4851, %v4852
        %v4854 = vrot.slane %v4775, 5
        %v4855 = vrot.slane %v4776, 5
        %v4856 = vsel %vm1300, %v4854, %v4855
        %v4857 = vrot.slane %v4777, 5
        %v4858 = vrot.slane %v4778, 5
        %v4859 = vsel %vm1300, %v4857, %v4858
        %v4860 = vrot.slane %v4779, 5
        %v4861 = vrot.slane %v4780, 5
        %v4862 = vsel %vm1300, %v4860, %v4861
        %v4911 = vsel %vm1300, 0.0, %v4815
        %v4912 = vsel %vm1300, 0.0, %v4818
        %v4913 = vsel %vm1300, 0.0, %v4821
        %v4914 = vsel %vm1300, 0.0, %v4824
        %v4915 = vsel %vm1300, 0.0, %v4827
        %v4916 = vsel %vm1300, 0.0, %v4830
        %v4917 = vsel %vm1300, 0.0, %v4833
        %v4918 = vsel %vm1300, 0.0, %v4836
        %v4919 = vsel %vm1300, 0.0, %v4839
        %v4920 = vsel %vm1300, 0.0, %v4842
        %v4921 = vsel %vm1300, 0.0, %v4845
        %v4922 = vsel %vm1300, 0.0, %v4848
        %v4923 = vsel %vm1300, 0.0, %v4851
        %v4924 = vsel %vm1300, 0.0, %v4854
        %v4925 = vsel %vm1300, 0.0, %v4857
        %v4926 = vsel %vm1300, 0.0, %v4860
        %v4927 = vsel %vm1300, %v4816, 0.0
        %v4928 = vsel %vm1300, %v4819, 0.0
        %v4929 = vsel %vm1300, %v4822, 0.0
        %v4930 = vsel %vm1300, %v4825, 0.0
        %v4931 = vsel %vm1300, %v4828, 0.0
        %v4932 = vsel %vm1300, %v4831, 0.0
        %v4933 = vsel %vm1300, %v4834, 0.0
        %v4934 = vsel %vm1300, %v4837, 0.0
        %v4935 = vsel %vm1300, %v4840, 0.0
        %v4936 = vsel %vm1300, %v4843, 0.0
        %v4937 = vsel %vm1300, %v4846, 0.0
        %v4938 = vsel %vm1300, %v4849, 0.0
        %v4939 = vsel %vm1300, %v4852, 0.0
        %v4940 = vsel %vm1300, %v4855, 0.0
        %v4941 = vsel %vm1300, %v4858, 0.0
        %v4942 = vsel %vm1300, %v4861, 0.0
        %v4975 = vrot.slane %v4911, 1
        %v4976 = vrot.slane %v4817, 1
        %v4977 = vsel %vm543, %v4975, %v4976
        %v4978 = vrot.slane %v4927, 1
        %v4979 = vsel %vm543, %v4976, %v4978
        %v4980 = vrot.slane %v4912, 1
        %v4981 = vrot.slane %v4820, 1
        %v4982 = vsel %vm543, %v4980, %v4981
        %v4983 = vrot.slane %v4928, 1
        %v4984 = vsel %vm543, %v4981, %v4983
        %v4985 = vrot.slane %v4913, 1
        %v4986 = vrot.slane %v4823, 1
        %v4987 = vsel %vm543, %v4985, %v4986
        %v4988 = vrot.slane %v4929, 1
        %v4989 = vsel %vm543, %v4986, %v4988
        %v4990 = vrot.slane %v4914, 1
        %v4991 = vrot.slane %v4826, 1
        %v4992 = vsel %vm543, %v4990, %v4991
        %v4993 = vrot.slane %v4930, 1
        %v4994 = vsel %vm543, %v4991, %v4993
        %v4995 = vrot.slane %v4915, 1
        %v4996 = vrot.slane %v4829, 1
        %v4997 = vsel %vm543, %v4995, %v4996
        %v4998 = vrot.slane %v4931, 1
        %v4999 = vsel %vm543, %v4996, %v4998
        %v5000 = vrot.slane %v4916, 1
        %v5001 = vrot.slane %v4832, 1
        %v5002 = vsel %vm543, %v5000, %v5001
        %v5003 = vrot.slane %v4932, 1
        %v5004 = vsel %vm543, %v5001, %v5003
        %v5005 = vrot.slane %v4917, 1
        %v5006 = vrot.slane %v4835, 1
        %v5007 = vsel %vm543, %v5005, %v5006
        %v5008 = vrot.slane %v4933, 1
        %v5009 = vsel %vm543, %v5006, %v5008
        %v5010 = vrot.slane %v4918, 1
        %v5011 = vrot.slane %v4838, 1
        %v5012 = vsel %vm543, %v5010, %v5011
        %v5013 = vrot.slane %v4934, 1
        %v5014 = vsel %vm543, %v5011, %v5013
        %v5015 = vrot.slane %v4919, 1
        %v5016 = vrot.slane %v4841, 1
        %v5017 = vsel %vm543, %v5015, %v5016
        %v5018 = vrot.slane %v4935, 1
        %v5019 = vsel %vm543, %v5016, %v5018
        %v5020 = vrot.slane %v4920, 1
        %v5021 = vrot.slane %v4844, 1
        %v5022 = vsel %vm543, %v5020, %v5021
        %v5023 = vrot.slane %v4936, 1
        %v5024 = vsel %vm543, %v5021, %v5023
        %v5025 = vrot.slane %v4921, 1
        %v5026 = vrot.slane %v4847, 1
        %v5027 = vsel %vm543, %v5025, %v5026
        %v5028 = vrot.slane %v4937, 1
        %v5029 = vsel %vm543, %v5026, %v5028
        %v5030 = vrot.slane %v4922, 1
        %v5031 = vrot.slane %v4850, 1
        %v5032 = vsel %vm543, %v5030, %v5031
        %v5033 = vrot.slane %v4938, 1
        %v5034 = vsel %vm543, %v5031, %v5033
        %v5035 = vrot.slane %v4923, 1
        %v5036 = vrot.slane %v4853, 1
        %v5037 = vsel %vm543, %v5035, %v5036
        %v5038 = vrot.slane %v4939, 1
        %v5039 = vsel %vm543, %v5036, %v5038
        %v5040 = vrot.slane %v4924, 1
        %v5041 = vrot.slane %v4856, 1
        %v5042 = vsel %vm543, %v5040, %v5041
        %v5043 = vrot.slane %v4940, 1
        %v5044 = vsel %vm543, %v5041, %v5043
        %v5045 = vrot.slane %v4925, 1
        %v5046 = vrot.slane %v4859, 1
        %v5047 = vsel %vm543, %v5045, %v5046
        %v5048 = vrot.slane %v4941, 1
        %v5049 = vsel %vm543, %v5046, %v5048
        %v5050 = vrot.slane %v4926, 1
        %v5051 = vrot.slane %v4862, 1
        %v5052 = vsel %vm543, %v5050, %v5051
        %v5053 = vrot.slane %v4942, 1
        %v5054 = vsel %vm543, %v5051, %v5053
        %5055 = vrot.lane.b32.xlu0 %v4977, 64
        %v5056 = vpop.permute.xlu0 %5055
        %5057 = vrot.lane.b32.xlu0 %v4979, 64
        %v5058 = vpop.permute.xlu0 %5057
        %5059 = vrot.lane.b32.xlu0 %v4982, 64
        %v5060 = vpop.permute.xlu0 %5059
        %5061 = vrot.lane.b32.xlu0 %v4984, 64
        %v5062 = vpop.permute.xlu0 %5061
        %5063 = vrot.lane.b32.xlu0 %v4987, 64
        %v5064 = vpop.permute.xlu0 %5063
        %5065 = vrot.lane.b32.xlu0 %v4989, 64
        %v5066 = vpop.permute.xlu0 %5065
        %5067 = vrot.lane.b32.xlu0 %v4992, 64
        %v5068 = vpop.permute.xlu0 %5067
        %5069 = vrot.lane.b32.xlu0 %v4994, 64
        %v5070 = vpop.permute.xlu0 %5069
        %5071 = vrot.lane.b32.xlu0 %v4997, 64
        %v5072 = vpop.permute.xlu0 %5071
        %5073 = vrot.lane.b32.xlu0 %v4999, 64
        %v5074 = vpop.permute.xlu0 %5073
        %5075 = vrot.lane.b32.xlu0 %v5002, 64
        %v5076 = vpop.permute.xlu0 %5075
        %5077 = vrot.lane.b32.xlu0 %v5004, 64
        %v5078 = vpop.permute.xlu0 %5077
        %5079 = vrot.lane.b32.xlu0 %v5007, 64
        %v5080 = vpop.permute.xlu0 %5079
        %5081 = vrot.lane.b32.xlu0 %v5009, 64
        %v5082 = vpop.permute.xlu0 %5081
        %5083 = vrot.lane.b32.xlu0 %v5012, 64
        %v5084 = vpop.permute.xlu0 %5083
        %5085 = vrot.lane.b32.xlu0 %v5014, 64
        %v5086 = vpop.permute.xlu0 %5085
        %5087 = vrot.lane.b32.xlu0 %v5017, 64
        %v5088 = vpop.permute.xlu0 %5087
        %5089 = vrot.lane.b32.xlu0 %v5019, 64
        %v5090 = vpop.permute.xlu0 %5089
        %5091 = vrot.lane.b32.xlu0 %v5022, 64
        %v5092 = vpop.permute.xlu0 %5091
        %5093 = vrot.lane.b32.xlu0 %v5024, 64
        %v5094 = vpop.permute.xlu0 %5093
        %5095 = vrot.lane.b32.xlu0 %v5027, 64
        %v5096 = vpop.permute.xlu0 %5095
        %5097 = vrot.lane.b32.xlu0 %v5029, 64
        %v5098 = vpop.permute.xlu0 %5097
        %5099 = vrot.lane.b32.xlu0 %v5032, 64
        %v5100 = vpop.permute.xlu0 %5099
        %5101 = vrot.lane.b32.xlu0 %v5034, 64
        %v5102 = vpop.permute.xlu0 %5101
        %5103 = vrot.lane.b32.xlu0 %v5037, 64
        %v5104 = vpop.permute.xlu0 %5103
        %5105 = vrot.lane.b32.xlu0 %v5039, 64
        %v5106 = vpop.permute.xlu0 %5105
        %5107 = vrot.lane.b32.xlu0 %v5042, 64
        %v5108 = vpop.permute.xlu0 %5107
        %5109 = vrot.lane.b32.xlu0 %v5044, 64
        %v5110 = vpop.permute.xlu0 %5109
        %5111 = vrot.lane.b32.xlu0 %v5047, 64
        %v5112 = vpop.permute.xlu0 %5111
        %5113 = vrot.lane.b32.xlu0 %v5049, 64
        %v5114 = vpop.permute.xlu0 %5113
        %5115 = vrot.lane.b32.xlu0 %v5052, 64
        %v5116 = vpop.permute.xlu0 %5115
        %5117 = vrot.lane.b32.xlu0 %v5054, 64
        %v5118 = vpop.permute.xlu0 %5117
        %v5151 = vrot.slane %v4911, 2
        %v5152 = vrot.slane %v4817, 2
        %v5153 = vsel %vm1733, %v5151, %v5152
        %v5154 = vrot.slane %v4927, 2
        %v5155 = vsel %vm1733, %v5152, %v5154
        %v5156 = vrot.slane %v4912, 2
        %v5157 = vrot.slane %v4820, 2
        %v5158 = vsel %vm1733, %v5156, %v5157
        %v5159 = vrot.slane %v4928, 2
        %v5160 = vsel %vm1733, %v5157, %v5159
        %v5161 = vrot.slane %v4913, 2
        %v5162 = vrot.slane %v4823, 2
        %v5163 = vsel %vm1733, %v5161, %v5162
        %v5164 = vrot.slane %v4929, 2
        %v5165 = vsel %vm1733, %v5162, %v5164
        %v5166 = vrot.slane %v4914, 2
        %v5167 = vrot.slane %v4826, 2
        %v5168 = vsel %vm1733, %v5166, %v5167
        %v5169 = vrot.slane %v4930, 2
        %v5170 = vsel %vm1733, %v5167, %v5169
        %v5171 = vrot.slane %v4915, 2
        %v5172 = vrot.slane %v4829, 2
        %v5173 = vsel %vm1733, %v5171, %v5172
        %v5174 = vrot.slane %v4931, 2
        %v5175 = vsel %vm1733, %v5172, %v5174
        %v5176 = vrot.slane %v4916, 2
        %v5177 = vrot.slane %v4832, 2
        %v5178 = vsel %vm1733, %v5176, %v5177
        %v5179 = vrot.slane %v4932, 2
        %v5180 = vsel %vm1733, %v5177, %v5179
        %v5181 = vrot.slane %v4917, 2
        %v5182 = vrot.slane %v4835, 2
        %v5183 = vsel %vm1733, %v5181, %v5182
        %v5184 = vrot.slane %v4933, 2
        %v5185 = vsel %vm1733, %v5182, %v5184
        %v5186 = vrot.slane %v4918, 2
        %v5187 = vrot.slane %v4838, 2
        %v5188 = vsel %vm1733, %v5186, %v5187
        %v5189 = vrot.slane %v4934, 2
        %v5190 = vsel %vm1733, %v5187, %v5189
        %v5191 = vrot.slane %v4919, 2
        %v5192 = vrot.slane %v4841, 2
        %v5193 = vsel %vm1733, %v5191, %v5192
        %v5194 = vrot.slane %v4935, 2
        %v5195 = vsel %vm1733, %v5192, %v5194
        %v5196 = vrot.slane %v4920, 2
        %v5197 = vrot.slane %v4844, 2
        %v5198 = vsel %vm1733, %v5196, %v5197
        %v5199 = vrot.slane %v4936, 2
        %v5200 = vsel %vm1733, %v5197, %v5199
        %v5201 = vrot.slane %v4921, 2
        %v5202 = vrot.slane %v4847, 2
        %v5203 = vsel %vm1733, %v5201, %v5202
        %v5204 = vrot.slane %v4937, 2
        %v5205 = vsel %vm1733, %v5202, %v5204
        %v5206 = vrot.slane %v4922, 2
        %v5207 = vrot.slane %v4850, 2
        %v5208 = vsel %vm1733, %v5206, %v5207
        %v5209 = vrot.slane %v4938, 2
        %v5210 = vsel %vm1733, %v5207, %v5209
        %v5211 = vrot.slane %v4923, 2
        %v5212 = vrot.slane %v4853, 2
        %v5213 = vsel %vm1733, %v5211, %v5212
        %v5214 = vrot.slane %v4939, 2
        %v5215 = vsel %vm1733, %v5212, %v5214
        %v5216 = vrot.slane %v4924, 2
        %v5217 = vrot.slane %v4856, 2
        %v5218 = vsel %vm1733, %v5216, %v5217
        %v5219 = vrot.slane %v4940, 2
        %v5220 = vsel %vm1733, %v5217, %v5219
        %v5221 = vrot.slane %v4925, 2
        %v5222 = vrot.slane %v4859, 2
        %v5223 = vsel %vm1733, %v5221, %v5222
        %v5224 = vrot.slane %v4941, 2
        %v5225 = vsel %vm1733, %v5222, %v5224
        %v5226 = vrot.slane %v4926, 2
        %v5227 = vrot.slane %v4862, 2
        %v5228 = vsel %vm1733, %v5226, %v5227
        %v5229 = vrot.slane %v4942, 2
        %v5230 = vsel %vm1733, %v5227, %v5229
        %v5263 = vrot.slane %v4911, 3
        %v5264 = vrot.slane %v4817, 3
        %v5265 = vsel %vm1846, %v5263, %v5264
        %v5266 = vrot.slane %v4927, 3
        %v5267 = vsel %vm1846, %v5264, %v5266
        %v5268 = vrot.slane %v4912, 3
        %v5269 = vrot.slane %v4820, 3
        %v5270 = vsel %vm1846, %v5268, %v5269
        %v5271 = vrot.slane %v4928, 3
        %v5272 = vsel %vm1846, %v5269, %v5271
        %v5273 = vrot.slane %v4913, 3
        %v5274 = vrot.slane %v4823, 3
        %v5275 = vsel %vm1846, %v5273, %v5274
        %v5276 = vrot.slane %v4929, 3
        %v5277 = vsel %vm1846, %v5274, %v5276
        %v5278 = vrot.slane %v4914, 3
        %v5279 = vrot.slane %v4826, 3
        %v5280 = vsel %vm1846, %v5278, %v5279
        %v5281 = vrot.slane %v4930, 3
        %v5282 = vsel %vm1846, %v5279, %v5281
        %v5283 = vrot.slane %v4915, 3
        %v5284 = vrot.slane %v4829, 3
        %v5285 = vsel %vm1846, %v5283, %v5284
        %v5286 = vrot.slane %v4931, 3
        %v5287 = vsel %vm1846, %v5284, %v5286
        %v5288 = vrot.slane %v4916, 3
        %v5289 = vrot.slane %v4832, 3
        %v5290 = vsel %vm1846, %v5288, %v5289
        %v5291 = vrot.slane %v4932, 3
        %v5292 = vsel %vm1846, %v5289, %v5291
        %v5293 = vrot.slane %v4917, 3
        %v5294 = vrot.slane %v4835, 3
        %v5295 = vsel %vm1846, %v5293, %v5294
        %v5296 = vrot.slane %v4933, 3
        %v5297 = vsel %vm1846, %v5294, %v5296
        %v5298 = vrot.slane %v4918, 3
        %v5299 = vrot.slane %v4838, 3
        %v5300 = vsel %vm1846, %v5298, %v5299
        %v5301 = vrot.slane %v4934, 3
        %v5302 = vsel %vm1846, %v5299, %v5301
        %v5303 = vrot.slane %v4919, 3
        %v5304 = vrot.slane %v4841, 3
        %v5305 = vsel %vm1846, %v5303, %v5304
        %v5306 = vrot.slane %v4935, 3
        %v5307 = vsel %vm1846, %v5304, %v5306
        %v5308 = vrot.slane %v4920, 3
        %v5309 = vrot.slane %v4844, 3
        %v5310 = vsel %vm1846, %v5308, %v5309
        %v5311 = vrot.slane %v4936, 3
        %v5312 = vsel %vm1846, %v5309, %v5311
        %v5313 = vrot.slane %v4921, 3
        %v5314 = vrot.slane %v4847, 3
        %v5315 = vsel %vm1846, %v5313, %v5314
        %v5316 = vrot.slane %v4937, 3
        %v5317 = vsel %vm1846, %v5314, %v5316
        %v5318 = vrot.slane %v4922, 3
        %v5319 = vrot.slane %v4850, 3
        %v5320 = vsel %vm1846, %v5318, %v5319
        %v5321 = vrot.slane %v4938, 3
        %v5322 = vsel %vm1846, %v5319, %v5321
        %v5323 = vrot.slane %v4923, 3
        %v5324 = vrot.slane %v4853, 3
        %v5325 = vsel %vm1846, %v5323, %v5324
        %v5326 = vrot.slane %v4939, 3
        %v5327 = vsel %vm1846, %v5324, %v5326
        %v5328 = vrot.slane %v4924, 3
        %v5329 = vrot.slane %v4856, 3
        %v5330 = vsel %vm1846, %v5328, %v5329
        %v5331 = vrot.slane %v4940, 3
        %v5332 = vsel %vm1846, %v5329, %v5331
        %v5333 = vrot.slane %v4925, 3
        %v5334 = vrot.slane %v4859, 3
        %v5335 = vsel %vm1846, %v5333, %v5334
        %v5336 = vrot.slane %v4941, 3
        %v5337 = vsel %vm1846, %v5334, %v5336
        %v5338 = vrot.slane %v4926, 3
        %v5339 = vrot.slane %v4862, 3
        %v5340 = vsel %vm1846, %v5338, %v5339
        %v5341 = vrot.slane %v4942, 3
        %v5342 = vsel %vm1846, %v5339, %v5341
        %5343 = vrot.lane.b32.xlu0 %v5265, 64
        %v5344 = vpop.permute.xlu0 %5343
        %5345 = vrot.lane.b32.xlu0 %v5267, 64
        %v5346 = vpop.permute.xlu0 %5345
        %5347 = vrot.lane.b32.xlu0 %v5270, 64
        %v5348 = vpop.permute.xlu0 %5347
        %5349 = vrot.lane.b32.xlu0 %v5272, 64
        %v5350 = vpop.permute.xlu0 %5349
        %5351 = vrot.lane.b32.xlu0 %v5275, 64
        %v5352 = vpop.permute.xlu0 %5351
        %5353 = vrot.lane.b32.xlu0 %v5277, 64
        %v5354 = vpop.permute.xlu0 %5353
        %5355 = vrot.lane.b32.xlu0 %v5280, 64
        %v5356 = vpop.permute.xlu0 %5355
        %5357 = vrot.lane.b32.xlu0 %v5282, 64
        %v5358 = vpop.permute.xlu0 %5357
        %5359 = vrot.lane.b32.xlu0 %v5285, 64
        %v5360 = vpop.permute.xlu0 %5359
        %5361 = vrot.lane.b32.xlu0 %v5287, 64
        %v5362 = vpop.permute.xlu0 %5361
        %5363 = vrot.lane.b32.xlu0 %v5290, 64
        %v5364 = vpop.permute.xlu0 %5363
        %5365 = vrot.lane.b32.xlu0 %v5292, 64
        %v5366 = vpop.permute.xlu0 %5365
        %5367 = vrot.lane.b32.xlu0 %v5295, 64
        %v5368 = vpop.permute.xlu0 %5367
        %5369 = vrot.lane.b32.xlu0 %v5297, 64
        %v5370 = vpop.permute.xlu0 %5369
        %5371 = vrot.lane.b32.xlu0 %v5300, 64
        %v5372 = vpop.permute.xlu0 %5371
        %5373 = vrot.lane.b32.xlu0 %v5302, 64
        %v5374 = vpop.permute.xlu0 %5373
        %5375 = vrot.lane.b32.xlu0 %v5305, 64
        %v5376 = vpop.permute.xlu0 %5375
        %5377 = vrot.lane.b32.xlu0 %v5307, 64
        %v5378 = vpop.permute.xlu0 %5377
        %5379 = vrot.lane.b32.xlu0 %v5310, 64
        %v5380 = vpop.permute.xlu0 %5379
        %5381 = vrot.lane.b32.xlu0 %v5312, 64
        %v5382 = vpop.permute.xlu0 %5381
        %5383 = vrot.lane.b32.xlu0 %v5315, 64
        %v5384 = vpop.permute.xlu0 %5383
        %5385 = vrot.lane.b32.xlu0 %v5317, 64
        %v5386 = vpop.permute.xlu0 %5385
        %5387 = vrot.lane.b32.xlu0 %v5320, 64
        %v5388 = vpop.permute.xlu0 %5387
        %5389 = vrot.lane.b32.xlu0 %v5322, 64
        %v5390 = vpop.permute.xlu0 %5389
        %5391 = vrot.lane.b32.xlu0 %v5325, 64
        %v5392 = vpop.permute.xlu0 %5391
        %5393 = vrot.lane.b32.xlu0 %v5327, 64
        %v5394 = vpop.permute.xlu0 %5393
        %5395 = vrot.lane.b32.xlu0 %v5330, 64
        %v5396 = vpop.permute.xlu0 %5395
        %5397 = vrot.lane.b32.xlu0 %v5332, 64
        %v5398 = vpop.permute.xlu0 %5397
        %5399 = vrot.lane.b32.xlu0 %v5335, 64
        %v5400 = vpop.permute.xlu0 %5399
        %5401 = vrot.lane.b32.xlu0 %v5337, 64
        %v5402 = vpop.permute.xlu0 %5401
        %5403 = vrot.lane.b32.xlu0 %v5340, 64
        %v5404 = vpop.permute.xlu0 %5403
        %5405 = vrot.lane.b32.xlu0 %v5342, 64
        %v5406 = vpop.permute.xlu0 %5405
        %v5439 = vrot.slane %v4911, 4
        %v5440 = vrot.slane %v4817, 4
        %v5441 = vsel %vm2023, %v5439, %v5440
        %v5442 = vrot.slane %v4927, 4
        %v5443 = vsel %vm2023, %v5440, %v5442
        %v5444 = vrot.slane %v4912, 4
        %v5445 = vrot.slane %v4820, 4
        %v5446 = vsel %vm2023, %v5444, %v5445
        %v5447 = vrot.slane %v4928, 4
        %v5448 = vsel %vm2023, %v5445, %v5447
        %v5449 = vrot.slane %v4913, 4
        %v5450 = vrot.slane %v4823, 4
        %v5451 = vsel %vm2023, %v5449, %v5450
        %v5452 = vrot.slane %v4929, 4
        %v5453 = vsel %vm2023, %v5450, %v5452
        %v5454 = vrot.slane %v4914, 4
        %v5455 = vrot.slane %v4826, 4
        %v5456 = vsel %vm2023, %v5454, %v5455
        %v5457 = vrot.slane %v4930, 4
        %v5458 = vsel %vm2023, %v5455, %v5457
        %v5459 = vrot.slane %v4915, 4
        %v5460 = vrot.slane %v4829, 4
        %v5461 = vsel %vm2023, %v5459, %v5460
        %v5462 = vrot.slane %v4931, 4
        %v5463 = vsel %vm2023, %v5460, %v5462
        %v5464 = vrot.slane %v4916, 4
        %v5465 = vrot.slane %v4832, 4
        %v5466 = vsel %vm2023, %v5464, %v5465
        %v5467 = vrot.slane %v4932, 4
        %v5468 = vsel %vm2023, %v5465, %v5467
        %v5469 = vrot.slane %v4917, 4
        %v5470 = vrot.slane %v4835, 4
        %v5471 = vsel %vm2023, %v5469, %v5470
        %v5472 = vrot.slane %v4933, 4
        %v5473 = vsel %vm2023, %v5470, %v5472
        %v5474 = vrot.slane %v4918, 4
        %v5475 = vrot.slane %v4838, 4
        %v5476 = vsel %vm2023, %v5474, %v5475
        %v5477 = vrot.slane %v4934, 4
        %v5478 = vsel %vm2023, %v5475, %v5477
        %v5479 = vrot.slane %v4919, 4
        %v5480 = vrot.slane %v4841, 4
        %v5481 = vsel %vm2023, %v5479, %v5480
        %v5482 = vrot.slane %v4935, 4
        %v5483 = vsel %vm2023, %v5480, %v5482
        %v5484 = vrot.slane %v4920, 4
        %v5485 = vrot.slane %v4844, 4
        %v5486 = vsel %vm2023, %v5484, %v5485
        %v5487 = vrot.slane %v4936, 4
        %v5488 = vsel %vm2023, %v5485, %v5487
        %v5489 = vrot.slane %v4921, 4
        %v5490 = vrot.slane %v4847, 4
        %v5491 = vsel %vm2023, %v5489, %v5490
        %v5492 = vrot.slane %v4937, 4
        %v5493 = vsel %vm2023, %v5490, %v5492
        %v5494 = vrot.slane %v4922, 4
        %v5495 = vrot.slane %v4850, 4
        %v5496 = vsel %vm2023, %v5494, %v5495
        %v5497 = vrot.slane %v4938, 4
        %v5498 = vsel %vm2023, %v5495, %v5497
        %v5499 = vrot.slane %v4923, 4
        %v5500 = vrot.slane %v4853, 4
        %v5501 = vsel %vm2023, %v5499, %v5500
        %v5502 = vrot.slane %v4939, 4
        %v5503 = vsel %vm2023, %v5500, %v5502
        %v5504 = vrot.slane %v4924, 4
        %v5505 = vrot.slane %v4856, 4
        %v5506 = vsel %vm2023, %v5504, %v5505
        %v5507 = vrot.slane %v4940, 4
        %v5508 = vsel %vm2023, %v5505, %v5507
        %v5509 = vrot.slane %v4925, 4
        %v5510 = vrot.slane %v4859, 4
        %v5511 = vsel %vm2023, %v5509, %v5510
        %v5512 = vrot.slane %v4941, 4
        %v5513 = vsel %vm2023, %v5510, %v5512
        %v5514 = vrot.slane %v4926, 4
        %v5515 = vrot.slane %v4862, 4
        %v5516 = vsel %vm2023, %v5514, %v5515
        %v5517 = vrot.slane %v4942, 4
        %v5518 = vsel %vm2023, %v5515, %v5517
        %v5551 = vrot.slane %v4911, 5
        %v5552 = vrot.slane %v4817, 5
        %v5553 = vsel %vm1300, %v5551, %v5552
        %v5554 = vrot.slane %v4927, 5
        %v5555 = vsel %vm1300, %v5552, %v5554
        %v5556 = vrot.slane %v4912, 5
        %v5557 = vrot.slane %v4820, 5
        %v5558 = vsel %vm1300, %v5556, %v5557
        %v5559 = vrot.slane %v4928, 5
        %v5560 = vsel %vm1300, %v5557, %v5559
        %v5561 = vrot.slane %v4913, 5
        %v5562 = vrot.slane %v4823, 5
        %v5563 = vsel %vm1300, %v5561, %v5562
        %v5564 = vrot.slane %v4929, 5
        %v5565 = vsel %vm1300, %v5562, %v5564
        %v5566 = vrot.slane %v4914, 5
        %v5567 = vrot.slane %v4826, 5
        %v5568 = vsel %vm1300, %v5566, %v5567
        %v5569 = vrot.slane %v4930, 5
        %v5570 = vsel %vm1300, %v5567, %v5569
        %v5571 = vrot.slane %v4915, 5
        %v5572 = vrot.slane %v4829, 5
        %v5573 = vsel %vm1300, %v5571, %v5572
        %v5574 = vrot.slane %v4931, 5
        %v5575 = vsel %vm1300, %v5572, %v5574
        %v5576 = vrot.slane %v4916, 5
        %v5577 = vrot.slane %v4832, 5
        %v5578 = vsel %vm1300, %v5576, %v5577
        %v5579 = vrot.slane %v4932, 5
        %v5580 = vsel %vm1300, %v5577, %v5579
        %v5581 = vrot.slane %v4917, 5
        %v5582 = vrot.slane %v4835, 5
        %v5583 = vsel %vm1300, %v5581, %v5582
        %v5584 = vrot.slane %v4933, 5
        %v5585 = vsel %vm1300, %v5582, %v5584
        %v5586 = vrot.slane %v4918, 5
        %v5587 = vrot.slane %v4838, 5
        %v5588 = vsel %vm1300, %v5586, %v5587
        %v5589 = vrot.slane %v4934, 5
        %v5590 = vsel %vm1300, %v5587, %v5589
        %v5591 = vrot.slane %v4919, 5
        %v5592 = vrot.slane %v4841, 5
        %v5593 = vsel %vm1300, %v5591, %v5592
        %v5594 = vrot.slane %v4935, 5
        %v5595 = vsel %vm1300, %v5592, %v5594
        %v5596 = vrot.slane %v4920, 5
        %v5597 = vrot.slane %v4844, 5
        %v5598 = vsel %vm1300, %v5596, %v5597
        %v5599 = vrot.slane %v4936, 5
        %v5600 = vsel %vm1300, %v5597, %v5599
        %v5601 = vrot.slane %v4921, 5
        %v5602 = vrot.slane %v4847, 5
        %v5603 = vsel %vm1300, %v5601, %v5602
        %v5604 = vrot.slane %v4937, 5
        %v5605 = vsel %vm1300, %v5602, %v5604
        %v5606 = vrot.slane %v4922, 5
        %v5607 = vrot.slane %v4850, 5
        %v5608 = vsel %vm1300, %v5606, %v5607
        %v5609 = vrot.slane %v4938, 5
        %v5610 = vsel %vm1300, %v5607, %v5609
        %v5611 = vrot.slane %v4923, 5
        %v5612 = vrot.slane %v4853, 5
        %v5613 = vsel %vm1300, %v5611, %v5612
        %v5614 = vrot.slane %v4939, 5
        %v5615 = vsel %vm1300, %v5612, %v5614
        %v5616 = vrot.slane %v4924, 5
        %v5617 = vrot.slane %v4856, 5
        %v5618 = vsel %vm1300, %v5616, %v5617
        %v5619 = vrot.slane %v4940, 5
        %v5620 = vsel %vm1300, %v5617, %v5619
        %v5621 = vrot.slane %v4925, 5
        %v5622 = vrot.slane %v4859, 5
        %v5623 = vsel %vm1300, %v5621, %v5622
        %v5624 = vrot.slane %v4941, 5
        %v5625 = vsel %vm1300, %v5622, %v5624
        %v5626 = vrot.slane %v4926, 5
        %v5627 = vrot.slane %v4862, 5
        %v5628 = vsel %vm1300, %v5626, %v5627
        %v5629 = vrot.slane %v4942, 5
        %v5630 = vsel %vm1300, %v5627, %v5629
        %5631 = vrot.lane.b32.xlu0 %v5553, 64
        %v5632 = vpop.permute.xlu0 %5631
        %5633 = vrot.lane.b32.xlu0 %v5555, 64
        %v5634 = vpop.permute.xlu0 %5633
        %5635 = vrot.lane.b32.xlu0 %v5558, 64
        %v5636 = vpop.permute.xlu0 %5635
        %5637 = vrot.lane.b32.xlu0 %v5560, 64
        %v5638 = vpop.permute.xlu0 %5637
        %5639 = vrot.lane.b32.xlu0 %v5563, 64
        %v5640 = vpop.permute.xlu0 %5639
        %5641 = vrot.lane.b32.xlu0 %v5565, 64
        %v5642 = vpop.permute.xlu0 %5641
        %5643 = vrot.lane.b32.xlu0 %v5568, 64
        %v5644 = vpop.permute.xlu0 %5643
        %5645 = vrot.lane.b32.xlu0 %v5570, 64
        %v5646 = vpop.permute.xlu0 %5645
        %5647 = vrot.lane.b32.xlu0 %v5573, 64
        %v5648 = vpop.permute.xlu0 %5647
        %5649 = vrot.lane.b32.xlu0 %v5575, 64
        %v5650 = vpop.permute.xlu0 %5649
        %5651 = vrot.lane.b32.xlu0 %v5578, 64
        %v5652 = vpop.permute.xlu0 %5651
        %5653 = vrot.lane.b32.xlu0 %v5580, 64
        %v5654 = vpop.permute.xlu0 %5653
        %5655 = vrot.lane.b32.xlu0 %v5583, 64
        %v5656 = vpop.permute.xlu0 %5655
        %5657 = vrot.lane.b32.xlu0 %v5585, 64
        %v5658 = vpop.permute.xlu0 %5657
        %5659 = vrot.lane.b32.xlu0 %v5588, 64
        %v5660 = vpop.permute.xlu0 %5659
        %5661 = vrot.lane.b32.xlu0 %v5590, 64
        %v5662 = vpop.permute.xlu0 %5661
        %5663 = vrot.lane.b32.xlu0 %v5593, 64
        %v5664 = vpop.permute.xlu0 %5663
        %5665 = vrot.lane.b32.xlu0 %v5595, 64
        %v5666 = vpop.permute.xlu0 %5665
        %5667 = vrot.lane.b32.xlu0 %v5598, 64
        %v5668 = vpop.permute.xlu0 %5667
        %5669 = vrot.lane.b32.xlu0 %v5600, 64
        %v5670 = vpop.permute.xlu0 %5669
        %5671 = vrot.lane.b32.xlu0 %v5603, 64
        %v5672 = vpop.permute.xlu0 %5671
        %5673 = vrot.lane.b32.xlu0 %v5605, 64
        %v5674 = vpop.permute.xlu0 %5673
        %5675 = vrot.lane.b32.xlu0 %v5608, 64
        %v5676 = vpop.permute.xlu0 %5675
        %5677 = vrot.lane.b32.xlu0 %v5610, 64
        %v5678 = vpop.permute.xlu0 %5677
        %5679 = vrot.lane.b32.xlu0 %v5613, 64
        %v5680 = vpop.permute.xlu0 %5679
        %5681 = vrot.lane.b32.xlu0 %v5615, 64
        %v5682 = vpop.permute.xlu0 %5681
        %5683 = vrot.lane.b32.xlu0 %v5618, 64
        %v5684 = vpop.permute.xlu0 %5683
        %5685 = vrot.lane.b32.xlu0 %v5620, 64
        %v5686 = vpop.permute.xlu0 %5685
        %5687 = vrot.lane.b32.xlu0 %v5623, 64
        %v5688 = vpop.permute.xlu0 %5687
        %5689 = vrot.lane.b32.xlu0 %v5625, 64
        %v5690 = vpop.permute.xlu0 %5689
        %5691 = vrot.lane.b32.xlu0 %v5628, 64
        %v5692 = vpop.permute.xlu0 %5691
        %5693 = vrot.lane.b32.xlu0 %v5630, 64
        %v5694 = vpop.permute.xlu0 %5693
        %v5727 = vrot.slane %v4911, 6
        %v5728 = vrot.slane %v4817, 6
        %v5729 = vsel %vm2312, %v5727, %v5728
        %v5730 = vrot.slane %v4927, 6
        %v5731 = vsel %vm2312, %v5728, %v5730
        %v5732 = vrot.slane %v4912, 6
        %v5733 = vrot.slane %v4820, 6
        %v5734 = vsel %vm2312, %v5732, %v5733
        %v5735 = vrot.slane %v4928, 6
        %v5736 = vsel %vm2312, %v5733, %v5735
        %v5737 = vrot.slane %v4913, 6
        %v5738 = vrot.slane %v4823, 6
        %v5739 = vsel %vm2312, %v5737, %v5738
        %v5740 = vrot.slane %v4929, 6
        %v5741 = vsel %vm2312, %v5738, %v5740
        %v5742 = vrot.slane %v4914, 6
        %v5743 = vrot.slane %v4826, 6
        %v5744 = vsel %vm2312, %v5742, %v5743
        %v5745 = vrot.slane %v4930, 6
        %v5746 = vsel %vm2312, %v5743, %v5745
        %v5747 = vrot.slane %v4915, 6
        %v5748 = vrot.slane %v4829, 6
        %v5749 = vsel %vm2312, %v5747, %v5748
        %v5750 = vrot.slane %v4931, 6
        %v5751 = vsel %vm2312, %v5748, %v5750
        %v5752 = vrot.slane %v4916, 6
        %v5753 = vrot.slane %v4832, 6
        %v5754 = vsel %vm2312, %v5752, %v5753
        %v5755 = vrot.slane %v4932, 6
        %v5756 = vsel %vm2312, %v5753, %v5755
        %v5757 = vrot.slane %v4917, 6
        %v5758 = vrot.slane %v4835, 6
        %v5759 = vsel %vm2312, %v5757, %v5758
        %v5760 = vrot.slane %v4933, 6
        %v5761 = vsel %vm2312, %v5758, %v5760
        %v5762 = vrot.slane %v4918, 6
        %v5763 = vrot.slane %v4838, 6
        %v5764 = vsel %vm2312, %v5762, %v5763
        %v5765 = vrot.slane %v4934, 6
        %v5766 = vsel %vm2312, %v5763, %v5765
        %v5767 = vrot.slane %v4919, 6
        %v5768 = vrot.slane %v4841, 6
        %v5769 = vsel %vm2312, %v5767, %v5768
        %v5770 = vrot.slane %v4935, 6
        %v5771 = vsel %vm2312, %v5768, %v5770
        %v5772 = vrot.slane %v4920, 6
        %v5773 = vrot.slane %v4844, 6
        %v5774 = vsel %vm2312, %v5772, %v5773
        %v5775 = vrot.slane %v4936, 6
        %v5776 = vsel %vm2312, %v5773, %v5775
        %v5777 = vrot.slane %v4921, 6
        %v5778 = vrot.slane %v4847, 6
        %v5779 = vsel %vm2312, %v5777, %v5778
        %v5780 = vrot.slane %v4937, 6
        %v5781 = vsel %vm2312, %v5778, %v5780
        %v5782 = vrot.slane %v4922, 6
        %v5783 = vrot.slane %v4850, 6
        %v5784 = vsel %vm2312, %v5782, %v5783
        %v5785 = vrot.slane %v4938, 6
        %v5786 = vsel %vm2312, %v5783, %v5785
        %v5787 = vrot.slane %v4923, 6
        %v5788 = vrot.slane %v4853, 6
        %v5789 = vsel %vm2312, %v5787, %v5788
        %v5790 = vrot.slane %v4939, 6
        %v5791 = vsel %vm2312, %v5788, %v5790
        %v5792 = vrot.slane %v4924, 6
        %v5793 = vrot.slane %v4856, 6
        %v5794 = vsel %vm2312, %v5792, %v5793
        %v5795 = vrot.slane %v4940, 6
        %v5796 = vsel %vm2312, %v5793, %v5795
        %v5797 = vrot.slane %v4925, 6
        %v5798 = vrot.slane %v4859, 6
        %v5799 = vsel %vm2312, %v5797, %v5798
        %v5800 = vrot.slane %v4941, 6
        %v5801 = vsel %vm2312, %v5798, %v5800
        %v5802 = vrot.slane %v4926, 6
        %v5803 = vrot.slane %v4862, 6
        %v5804 = vsel %vm2312, %v5802, %v5803
        %v5805 = vrot.slane %v4942, 6
        %v5806 = vsel %vm2312, %v5803, %v5805
        %v5807 = vsel %vm2393, %v4911, %v5056
        %v5808 = vsel %vm2393, %v4817, %v5058
        %v5809 = vsel %vm2393, %v4912, %v5060
        %v5810 = vsel %vm2393, %v4820, %v5062
        %v5811 = vsel %vm2393, %v4913, %v5064
        %v5812 = vsel %vm2393, %v4823, %v5066
        %v5813 = vsel %vm2393, %v4914, %v5068
        %v5814 = vsel %vm2393, %v4826, %v5070
        %v5815 = vsel %vm2393, %v4915, %v5072
        %v5816 = vsel %vm2393, %v4829, %v5074
        %v5817 = vsel %vm2393, %v4916, %v5076
        %v5818 = vsel %vm2393, %v4832, %v5078
        %v5819 = vsel %vm2393, %v4917, %v5080
        %v5820 = vsel %vm2393, %v4835, %v5082
        %v5821 = vsel %vm2393, %v4918, %v5084
        %v5822 = vsel %vm2393, %v4838, %v5086
        %v5823 = vsel %vm2393, %v4919, %v5088
        %v5824 = vsel %vm2393, %v4841, %v5090
        %v5825 = vsel %vm2393, %v4920, %v5092
        %v5826 = vsel %vm2393, %v4844, %v5094
        %v5827 = vsel %vm2393, %v4921, %v5096
        %v5828 = vsel %vm2393, %v4847, %v5098
        %v5829 = vsel %vm2393, %v4922, %v5100
        %v5830 = vsel %vm2393, %v4850, %v5102
        %v5831 = vsel %vm2393, %v4923, %v5104
        %v5832 = vsel %vm2393, %v4853, %v5106
        %v5833 = vsel %vm2393, %v4924, %v5108
        %v5834 = vsel %vm2393, %v4856, %v5110
        %v5835 = vsel %vm2393, %v4925, %v5112
        %v5836 = vsel %vm2393, %v4859, %v5114
        %v5837 = vsel %vm2393, %v4926, %v5116
        %v5838 = vsel %vm2393, %v4862, %v5118
        %v5839 = vsel %vm2393, %v5153, %v5344
        %v5840 = vsel %vm2393, %v5155, %v5346
        %v5841 = vsel %vm2393, %v5158, %v5348
        %v5842 = vsel %vm2393, %v5160, %v5350
        %v5843 = vsel %vm2393, %v5163, %v5352
        %v5844 = vsel %vm2393, %v5165, %v5354
        %v5845 = vsel %vm2393, %v5168, %v5356
        %v5846 = vsel %vm2393, %v5170, %v5358
        %v5847 = vsel %vm2393, %v5173, %v5360
        %v5848 = vsel %vm2393, %v5175, %v5362
        %v5849 = vsel %vm2393, %v5178, %v5364
        %v5850 = vsel %vm2393, %v5180, %v5366
        %v5851 = vsel %vm2393, %v5183, %v5368
        %v5852 = vsel %vm2393, %v5185, %v5370
        %v5853 = vsel %vm2393, %v5188, %v5372
        %v5854 = vsel %vm2393, %v5190, %v5374
        %v5855 = vsel %vm2393, %v5193, %v5376
        %v5856 = vsel %vm2393, %v5195, %v5378
        %v5857 = vsel %vm2393, %v5198, %v5380
        %v5858 = vsel %vm2393, %v5200, %v5382
        %v5859 = vsel %vm2393, %v5203, %v5384
        %v5860 = vsel %vm2393, %v5205, %v5386
        %v5861 = vsel %vm2393, %v5208, %v5388
        %v5862 = vsel %vm2393, %v5210, %v5390
        %v5863 = vsel %vm2393, %v5213, %v5392
        %v5864 = vsel %vm2393, %v5215, %v5394
        %v5865 = vsel %vm2393, %v5218, %v5396
        %v5866 = vsel %vm2393, %v5220, %v5398
        %v5867 = vsel %vm2393, %v5223, %v5400
        %v5868 = vsel %vm2393, %v5225, %v5402
        %v5869 = vsel %vm2393, %v5228, %v5404
        %v5870 = vsel %vm2393, %v5230, %v5406
        %v5871 = vsel %vm2393, %v5441, %v5632
        %v5872 = vsel %vm2393, %v5443, %v5634
        %v5873 = vsel %vm2393, %v5446, %v5636
        %v5874 = vsel %vm2393, %v5448, %v5638
        %v5875 = vsel %vm2393, %v5451, %v5640
        %v5876 = vsel %vm2393, %v5453, %v5642
        %v5877 = vsel %vm2393, %v5456, %v5644
        %v5878 = vsel %vm2393, %v5458, %v5646
        %v5879 = vsel %vm2393, %v5461, %v5648
        %v5880 = vsel %vm2393, %v5463, %v5650
        %v5881 = vsel %vm2393, %v5466, %v5652
        %v5882 = vsel %vm2393, %v5468, %v5654
        %v5883 = vsel %vm2393, %v5471, %v5656
        %v5884 = vsel %vm2393, %v5473, %v5658
        %v5885 = vsel %vm2393, %v5476, %v5660
        %v5886 = vsel %vm2393, %v5478, %v5662
        %v5887 = vsel %vm2393, %v5481, %v5664
        %v5888 = vsel %vm2393, %v5483, %v5666
        %v5889 = vsel %vm2393, %v5486, %v5668
        %v5890 = vsel %vm2393, %v5488, %v5670
        %v5891 = vsel %vm2393, %v5491, %v5672
        %v5892 = vsel %vm2393, %v5493, %v5674
        %v5893 = vsel %vm2393, %v5496, %v5676
        %v5894 = vsel %vm2393, %v5498, %v5678
        %v5895 = vsel %vm2393, %v5501, %v5680
        %v5896 = vsel %vm2393, %v5503, %v5682
        %v5897 = vsel %vm2393, %v5506, %v5684
        %v5898 = vsel %vm2393, %v5508, %v5686
        %v5899 = vsel %vm2393, %v5511, %v5688
        %v5900 = vsel %vm2393, %v5513, %v5690
        %v5901 = vsel %vm2393, %v5516, %v5692
        %v5902 = vsel %vm2393, %v5518, %v5694
        %v5903 = vld [vmem:[%s6] sm:$0xff]
        %v5904 = vld [vmem:[%s6 + $0x8] sm:$0xff]
        %v5905 = vld [vmem:[%s6 + $0x10] sm:$0xff]
        %v5906 = vld [vmem:[%s6 + $0x18] sm:$0xff]
        %v5907 = vld [vmem:[%s6 + $0x20] sm:$0xff]
        %v5908 = vld [vmem:[%s6 + $0x28] sm:$0xff]
        %v5909 = vld [vmem:[%s6 + $0x30] sm:$0xff]
        %v5910 = vld [vmem:[%s6 + $0x38] sm:$0xff]
        %v5911 = vld [vmem:[%s6 + $0x40] sm:$0xff]
        %v5912 = vld [vmem:[%s6 + $0x48] sm:$0xff]
        %v5913 = vld [vmem:[%s6 + $0x50] sm:$0xff]
        %v5914 = vld [vmem:[%s6 + $0x58] sm:$0xff]
        %v5915 = vld [vmem:[%s6 + $0x60] sm:$0xff]
        %v5916 = vld [vmem:[%s6 + $0x68] sm:$0xff]
        %v5917 = vld [vmem:[%s6 + $0x70] sm:$0xff]
        %v5918 = vld [vmem:[%s6 + $0x78] sm:$0xff]
        %v5919 = vld [vmem:[%s6 + $0x80] sm:$0xff]
        %v5920 = vld [vmem:[%s6 + $0x88] sm:$0xff]
        %v5921 = vld [vmem:[%s6 + $0x90] sm:$0xff]
        %v5922 = vld [vmem:[%s6 + $0x98] sm:$0xff]
        %v5923 = vld [vmem:[%s6 + $0xa0] sm:$0xff]
        %v5924 = vld [vmem:[%s6 + $0xa8] sm:$0xff]
        %v5925 = vld [vmem:[%s6 + $0xb0] sm:$0xff]
        %v5926 = vld [vmem:[%s6 + $0xb8] sm:$0xff]
        %v5927 = vld [vmem:[%s6 + $0xc0] sm:$0xff]
        %v5928 = vld [vmem:[%s6 + $0xc8] sm:$0xff]
        %v5929 = vld [vmem:[%s6 + $0xd0] sm:$0xff]
        %v5930 = vld [vmem:[%s6 + $0xd8] sm:$0xff]
        %v5931 = vld [vmem:[%s6 + $0xe0] sm:$0xff]
        %v5932 = vld [vmem:[%s6 + $0xe8] sm:$0xff]
        %v5933 = vld [vmem:[%s6 + $0xf0] sm:$0xff]
        %v5934 = vld [vmem:[%s6 + $0xf8] sm:$0xff]
        %v5935 = vld [vmem:[%s6 + $0x100] sm:$0xff]
        %v5936 = vld [vmem:[%s6 + $0x108] sm:$0xff]
        %v5937 = vld [vmem:[%s6 + $0x110] sm:$0xff]
        %v5938 = vld [vmem:[%s6 + $0x118] sm:$0xff]
        %v5939 = vld [vmem:[%s6 + $0x120] sm:$0xff]
        %v5940 = vld [vmem:[%s6 + $0x128] sm:$0xff]
        %v5941 = vld [vmem:[%s6 + $0x130] sm:$0xff]
        %v5942 = vld [vmem:[%s6 + $0x138] sm:$0xff]
        %v5943 = vld [vmem:[%s6 + $0x140] sm:$0xff]
        %v5944 = vld [vmem:[%s6 + $0x148] sm:$0xff]
        %v5945 = vld [vmem:[%s6 + $0x150] sm:$0xff]
        %v5946 = vld [vmem:[%s6 + $0x158] sm:$0xff]
        %v5947 = vld [vmem:[%s6 + $0x160] sm:$0xff]
        %v5948 = vld [vmem:[%s6 + $0x168] sm:$0xff]
        %v5949 = vld [vmem:[%s6 + $0x170] sm:$0xff]
        %v5950 = vld [vmem:[%s6 + $0x178] sm:$0xff]
        %v5951 = vld [vmem:[%s6 + $0x180] sm:$0xff]
        %v5952 = vld [vmem:[%s6 + $0x188] sm:$0xff]
        %v5953 = vld [vmem:[%s6 + $0x190] sm:$0xff]
        %v5954 = vld [vmem:[%s6 + $0x198] sm:$0xff]
        %v5955 = vld [vmem:[%s6 + $0x1a0] sm:$0xff]
        %v5956 = vld [vmem:[%s6 + $0x1a8] sm:$0xff]
        %v5957 = vld [vmem:[%s6 + $0x1b0] sm:$0xff]
        %v5958 = vld [vmem:[%s6 + $0x1b8] sm:$0xff]
        %v5960 = vlaneseq
        %v5961 = vshrl.u32 %v5960, 7
        %v5962 = vsub.s32 0, %v5961
        %v5963 = vrot.slane %v4782, %v5962
        %v5965 = vsel %vm2393, %v5729, 0
        %v5967 = vsel %vm2393, %v5731, 0
        %v5969 = vsel %vm2393, %v5734, 0
        %v5971 = vsel %vm2393, %v5736, 0
        %v5973 = vsel %vm2393, %v5739, 0
        %v5975 = vsel %vm2393, %v5741, 0
        %v5977 = vsel %vm2393, %v5744, 0
        %v5979 = vsel %vm2393, %v5746, 0
        %v5981 = vsel %vm2393, %v5749, 0
        %v5983 = vsel %vm2393, %v5751, 0
        %v5985 = vsel %vm2393, %v5754, 0
        %v5987 = vsel %vm2393, %v5756, 0
        %v5989 = vsel %vm2393, %v5759, 0
        %v5991 = vsel %vm2393, %v5761, 0
        %v5993 = vsel %vm2393, %v5764, 0
        %v5995 = vsel %vm2393, %v5766, 0
        %v5997 = vsel %vm2393, %v5769, 0
        %v5999 = vsel %vm2393, %v5771, 0
        %v6001 = vsel %vm2393, %v5774, 0
        %v6003 = vsel %vm2393, %v5776, 0
        %v6005 = vsel %vm2393, %v5779, 0
        %v6007 = vsel %vm2393, %v5781, 0
        %v6009 = vsel %vm2393, %v5784, 0
        %v6011 = vsel %vm2393, %v5786, 0
        %v6013 = vsel %vm2393, %v5789, 0
        %v6015 = vsel %vm2393, %v5791, 0
        %v6017 = vsel %vm2393, %v5794, 0
        %v6019 = vsel %vm2393, %v5796, 0
        %v6021 = vsel %vm2393, %v5799, 0
        %v6023 = vsel %vm2393, %v5801, 0
        %v6025 = vsel %vm2393, %v5804, 0
        %v6027 = vsel %vm2393, %v5806, 0
        %6029 = vmatprep.subr.mxu0 0.0
        %6030 = vmatpush1.msra.mxu0 %v5903
        %6031 = vmatprep.subr.mxu0 0.0
        %6032 = vmatpush1.msra.mxu0 %v5904
        %6033 = vmatprep.subr.mxu0 0.0
        %6034 = vmatpush1.msra.mxu0 %v5905
        %6035 = vmatprep.subr.mxu0 0.0
        %6036 = vmatpush1.msra.mxu0 %v5906
        %6037 = vmatprep.subr.mxu0 0.0
        %6038 = vmatpush1.msra.mxu0 %v5907
        %6039 = vmatprep.subr.mxu0 0.0
        %6040 = vmatpush1.msra.mxu0 %v5908
        %6041 = vmatprep.subr.mxu0 0.0
        %6042 = vmatpush1.msra.mxu0 %v5909
        %6043 = vmatprep.subr.mxu0 0.0
        %6044 = vmatpush1.msra.mxu0 %v5910
        %6045 = vmatprep.subr.mxu0 0.0
        %6046 = vmatpush1.msra.mxu0 %v5911
        %6047 = vmatprep.subr.mxu0 0.0
        %6048 = vmatpush1.msra.mxu0 %v5912
        %6049 = vmatprep.subr.mxu0 0.0
        %6050 = vmatpush1.msra.mxu0 %v5913
        %6051 = vmatprep.subr.mxu0 0.0
        %6052 = vmatpush1.msra.mxu0 %v5914
        %6053 = vmatprep.subr.mxu0 0.0
        %6054 = vmatpush1.msra.mxu0 %v5915
        %6055 = vmatprep.subr.mxu0 0.0
        %6056 = vmatpush1.msra.mxu0 %v5916
        %6057 = vmatprep.subr.mxu0 0.0
        %6058 = vmatpush1.msra.mxu0 %v5917
        %6059 = vmatprep.subr.mxu0 0.0
        %6060 = vmatpush1.msra.mxu0 %v5918
        %6061 = vmatprep.subr.mxu0 0.0
        %6062 = vmatpush1.msra.mxu0 %v5919
        %6063 = vmatprep.subr.mxu0 0.0
        %6064 = vmatpush1.msra.mxu0 %v5920
        %6065 = vmatprep.subr.mxu0 0.0
        %6066 = vmatpush1.msra.mxu0 %v5921
        %6067 = vmatprep.subr.mxu0 0.0
        %6068 = vmatpush1.msra.mxu0 %v5922
        %6069 = vmatprep.subr.mxu0 0.0
        %6070 = vmatpush1.msra.mxu0 %v5923
        %6071 = vmatprep.subr.mxu0 0.0
        %6072 = vmatpush1.msra.mxu0 %v5924
        %6073 = vmatprep.subr.mxu0 0.0
        %6074 = vmatpush1.msra.mxu0 %v5925
        %6075 = vmatprep.subr.mxu0 0.0
        %6076 = vmatpush1.msra.mxu0 %v5926
        %6077 = vmatprep.subr.mxu0 0.0
        %6078 = vmatpush1.msra.mxu0 %v5927
        %6079 = vmatprep.subr.mxu0 0.0
        %6080 = vmatpush1.msra.mxu0 %v5928
        %6081 = vmatprep.subr.mxu0 0.0
        %6082 = vmatpush1.msra.mxu0 %v5929
        %6083 = vmatprep.subr.mxu0 0.0
        %6084 = vmatpush1.msra.mxu0 %v5930
        %6085 = vmatprep.subr.mxu0 0.0
        %6086 = vmatpush1.msra.mxu0 %v5931
        %6087 = vmatprep.subr.mxu0 0.0
        %6088 = vmatpush1.msra.mxu0 %v5932
        %6089 = vmatprep.subr.mxu0 0.0
        %6090 = vmatpush1.msra.mxu0 %v5933
        %6091 = vmatprep.subr.mxu0 0.0
        %6092 = vmatpush1.msra.mxu0 %v5934
        %6093 = vmatprep.mubr.f32.mxu0 %v5839
        %6094 = vmatmul.mubr.f32.gmra.mrb[0].mxu0 %v5807
        %v6095 = vpop.f32.mrb[0].mxu0
        %v6096 = vadd.f32 %v5963, %v6095
        %v6097 = vpop.f32.mrb[0].mxu0
        %6098 = vmatprep.mubr.f32.mxu0 %v5840
        %6099 = vmatmul.mubr.f32.gmra.mrb[0].mxu0 %v5808
        %v6100 = vpop.f32.mrb[0].mxu0
        %v6101 = vadd.f32 %v5963, %v6100
        %v6102 = vpop.f32.mrb[0].mxu0
        %6103 = vmatprep.mubr.f32.mxu0 %v5841
        %6104 = vmatmul.mubr.f32.gmra.mrb[0].mxu0 %v5809
        %v6105 = vpop.f32.mrb[0].mxu0
        %v6106 = vadd.f32 %v5963, %v6105
        %v6107 = vpop.f32.mrb[0].mxu0
        %6108 = vmatprep.mubr.f32.mxu0 %v5842
        %6109 = vmatmul.mubr.f32.gmra.mrb[0].mxu0 %v5810
        %v6110 = vpop.f32.mrb[0].mxu0
        %v6111 = vadd.f32 %v5963, %v6110
        %v6112 = vpop.f32.mrb[0].mxu0
        %6113 = vmatprep.mubr.f32.mxu0 %v5843
        %6114 = vmatmul.mubr.f32.gmra.mrb[0].mxu0 %v5811
        %v6115 = vpop.f32.mrb[0].mxu0
        %v6116 = vadd.f32 %v5963, %v6115
        %v6117 = vpop.f32.mrb[0].mxu0
        %6118 = vmatprep.mubr.f32.mxu0 %v5844
        %6119 = vmatmul.mubr.f32.gmra.mrb[0].mxu0 %v5812
        %v6120 = vpop.f32.mrb[0].mxu0
        %v6121 = vadd.f32 %v5963, %v6120
        %v6122 = vpop.f32.mrb[0].mxu0
        %6123 = vmatprep.mubr.f32.mxu0 %v5845
        %6124 = vmatmul.mubr.f32.gmra.mrb[0].mxu0 %v5813
        %v6125 = vpop.f32.mrb[0].mxu0
        %v6126 = vadd.f32 %v5963, %v6125
        %v6127 = vpop.f32.mrb[0].mxu0
        %6128 = vmatprep.mubr.f32.mxu0 %v5846
        %6129 = vmatmul.mubr.f32.gmra.mrb[0].mxu0 %v5814
        %v6130 = vpop.f32.mrb[0].mxu0
        %v6131 = vadd.f32 %v5963, %v6130
        %v6132 = vpop.f32.mrb[0].mxu0
        %6133 = vmatprep.mubr.f32.mxu0 %v5847
        %6134 = vmatmul.mubr.f32.gmra.mrb[0].mxu0 %v5815
        %v6135 = vpop.f32.mrb[0].mxu0
        %v6136 = vadd.f32 %v5963, %v6135
        %v6137 = vpop.f32.mrb[0].mxu0
        %6138 = vmatprep.mubr.f32.mxu0 %v5848
        %6139 = vmatmul.mubr.f32.gmra.mrb[0].mxu0 %v5816
        %v6140 = vpop.f32.mrb[0].mxu0
        %v6141 = vadd.f32 %v5963, %v6140
        %v6142 = vpop.f32.mrb[0].mxu0
        %6143 = vmatprep.mubr.f32.mxu0 %v5849
        %6144 = vmatmul.mubr.f32.gmra.mrb[0].mxu0 %v5817
        %v6145 = vpop.f32.mrb[0].mxu0
        %v6146 = vadd.f32 %v5963, %v6145
        %v6147 = vpop.f32.mrb[0].mxu0
        %6148 = vmatprep.mubr.f32.mxu0 %v5850
        %6149 = vmatmul.mubr.f32.gmra.mrb[0].mxu0 %v5818
        %v6150 = vpop.f32.mrb[0].mxu0
        %v6151 = vadd.f32 %v5963, %v6150
        %v6152 = vpop.f32.mrb[0].mxu0
        %6153 = vmatprep.mubr.f32.mxu0 %v5851
        %6154 = vmatmul.mubr.f32.gmra.mrb[0].mxu0 %v5819
        %v6155 = vpop.f32.mrb[0].mxu0
        %v6156 = vadd.f32 %v5963, %v6155
        %v6157 = vpop.f32.mrb[0].mxu0
        %6158 = vmatprep.mubr.f32.mxu0 %v5852
        %6159 = vmatmul.mubr.f32.gmra.mrb[0].mxu0 %v5820
        %v6160 = vpop.f32.mrb[0].mxu0
        %v6161 = vadd.f32 %v5963, %v6160
        %v6162 = vpop.f32.mrb[0].mxu0
        %6163 = vmatprep.mubr.f32.mxu0 %v5853
        %6164 = vmatmul.mubr.f32.gmra.mrb[0].mxu0 %v5821
        %v6165 = vpop.f32.mrb[0].mxu0
        %v6166 = vadd.f32 %v5963, %v6165
        %v6167 = vpop.f32.mrb[0].mxu0
        %6168 = vmatprep.mubr.f32.mxu0 %v5854
        %6169 = vmatmul.mubr.f32.gmra.mrb[0].mxu0 %v5822
        %v6170 = vpop.f32.mrb[0].mxu0
        %v6171 = vadd.f32 %v5963, %v6170
        %v6172 = vpop.f32.mrb[0].mxu0
        %6173 = vmatprep.mubr.f32.mxu0 %v5855
        %6174 = vmatmul.mubr.f32.gmra.mrb[0].mxu0 %v5823
        %v6175 = vpop.f32.mrb[0].mxu0
        %v6176 = vadd.f32 %v5963, %v6175
        %v6177 = vpop.f32.mrb[0].mxu0
        %6178 = vmatprep.mubr.f32.mxu0 %v5856
        %6179 = vmatmul.mubr.f32.gmra.mrb[0].mxu0 %v5824
        %v6180 = vpop.f32.mrb[0].mxu0
        %v6181 = vadd.f32 %v5963, %v6180
        %v6182 = vpop.f32.mrb[0].mxu0
        %6183 = vmatprep.mubr.f32.mxu0 %v5857
        %6184 = vmatmul.mubr.f32.gmra.mrb[0].mxu0 %v5825
        %v6185 = vpop.f32.mrb[0].mxu0
        %v6186 = vadd.f32 %v5963, %v6185
        %v6187 = vpop.f32.mrb[0].mxu0
        %6188 = vmatprep.mubr.f32.mxu0 %v5858
        %6189 = vmatmul.mubr.f32.gmra.mrb[0].mxu0 %v5826
        %v6190 = vpop.f32.mrb[0].mxu0
        %v6191 = vadd.f32 %v5963, %v6190
        %v6192 = vpop.f32.mrb[0].mxu0
        %6193 = vmatprep.mubr.f32.mxu0 %v5859
        %6194 = vmatmul.mubr.f32.gmra.mrb[0].mxu0 %v5827
        %v6195 = vpop.f32.mrb[0].mxu0
        %v6196 = vadd.f32 %v5963, %v6195
        %v6197 = vpop.f32.mrb[0].mxu0
        %6198 = vmatprep.mubr.f32.mxu0 %v5860
        %6199 = vmatmul.mubr.f32.gmra.mrb[0].mxu0 %v5828
        %v6200 = vpop.f32.mrb[0].mxu0
        %v6201 = vadd.f32 %v5963, %v6200
        %v6202 = vpop.f32.mrb[0].mxu0
        %6203 = vmatprep.mubr.f32.mxu0 %v5861
        %6204 = vmatmul.mubr.f32.gmra.mrb[0].mxu0 %v5829
        %v6205 = vpop.f32.mrb[0].mxu0
        %v6206 = vadd.f32 %v5963, %v6205
        %v6207 = vpop.f32.mrb[0].mxu0
        %6208 = vmatprep.mubr.f32.mxu0 %v5862
        %6209 = vmatmul.mubr.f32.gmra.mrb[0].mxu0 %v5830
        %v6210 = vpop.f32.mrb[0].mxu0
        %v6211 = vadd.f32 %v5963, %v6210
        %v6212 = vpop.f32.mrb[0].mxu0
        %6213 = vmatprep.mubr.f32.mxu0 %v5863
        %6214 = vmatmul.mubr.f32.gmra.mrb[0].mxu0 %v5831
        %v6215 = vpop.f32.mrb[0].mxu0
        %v6216 = vadd.f32 %v5963, %v6215
        %v6217 = vpop.f32.mrb[0].mxu0
        %6218 = vmatprep.mubr.f32.mxu0 %v5864
        %6219 = vmatmul.mubr.f32.gmra.mrb[0].mxu0 %v5832
        %v6220 = vpop.f32.mrb[0].mxu0
        %v6221 = vadd.f32 %v5963, %v6220
        %v6222 = vpop.f32.mrb[0].mxu0
        %6223 = vmatprep.mubr.f32.mxu0 %v5865
        %6224 = vmatmul.mubr.f32.gmra.mrb[0].mxu0 %v5833
        %v6225 = vpop.f32.mrb[0].mxu0
        %v6226 = vadd.f32 %v5963, %v6225
        %v6227 = vpop.f32.mrb[0].mxu0
        %6228 = vmatprep.mubr.f32.mxu0 %v5866
        %6229 = vmatmul.mubr.f32.gmra.mrb[0].mxu0 %v5834
        %v6230 = vpop.f32.mrb[0].mxu0
        %v6231 = vadd.f32 %v5963, %v6230
        %v6232 = vpop.f32.mrb[0].mxu0
        %6233 = vmatprep.mubr.f32.mxu0 %v5867
        %6234 = vmatmul.mubr.f32.gmra.mrb[0].mxu0 %v5835
        %v6235 = vpop.f32.mrb[0].mxu0
        %v6236 = vadd.f32 %v5963, %v6235
        %v6237 = vpop.f32.mrb[0].mxu0
        %6238 = vmatprep.mubr.f32.mxu0 %v5868
        %6239 = vmatmul.mubr.f32.gmra.mrb[0].mxu0 %v5836
        %v6240 = vpop.f32.mrb[0].mxu0
        %v6241 = vadd.f32 %v5963, %v6240
        %v6242 = vpop.f32.mrb[0].mxu0
        %6243 = vmatprep.mubr.f32.mxu0 %v5869
        %6244 = vmatmul.mubr.f32.gmra.mrb[0].mxu0 %v5837
        %v6245 = vpop.f32.mrb[0].mxu0
        %v6246 = vadd.f32 %v5963, %v6245
        %v6247 = vpop.f32.mrb[0].mxu0
        %6248 = vmatprep.mubr.f32.mxu0 %v5870
        %6249 = vmatmul.mubr.f32.gmra.mrb[0].mxu0 %v5838
        %v6250 = vpop.f32.mrb[0].mxu0
        %v6251 = vadd.f32 %v5963, %v6250
        %v6252 = vpop.f32.mrb[0].mxu0
        %6253 = vdwg.mxu0
        %6254 = vmatprep.subr.mxu0 0.0
        %6255 = vmatpush1.msra.mxu0 %v5935
        %6256 = vmatprep.subr.mxu0 0.0
        %6257 = vmatpush1.msra.mxu0 %v5936
        %6258 = vmatprep.subr.mxu0 0.0
        %6259 = vmatpush1.msra.mxu0 %v5937
        %6260 = vmatprep.subr.mxu0 0.0
        %6261 = vmatpush1.msra.mxu0 %v5938
        %6262 = vmatprep.subr.mxu0 0.0
        %6263 = vmatpush1.msra.mxu0 %v5939
        %6264 = vmatprep.subr.mxu0 0.0
        %6265 = vmatpush1.msra.mxu0 %v5940
        %6266 = vmatprep.subr.mxu0 0.0
        %6267 = vmatpush1.msra.mxu0 %v5941
        %6268 = vmatprep.subr.mxu0 0.0
        %6269 = vmatpush1.msra.mxu0 %v5942
        %6270 = vmatprep.subr.mxu0 0.0
        %6271 = vmatpush1.msra.mxu0 %v5943
        %6272 = vmatprep.subr.mxu0 0.0
        %6273 = vmatpush1.msra.mxu0 %v5944
        %6274 = vmatprep.subr.mxu0 0.0
        %6275 = vmatpush1.msra.mxu0 %v5945
        %6276 = vmatprep.subr.mxu0 0.0
        %6277 = vmatpush1.msra.mxu0 %v5946
        %6278 = vmatprep.subr.mxu0 0.0
        %6279 = vmatpush1.msra.mxu0 %v5947
        %6280 = vmatprep.subr.mxu0 0.0
        %6281 = vmatpush1.msra.mxu0 %v5948
        %6282 = vmatprep.subr.mxu0 0.0
        %6283 = vmatpush1.msra.mxu0 %v5949
        %6284 = vmatprep.subr.mxu0 0.0
        %6285 = vmatpush1.msra.mxu0 %v5950
        %6286 = vmatprep.subr.mxu0 0.0
        %6287 = vmatpush1.msra.mxu0 %v5951
        %6288 = vmatprep.subr.mxu0 0.0
        %6289 = vmatpush1.msra.mxu0 %v5952
        %6290 = vmatprep.subr.mxu0 0.0
        %6291 = vmatpush1.msra.mxu0 %v5953
        %6292 = vmatprep.subr.mxu0 0.0
        %6293 = vmatpush1.msra.mxu0 %v5954
        %6294 = vmatprep.subr.mxu0 0.0
        %6295 = vmatpush1.msra.mxu0 %v5955
        %6296 = vmatprep.subr.mxu0 0.0
        %6297 = vmatpush1.msra.mxu0 %v5956
        %6298 = vmatprep.subr.mxu0 0.0
        %6299 = vmatpush1.msra.mxu0 %v5957
        %6300 = vmatprep.subr.mxu0 0.0
        %6301 = vmatpush1.msra.mxu0 %v5958
        %6302 = vmatprep.subr.mxu0 0.0
        %6303 = vmatpush1.msra.mxu0 0.0
        %6304 = vmatprep.subr.mxu0 0.0
        %6305 = vmatpush1.msra.mxu0 0.0
        %6306 = vmatprep.subr.mxu0 0.0
        %6307 = vmatpush1.msra.mxu0 0.0
        %6308 = vmatprep.subr.mxu0 0.0
        %6309 = vmatpush1.msra.mxu0 0.0
        %6310 = vmatprep.subr.mxu0 0.0
        %6311 = vmatpush1.msra.mxu0 0.0
        %6312 = vmatprep.subr.mxu0 0.0
        %6313 = vmatpush1.msra.mxu0 0.0
        %6314 = vmatprep.subr.mxu0 0.0
        %6315 = vmatpush1.msra.mxu0 0.0
        %6316 = vmatprep.subr.mxu0 0.0
        %6317 = vmatpush1.msra.mxu0 0.0
        %6318 = vmatprep.mubr.f32.mxu0 %v5965
        %6319 = vmatmul.mubr.f32.gmra.mrb[0].mxu0 %v5871
        %v6320 = vpop.f32.mrb[0].mxu0
        %v6321 = vadd.f32 %v6096, %v6320
        %v6322 = vpop.f32.mrb[0].mxu0
        %6323 = vmatprep.mubr.f32.mxu0 %v5967
        %6324 = vmatmul.mubr.f32.gmra.mrb[0].mxu0 %v5872
        %v6325 = vpop.f32.mrb[0].mxu0
        %v6326 = vadd.f32 %v6101, %v6325
        %v6327 = vpop.f32.mrb[0].mxu0
        %6328 = vmatprep.mubr.f32.mxu0 %v5969
        %6329 = vmatmul.mubr.f32.gmra.mrb[0].mxu0 %v5873
        %v6330 = vpop.f32.mrb[0].mxu0
        %v6331 = vadd.f32 %v6106, %v6330
        %v6332 = vpop.f32.mrb[0].mxu0
        %6333 = vmatprep.mubr.f32.mxu0 %v5971
        %6334 = vmatmul.mubr.f32.gmra.mrb[0].mxu0 %v5874
        %v6335 = vpop.f32.mrb[0].mxu0
        %v6336 = vadd.f32 %v6111, %v6335
        %v6337 = vpop.f32.mrb[0].mxu0
        %6338 = vmatprep.mubr.f32.mxu0 %v5973
        %6339 = vmatmul.mubr.f32.gmra.mrb[0].mxu0 %v5875
        %v6340 = vpop.f32.mrb[0].mxu0
        %v6341 = vadd.f32 %v6116, %v6340
        %v6342 = vpop.f32.mrb[0].mxu0
        %6343 = vmatprep.mubr.f32.mxu0 %v5975
        %6344 = vmatmul.mubr.f32.gmra.mrb[0].mxu0 %v5876
        %v6345 = vpop.f32.mrb[0].mxu0
        %v6346 = vadd.f32 %v6121, %v6345
        %v6347 = vpop.f32.mrb[0].mxu0
        %6348 = vmatprep.mubr.f32.mxu0 %v5977
        %6349 = vmatmul.mubr.f32.gmra.mrb[0].mxu0 %v5877
        %v6350 = vpop.f32.mrb[0].mxu0
        %v6351 = vadd.f32 %v6126, %v6350
        %v6352 = vpop.f32.mrb[0].mxu0
        %6353 = vmatprep.mubr.f32.mxu0 %v5979
        %6354 = vmatmul.mubr.f32.gmra.mrb[0].mxu0 %v5878
        %v6355 = vpop.f32.mrb[0].mxu0
        %v6356 = vadd.f32 %v6131, %v6355
        %v6357 = vpop.f32.mrb[0].mxu0
        %6358 = vmatprep.mubr.f32.mxu0 %v5981
        %6359 = vmatmul.mubr.f32.gmra.mrb[0].mxu0 %v5879
        %v6360 = vpop.f32.mrb[0].mxu0
        %v6361 = vadd.f32 %v6136, %v6360
        %v6362 = vpop.f32.mrb[0].mxu0
        %6363 = vmatprep.mubr.f32.mxu0 %v5983
        %6364 = vmatmul.mubr.f32.gmra.mrb[0].mxu0 %v5880
        %v6365 = vpop.f32.mrb[0].mxu0
        %v6366 = vadd.f32 %v6141, %v6365
        %v6367 = vpop.f32.mrb[0].mxu0
        %6368 = vmatprep.mubr.f32.mxu0 %v5985
        %6369 = vmatmul.mubr.f32.gmra.mrb[0].mxu0 %v5881
        %v6370 = vpop.f32.mrb[0].mxu0
        %v6371 = vadd.f32 %v6146, %v6370
        %v6372 = vpop.f32.mrb[0].mxu0
        %6373 = vmatprep.mubr.f32.mxu0 %v5987
        %6374 = vmatmul.mubr.f32.gmra.mrb[0].mxu0 %v5882
        %v6375 = vpop.f32.mrb[0].mxu0
        %v6376 = vadd.f32 %v6151, %v6375
        %v6377 = vpop.f32.mrb[0].mxu0
        %6378 = vmatprep.mubr.f32.mxu0 %v5989
        %6379 = vmatmul.mubr.f32.gmra.mrb[0].mxu0 %v5883
        %v6380 = vpop.f32.mrb[0].mxu0
        %v6381 = vadd.f32 %v6156, %v6380
        %v6382 = vpop.f32.mrb[0].mxu0
        %6383 = vmatprep.mubr.f32.mxu0 %v5991
        %6384 = vmatmul.mubr.f32.gmra.mrb[0].mxu0 %v5884
        %v6385 = vpop.f32.mrb[0].mxu0
        %v6386 = vadd.f32 %v6161, %v6385
        %v6387 = vpop.f32.mrb[0].mxu0
        %6388 = vmatprep.mubr.f32.mxu0 %v5993
        %6389 = vmatmul.mubr.f32.gmra.mrb[0].mxu0 %v5885
        %v6390 = vpop.f32.mrb[0].mxu0
        %v6391 = vadd.f32 %v6166, %v6390
        %v6392 = vpop.f32.mrb[0].mxu0
        %6393 = vmatprep.mubr.f32.mxu0 %v5995
        %6394 = vmatmul.mubr.f32.gmra.mrb[0].mxu0 %v5886
        %v6395 = vpop.f32.mrb[0].mxu0
        %v6396 = vadd.f32 %v6171, %v6395
        %v6397 = vpop.f32.mrb[0].mxu0
        %6398 = vmatprep.mubr.f32.mxu0 %v5997
        %6399 = vmatmul.mubr.f32.gmra.mrb[0].mxu0 %v5887
        %v6400 = vpop.f32.mrb[0].mxu0
        %v6401 = vadd.f32 %v6176, %v6400
        %v6402 = vpop.f32.mrb[0].mxu0
        %6403 = vmatprep.mubr.f32.mxu0 %v5999
        %6404 = vmatmul.mubr.f32.gmra.mrb[0].mxu0 %v5888
        %v6405 = vpop.f32.mrb[0].mxu0
        %v6406 = vadd.f32 %v6181, %v6405
        %v6407 = vpop.f32.mrb[0].mxu0
        %6408 = vmatprep.mubr.f32.mxu0 %v6001
        %6409 = vmatmul.mubr.f32.gmra.mrb[0].mxu0 %v5889
        %v6410 = vpop.f32.mrb[0].mxu0
        %v6411 = vadd.f32 %v6186, %v6410
        %v6412 = vpop.f32.mrb[0].mxu0
        %6413 = vmatprep.mubr.f32.mxu0 %v6003
        %6414 = vmatmul.mubr.f32.gmra.mrb[0].mxu0 %v5890
        %v6415 = vpop.f32.mrb[0].mxu0
        %v6416 = vadd.f32 %v6191, %v6415
        %v6417 = vpop.f32.mrb[0].mxu0
        %6418 = vmatprep.mubr.f32.mxu0 %v6005
        %6419 = vmatmul.mubr.f32.gmra.mrb[0].mxu0 %v5891
        %v6420 = vpop.f32.mrb[0].mxu0
        %v6421 = vadd.f32 %v6196, %v6420
        %v6422 = vpop.f32.mrb[0].mxu0
        %6423 = vmatprep.mubr.f32.mxu0 %v6007
        %6424 = vmatmul.mubr.f32.gmra.mrb[0].mxu0 %v5892
        %v6425 = vpop.f32.mrb[0].mxu0
        %v6426 = vadd.f32 %v6201, %v6425
        %v6427 = vpop.f32.mrb[0].mxu0
        %6428 = vmatprep.mubr.f32.mxu0 %v6009
        %6429 = vmatmul.mubr.f32.gmra.mrb[0].mxu0 %v5893
        %v6430 = vpop.f32.mrb[0].mxu0
        %v6431 = vadd.f32 %v6206, %v6430
        %v6432 = vpop.f32.mrb[0].mxu0
        %6433 = vmatprep.mubr.f32.mxu0 %v6011
        %6434 = vmatmul.mubr.f32.gmra.mrb[0].mxu0 %v5894
        %v6435 = vpop.f32.mrb[0].mxu0
        %v6436 = vadd.f32 %v6211, %v6435
        %v6437 = vpop.f32.mrb[0].mxu0
        %6438 = vmatprep.mubr.f32.mxu0 %v6013
        %6439 = vmatmul.mubr.f32.gmra.mrb[0].mxu0 %v5895
        %v6440 = vpop.f32.mrb[0].mxu0
        %v6441 = vadd.f32 %v6216, %v6440
        %v6442 = vpop.f32.mrb[0].mxu0
        %6443 = vmatprep.mubr.f32.mxu0 %v6015
        %6444 = vmatmul.mubr.f32.gmra.mrb[0].mxu0 %v5896
        %v6445 = vpop.f32.mrb[0].mxu0
        %v6446 = vadd.f32 %v6221, %v6445
        %v6447 = vpop.f32.mrb[0].mxu0
        %6448 = vmatprep.mubr.f32.mxu0 %v6017
        %6449 = vmatmul.mubr.f32.gmra.mrb[0].mxu0 %v5897
        %v6450 = vpop.f32.mrb[0].mxu0
        %v6451 = vadd.f32 %v6226, %v6450
        %v6452 = vpop.f32.mrb[0].mxu0
        %6453 = vmatprep.mubr.f32.mxu0 %v6019
        %6454 = vmatmul.mubr.f32.gmra.mrb[0].mxu0 %v5898
        %v6455 = vpop.f32.mrb[0].mxu0
        %v6456 = vadd.f32 %v6231, %v6455
        %v6457 = vpop.f32.mrb[0].mxu0
        %6458 = vmatprep.mubr.f32.mxu0 %v6021
        %6459 = vmatmul.mubr.f32.gmra.mrb[0].mxu0 %v5899
        %v6460 = vpop.f32.mrb[0].mxu0
        %v6461 = vadd.f32 %v6236, %v6460
        %v6462 = vpop.f32.mrb[0].mxu0
        %6463 = vmatprep.mubr.f32.mxu0 %v6023
        %6464 = vmatmul.mubr.f32.gmra.mrb[0].mxu0 %v5900
        %v6465 = vpop.f32.mrb[0].mxu0
        %v6466 = vadd.f32 %v6241, %v6465
        %v6467 = vpop.f32.mrb[0].mxu0
        %6468 = vmatprep.mubr.f32.mxu0 %v6025
        %6469 = vmatmul.mubr.f32.gmra.mrb[0].mxu0 %v5901
        %v6470 = vpop.f32.mrb[0].mxu0
        %v6471 = vadd.f32 %v6246, %v6470
        %v6472 = vpop.f32.mrb[0].mxu0
        %6473 = vmatprep.mubr.f32.mxu0 %v6027
        %6474 = vmatmul.mubr.f32.gmra.mrb[0].mxu0 %v5902
        %v6475 = vpop.f32.mrb[0].mxu0
        %v6476 = vadd.f32 %v6251, %v6475
        %v6477 = vpop.f32.mrb[0].mxu0
        %6478 = vdwg.mxu0
        %v6479 = vmax.f32 %v6321, 0.0
        %v6480 = vmax.f32 %v6326, 0.0
        %v6481 = vmax.f32 %v6331, 0.0
        %v6482 = vmax.f32 %v6336, 0.0
        %v6483 = vmax.f32 %v6341, 0.0
        %v6484 = vmax.f32 %v6346, 0.0
        %v6485 = vmax.f32 %v6351, 0.0
        %v6486 = vmax.f32 %v6356, 0.0
        %v6487 = vmax.f32 %v6361, 0.0
        %v6488 = vmax.f32 %v6366, 0.0
        %v6489 = vmax.f32 %v6371, 0.0
        %v6490 = vmax.f32 %v6376, 0.0
        %v6491 = vmax.f32 %v6381, 0.0
        %v6492 = vmax.f32 %v6386, 0.0
        %v6493 = vmax.f32 %v6391, 0.0
        %v6494 = vmax.f32 %v6396, 0.0
        %v6495 = vmax.f32 %v6401, 0.0
        %v6496 = vmax.f32 %v6406, 0.0
        %v6497 = vmax.f32 %v6411, 0.0
        %v6498 = vmax.f32 %v6416, 0.0
        %v6499 = vmax.f32 %v6421, 0.0
        %v6500 = vmax.f32 %v6426, 0.0
        %v6501 = vmax.f32 %v6431, 0.0
        %v6502 = vmax.f32 %v6436, 0.0
        %v6503 = vmax.f32 %v6441, 0.0
        %v6504 = vmax.f32 %v6446, 0.0
        %v6505 = vmax.f32 %v6451, 0.0
        %v6506 = vmax.f32 %v6456, 0.0
        %v6507 = vmax.f32 %v6461, 0.0
        %v6508 = vmax.f32 %v6466, 0.0
        %v6509 = vmax.f32 %v6471, 0.0
        %v6510 = vmax.f32 %v6476, 0.0
        %s6511 = scalar_lea.vmem %s10, 3
        %v6512 = vld [vmem:[%s6511] sm:$0x1]
        %6541 = vrot.lane.b32.xlu0 %v6479, 64
        %v6542 = vpop.permute.xlu0 %6541
        %6543 = vrot.lane.b32.xlu0 %v6480, 64
        %v6544 = vpop.permute.xlu0 %6543
        %6545 = vrot.lane.b32.xlu0 %v6481, 64
        %v6546 = vpop.permute.xlu0 %6545
        %6547 = vrot.lane.b32.xlu0 %v6482, 64
        %v6548 = vpop.permute.xlu0 %6547
        %6549 = vrot.lane.b32.xlu0 %v6483, 64
        %v6550 = vpop.permute.xlu0 %6549
        %6551 = vrot.lane.b32.xlu0 %v6484, 64
        %v6552 = vpop.permute.xlu0 %6551
        %6553 = vrot.lane.b32.xlu0 %v6485, 64
        %v6554 = vpop.permute.xlu0 %6553
        %6555 = vrot.lane.b32.xlu0 %v6486, 64
        %v6556 = vpop.permute.xlu0 %6555
        %6557 = vrot.lane.b32.xlu0 %v6487, 64
        %v6558 = vpop.permute.xlu0 %6557
        %6559 = vrot.lane.b32.xlu0 %v6488, 64
        %v6560 = vpop.permute.xlu0 %6559
        %6561 = vrot.lane.b32.xlu0 %v6489, 64
        %v6562 = vpop.permute.xlu0 %6561
        %6563 = vrot.lane.b32.xlu0 %v6490, 64
        %v6564 = vpop.permute.xlu0 %6563
        %6565 = vrot.lane.b32.xlu0 %v6491, 64
        %v6566 = vpop.permute.xlu0 %6565
        %6567 = vrot.lane.b32.xlu0 %v6492, 64
        %v6568 = vpop.permute.xlu0 %6567
        %6569 = vrot.lane.b32.xlu0 %v6493, 64
        %v6570 = vpop.permute.xlu0 %6569
        %6571 = vrot.lane.b32.xlu0 %v6494, 64
        %v6572 = vpop.permute.xlu0 %6571
        %6573 = vrot.lane.b32.xlu0 %v6495, 64
        %v6574 = vpop.permute.xlu0 %6573
        %6575 = vrot.lane.b32.xlu0 %v6496, 64
        %v6576 = vpop.permute.xlu0 %6575
        %6577 = vrot.lane.b32.xlu0 %v6497, 64
        %v6578 = vpop.permute.xlu0 %6577
        %6579 = vrot.lane.b32.xlu0 %v6498, 64
        %v6580 = vpop.permute.xlu0 %6579
        %6581 = vrot.lane.b32.xlu0 %v6499, 64
        %v6582 = vpop.permute.xlu0 %6581
        %6583 = vrot.lane.b32.xlu0 %v6500, 64
        %v6584 = vpop.permute.xlu0 %6583
        %6585 = vrot.lane.b32.xlu0 %v6501, 64
        %v6586 = vpop.permute.xlu0 %6585
        %6587 = vrot.lane.b32.xlu0 %v6502, 64
        %v6588 = vpop.permute.xlu0 %6587
        %6589 = vrot.lane.b32.xlu0 %v6503, 64
        %v6590 = vpop.permute.xlu0 %6589
        %6591 = vrot.lane.b32.xlu0 %v6504, 64
        %v6592 = vpop.permute.xlu0 %6591
        %6593 = vrot.lane.b32.xlu0 %v6505, 64
        %v6594 = vpop.permute.xlu0 %6593
        %6595 = vrot.lane.b32.xlu0 %v6506, 64
        %v6596 = vpop.permute.xlu0 %6595
        %6629 = vrot.lane.b32.xlu0 %v6507, 64
        %v6630 = vpop.permute.xlu0 %6629
        %6631 = vrot.lane.b32.xlu0 %v6508, 64
        %v6632 = vpop.permute.xlu0 %6631
        %6633 = vrot.lane.b32.xlu0 %v6509, 64
        %v6634 = vpop.permute.xlu0 %6633
        %6635 = vrot.lane.b32.xlu0 %v6510, 64
        %v6636 = vpop.permute.xlu0 %6635
        %v6641 = vsel %vm2393, 0.0, %v6542
        %v6642 = vsel %vm2393, 0.0, %v6544
        %v6643 = vsel %vm2393, %v6479, %v6546
        %v6644 = vsel %vm2393, %v6480, %v6548
        %v6645 = vsel %vm2393, %v6481, %v6550
        %v6646 = vsel %vm2393, %v6482, %v6552
        %v6647 = vsel %vm2393, %v6483, %v6554
        %v6648 = vsel %vm2393, %v6484, %v6556
        %v6649 = vsel %vm2393, %v6485, %v6558
        %v6650 = vsel %vm2393, %v6486, %v6560
        %v6651 = vsel %vm2393, %v6487, %v6562
        %v6652 = vsel %vm2393, %v6488, %v6564
        %v6653 = vsel %vm2393, %v6489, %v6566
        %v6654 = vsel %vm2393, %v6490, %v6568
        %v6655 = vsel %vm2393, %v6491, %v6570
        %v6656 = vsel %vm2393, %v6492, %v6572
        %v6657 = vsel %vm2393, %v6493, %v6574
        %v6658 = vsel %vm2393, %v6494, %v6576
        %v6659 = vsel %vm2393, %v6495, %v6578
        %v6660 = vsel %vm2393, %v6496, %v6580
        %v6661 = vsel %vm2393, %v6497, %v6582
        %v6662 = vsel %vm2393, %v6498, %v6584
        %v6663 = vsel %vm2393, %v6499, %v6586
        %v6664 = vsel %vm2393, %v6500, %v6588
        %v6665 = vsel %vm2393, %v6501, %v6590
        %v6666 = vsel %vm2393, %v6502, %v6592
        %v6667 = vsel %vm2393, %v6503, %v6594
        %v6668 = vsel %vm2393, %v6504, %v6596
        %v6669 = vsel %vm2393, %v6505, %v6630
        %v6670 = vsel %vm2393, %v6506, %v6632
        %v6671 = vsel %vm2393, %v6507, %v6634
        %v6672 = vsel %vm2393, %v6508, %v6636
        %v6673 = vsel %vm2393, %v6509, %v3129
        %v6674 = vsel %vm2393, %v6510, %v3129
        %v6675 = vld [vmem:[%s7] sm:$0xff]
        %v6676 = vld [vmem:[%s7 + $0x8] sm:$0xff]
        %v6677 = vld [vmem:[%s7 + $0x10] sm:$0xff]
        %v6678 = vld [vmem:[%s7 + $0x18] sm:$0xff]
        %v6679 = vld [vmem:[%s7 + $0x20] sm:$0xff]
        %v6680 = vld [vmem:[%s7 + $0x28] sm:$0xff]
        %v6681 = vld [vmem:[%s7 + $0x30] sm:$0xff]
        %v6682 = vld [vmem:[%s7 + $0x38] sm:$0xff]
        %v6683 = vld [vmem:[%s7 + $0x40] sm:$0xff]
        %v6684 = vld [vmem:[%s7 + $0x48] sm:$0xff]
        %v6685 = vld [vmem:[%s7 + $0x50] sm:$0xff]
        %v6686 = vld [vmem:[%s7 + $0x58] sm:$0xff]
        %v6687 = vld [vmem:[%s7 + $0x60] sm:$0xff]
        %v6688 = vld [vmem:[%s7 + $0x68] sm:$0xff]
        %v6689 = vld [vmem:[%s7 + $0x70] sm:$0xff]
        %v6690 = vld [vmem:[%s7 + $0x78] sm:$0xff]
        %v6691 = vld [vmem:[%s7 + $0x80] sm:$0xff]
        %v6692 = vld [vmem:[%s7 + $0x88] sm:$0xff]
        %v6693 = vld [vmem:[%s7 + $0x90] sm:$0xff]
        %v6694 = vld [vmem:[%s7 + $0x98] sm:$0xff]
        %v6695 = vld [vmem:[%s7 + $0xa0] sm:$0xff]
        %v6696 = vld [vmem:[%s7 + $0xa8] sm:$0xff]
        %v6697 = vld [vmem:[%s7 + $0xb0] sm:$0xff]
        %v6698 = vld [vmem:[%s7 + $0xb8] sm:$0xff]
        %v6699 = vld [vmem:[%s7 + $0xc0] sm:$0xff]
        %v6700 = vld [vmem:[%s7 + $0xc8] sm:$0xff]
        %v6701 = vld [vmem:[%s7 + $0xd0] sm:$0xff]
        %v6702 = vld [vmem:[%s7 + $0xd8] sm:$0xff]
        %v6703 = vld [vmem:[%s7 + $0xe0] sm:$0xff]
        %v6704 = vld [vmem:[%s7 + $0xe8] sm:$0xff]
        %v6705 = vld [vmem:[%s7 + $0xf0] sm:$0xff]
        %v6706 = vld [vmem:[%s7 + $0xf8] sm:$0xff]
        %v6707 = vld [vmem:[%s7 + $0x100] sm:$0xff]
        %v6708 = vld [vmem:[%s7 + $0x108] sm:$0xff]
        %v6709 = vld [vmem:[%s7 + $0x110] sm:$0xff]
        %v6710 = vld [vmem:[%s7 + $0x118] sm:$0xff]
        %v6711 = vld [vmem:[%s7 + $0x120] sm:$0xff]
        %v6712 = vld [vmem:[%s7 + $0x128] sm:$0xff]
        %v6713 = vld [vmem:[%s7 + $0x130] sm:$0xff]
        %v6714 = vld [vmem:[%s7 + $0x138] sm:$0xff]
        %v6715 = vld [vmem:[%s7 + $0x140] sm:$0xff]
        %v6716 = vld [vmem:[%s7 + $0x148] sm:$0xff]
        %v6717 = vld [vmem:[%s7 + $0x150] sm:$0xff]
        %v6718 = vld [vmem:[%s7 + $0x158] sm:$0xff]
        %v6719 = vld [vmem:[%s7 + $0x160] sm:$0xff]
        %v6720 = vld [vmem:[%s7 + $0x168] sm:$0xff]
        %v6721 = vld [vmem:[%s7 + $0x170] sm:$0xff]
        %v6722 = vld [vmem:[%s7 + $0x178] sm:$0xff]
        %v6723 = vld [vmem:[%s7 + $0x180] sm:$0xff]
        %v6724 = vld [vmem:[%s7 + $0x188] sm:$0xff]
        %v6725 = vld [vmem:[%s7 + $0x190] sm:$0xff]
        %v6726 = vld [vmem:[%s7 + $0x198] sm:$0xff]
        %v6727 = vld [vmem:[%s7 + $0x1a0] sm:$0xff]
        %v6728 = vld [vmem:[%s7 + $0x1a8] sm:$0xff]
        %v6729 = vld [vmem:[%s7 + $0x1b0] sm:$0xff]
        %v6730 = vld [vmem:[%s7 + $0x1b8] sm:$0xff]
        %v6732 = vlaneseq
        %v6733 = vshrl.u32 %v6732, 7
        %v6734 = vsub.s32 0, %v6733
        %v6735 = vrot.slane %v6512, %v6734
        %v6737 = vsel %vm2393, %v6485, 0
        %v6739 = vsel %vm2393, %v6486, 0
        %v6741 = vsel %vm2393, %v6487, 0
        %v6743 = vsel %vm2393, %v6488, 0
        %v6745 = vsel %vm2393, %v6489, 0
        %v6747 = vsel %vm2393, %v6490, 0
        %v6749 = vsel %vm2393, %v6491, 0
        %v6751 = vsel %vm2393, %v6492, 0
        %v6753 = vsel %vm2393, %v6493, 0
        %v6755 = vsel %vm2393, %v6494, 0
        %v6757 = vsel %vm2393, %v6495, 0
        %v6759 = vsel %vm2393, %v6496, 0
        %v6761 = vsel %vm2393, %v6497, 0
        %v6763 = vsel %vm2393, %v6498, 0
        %v6765 = vsel %vm2393, %v6499, 0
        %v6767 = vsel %vm2393, %v6500, 0
        %v6769 = vsel %vm2393, %v6501, 0
        %v6771 = vsel %vm2393, %v6502, 0
        %v6773 = vsel %vm2393, %v6503, 0
        %v6775 = vsel %vm2393, %v6504, 0
        %v6777 = vsel %vm2393, %v6505, 0
        %v6779 = vsel %vm2393, %v6506, 0
        %v6781 = vsel %vm2393, %v6507, 0
        %v6783 = vsel %vm2393, %v6508, 0
        %v6785 = vsel %vm2393, %v6509, 0
        %v6787 = vsel %vm2393, %v6510, 0
        %6789 = vmatprep.subr.mxu0 0.0
        %6790 = vmatpush1.msra.mxu0 %v6675
        %6791 = vmatprep.subr.mxu0 0.0
        %6792 = vmatpush1.msra.mxu0 %v6676
        %6793 = vmatprep.subr.mxu0 0.0
        %6794 = vmatpush1.msra.mxu0 %v6677
        %6795 = vmatprep.subr.mxu0 0.0
        %6796 = vmatpush1.msra.mxu0 %v6678
        %6797 = vmatprep.subr.mxu0 0.0
        %6798 = vmatpush1.msra.mxu0 %v6679
        %6799 = vmatprep.subr.mxu0 0.0
        %6800 = vmatpush1.msra.mxu0 %v6680
        %6801 = vmatprep.subr.mxu0 0.0
        %6802 = vmatpush1.msra.mxu0 %v6681
        %6803 = vmatprep.subr.mxu0 0.0
        %6804 = vmatpush1.msra.mxu0 %v6682
        %6805 = vmatprep.subr.mxu0 0.0
        %6806 = vmatpush1.msra.mxu0 %v6683
        %6807 = vmatprep.subr.mxu0 0.0
        %6808 = vmatpush1.msra.mxu0 %v6684
        %6809 = vmatprep.subr.mxu0 0.0
        %6810 = vmatpush1.msra.mxu0 %v6685
        %6811 = vmatprep.subr.mxu0 0.0
        %6812 = vmatpush1.msra.mxu0 %v6686
        %6813 = vmatprep.subr.mxu0 0.0
        %6814 = vmatpush1.msra.mxu0 %v6687
        %6815 = vmatprep.subr.mxu0 0.0
        %6816 = vmatpush1.msra.mxu0 %v6688
        %6817 = vmatprep.subr.mxu0 0.0
        %6818 = vmatpush1.msra.mxu0 %v6689
        %6819 = vmatprep.subr.mxu0 0.0
        %6820 = vmatpush1.msra.mxu0 %v6690
        %6821 = vmatprep.subr.mxu0 0.0
        %6822 = vmatpush1.msra.mxu0 %v6691
        %6823 = vmatprep.subr.mxu0 0.0
        %6824 = vmatpush1.msra.mxu0 %v6692
        %6825 = vmatprep.subr.mxu0 0.0
        %6826 = vmatpush1.msra.mxu0 %v6693
        %6827 = vmatprep.subr.mxu0 0.0
        %6828 = vmatpush1.msra.mxu0 %v6694
        %6829 = vmatprep.subr.mxu0 0.0
        %6830 = vmatpush1.msra.mxu0 %v6695
        %6831 = vmatprep.subr.mxu0 0.0
        %6832 = vmatpush1.msra.mxu0 %v6696
        %6833 = vmatprep.subr.mxu0 0.0
        %6834 = vmatpush1.msra.mxu0 %v6697
        %6835 = vmatprep.subr.mxu0 0.0
        %6836 = vmatpush1.msra.mxu0 %v6698
        %6837 = vmatprep.subr.mxu0 0.0
        %6838 = vmatpush1.msra.mxu0 %v6699
        %6839 = vmatprep.subr.mxu0 0.0
        %6840 = vmatpush1.msra.mxu0 %v6700
        %6841 = vmatprep.subr.mxu0 0.0
        %6842 = vmatpush1.msra.mxu0 %v6701
        %6843 = vmatprep.subr.mxu0 0.0
        %6844 = vmatpush1.msra.mxu0 %v6702
        %6845 = vmatprep.subr.mxu0 0.0
        %6846 = vmatpush1.msra.mxu0 %v6703
        %6847 = vmatprep.subr.mxu0 0.0
        %6848 = vmatpush1.msra.mxu0 %v6704
        %6849 = vmatprep.subr.mxu0 0.0
        %6850 = vmatpush1.msra.mxu0 %v6705
        %6851 = vmatprep.subr.mxu0 0.0
        %6852 = vmatpush1.msra.mxu0 %v6706
        %6853 = vmatprep.mubr.f32.mxu0 %v6641
        %6854 = vmatmul.mubr.f32.gmra.mrb[0].mxu0 %v3231
        %v6855 = vpop.f32.mrb[0].mxu0
        %v6856 = vadd.f32 %v6735, %v6855
        %v6857 = vpop.f32.mrb[0].mxu0
        %6858 = vmatprep.mubr.f32.mxu0 %v6642
        %6859 = vmatmul.mubr.f32.gmra.mrb[0].mxu0 %v3231
        %v6860 = vpop.f32.mrb[0].mxu0
        %v6861 = vadd.f32 %v6735, %v6860
        %v6862 = vpop.f32.mrb[0].mxu0
        %6863 = vmatprep.mubr.f32.mxu0 %v6643
        %6864 = vmatmul.mubr.f32.gmra.mrb[0].mxu0 %v3231
        %v6865 = vpop.f32.mrb[0].mxu0
        %v6866 = vadd.f32 %v6735, %v6865
        %v6867 = vpop.f32.mrb[0].mxu0
        %6868 = vmatprep.mubr.f32.mxu0 %v6644
        %6869 = vmatmul.mubr.f32.gmra.mrb[0].mxu0 %v3231
        %v6870 = vpop.f32.mrb[0].mxu0
        %v6871 = vadd.f32 %v6735, %v6870
        %v6872 = vpop.f32.mrb[0].mxu0
        %6873 = vmatprep.mubr.f32.mxu0 %v6645
        %6874 = vmatmul.mubr.f32.gmra.mrb[0].mxu0 %v6641
        %v6875 = vpop.f32.mrb[0].mxu0
        %v6876 = vadd.f32 %v6735, %v6875
        %v6877 = vpop.f32.mrb[0].mxu0
        %6878 = vmatprep.mubr.f32.mxu0 %v6646
        %6879 = vmatmul.mubr.f32.gmra.mrb[0].mxu0 %v6642
        %v6880 = vpop.f32.mrb[0].mxu0
        %v6881 = vadd.f32 %v6735, %v6880
        %v6882 = vpop.f32.mrb[0].mxu0
        %6883 = vmatprep.mubr.f32.mxu0 %v6647
        %6884 = vmatmul.mubr.f32.gmra.mrb[0].mxu0 %v6643
        %v6885 = vpop.f32.mrb[0].mxu0
        %v6886 = vadd.f32 %v6735, %v6885
        %v6887 = vpop.f32.mrb[0].mxu0
        %6888 = vmatprep.mubr.f32.mxu0 %v6648
        %6889 = vmatmul.mubr.f32.gmra.mrb[0].mxu0 %v6644
        %v6890 = vpop.f32.mrb[0].mxu0
        %v6891 = vadd.f32 %v6735, %v6890
        %v6892 = vpop.f32.mrb[0].mxu0
        %6893 = vmatprep.mubr.f32.mxu0 %v6649
        %6894 = vmatmul.mubr.f32.gmra.mrb[0].mxu0 %v6645
        %v6895 = vpop.f32.mrb[0].mxu0
        %v6896 = vadd.f32 %v6735, %v6895
        %v6897 = vpop.f32.mrb[0].mxu0
        %6898 = vmatprep.mubr.f32.mxu0 %v6650
        %6899 = vmatmul.mubr.f32.gmra.mrb[0].mxu0 %v6646
        %v6900 = vpop.f32.mrb[0].mxu0
        %v6901 = vadd.f32 %v6735, %v6900
        %v6902 = vpop.f32.mrb[0].mxu0
        %6903 = vmatprep.mubr.f32.mxu0 %v6651
        %6904 = vmatmul.mubr.f32.gmra.mrb[0].mxu0 %v6647
        %v6905 = vpop.f32.mrb[0].mxu0
        %v6906 = vadd.f32 %v6735, %v6905
        %v6907 = vpop.f32.mrb[0].mxu0
        %6908 = vmatprep.mubr.f32.mxu0 %v6652
        %6909 = vmatmul.mubr.f32.gmra.mrb[0].mxu0 %v6648
        %v6910 = vpop.f32.mrb[0].mxu0
        %v6911 = vadd.f32 %v6735, %v6910
        %v6912 = vpop.f32.mrb[0].mxu0
        %6913 = vmatprep.mubr.f32.mxu0 %v6653
        %6914 = vmatmul.mubr.f32.gmra.mrb[0].mxu0 %v6649
        %v6915 = vpop.f32.mrb[0].mxu0
        %v6916 = vadd.f32 %v6735, %v6915
        %v6917 = vpop.f32.mrb[0].mxu0
        %6918 = vmatprep.mubr.f32.mxu0 %v6654
        %6919 = vmatmul.mubr.f32.gmra.mrb[0].mxu0 %v6650
        %v6920 = vpop.f32.mrb[0].mxu0
        %v6921 = vadd.f32 %v6735, %v6920
        %v6922 = vpop.f32.mrb[0].mxu0
        %6923 = vmatprep.mubr.f32.mxu0 %v6655
        %6924 = vmatmul.mubr.f32.gmra.mrb[0].mxu0 %v6651
        %v6925 = vpop.f32.mrb[0].mxu0
        %v6926 = vadd.f32 %v6735, %v6925
        %v6927 = vpop.f32.mrb[0].mxu0
        %6928 = vmatprep.mubr.f32.mxu0 %v6656
        %6929 = vmatmul.mubr.f32.gmra.mrb[0].mxu0 %v6652
        %v6930 = vpop.f32.mrb[0].mxu0
        %v6931 = vadd.f32 %v6735, %v6930
        %v6932 = vpop.f32.mrb[0].mxu0
        %6933 = vmatprep.mubr.f32.mxu0 %v6657
        %6934 = vmatmul.mubr.f32.gmra.mrb[0].mxu0 %v6653
        %v6935 = vpop.f32.mrb[0].mxu0
        %v6936 = vadd.f32 %v6735, %v6935
        %v6937 = vpop.f32.mrb[0].mxu0
        %6938 = vmatprep.mubr.f32.mxu0 %v6658
        %6939 = vmatmul.mubr.f32.gmra.mrb[0].mxu0 %v6654
        %v6940 = vpop.f32.mrb[0].mxu0
        %v6941 = vadd.f32 %v6735, %v6940
        %v6942 = vpop.f32.mrb[0].mxu0
        %6943 = vmatprep.mubr.f32.mxu0 %v6659
        %6944 = vmatmul.mubr.f32.gmra.mrb[0].mxu0 %v6655
        %v6945 = vpop.f32.mrb[0].mxu0
        %v6946 = vadd.f32 %v6735, %v6945
        %v6947 = vpop.f32.mrb[0].mxu0
        %6948 = vmatprep.mubr.f32.mxu0 %v6660
        %6949 = vmatmul.mubr.f32.gmra.mrb[0].mxu0 %v6656
        %v6950 = vpop.f32.mrb[0].mxu0
        %v6951 = vadd.f32 %v6735, %v6950
        %v6952 = vpop.f32.mrb[0].mxu0
        %6953 = vmatprep.mubr.f32.mxu0 %v6661
        %6954 = vmatmul.mubr.f32.gmra.mrb[0].mxu0 %v6657
        %v6955 = vpop.f32.mrb[0].mxu0
        %v6956 = vadd.f32 %v6735, %v6955
        %v6957 = vpop.f32.mrb[0].mxu0
        %6958 = vmatprep.mubr.f32.mxu0 %v6662
        %6959 = vmatmul.mubr.f32.gmra.mrb[0].mxu0 %v6658
        %v6960 = vpop.f32.mrb[0].mxu0
        %v6961 = vadd.f32 %v6735, %v6960
        %v6962 = vpop.f32.mrb[0].mxu0
        %6963 = vmatprep.mubr.f32.mxu0 %v6663
        %6964 = vmatmul.mubr.f32.gmra.mrb[0].mxu0 %v6659
        %v6965 = vpop.f32.mrb[0].mxu0
        %v6966 = vadd.f32 %v6735, %v6965
        %v6967 = vpop.f32.mrb[0].mxu0
        %6968 = vmatprep.mubr.f32.mxu0 %v6664
        %6969 = vmatmul.mubr.f32.gmra.mrb[0].mxu0 %v6660
        %v6970 = vpop.f32.mrb[0].mxu0
        %v6971 = vadd.f32 %v6735, %v6970
        %v6972 = vpop.f32.mrb[0].mxu0
        %6973 = vmatprep.mubr.f32.mxu0 %v6665
        %6974 = vmatmul.mubr.f32.gmra.mrb[0].mxu0 %v6661
        %v6975 = vpop.f32.mrb[0].mxu0
        %v6976 = vadd.f32 %v6735, %v6975
        %v6977 = vpop.f32.mrb[0].mxu0
        %6978 = vmatprep.mubr.f32.mxu0 %v6666
        %6979 = vmatmul.mubr.f32.gmra.mrb[0].mxu0 %v6662
        %v6980 = vpop.f32.mrb[0].mxu0
        %v6981 = vadd.f32 %v6735, %v6980
        %v6982 = vpop.f32.mrb[0].mxu0
        %6983 = vmatprep.mubr.f32.mxu0 %v6667
        %6984 = vmatmul.mubr.f32.gmra.mrb[0].mxu0 %v6663
        %v6985 = vpop.f32.mrb[0].mxu0
        %v6986 = vadd.f32 %v6735, %v6985
        %v6987 = vpop.f32.mrb[0].mxu0
        %6988 = vmatprep.mubr.f32.mxu0 %v6668
        %6989 = vmatmul.mubr.f32.gmra.mrb[0].mxu0 %v6664
        %v6990 = vpop.f32.mrb[0].mxu0
        %v6991 = vadd.f32 %v6735, %v6990
        %v6992 = vpop.f32.mrb[0].mxu0
        %6993 = vmatprep.mubr.f32.mxu0 %v6669
        %6994 = vmatmul.mubr.f32.gmra.mrb[0].mxu0 %v6665
        %v6995 = vpop.f32.mrb[0].mxu0
        %v6996 = vadd.f32 %v6735, %v6995
        %v6997 = vpop.f32.mrb[0].mxu0
        %6998 = vmatprep.mubr.f32.mxu0 %v6670
        %6999 = vmatmul.mubr.f32.gmra.mrb[0].mxu0 %v6666
        %v7000 = vpop.f32.mrb[0].mxu0
        %v7001 = vadd.f32 %v6735, %v7000
        %v7002 = vpop.f32.mrb[0].mxu0
        %7003 = vmatprep.mubr.f32.mxu0 %v6671
        %7004 = vmatmul.mubr.f32.gmra.mrb[0].mxu0 %v6667
        %v7005 = vpop.f32.mrb[0].mxu0
        %v7006 = vadd.f32 %v6735, %v7005
        %v7007 = vpop.f32.mrb[0].mxu0
        %7008 = vmatprep.mubr.f32.mxu0 %v6672
        %7009 = vmatmul.mubr.f32.gmra.mrb[0].mxu0 %v6668
        %v7010 = vpop.f32.mrb[0].mxu0
        %v7011 = vadd.f32 %v6735, %v7010
        %v7012 = vpop.f32.mrb[0].mxu0
        %7013 = vdwg.mxu0
        %7014 = vmatprep.subr.mxu0 0.0
        %7015 = vmatpush1.msra.mxu0 %v6707
        %7016 = vmatprep.subr.mxu0 0.0
        %7017 = vmatpush1.msra.mxu0 %v6708
        %7018 = vmatprep.subr.mxu0 0.0
        %7019 = vmatpush1.msra.mxu0 %v6709
        %7020 = vmatprep.subr.mxu0 0.0
        %7021 = vmatpush1.msra.mxu0 %v6710
        %7022 = vmatprep.subr.mxu0 0.0
        %7023 = vmatpush1.msra.mxu0 %v6711
        %7024 = vmatprep.subr.mxu0 0.0
        %7025 = vmatpush1.msra.mxu0 %v6712
        %7026 = vmatprep.subr.mxu0 0.0
        %7027 = vmatpush1.msra.mxu0 %v6713
        %7028 = vmatprep.subr.mxu0 0.0
        %7029 = vmatpush1.msra.mxu0 %v6714
        %7030 = vmatprep.subr.mxu0 0.0
        %7031 = vmatpush1.msra.mxu0 %v6715
        %7032 = vmatprep.subr.mxu0 0.0
        %7033 = vmatpush1.msra.mxu0 %v6716
        %7034 = vmatprep.subr.mxu0 0.0
        %7035 = vmatpush1.msra.mxu0 %v6717
        %7036 = vmatprep.subr.mxu0 0.0
        %7037 = vmatpush1.msra.mxu0 %v6718
        %7038 = vmatprep.subr.mxu0 0.0
        %7039 = vmatpush1.msra.mxu0 %v6719
        %7040 = vmatprep.subr.mxu0 0.0
        %7041 = vmatpush1.msra.mxu0 %v6720
        %7042 = vmatprep.subr.mxu0 0.0
        %7043 = vmatpush1.msra.mxu0 %v6721
        %7044 = vmatprep.subr.mxu0 0.0
        %7045 = vmatpush1.msra.mxu0 %v6722
        %7046 = vmatprep.subr.mxu0 0.0
        %7047 = vmatpush1.msra.mxu0 %v6723
        %7048 = vmatprep.subr.mxu0 0.0
        %7049 = vmatpush1.msra.mxu0 %v6724
        %7050 = vmatprep.subr.mxu0 0.0
        %7051 = vmatpush1.msra.mxu0 %v6725
        %7052 = vmatprep.subr.mxu0 0.0
        %7053 = vmatpush1.msra.mxu0 %v6726
        %7054 = vmatprep.subr.mxu0 0.0
        %7055 = vmatpush1.msra.mxu0 %v6727
        %7056 = vmatprep.subr.mxu0 0.0
        %7057 = vmatpush1.msra.mxu0 %v6728
        %7058 = vmatprep.subr.mxu0 0.0
        %7059 = vmatpush1.msra.mxu0 %v6729
        %7060 = vmatprep.subr.mxu0 0.0
        %7061 = vmatpush1.msra.mxu0 %v6730
        %7062 = vmatprep.subr.mxu0 0.0
        %7063 = vmatpush1.msra.mxu0 0.0
        %7064 = vmatprep.subr.mxu0 0.0
        %7065 = vmatpush1.msra.mxu0 0.0
        %7066 = vmatprep.subr.mxu0 0.0
        %7067 = vmatpush1.msra.mxu0 0.0
        %7068 = vmatprep.subr.mxu0 0.0
        %7069 = vmatpush1.msra.mxu0 0.0
        %7070 = vmatprep.subr.mxu0 0.0
        %7071 = vmatpush1.msra.mxu0 0.0
        %7072 = vmatprep.subr.mxu0 0.0
        %7073 = vmatpush1.msra.mxu0 0.0
        %7074 = vmatprep.subr.mxu0 0.0
        %7075 = vmatpush1.msra.mxu0 0.0
        %7076 = vmatprep.subr.mxu0 0.0
        %7077 = vmatpush1.msra.mxu0 0.0
        %7078 = vmatprep.mubr.f32.mxu0 %v6737
        %7079 = vmatmul.mubr.f32.gmra.mrb[0].mxu0 %v6645
        %v7080 = vpop.f32.mrb[0].mxu0
        %v7081 = vadd.f32 %v6856, %v7080
        %v7082 = vpop.f32.mrb[0].mxu0
        %7083 = vmatprep.mubr.f32.mxu0 %v6739
        %7084 = vmatmul.mubr.f32.gmra.mrb[0].mxu0 %v6646
        %v7085 = vpop.f32.mrb[0].mxu0
        %v7086 = vadd.f32 %v6861, %v7085
        %v7087 = vpop.f32.mrb[0].mxu0
        %7088 = vmatprep.mubr.f32.mxu0 %v6741
        %7089 = vmatmul.mubr.f32.gmra.mrb[0].mxu0 %v6647
        %v7090 = vpop.f32.mrb[0].mxu0
        %v7091 = vadd.f32 %v6866, %v7090
        %v7092 = vpop.f32.mrb[0].mxu0
        %7093 = vmatprep.mubr.f32.mxu0 %v6743
        %7094 = vmatmul.mubr.f32.gmra.mrb[0].mxu0 %v6648
        %v7095 = vpop.f32.mrb[0].mxu0
        %v7096 = vadd.f32 %v6871, %v7095
        %v7097 = vpop.f32.mrb[0].mxu0
        %7098 = vmatprep.mubr.f32.mxu0 %v6745
        %7099 = vmatmul.mubr.f32.gmra.mrb[0].mxu0 %v6649
        %v7100 = vpop.f32.mrb[0].mxu0
        %v7101 = vadd.f32 %v6876, %v7100
        %v7102 = vpop.f32.mrb[0].mxu0
        %7103 = vmatprep.mubr.f32.mxu0 %v6747
        %7104 = vmatmul.mubr.f32.gmra.mrb[0].mxu0 %v6650
        %v7105 = vpop.f32.mrb[0].mxu0
        %v7106 = vadd.f32 %v6881, %v7105
        %v7107 = vpop.f32.mrb[0].mxu0
        %7108 = vmatprep.mubr.f32.mxu0 %v6749
        %7109 = vmatmul.mubr.f32.gmra.mrb[0].mxu0 %v6651
        %v7110 = vpop.f32.mrb[0].mxu0
        %v7111 = vadd.f32 %v6886, %v7110
        %v7112 = vpop.f32.mrb[0].mxu0
        %7113 = vmatprep.mubr.f32.mxu0 %v6751
        %7114 = vmatmul.mubr.f32.gmra.mrb[0].mxu0 %v6652
        %v7115 = vpop.f32.mrb[0].mxu0
        %v7116 = vadd.f32 %v6891, %v7115
        %v7117 = vpop.f32.mrb[0].mxu0
        %7118 = vmatprep.mubr.f32.mxu0 %v6753
        %7119 = vmatmul.mubr.f32.gmra.mrb[0].mxu0 %v6653
        %v7120 = vpop.f32.mrb[0].mxu0
        %v7121 = vadd.f32 %v6896, %v7120
        %v7122 = vpop.f32.mrb[0].mxu0
        %7123 = vmatprep.mubr.f32.mxu0 %v6755
        %7124 = vmatmul.mubr.f32.gmra.mrb[0].mxu0 %v6654
        %v7125 = vpop.f32.mrb[0].mxu0
        %v7126 = vadd.f32 %v6901, %v7125
        %v7127 = vpop.f32.mrb[0].mxu0
        %7128 = vmatprep.mubr.f32.mxu0 %v6757
        %7129 = vmatmul.mubr.f32.gmra.mrb[0].mxu0 %v6655
        %v7130 = vpop.f32.mrb[0].mxu0
        %v7131 = vadd.f32 %v6906, %v7130
        %v7132 = vpop.f32.mrb[0].mxu0
        %7133 = vmatprep.mubr.f32.mxu0 %v6759
        %7134 = vmatmul.mubr.f32.gmra.mrb[0].mxu0 %v6656
        %v7135 = vpop.f32.mrb[0].mxu0
        %v7136 = vadd.f32 %v6911, %v7135
        %v7137 = vpop.f32.mrb[0].mxu0
        %7138 = vmatprep.mubr.f32.mxu0 %v6761
        %7139 = vmatmul.mubr.f32.gmra.mrb[0].mxu0 %v6657
        %v7140 = vpop.f32.mrb[0].mxu0
        %v7141 = vadd.f32 %v6916, %v7140
        %v7142 = vpop.f32.mrb[0].mxu0
        %7143 = vmatprep.mubr.f32.mxu0 %v6763
        %7144 = vmatmul.mubr.f32.gmra.mrb[0].mxu0 %v6658
        %v7145 = vpop.f32.mrb[0].mxu0
        %v7146 = vadd.f32 %v6921, %v7145
        %v7147 = vpop.f32.mrb[0].mxu0
        %7148 = vmatprep.mubr.f32.mxu0 %v6765
        %7149 = vmatmul.mubr.f32.gmra.mrb[0].mxu0 %v6659
        %v7150 = vpop.f32.mrb[0].mxu0
        %v7151 = vadd.f32 %v6926, %v7150
        %v7152 = vpop.f32.mrb[0].mxu0
        %7153 = vmatprep.mubr.f32.mxu0 %v6767
        %7154 = vmatmul.mubr.f32.gmra.mrb[0].mxu0 %v6660
        %v7155 = vpop.f32.mrb[0].mxu0
        %v7156 = vadd.f32 %v6931, %v7155
        %v7157 = vpop.f32.mrb[0].mxu0
        %7158 = vmatprep.mubr.f32.mxu0 %v6769
        %7159 = vmatmul.mubr.f32.gmra.mrb[0].mxu0 %v6661
        %v7160 = vpop.f32.mrb[0].mxu0
        %v7161 = vadd.f32 %v6936, %v7160
        %v7162 = vpop.f32.mrb[0].mxu0
        %7163 = vmatprep.mubr.f32.mxu0 %v6771
        %7164 = vmatmul.mubr.f32.gmra.mrb[0].mxu0 %v6662
        %v7165 = vpop.f32.mrb[0].mxu0
        %v7166 = vadd.f32 %v6941, %v7165
        %v7167 = vpop.f32.mrb[0].mxu0
        %7168 = vmatprep.mubr.f32.mxu0 %v6773
        %7169 = vmatmul.mubr.f32.gmra.mrb[0].mxu0 %v6663
        %v7170 = vpop.f32.mrb[0].mxu0
        %v7171 = vadd.f32 %v6946, %v7170
        %v7172 = vpop.f32.mrb[0].mxu0
        %7173 = vmatprep.mubr.f32.mxu0 %v6775
        %7174 = vmatmul.mubr.f32.gmra.mrb[0].mxu0 %v6664
        %v7175 = vpop.f32.mrb[0].mxu0
        %v7176 = vadd.f32 %v6951, %v7175
        %v7177 = vpop.f32.mrb[0].mxu0
        %7178 = vmatprep.mubr.f32.mxu0 %v6777
        %7179 = vmatmul.mubr.f32.gmra.mrb[0].mxu0 %v6665
        %v7180 = vpop.f32.mrb[0].mxu0
        %v7181 = vadd.f32 %v6956, %v7180
        %v7182 = vpop.f32.mrb[0].mxu0
        %7183 = vmatprep.mubr.f32.mxu0 %v6779
        %7184 = vmatmul.mubr.f32.gmra.mrb[0].mxu0 %v6666
        %v7185 = vpop.f32.mrb[0].mxu0
        %v7186 = vadd.f32 %v6961, %v7185
        %v7187 = vpop.f32.mrb[0].mxu0
        %7188 = vmatprep.mubr.f32.mxu0 %v6781
        %7189 = vmatmul.mubr.f32.gmra.mrb[0].mxu0 %v6667
        %v7190 = vpop.f32.mrb[0].mxu0
        %v7191 = vadd.f32 %v6966, %v7190
        %v7192 = vpop.f32.mrb[0].mxu0
        %7193 = vmatprep.mubr.f32.mxu0 %v6783
        %7194 = vmatmul.mubr.f32.gmra.mrb[0].mxu0 %v6668
        %v7195 = vpop.f32.mrb[0].mxu0
        %v7196 = vadd.f32 %v6971, %v7195
        %v7197 = vpop.f32.mrb[0].mxu0
        %7198 = vmatprep.mubr.f32.mxu0 %v6785
        %7199 = vmatmul.mubr.f32.gmra.mrb[0].mxu0 %v6669
        %v7200 = vpop.f32.mrb[0].mxu0
        %v7201 = vadd.f32 %v6976, %v7200
        %v7202 = vpop.f32.mrb[0].mxu0
        %7203 = vmatprep.mubr.f32.mxu0 %v6787
        %7204 = vmatmul.mubr.f32.gmra.mrb[0].mxu0 %v6670
        %v7205 = vpop.f32.mrb[0].mxu0
        %v7206 = vadd.f32 %v6981, %v7205
        %v7207 = vpop.f32.mrb[0].mxu0
        %7208 = vmatprep.mubr.f32.mxu0 %v3441
        %7209 = vmatmul.mubr.f32.gmra.mrb[0].mxu0 %v6671
        %v7210 = vpop.f32.mrb[0].mxu0
        %v7211 = vadd.f32 %v6986, %v7210
        %v7212 = vpop.f32.mrb[0].mxu0
        %7213 = vmatprep.mubr.f32.mxu0 %v3441
        %7214 = vmatmul.mubr.f32.gmra.mrb[0].mxu0 %v6672
        %v7215 = vpop.f32.mrb[0].mxu0
        %v7216 = vadd.f32 %v6991, %v7215
        %v7217 = vpop.f32.mrb[0].mxu0
        %7218 = vmatprep.mubr.f32.mxu0 %v3441
        %7219 = vmatmul.mubr.f32.gmra.mrb[0].mxu0 %v6673
        %v7220 = vpop.f32.mrb[0].mxu0
        %v7221 = vadd.f32 %v6996, %v7220
        %v7222 = vpop.f32.mrb[0].mxu0
        %7223 = vmatprep.mubr.f32.mxu0 %v3441
        %7224 = vmatmul.mubr.f32.gmra.mrb[0].mxu0 %v6674
        %v7225 = vpop.f32.mrb[0].mxu0
        %v7226 = vadd.f32 %v7001, %v7225
        %v7227 = vpop.f32.mrb[0].mxu0
        %7228 = vmatprep.mubr.f32.mxu0 %v3441
        %7229 = vmatmul.mubr.f32.gmra.mrb[0].mxu0 %v3231
        %v7230 = vpop.f32.mrb[0].mxu0
        %v7231 = vadd.f32 %v7006, %v7230
        %v7232 = vpop.f32.mrb[0].mxu0
        %7233 = vmatprep.mubr.f32.mxu0 %v3441
        %7234 = vmatmul.mubr.f32.gmra.mrb[0].mxu0 %v3231
        %v7235 = vpop.f32.mrb[0].mxu0
        %v7236 = vadd.f32 %v7011, %v7235
        %v7237 = vpop.f32.mrb[0].mxu0
        %7238 = vdwg.mxu0
        %v7239 = vmax.f32 %v7081, 0.0
        %v7240 = vmax.f32 %v7086, 0.0
        %v7241 = vmax.f32 %v7091, 0.0
        %v7242 = vmax.f32 %v7096, 0.0
        %v7243 = vmax.f32 %v7101, 0.0
        %v7244 = vmax.f32 %v7106, 0.0
        %v7245 = vmax.f32 %v7111, 0.0
        %v7246 = vmax.f32 %v7116, 0.0
        %v7247 = vmax.f32 %v7121, 0.0
        %v7248 = vmax.f32 %v7126, 0.0
        %v7249 = vmax.f32 %v7131, 0.0
        %v7250 = vmax.f32 %v7136, 0.0
        %v7251 = vmax.f32 %v7141, 0.0
        %v7252 = vmax.f32 %v7146, 0.0
        %v7253 = vmax.f32 %v7151, 0.0
        %v7254 = vmax.f32 %v7156, 0.0
        %v7255 = vmax.f32 %v7161, 0.0
        %v7256 = vmax.f32 %v7166, 0.0
        %v7257 = vmax.f32 %v7171, 0.0
        %v7258 = vmax.f32 %v7176, 0.0
        %v7259 = vmax.f32 %v7181, 0.0
        %v7260 = vmax.f32 %v7186, 0.0
        %v7261 = vmax.f32 %v7191, 0.0
        %v7262 = vmax.f32 %v7196, 0.0
        %v7263 = vmax.f32 %v7201, 0.0
        %v7264 = vmax.f32 %v7206, 0.0
        %v7265 = vmax.f32 %v7211, 0.0
        %v7266 = vmax.f32 %v7216, 0.0
        %v7267 = vmax.f32 %v7221, 0.0
        %v7268 = vmax.f32 %v7226, 0.0
        %v7269 = vmax.f32 %v7231, 0.0
        %v7270 = vmax.f32 %v7236, 0.0
        %s7271 = scalar_lea.vmem %s11, 2
        %v7272 = vld [vmem:[%s7271] sm:$0x3]
        %v7305 = vrot.slane %v7239, 5
        %v7306 = vrot.slane %v7240, 5
        %v7307 = vsel %vm1300, %v7305, %v7306
        %v7308 = vrot.slane %v7241, 5
        %v7309 = vrot.slane %v7242, 5
        %v7310 = vsel %vm1300, %v7308, %v7309
        %v7311 = vrot.slane %v7243, 5
        %v7312 = vrot.slane %v7244, 5
        %v7313 = vsel %vm1300, %v7311, %v7312
        %v7314 = vrot.slane %v7245, 5
        %v7315 = vrot.slane %v7246, 5
        %v7316 = vsel %vm1300, %v7314, %v7315
        %v7317 = vrot.slane %v7247, 5
        %v7318 = vrot.slane %v7248, 5
        %v7319 = vsel %vm1300, %v7317, %v7318
        %v7320 = vrot.slane %v7249, 5
        %v7321 = vrot.slane %v7250, 5
        %v7322 = vsel %vm1300, %v7320, %v7321
        %v7323 = vrot.slane %v7251, 5
        %v7324 = vrot.slane %v7252, 5
        %v7325 = vsel %vm1300, %v7323, %v7324
        %v7326 = vrot.slane %v7253, 5
        %v7327 = vrot.slane %v7254, 5
        %v7328 = vsel %vm1300, %v7326, %v7327
        %v7329 = vrot.slane %v7255, 5
        %v7330 = vrot.slane %v7256, 5
        %v7331 = vsel %vm1300, %v7329, %v7330
        %v7332 = vrot.slane %v7257, 5
        %v7333 = vrot.slane %v7258, 5
        %v7334 = vsel %vm1300, %v7332, %v7333
        %v7335 = vrot.slane %v7259, 5
        %v7336 = vrot.slane %v7260, 5
        %v7337 = vsel %vm1300, %v7335, %v7336
        %v7338 = vrot.slane %v7261, 5
        %v7339 = vrot.slane %v7262, 5
        %v7340 = vsel %vm1300, %v7338, %v7339
        %v7341 = vrot.slane %v7263, 5
        %v7342 = vrot.slane %v7264, 5
        %v7343 = vsel %vm1300, %v7341, %v7342
        %v7344 = vrot.slane %v7265, 5
        %v7345 = vrot.slane %v7266, 5
        %v7346 = vsel %vm1300, %v7344, %v7345
        %v7347 = vrot.slane %v7267, 5
        %v7348 = vrot.slane %v7268, 5
        %v7349 = vsel %vm1300, %v7347, %v7348
        %v7350 = vrot.slane %v7269, 5
        %v7351 = vrot.slane %v7270, 5
        %v7352 = vsel %vm1300, %v7350, %v7351
        %v7401 = vsel %vm1300, 0.0, %v7305
        %v7402 = vsel %vm1300, 0.0, %v7308
        %v7403 = vsel %vm1300, 0.0, %v7311
        %v7404 = vsel %vm1300, 0.0, %v7314
        %v7405 = vsel %vm1300, 0.0, %v7317
        %v7406 = vsel %vm1300, 0.0, %v7320
        %v7407 = vsel %vm1300, 0.0, %v7323
        %v7408 = vsel %vm1300, 0.0, %v7326
        %v7409 = vsel %vm1300, 0.0, %v7329
        %v7410 = vsel %vm1300, 0.0, %v7332
        %v7411 = vsel %vm1300, 0.0, %v7335
        %v7412 = vsel %vm1300, 0.0, %v7338
        %v7413 = vsel %vm1300, 0.0, %v7341
        %v7414 = vsel %vm1300, 0.0, %v7344
        %v7415 = vsel %vm1300, 0.0, %v7347
        %v7416 = vsel %vm1300, 0.0, %v7350
        %v7417 = vsel %vm1300, %v7306, 0.0
        %v7418 = vsel %vm1300, %v7309, 0.0
        %v7419 = vsel %vm1300, %v7312, 0.0
        %v7420 = vsel %vm1300, %v7315, 0.0
        %v7421 = vsel %vm1300, %v7318, 0.0
        %v7422 = vsel %vm1300, %v7321, 0.0
        %v7423 = vsel %vm1300, %v7324, 0.0
        %v7424 = vsel %vm1300, %v7327, 0.0
        %v7425 = vsel %vm1300, %v7330, 0.0
        %v7426 = vsel %vm1300, %v7333, 0.0
        %v7427 = vsel %vm1300, %v7336, 0.0
        %v7428 = vsel %vm1300, %v7339, 0.0
        %v7429 = vsel %vm1300, %v7342, 0.0
        %v7430 = vsel %vm1300, %v7345, 0.0
        %v7431 = vsel %vm1300, %v7348, 0.0
        %v7432 = vsel %vm1300, %v7351, 0.0
        %v7465 = vrot.slane %v7401, 1
        %v7466 = vrot.slane %v7307, 1
        %v7467 = vsel %vm543, %v7465, %v7466
        %v7468 = vrot.slane %v7417, 1
        %v7469 = vsel %vm543, %v7466, %v7468
        %v7470 = vrot.slane %v7402, 1
        %v7471 = vrot.slane %v7310, 1
        %v7472 = vsel %vm543, %v7470, %v7471
        %v7473 = vrot.slane %v7418, 1
        %v7474 = vsel %vm543, %v7471, %v7473
        %v7475 = vrot.slane %v7403, 1
        %v7476 = vrot.slane %v7313, 1
        %v7477 = vsel %vm543, %v7475, %v7476
        %v7478 = vrot.slane %v7419, 1
        %v7479 = vsel %vm543, %v7476, %v7478
        %v7480 = vrot.slane %v7404, 1
        %v7481 = vrot.slane %v7316, 1
        %v7482 = vsel %vm543, %v7480, %v7481
        %v7483 = vrot.slane %v7420, 1
        %v7484 = vsel %vm543, %v7481, %v7483
        %v7485 = vrot.slane %v7405, 1
        %v7486 = vrot.slane %v7319, 1
        %v7487 = vsel %vm543, %v7485, %v7486
        %v7488 = vrot.slane %v7421, 1
        %v7489 = vsel %vm543, %v7486, %v7488
        %v7490 = vrot.slane %v7406, 1
        %v7491 = vrot.slane %v7322, 1
        %v7492 = vsel %vm543, %v7490, %v7491
        %v7493 = vrot.slane %v7422, 1
        %v7494 = vsel %vm543, %v7491, %v7493
        %v7495 = vrot.slane %v7407, 1
        %v7496 = vrot.slane %v7325, 1
        %v7497 = vsel %vm543, %v7495, %v7496
        %v7498 = vrot.slane %v7423, 1
        %v7499 = vsel %vm543, %v7496, %v7498
        %v7500 = vrot.slane %v7408, 1
        %v7501 = vrot.slane %v7328, 1
        %v7502 = vsel %vm543, %v7500, %v7501
        %v7503 = vrot.slane %v7424, 1
        %v7504 = vsel %vm543, %v7501, %v7503
        %v7505 = vrot.slane %v7409, 1
        %v7506 = vrot.slane %v7331, 1
        %v7507 = vsel %vm543, %v7505, %v7506
        %v7508 = vrot.slane %v7425, 1
        %v7509 = vsel %vm543, %v7506, %v7508
        %v7510 = vrot.slane %v7410, 1
        %v7511 = vrot.slane %v7334, 1
        %v7512 = vsel %vm543, %v7510, %v7511
        %v7513 = vrot.slane %v7426, 1
        %v7514 = vsel %vm543, %v7511, %v7513
        %v7515 = vrot.slane %v7411, 1
        %v7516 = vrot.slane %v7337, 1
        %v7517 = vsel %vm543, %v7515, %v7516
        %v7518 = vrot.slane %v7427, 1
        %v7519 = vsel %vm543, %v7516, %v7518
        %v7520 = vrot.slane %v7412, 1
        %v7521 = vrot.slane %v7340, 1
        %v7522 = vsel %vm543, %v7520, %v7521
        %v7523 = vrot.slane %v7428, 1
        %v7524 = vsel %vm543, %v7521, %v7523
        %v7525 = vrot.slane %v7413, 1
        %v7526 = vrot.slane %v7343, 1
        %v7527 = vsel %vm543, %v7525, %v7526
        %v7528 = vrot.slane %v7429, 1
        %v7529 = vsel %vm543, %v7526, %v7528
        %v7530 = vrot.slane %v7414, 1
        %v7531 = vrot.slane %v7346, 1
        %v7532 = vsel %vm543, %v7530, %v7531
        %v7533 = vrot.slane %v7430, 1
        %v7534 = vsel %vm543, %v7531, %v7533
        %v7535 = vrot.slane %v7415, 1
        %v7536 = vrot.slane %v7349, 1
        %v7537 = vsel %vm543, %v7535, %v7536
        %v7538 = vrot.slane %v7431, 1
        %v7539 = vsel %vm543, %v7536, %v7538
        %v7540 = vrot.slane %v7416, 1
        %v7541 = vrot.slane %v7352, 1
        %v7542 = vsel %vm543, %v7540, %v7541
        %v7543 = vrot.slane %v7432, 1
        %v7544 = vsel %vm543, %v7541, %v7543
        %7545 = vrot.lane.b32.xlu0 %v7467, 64
        %v7546 = vpop.permute.xlu0 %7545
        %7547 = vrot.lane.b32.xlu0 %v7469, 64
        %v7548 = vpop.permute.xlu0 %7547
        %7549 = vrot.lane.b32.xlu0 %v7472, 64
        %v7550 = vpop.permute.xlu0 %7549
        %7551 = vrot.lane.b32.xlu0 %v7474, 64
        %v7552 = vpop.permute.xlu0 %7551
        %7553 = vrot.lane.b32.xlu0 %v7477, 64
        %v7554 = vpop.permute.xlu0 %7553
        %7555 = vrot.lane.b32.xlu0 %v7479, 64
        %v7556 = vpop.permute.xlu0 %7555
        %7557 = vrot.lane.b32.xlu0 %v7482, 64
        %v7558 = vpop.permute.xlu0 %7557
        %7559 = vrot.lane.b32.xlu0 %v7484, 64
        %v7560 = vpop.permute.xlu0 %7559
        %7561 = vrot.lane.b32.xlu0 %v7487, 64
        %v7562 = vpop.permute.xlu0 %7561
        %7563 = vrot.lane.b32.xlu0 %v7489, 64
        %v7564 = vpop.permute.xlu0 %7563
        %7565 = vrot.lane.b32.xlu0 %v7492, 64
        %v7566 = vpop.permute.xlu0 %7565
        %7567 = vrot.lane.b32.xlu0 %v7494, 64
        %v7568 = vpop.permute.xlu0 %7567
        %7569 = vrot.lane.b32.xlu0 %v7497, 64
        %v7570 = vpop.permute.xlu0 %7569
        %7571 = vrot.lane.b32.xlu0 %v7499, 64
        %v7572 = vpop.permute.xlu0 %7571
        %7573 = vrot.lane.b32.xlu0 %v7502, 64
        %v7574 = vpop.permute.xlu0 %7573
        %7575 = vrot.lane.b32.xlu0 %v7504, 64
        %v7576 = vpop.permute.xlu0 %7575
        %7577 = vrot.lane.b32.xlu0 %v7507, 64
        %v7578 = vpop.permute.xlu0 %7577
        %7579 = vrot.lane.b32.xlu0 %v7509, 64
        %v7580 = vpop.permute.xlu0 %7579
        %7581 = vrot.lane.b32.xlu0 %v7512, 64
        %v7582 = vpop.permute.xlu0 %7581
        %7583 = vrot.lane.b32.xlu0 %v7514, 64
        %v7584 = vpop.permute.xlu0 %7583
        %7585 = vrot.lane.b32.xlu0 %v7517, 64
        %v7586 = vpop.permute.xlu0 %7585
        %7587 = vrot.lane.b32.xlu0 %v7519, 64
        %v7588 = vpop.permute.xlu0 %7587
        %7589 = vrot.lane.b32.xlu0 %v7522, 64
        %v7590 = vpop.permute.xlu0 %7589
        %7591 = vrot.lane.b32.xlu0 %v7524, 64
        %v7592 = vpop.permute.xlu0 %7591
        %7593 = vrot.lane.b32.xlu0 %v7527, 64
        %v7594 = vpop.permute.xlu0 %7593
        %7595 = vrot.lane.b32.xlu0 %v7529, 64
        %v7596 = vpop.permute.xlu0 %7595
        %7597 = vrot.lane.b32.xlu0 %v7532, 64
        %v7598 = vpop.permute.xlu0 %7597
        %7599 = vrot.lane.b32.xlu0 %v7534, 64
        %v7600 = vpop.permute.xlu0 %7599
        %7601 = vrot.lane.b32.xlu0 %v7537, 64
        %v7602 = vpop.permute.xlu0 %7601
        %7603 = vrot.lane.b32.xlu0 %v7539, 64
        %v7604 = vpop.permute.xlu0 %7603
        %7605 = vrot.lane.b32.xlu0 %v7542, 64
        %v7606 = vpop.permute.xlu0 %7605
        %7607 = vrot.lane.b32.xlu0 %v7544, 64
        %v7608 = vpop.permute.xlu0 %7607
        %v7641 = vrot.slane %v7401, 2
        %v7642 = vrot.slane %v7307, 2
        %v7643 = vsel %vm1733, %v7641, %v7642
        %v7644 = vrot.slane %v7417, 2
        %v7645 = vsel %vm1733, %v7642, %v7644
        %v7646 = vrot.slane %v7402, 2
        %v7647 = vrot.slane %v7310, 2
        %v7648 = vsel %vm1733, %v7646, %v7647
        %v7649 = vrot.slane %v7418, 2
        %v7650 = vsel %vm1733, %v7647, %v7649
        %v7651 = vrot.slane %v7403, 2
        %v7652 = vrot.slane %v7313, 2
        %v7653 = vsel %vm1733, %v7651, %v7652
        %v7654 = vrot.slane %v7419, 2
        %v7655 = vsel %vm1733, %v7652, %v7654
        %v7656 = vrot.slane %v7404, 2
        %v7657 = vrot.slane %v7316, 2
        %v7658 = vsel %vm1733, %v7656, %v7657
        %v7659 = vrot.slane %v7420, 2
        %v7660 = vsel %vm1733, %v7657, %v7659
        %v7661 = vrot.slane %v7405, 2
        %v7662 = vrot.slane %v7319, 2
        %v7663 = vsel %vm1733, %v7661, %v7662
        %v7664 = vrot.slane %v7421, 2
        %v7665 = vsel %vm1733, %v7662, %v7664
        %v7666 = vrot.slane %v7406, 2
        %v7667 = vrot.slane %v7322, 2
        %v7668 = vsel %vm1733, %v7666, %v7667
        %v7669 = vrot.slane %v7422, 2
        %v7670 = vsel %vm1733, %v7667, %v7669
        %v7671 = vrot.slane %v7407, 2
        %v7672 = vrot.slane %v7325, 2
        %v7673 = vsel %vm1733, %v7671, %v7672
        %v7674 = vrot.slane %v7423, 2
        %v7675 = vsel %vm1733, %v7672, %v7674
        %v7676 = vrot.slane %v7408, 2
        %v7677 = vrot.slane %v7328, 2
        %v7678 = vsel %vm1733, %v7676, %v7677
        %v7679 = vrot.slane %v7424, 2
        %v7680 = vsel %vm1733, %v7677, %v7679
        %v7681 = vrot.slane %v7409, 2
        %v7682 = vrot.slane %v7331, 2
        %v7683 = vsel %vm1733, %v7681, %v7682
        %v7684 = vrot.slane %v7425, 2
        %v7685 = vsel %vm1733, %v7682, %v7684
        %v7686 = vrot.slane %v7410, 2
        %v7687 = vrot.slane %v7334, 2
        %v7688 = vsel %vm1733, %v7686, %v7687
        %v7689 = vrot.slane %v7426, 2
        %v7690 = vsel %vm1733, %v7687, %v7689
        %v7691 = vrot.slane %v7411, 2
        %v7692 = vrot.slane %v7337, 2
        %v7693 = vsel %vm1733, %v7691, %v7692
        %v7694 = vrot.slane %v7427, 2
        %v7695 = vsel %vm1733, %v7692, %v7694
        %v7696 = vrot.slane %v7412, 2
        %v7697 = vrot.slane %v7340, 2
        %v7698 = vsel %vm1733, %v7696, %v7697
        %v7699 = vrot.slane %v7428, 2
        %v7700 = vsel %vm1733, %v7697, %v7699
        %v7701 = vrot.slane %v7413, 2
        %v7702 = vrot.slane %v7343, 2
        %v7703 = vsel %vm1733, %v7701, %v7702
        %v7704 = vrot.slane %v7429, 2
        %v7705 = vsel %vm1733, %v7702, %v7704
        %v7706 = vrot.slane %v7414, 2
        %v7707 = vrot.slane %v7346, 2
        %v7708 = vsel %vm1733, %v7706, %v7707
        %v7709 = vrot.slane %v7430, 2
        %v7710 = vsel %vm1733, %v7707, %v7709
        %v7711 = vrot.slane %v7415, 2
        %v7712 = vrot.slane %v7349, 2
        %v7713 = vsel %vm1733, %v7711, %v7712
        %v7714 = vrot.slane %v7431, 2
        %v7715 = vsel %vm1733, %v7712, %v7714
        %v7716 = vrot.slane %v7416, 2
        %v7717 = vrot.slane %v7352, 2
        %v7718 = vsel %vm1733, %v7716, %v7717
        %v7719 = vrot.slane %v7432, 2
        %v7720 = vsel %vm1733, %v7717, %v7719
        %v7753 = vrot.slane %v7401, 3
        %v7754 = vrot.slane %v7307, 3
        %v7755 = vsel %vm1846, %v7753, %v7754
        %v7756 = vrot.slane %v7417, 3
        %v7757 = vsel %vm1846, %v7754, %v7756
        %v7758 = vrot.slane %v7402, 3
        %v7759 = vrot.slane %v7310, 3
        %v7760 = vsel %vm1846, %v7758, %v7759
        %v7761 = vrot.slane %v7418, 3
        %v7762 = vsel %vm1846, %v7759, %v7761
        %v7763 = vrot.slane %v7403, 3
        %v7764 = vrot.slane %v7313, 3
        %v7765 = vsel %vm1846, %v7763, %v7764
        %v7766 = vrot.slane %v7419, 3
        %v7767 = vsel %vm1846, %v7764, %v7766
        %v7768 = vrot.slane %v7404, 3
        %v7769 = vrot.slane %v7316, 3
        %v7770 = vsel %vm1846, %v7768, %v7769
        %v7771 = vrot.slane %v7420, 3
        %v7772 = vsel %vm1846, %v7769, %v7771
        %v7773 = vrot.slane %v7405, 3
        %v7774 = vrot.slane %v7319, 3
        %v7775 = vsel %vm1846, %v7773, %v7774
        %v7776 = vrot.slane %v7421, 3
        %v7777 = vsel %vm1846, %v7774, %v7776
        %v7778 = vrot.slane %v7406, 3
        %v7779 = vrot.slane %v7322, 3
        %v7780 = vsel %vm1846, %v7778, %v7779
        %v7781 = vrot.slane %v7422, 3
        %v7782 = vsel %vm1846, %v7779, %v7781
        %v7783 = vrot.slane %v7407, 3
        %v7784 = vrot.slane %v7325, 3
        %v7785 = vsel %vm1846, %v7783, %v7784
        %v7786 = vrot.slane %v7423, 3
        %v7787 = vsel %vm1846, %v7784, %v7786
        %v7788 = vrot.slane %v7408, 3
        %v7789 = vrot.slane %v7328, 3
        %v7790 = vsel %vm1846, %v7788, %v7789
        %v7791 = vrot.slane %v7424, 3
        %v7792 = vsel %vm1846, %v7789, %v7791
        %v7793 = vrot.slane %v7409, 3
        %v7794 = vrot.slane %v7331, 3
        %v7795 = vsel %vm1846, %v7793, %v7794
        %v7796 = vrot.slane %v7425, 3
        %v7797 = vsel %vm1846, %v7794, %v7796
        %v7798 = vrot.slane %v7410, 3
        %v7799 = vrot.slane %v7334, 3
        %v7800 = vsel %vm1846, %v7798, %v7799
        %v7801 = vrot.slane %v7426, 3
        %v7802 = vsel %vm1846, %v7799, %v7801
        %v7803 = vrot.slane %v7411, 3
        %v7804 = vrot.slane %v7337, 3
        %v7805 = vsel %vm1846, %v7803, %v7804
        %v7806 = vrot.slane %v7427, 3
        %v7807 = vsel %vm1846, %v7804, %v7806
        %v7808 = vrot.slane %v7412, 3
        %v7809 = vrot.slane %v7340, 3
        %v7810 = vsel %vm1846, %v7808, %v7809
        %v7811 = vrot.slane %v7428, 3
        %v7812 = vsel %vm1846, %v7809, %v7811
        %v7813 = vrot.slane %v7413, 3
        %v7814 = vrot.slane %v7343, 3
        %v7815 = vsel %vm1846, %v7813, %v7814
        %v7816 = vrot.slane %v7429, 3
        %v7817 = vsel %vm1846, %v7814, %v7816
        %v7818 = vrot.slane %v7414, 3
        %v7819 = vrot.slane %v7346, 3
        %v7820 = vsel %vm1846, %v7818, %v7819
        %v7821 = vrot.slane %v7430, 3
        %v7822 = vsel %vm1846, %v7819, %v7821
        %v7823 = vrot.slane %v7415, 3
        %v7824 = vrot.slane %v7349, 3
        %v7825 = vsel %vm1846, %v7823, %v7824
        %v7826 = vrot.slane %v7431, 3
        %v7827 = vsel %vm1846, %v7824, %v7826
        %v7828 = vrot.slane %v7416, 3
        %v7829 = vrot.slane %v7352, 3
        %v7830 = vsel %vm1846, %v7828, %v7829
        %v7831 = vrot.slane %v7432, 3
        %v7832 = vsel %vm1846, %v7829, %v7831
        %7833 = vrot.lane.b32.xlu0 %v7755, 64
        %v7834 = vpop.permute.xlu0 %7833
        %7835 = vrot.lane.b32.xlu0 %v7757, 64
        %v7836 = vpop.permute.xlu0 %7835
        %7837 = vrot.lane.b32.xlu0 %v7760, 64
        %v7838 = vpop.permute.xlu0 %7837
        %7839 = vrot.lane.b32.xlu0 %v7762, 64
        %v7840 = vpop.permute.xlu0 %7839
        %7841 = vrot.lane.b32.xlu0 %v7765, 64
        %v7842 = vpop.permute.xlu0 %7841
        %7843 = vrot.lane.b32.xlu0 %v7767, 64
        %v7844 = vpop.permute.xlu0 %7843
        %7845 = vrot.lane.b32.xlu0 %v7770, 64
        %v7846 = vpop.permute.xlu0 %7845
        %7847 = vrot.lane.b32.xlu0 %v7772, 64
        %v7848 = vpop.permute.xlu0 %7847
        %7849 = vrot.lane.b32.xlu0 %v7775, 64
        %v7850 = vpop.permute.xlu0 %7849
        %7851 = vrot.lane.b32.xlu0 %v7777, 64
        %v7852 = vpop.permute.xlu0 %7851
        %7853 = vrot.lane.b32.xlu0 %v7780, 64
        %v7854 = vpop.permute.xlu0 %7853
        %7855 = vrot.lane.b32.xlu0 %v7782, 64
        %v7856 = vpop.permute.xlu0 %7855
        %7857 = vrot.lane.b32.xlu0 %v7785, 64
        %v7858 = vpop.permute.xlu0 %7857
        %7859 = vrot.lane.b32.xlu0 %v7787, 64
        %v7860 = vpop.permute.xlu0 %7859
        %7861 = vrot.lane.b32.xlu0 %v7790, 64
        %v7862 = vpop.permute.xlu0 %7861
        %7863 = vrot.lane.b32.xlu0 %v7792, 64
        %v7864 = vpop.permute.xlu0 %7863
        %7865 = vrot.lane.b32.xlu0 %v7795, 64
        %v7866 = vpop.permute.xlu0 %7865
        %7867 = vrot.lane.b32.xlu0 %v7797, 64
        %v7868 = vpop.permute.xlu0 %7867
        %7869 = vrot.lane.b32.xlu0 %v7800, 64
        %v7870 = vpop.permute.xlu0 %7869
        %7871 = vrot.lane.b32.xlu0 %v7802, 64
        %v7872 = vpop.permute.xlu0 %7871
        %7873 = vrot.lane.b32.xlu0 %v7805, 64
        %v7874 = vpop.permute.xlu0 %7873
        %7875 = vrot.lane.b32.xlu0 %v7807, 64
        %v7876 = vpop.permute.xlu0 %7875
        %7877 = vrot.lane.b32.xlu0 %v7810, 64
        %v7878 = vpop.permute.xlu0 %7877
        %7879 = vrot.lane.b32.xlu0 %v7812, 64
        %v7880 = vpop.permute.xlu0 %7879
        %7881 = vrot.lane.b32.xlu0 %v7815, 64
        %v7882 = vpop.permute.xlu0 %7881
        %7883 = vrot.lane.b32.xlu0 %v7817, 64
        %v7884 = vpop.permute.xlu0 %7883
        %7885 = vrot.lane.b32.xlu0 %v7820, 64
        %v7886 = vpop.permute.xlu0 %7885
        %7887 = vrot.lane.b32.xlu0 %v7822, 64
        %v7888 = vpop.permute.xlu0 %7887
        %7889 = vrot.lane.b32.xlu0 %v7825, 64
        %v7890 = vpop.permute.xlu0 %7889
        %7891 = vrot.lane.b32.xlu0 %v7827, 64
        %v7892 = vpop.permute.xlu0 %7891
        %7893 = vrot.lane.b32.xlu0 %v7830, 64
        %v7894 = vpop.permute.xlu0 %7893
        %7895 = vrot.lane.b32.xlu0 %v7832, 64
        %v7896 = vpop.permute.xlu0 %7895
        %v7929 = vrot.slane %v7401, 4
        %v7930 = vrot.slane %v7307, 4
        %v7931 = vsel %vm2023, %v7929, %v7930
        %v7932 = vrot.slane %v7417, 4
        %v7933 = vsel %vm2023, %v7930, %v7932
        %v7934 = vrot.slane %v7402, 4
        %v7935 = vrot.slane %v7310, 4
        %v7936 = vsel %vm2023, %v7934, %v7935
        %v7937 = vrot.slane %v7418, 4
        %v7938 = vsel %vm2023, %v7935, %v7937
        %v7939 = vrot.slane %v7403, 4
        %v7940 = vrot.slane %v7313, 4
        %v7941 = vsel %vm2023, %v7939, %v7940
        %v7942 = vrot.slane %v7419, 4
        %v7943 = vsel %vm2023, %v7940, %v7942
        %v7944 = vrot.slane %v7404, 4
        %v7945 = vrot.slane %v7316, 4
        %v7946 = vsel %vm2023, %v7944, %v7945
        %v7947 = vrot.slane %v7420, 4
        %v7948 = vsel %vm2023, %v7945, %v7947
        %v7949 = vrot.slane %v7405, 4
        %v7950 = vrot.slane %v7319, 4
        %v7951 = vsel %vm2023, %v7949, %v7950
        %v7952 = vrot.slane %v7421, 4
        %v7953 = vsel %vm2023, %v7950, %v7952
        %v7954 = vrot.slane %v7406, 4
        %v7955 = vrot.slane %v7322, 4
        %v7956 = vsel %vm2023, %v7954, %v7955
        %v7957 = vrot.slane %v7422, 4
        %v7958 = vsel %vm2023, %v7955, %v7957
        %v7959 = vrot.slane %v7407, 4
        %v7960 = vrot.slane %v7325, 4
        %v7961 = vsel %vm2023, %v7959, %v7960
        %v7962 = vrot.slane %v7423, 4
        %v7963 = vsel %vm2023, %v7960, %v7962
        %v7964 = vrot.slane %v7408, 4
        %v7965 = vrot.slane %v7328, 4
        %v7966 = vsel %vm2023, %v7964, %v7965
        %v7967 = vrot.slane %v7424, 4
        %v7968 = vsel %vm2023, %v7965, %v7967
        %v7969 = vrot.slane %v7409, 4
        %v7970 = vrot.slane %v7331, 4
        %v7971 = vsel %vm2023, %v7969, %v7970
        %v7972 = vrot.slane %v7425, 4
        %v7973 = vsel %vm2023, %v7970, %v7972
        %v7974 = vrot.slane %v7410, 4
        %v7975 = vrot.slane %v7334, 4
        %v7976 = vsel %vm2023, %v7974, %v7975
        %v7977 = vrot.slane %v7426, 4
        %v7978 = vsel %vm2023, %v7975, %v7977
        %v7979 = vrot.slane %v7411, 4
        %v7980 = vrot.slane %v7337, 4
        %v7981 = vsel %vm2023, %v7979, %v7980
        %v7982 = vrot.slane %v7427, 4
        %v7983 = vsel %vm2023, %v7980, %v7982
        %v7984 = vrot.slane %v7412, 4
        %v7985 = vrot.slane %v7340, 4
        %v7986 = vsel %vm2023, %v7984, %v7985
        %v7987 = vrot.slane %v7428, 4
        %v7988 = vsel %vm2023, %v7985, %v7987
        %v7989 = vrot.slane %v7413, 4
        %v7990 = vrot.slane %v7343, 4
        %v7991 = vsel %vm2023, %v7989, %v7990
        %v7992 = vrot.slane %v7429, 4
        %v7993 = vsel %vm2023, %v7990, %v7992
        %v7994 = vrot.slane %v7414, 4
        %v7995 = vrot.slane %v7346, 4
        %v7996 = vsel %vm2023, %v7994, %v7995
        %v7997 = vrot.slane %v7430, 4
        %v7998 = vsel %vm2023, %v7995, %v7997
        %v7999 = vrot.slane %v7415, 4
        %v8000 = vrot.slane %v7349, 4
        %v8001 = vsel %vm2023, %v7999, %v8000
        %v8002 = vrot.slane %v7431, 4
        %v8003 = vsel %vm2023, %v8000, %v8002
        %v8004 = vrot.slane %v7416, 4
        %v8005 = vrot.slane %v7352, 4
        %v8006 = vsel %vm2023, %v8004, %v8005
        %v8007 = vrot.slane %v7432, 4
        %v8008 = vsel %vm2023, %v8005, %v8007
        %v8041 = vrot.slane %v7401, 5
        %v8042 = vrot.slane %v7307, 5
        %v8043 = vsel %vm1300, %v8041, %v8042
        %v8044 = vrot.slane %v7417, 5
        %v8045 = vsel %vm1300, %v8042, %v8044
        %v8046 = vrot.slane %v7402, 5
        %v8047 = vrot.slane %v7310, 5
        %v8048 = vsel %vm1300, %v8046, %v8047
        %v8049 = vrot.slane %v7418, 5
        %v8050 = vsel %vm1300, %v8047, %v8049
        %v8051 = vrot.slane %v7403, 5
        %v8052 = vrot.slane %v7313, 5
        %v8053 = vsel %vm1300, %v8051, %v8052
        %v8054 = vrot.slane %v7419, 5
        %v8055 = vsel %vm1300, %v8052, %v8054
        %v8056 = vrot.slane %v7404, 5
        %v8057 = vrot.slane %v7316, 5
        %v8058 = vsel %vm1300, %v8056, %v8057
        %v8059 = vrot.slane %v7420, 5
        %v8060 = vsel %vm1300, %v8057, %v8059
        %v8061 = vrot.slane %v7405, 5
        %v8062 = vrot.slane %v7319, 5
        %v8063 = vsel %vm1300, %v8061, %v8062
        %v8064 = vrot.slane %v7421, 5
        %v8065 = vsel %vm1300, %v8062, %v8064
        %v8066 = vrot.slane %v7406, 5
        %v8067 = vrot.slane %v7322, 5
        %v8068 = vsel %vm1300, %v8066, %v8067
        %v8069 = vrot.slane %v7422, 5
        %v8070 = vsel %vm1300, %v8067, %v8069
        %v8071 = vrot.slane %v7407, 5
        %v8072 = vrot.slane %v7325, 5
        %v8073 = vsel %vm1300, %v8071, %v8072
        %v8074 = vrot.slane %v7423, 5
        %v8075 = vsel %vm1300, %v8072, %v8074
        %v8076 = vrot.slane %v7408, 5
        %v8077 = vrot.slane %v7328, 5
        %v8078 = vsel %vm1300, %v8076, %v8077
        %v8079 = vrot.slane %v7424, 5
        %v8080 = vsel %vm1300, %v8077, %v8079
        %v8081 = vrot.slane %v7409, 5
        %v8082 = vrot.slane %v7331, 5
        %v8083 = vsel %vm1300, %v8081, %v8082
        %v8084 = vrot.slane %v7425, 5
        %v8085 = vsel %vm1300, %v8082, %v8084
        %v8086 = vrot.slane %v7410, 5
        %v8087 = vrot.slane %v7334, 5
        %v8088 = vsel %vm1300, %v8086, %v8087
        %v8089 = vrot.slane %v7426, 5
        %v8090 = vsel %vm1300, %v8087, %v8089
        %v8091 = vrot.slane %v7411, 5
        %v8092 = vrot.slane %v7337, 5
        %v8093 = vsel %vm1300, %v8091, %v8092
        %v8094 = vrot.slane %v7427, 5
        %v8095 = vsel %vm1300, %v8092, %v8094
        %v8096 = vrot.slane %v7412, 5
        %v8097 = vrot.slane %v7340, 5
        %v8098 = vsel %vm1300, %v8096, %v8097
        %v8099 = vrot.slane %v7428, 5
        %v8100 = vsel %vm1300, %v8097, %v8099
        %v8101 = vrot.slane %v7413, 5
        %v8102 = vrot.slane %v7343, 5
        %v8103 = vsel %vm1300, %v8101, %v8102
        %v8104 = vrot.slane %v7429, 5
        %v8105 = vsel %vm1300, %v8102, %v8104
        %v8106 = vrot.slane %v7414, 5
        %v8107 = vrot.slane %v7346, 5
        %v8108 = vsel %vm1300, %v8106, %v8107
        %v8109 = vrot.slane %v7430, 5
        %v8110 = vsel %vm1300, %v8107, %v8109
        %v8111 = vrot.slane %v7415, 5
        %v8112 = vrot.slane %v7349, 5
        %v8113 = vsel %vm1300, %v8111, %v8112
        %v8114 = vrot.slane %v7431, 5
        %v8115 = vsel %vm1300, %v8112, %v8114
        %v8116 = vrot.slane %v7416, 5
        %v8117 = vrot.slane %v7352, 5
        %v8118 = vsel %vm1300, %v8116, %v8117
        %v8119 = vrot.slane %v7432, 5
        %v8120 = vsel %vm1300, %v8117, %v8119
        %8121 = vrot.lane.b32.xlu0 %v8043, 64
        %v8122 = vpop.permute.xlu0 %8121
        %8123 = vrot.lane.b32.xlu0 %v8045, 64
        %v8124 = vpop.permute.xlu0 %8123
        %8125 = vrot.lane.b32.xlu0 %v8048, 64
        %v8126 = vpop.permute.xlu0 %8125
        %8127 = vrot.lane.b32.xlu0 %v8050, 64
        %v8128 = vpop.permute.xlu0 %8127
        %8129 = vrot.lane.b32.xlu0 %v8053, 64
        %v8130 = vpop.permute.xlu0 %8129
        %8131 = vrot.lane.b32.xlu0 %v8055, 64
        %v8132 = vpop.permute.xlu0 %8131
        %8133 = vrot.lane.b32.xlu0 %v8058, 64
        %v8134 = vpop.permute.xlu0 %8133
        %8135 = vrot.lane.b32.xlu0 %v8060, 64
        %v8136 = vpop.permute.xlu0 %8135
        %8137 = vrot.lane.b32.xlu0 %v8063, 64
        %v8138 = vpop.permute.xlu0 %8137
        %8139 = vrot.lane.b32.xlu0 %v8065, 64
        %v8140 = vpop.permute.xlu0 %8139
        %8141 = vrot.lane.b32.xlu0 %v8068, 64
        %v8142 = vpop.permute.xlu0 %8141
        %8143 = vrot.lane.b32.xlu0 %v8070, 64
        %v8144 = vpop.permute.xlu0 %8143
        %8145 = vrot.lane.b32.xlu0 %v8073, 64
        %v8146 = vpop.permute.xlu0 %8145
        %8147 = vrot.lane.b32.xlu0 %v8075, 64
        %v8148 = vpop.permute.xlu0 %8147
        %8149 = vrot.lane.b32.xlu0 %v8078, 64
        %v8150 = vpop.permute.xlu0 %8149
        %8151 = vrot.lane.b32.xlu0 %v8080, 64
        %v8152 = vpop.permute.xlu0 %8151
        %8153 = vrot.lane.b32.xlu0 %v8083, 64
        %v8154 = vpop.permute.xlu0 %8153
        %8155 = vrot.lane.b32.xlu0 %v8085, 64
        %v8156 = vpop.permute.xlu0 %8155
        %8157 = vrot.lane.b32.xlu0 %v8088, 64
        %v8158 = vpop.permute.xlu0 %8157
        %8159 = vrot.lane.b32.xlu0 %v8090, 64
        %v8160 = vpop.permute.xlu0 %8159
        %8161 = vrot.lane.b32.xlu0 %v8093, 64
        %v8162 = vpop.permute.xlu0 %8161
        %8163 = vrot.lane.b32.xlu0 %v8095, 64
        %v8164 = vpop.permute.xlu0 %8163
        %8165 = vrot.lane.b32.xlu0 %v8098, 64
        %v8166 = vpop.permute.xlu0 %8165
        %8167 = vrot.lane.b32.xlu0 %v8100, 64
        %v8168 = vpop.permute.xlu0 %8167
        %8169 = vrot.lane.b32.xlu0 %v8103, 64
        %v8170 = vpop.permute.xlu0 %8169
        %8171 = vrot.lane.b32.xlu0 %v8105, 64
        %v8172 = vpop.permute.xlu0 %8171
        %8173 = vrot.lane.b32.xlu0 %v8108, 64
        %v8174 = vpop.permute.xlu0 %8173
        %8175 = vrot.lane.b32.xlu0 %v8110, 64
        %v8176 = vpop.permute.xlu0 %8175
        %8177 = vrot.lane.b32.xlu0 %v8113, 64
        %v8178 = vpop.permute.xlu0 %8177
        %8179 = vrot.lane.b32.xlu0 %v8115, 64
        %v8180 = vpop.permute.xlu0 %8179
        %8181 = vrot.lane.b32.xlu0 %v8118, 64
        %v8182 = vpop.permute.xlu0 %8181
        %8183 = vrot.lane.b32.xlu0 %v8120, 64
        %v8184 = vpop.permute.xlu0 %8183
        %v8217 = vrot.slane %v7401, 6
        %v8218 = vrot.slane %v7307, 6
        %v8219 = vsel %vm2312, %v8217, %v8218
        %v8220 = vrot.slane %v7417, 6
        %v8221 = vsel %vm2312, %v8218, %v8220
        %v8222 = vrot.slane %v7402, 6
        %v8223 = vrot.slane %v7310, 6
        %v8224 = vsel %vm2312, %v8222, %v8223
        %v8225 = vrot.slane %v7418, 6
        %v8226 = vsel %vm2312, %v8223, %v8225
        %v8227 = vrot.slane %v7403, 6
        %v8228 = vrot.slane %v7313, 6
        %v8229 = vsel %vm2312, %v8227, %v8228
        %v8230 = vrot.slane %v7419, 6
        %v8231 = vsel %vm2312, %v8228, %v8230
        %v8232 = vrot.slane %v7404, 6
        %v8233 = vrot.slane %v7316, 6
        %v8234 = vsel %vm2312, %v8232, %v8233
        %v8235 = vrot.slane %v7420, 6
        %v8236 = vsel %vm2312, %v8233, %v8235
        %v8237 = vrot.slane %v7405, 6
        %v8238 = vrot.slane %v7319, 6
        %v8239 = vsel %vm2312, %v8237, %v8238
        %v8240 = vrot.slane %v7421, 6
        %v8241 = vsel %vm2312, %v8238, %v8240
        %v8242 = vrot.slane %v7406, 6
        %v8243 = vrot.slane %v7322, 6
        %v8244 = vsel %vm2312, %v8242, %v8243
        %v8245 = vrot.slane %v7422, 6
        %v8246 = vsel %vm2312, %v8243, %v8245
        %v8247 = vrot.slane %v7407, 6
        %v8248 = vrot.slane %v7325, 6
        %v8249 = vsel %vm2312, %v8247, %v8248
        %v8250 = vrot.slane %v7423, 6
        %v8251 = vsel %vm2312, %v8248, %v8250
        %v8252 = vrot.slane %v7408, 6
        %v8253 = vrot.slane %v7328, 6
        %v8254 = vsel %vm2312, %v8252, %v8253
        %v8255 = vrot.slane %v7424, 6
        %v8256 = vsel %vm2312, %v8253, %v8255
        %v8257 = vrot.slane %v7409, 6
        %v8258 = vrot.slane %v7331, 6
        %v8259 = vsel %vm2312, %v8257, %v8258
        %v8260 = vrot.slane %v7425, 6
        %v8261 = vsel %vm2312, %v8258, %v8260
        %v8262 = vrot.slane %v7410, 6
        %v8263 = vrot.slane %v7334, 6
        %v8264 = vsel %vm2312, %v8262, %v8263
        %v8265 = vrot.slane %v7426, 6
        %v8266 = vsel %vm2312, %v8263, %v8265
        %v8267 = vrot.slane %v7411, 6
        %v8268 = vrot.slane %v7337, 6
        %v8269 = vsel %vm2312, %v8267, %v8268
        %v8270 = vrot.slane %v7427, 6
        %v8271 = vsel %vm2312, %v8268, %v8270
        %v8272 = vrot.slane %v7412, 6
        %v8273 = vrot.slane %v7340, 6
        %v8274 = vsel %vm2312, %v8272, %v8273
        %v8275 = vrot.slane %v7428, 6
        %v8276 = vsel %vm2312, %v8273, %v8275
        %v8277 = vrot.slane %v7413, 6
        %v8278 = vrot.slane %v7343, 6
        %v8279 = vsel %vm2312, %v8277, %v8278
        %v8280 = vrot.slane %v7429, 6
        %v8281 = vsel %vm2312, %v8278, %v8280
        %v8282 = vrot.slane %v7414, 6
        %v8283 = vrot.slane %v7346, 6
        %v8284 = vsel %vm2312, %v8282, %v8283
        %v8285 = vrot.slane %v7430, 6
        %v8286 = vsel %vm2312, %v8283, %v8285
        %v8287 = vrot.slane %v7415, 6
        %v8288 = vrot.slane %v7349, 6
        %v8289 = vsel %vm2312, %v8287, %v8288
        %v8290 = vrot.slane %v7431, 6
        %v8291 = vsel %vm2312, %v8288, %v8290
        %v8292 = vrot.slane %v7416, 6
        %v8293 = vrot.slane %v7352, 6
        %v8294 = vsel %vm2312, %v8292, %v8293
        %v8295 = vrot.slane %v7432, 6
        %v8296 = vsel %vm2312, %v8293, %v8295
        %v8297 = vsel %vm2393, %v7401, %v7546
        %v8298 = vsel %vm2393, %v7307, %v7548
        %v8299 = vsel %vm2393, %v7402, %v7550
        %v8300 = vsel %vm2393, %v7310, %v7552
        %v8301 = vsel %vm2393, %v7403, %v7554
        %v8302 = vsel %vm2393, %v7313, %v7556
        %v8303 = vsel %vm2393, %v7404, %v7558
        %v8304 = vsel %vm2393, %v7316, %v7560
        %v8305 = vsel %vm2393, %v7405, %v7562
        %v8306 = vsel %vm2393, %v7319, %v7564
        %v8307 = vsel %vm2393, %v7406, %v7566
        %v8308 = vsel %vm2393, %v7322, %v7568
        %v8309 = vsel %vm2393, %v7407, %v7570
        %v8310 = vsel %vm2393, %v7325, %v7572
        %v8311 = vsel %vm2393, %v7408, %v7574
        %v8312 = vsel %vm2393, %v7328, %v7576
        %v8313 = vsel %vm2393, %v7409, %v7578
        %v8314 = vsel %vm2393, %v7331, %v7580
        %v8315 = vsel %vm2393, %v7410, %v7582
        %v8316 = vsel %vm2393, %v7334, %v7584
        %v8317 = vsel %vm2393, %v7411, %v7586
        %v8318 = vsel %vm2393, %v7337, %v7588
        %v8319 = vsel %vm2393, %v7412, %v7590
        %v8320 = vsel %vm2393, %v7340, %v7592
        %v8321 = vsel %vm2393, %v7413, %v7594
        %v8322 = vsel %vm2393, %v7343, %v7596
        %v8323 = vsel %vm2393, %v7414, %v7598
        %v8324 = vsel %vm2393, %v7346, %v7600
        %v8325 = vsel %vm2393, %v7415, %v7602
        %v8326 = vsel %vm2393, %v7349, %v7604
        %v8327 = vsel %vm2393, %v7416, %v7606
        %v8328 = vsel %vm2393, %v7352, %v7608
        %v8329 = vsel %vm2393, %v7643, %v7834
        %v8330 = vsel %vm2393, %v7645, %v7836
        %v8331 = vsel %vm2393, %v7648, %v7838
        %v8332 = vsel %vm2393, %v7650, %v7840
        %v8333 = vsel %vm2393, %v7653, %v7842
        %v8334 = vsel %vm2393, %v7655, %v7844
        %v8335 = vsel %vm2393, %v7658, %v7846
        %v8336 = vsel %vm2393, %v7660, %v7848
        %v8337 = vsel %vm2393, %v7663, %v7850
        %v8338 = vsel %vm2393, %v7665, %v7852
        %v8339 = vsel %vm2393, %v7668, %v7854
        %v8340 = vsel %vm2393, %v7670, %v7856
        %v8341 = vsel %vm2393, %v7673, %v7858
        %v8342 = vsel %vm2393, %v7675, %v7860
        %v8343 = vsel %vm2393, %v7678, %v7862
        %v8344 = vsel %vm2393, %v7680, %v7864
        %v8345 = vsel %vm2393, %v7683, %v7866
        %v8346 = vsel %vm2393, %v7685, %v7868
        %v8347 = vsel %vm2393, %v7688, %v7870
        %v8348 = vsel %vm2393, %v7690, %v7872
        %v8349 = vsel %vm2393, %v7693, %v7874
        %v8350 = vsel %vm2393, %v7695, %v7876
        %v8351 = vsel %vm2393, %v7698, %v7878
        %v8352 = vsel %vm2393, %v7700, %v7880
        %v8353 = vsel %vm2393, %v7703, %v7882
        %v8354 = vsel %vm2393, %v7705, %v7884
        %v8355 = vsel %vm2393, %v7708, %v7886
        %v8356 = vsel %vm2393, %v7710, %v7888
        %v8357 = vsel %vm2393, %v7713, %v7890
        %v8358 = vsel %vm2393, %v7715, %v7892
        %v8359 = vsel %vm2393, %v7718, %v7894
        %v8360 = vsel %vm2393, %v7720, %v7896
        %v8361 = vsel %vm2393, %v7931, %v8122
        %v8362 = vsel %vm2393, %v7933, %v8124
        %v8363 = vsel %vm2393, %v7936, %v8126
        %v8364 = vsel %vm2393, %v7938, %v8128
        %v8365 = vsel %vm2393, %v7941, %v8130
        %v8366 = vsel %vm2393, %v7943, %v8132
        %v8367 = vsel %vm2393, %v7946, %v8134
        %v8368 = vsel %vm2393, %v7948, %v8136
        %v8369 = vsel %vm2393, %v7951, %v8138
        %v8370 = vsel %vm2393, %v7953, %v8140
        %v8371 = vsel %vm2393, %v7956, %v8142
        %v8372 = vsel %vm2393, %v7958, %v8144
        %v8373 = vsel %vm2393, %v7961, %v8146
        %v8374 = vsel %vm2393, %v7963, %v8148
        %v8375 = vsel %vm2393, %v7966, %v8150
        %v8376 = vsel %vm2393, %v7968, %v8152
        %v8377 = vsel %vm2393, %v7971, %v8154
        %v8378 = vsel %vm2393, %v7973, %v8156
        %v8379 = vsel %vm2393, %v7976, %v8158
        %v8380 = vsel %vm2393, %v7978, %v8160
        %v8381 = vsel %vm2393, %v7981, %v8162
        %v8382 = vsel %vm2393, %v7983, %v8164
        %v8383 = vsel %vm2393, %v7986, %v8166
        %v8384 = vsel %vm2393, %v7988, %v8168
        %v8385 = vsel %vm2393, %v7991, %v8170
        %v8386 = vsel %vm2393, %v7993, %v8172
        %v8387 = vsel %vm2393, %v7996, %v8174
        %v8388 = vsel %vm2393, %v7998, %v8176
        %v8389 = vsel %vm2393, %v8001, %v8178
        %v8390 = vsel %vm2393, %v8003, %v8180
        %v8391 = vsel %vm2393, %v8006, %v8182
        %v8392 = vsel %vm2393, %v8008, %v8184
        %v8393 = vld [vmem:[%s8] sm:$0xff]
        %v8394 = vld [vmem:[%s8 + $0x8] sm:$0xff]
        %v8395 = vld [vmem:[%s8 + $0x10] sm:$0xff]
        %v8396 = vld [vmem:[%s8 + $0x18] sm:$0xff]
        %v8397 = vld [vmem:[%s8 + $0x20] sm:$0xff]
        %v8398 = vld [vmem:[%s8 + $0x28] sm:$0xff]
        %v8399 = vld [vmem:[%s8 + $0x30] sm:$0xff]
        %v8400 = vld [vmem:[%s8 + $0x38] sm:$0xff]
        %v8401 = vld [vmem:[%s8 + $0x40] sm:$0xff]
        %v8402 = vld [vmem:[%s8 + $0x48] sm:$0xff]
        %v8403 = vld [vmem:[%s8 + $0x50] sm:$0xff]
        %v8404 = vld [vmem:[%s8 + $0x58] sm:$0xff]
        %v8405 = vld [vmem:[%s8 + $0x60] sm:$0xff]
        %v8406 = vld [vmem:[%s8 + $0x68] sm:$0xff]
        %v8407 = vld [vmem:[%s8 + $0x70] sm:$0xff]
        %v8408 = vld [vmem:[%s8 + $0x78] sm:$0xff]
        %v8409 = vld [vmem:[%s8 + $0x80] sm:$0xff]
        %v8410 = vld [vmem:[%s8 + $0x88] sm:$0xff]
        %v8411 = vld [vmem:[%s8 + $0x90] sm:$0xff]
        %v8412 = vld [vmem:[%s8 + $0x98] sm:$0xff]
        %v8413 = vld [vmem:[%s8 + $0xa0] sm:$0xff]
        %v8414 = vld [vmem:[%s8 + $0xa8] sm:$0xff]
        %v8415 = vld [vmem:[%s8 + $0xb0] sm:$0xff]
        %v8416 = vld [vmem:[%s8 + $0xb8] sm:$0xff]
        %v8417 = vld [vmem:[%s8 + $0xc0] sm:$0xff]
        %v8418 = vld [vmem:[%s8 + $0xc8] sm:$0xff]
        %v8419 = vld [vmem:[%s8 + $0xd0] sm:$0xff]
        %v8420 = vld [vmem:[%s8 + $0xd8] sm:$0xff]
        %v8421 = vld [vmem:[%s8 + $0xe0] sm:$0xff]
        %v8422 = vld [vmem:[%s8 + $0xe8] sm:$0xff]
        %v8423 = vld [vmem:[%s8 + $0xf0] sm:$0xff]
        %v8424 = vld [vmem:[%s8 + $0xf8] sm:$0xff]
        %v8425 = vld [vmem:[%s8 + $0x100] sm:$0xff]
        %v8426 = vld [vmem:[%s8 + $0x108] sm:$0xff]
        %v8427 = vld [vmem:[%s8 + $0x110] sm:$0xff]
        %v8428 = vld [vmem:[%s8 + $0x118] sm:$0xff]
        %v8429 = vld [vmem:[%s8 + $0x120] sm:$0xff]
        %v8430 = vld [vmem:[%s8 + $0x128] sm:$0xff]
        %v8431 = vld [vmem:[%s8 + $0x130] sm:$0xff]
        %v8432 = vld [vmem:[%s8 + $0x138] sm:$0xff]
        %v8433 = vld [vmem:[%s8 + $0x140] sm:$0xff]
        %v8434 = vld [vmem:[%s8 + $0x148] sm:$0xff]
        %v8435 = vld [vmem:[%s8 + $0x150] sm:$0xff]
        %v8436 = vld [vmem:[%s8 + $0x158] sm:$0xff]
        %v8437 = vld [vmem:[%s8 + $0x160] sm:$0xff]
        %v8438 = vld [vmem:[%s8 + $0x168] sm:$0xff]
        %v8439 = vld [vmem:[%s8 + $0x170] sm:$0xff]
        %v8440 = vld [vmem:[%s8 + $0x178] sm:$0xff]
        %v8441 = vld [vmem:[%s8 + $0x180] sm:$0xff]
        %v8442 = vld [vmem:[%s8 + $0x188] sm:$0xff]
        %v8443 = vld [vmem:[%s8 + $0x190] sm:$0xff]
        %v8444 = vld [vmem:[%s8 + $0x198] sm:$0xff]
        %v8445 = vld [vmem:[%s8 + $0x1a0] sm:$0xff]
        %v8446 = vld [vmem:[%s8 + $0x1a8] sm:$0xff]
        %v8447 = vld [vmem:[%s8 + $0x1b0] sm:$0xff]
        %v8448 = vld [vmem:[%s8 + $0x1b8] sm:$0xff]
        %v8449 = vld [vmem:[%s8 + $0x1c0] sm:$0xff]
        %v8450 = vld [vmem:[%s8 + $0x1c8] sm:$0xff]
        %v8451 = vld [vmem:[%s8 + $0x1d0] sm:$0xff]
        %v8452 = vld [vmem:[%s8 + $0x1d8] sm:$0xff]
        %v8453 = vld [vmem:[%s8 + $0x1e0] sm:$0xff]
        %v8454 = vld [vmem:[%s8 + $0x1e8] sm:$0xff]
        %v8455 = vld [vmem:[%s8 + $0x1f0] sm:$0xff]
        %v8456 = vld [vmem:[%s8 + $0x1f8] sm:$0xff]
        %v8457 = vld [vmem:[%s8 + $0x200] sm:$0xff]
        %v8458 = vld [vmem:[%s8 + $0x208] sm:$0xff]
        %v8459 = vld [vmem:[%s8 + $0x210] sm:$0xff]
        %v8460 = vld [vmem:[%s8 + $0x218] sm:$0xff]
        %v8461 = vld [vmem:[%s8 + $0x220] sm:$0xff]
        %v8462 = vld [vmem:[%s8 + $0x228] sm:$0xff]
        %v8463 = vld [vmem:[%s8 + $0x230] sm:$0xff]
        %v8464 = vld [vmem:[%s8 + $0x238] sm:$0xff]
        %v8465 = vld [vmem:[%s8 + $0x240] sm:$0xff]
        %v8466 = vld [vmem:[%s8 + $0x248] sm:$0xff]
        %v8467 = vld [vmem:[%s8 + $0x250] sm:$0xff]
        %v8468 = vld [vmem:[%s8 + $0x258] sm:$0xff]
        %v8469 = vld [vmem:[%s8 + $0x260] sm:$0xff]
        %v8470 = vld [vmem:[%s8 + $0x268] sm:$0xff]
        %v8471 = vld [vmem:[%s8 + $0x270] sm:$0xff]
        %v8472 = vld [vmem:[%s8 + $0x278] sm:$0xff]
        %v8473 = vld [vmem:[%s8 + $0x280] sm:$0xff]
        %v8474 = vld [vmem:[%s8 + $0x288] sm:$0xff]
        %v8475 = vld [vmem:[%s8 + $0x290] sm:$0xff]
        %v8476 = vld [vmem:[%s8 + $0x298] sm:$0xff]
        %v8477 = vld [vmem:[%s8 + $0x2a0] sm:$0xff]
        %v8478 = vld [vmem:[%s8 + $0x2a8] sm:$0xff]
        %v8479 = vld [vmem:[%s8 + $0x2b0] sm:$0xff]
        %v8480 = vld [vmem:[%s8 + $0x2b8] sm:$0xff]
        %v8481 = vld [vmem:[%s8 + $0x2c0] sm:$0xff]
        %v8482 = vld [vmem:[%s8 + $0x2c8] sm:$0xff]
        %v8483 = vld [vmem:[%s8 + $0x2d0] sm:$0xff]
        %v8484 = vld [vmem:[%s8 + $0x2d8] sm:$0xff]
        %v8485 = vld [vmem:[%s8 + $0x2e0] sm:$0xff]
        %v8486 = vld [vmem:[%s8 + $0x2e8] sm:$0xff]
        %v8487 = vld [vmem:[%s8 + $0x2f0] sm:$0xff]
        %v8488 = vld [vmem:[%s8 + $0x2f8] sm:$0xff]
        %v8489 = vld [vmem:[%s8 + $0x300] sm:$0xff]
        %v8490 = vld [vmem:[%s8 + $0x308] sm:$0xff]
        %v8491 = vld [vmem:[%s8 + $0x310] sm:$0xff]
        %v8492 = vld [vmem:[%s8 + $0x318] sm:$0xff]
        %v8493 = vld [vmem:[%s8 + $0x320] sm:$0xff]
        %v8494 = vld [vmem:[%s8 + $0x328] sm:$0xff]
        %v8495 = vld [vmem:[%s8 + $0x330] sm:$0xff]
        %v8496 = vld [vmem:[%s8 + $0x338] sm:$0xff]
        %v8497 = vld [vmem:[%s8 + $0x340] sm:$0xff]
        %v8498 = vld [vmem:[%s8 + $0x348] sm:$0xff]
        %v8499 = vld [vmem:[%s8 + $0x350] sm:$0xff]
        %v8500 = vld [vmem:[%s8 + $0x358] sm:$0xff]
        %v8501 = vld [vmem:[%s8 + $0x360] sm:$0xff]
        %v8502 = vld [vmem:[%s8 + $0x368] sm:$0xff]
        %v8503 = vld [vmem:[%s8 + $0x370] sm:$0xff]
        %v8504 = vld [vmem:[%s8 + $0x378] sm:$0xff]
        %v8506 = vlaneseq
        %v8507 = vshrl.u32 %v8506, 7
        %v8508 = vsub.s32 0, %v8507
        %v8509 = vrot.slane %v7272, %v8508
        %v8510 = vlaneseq
        %v8511 = vshrl.u32 %v8510, 7
        %v8512 = vsub.s32 1, %v8511
        %v8513 = vrot.slane %v7272, %v8512
        %v8516 = vsel %vm2393, %v8219, 0
        %v8518 = vsel %vm2393, %v8221, 0
        %v8520 = vsel %vm2393, %v8224, 0
        %v8522 = vsel %vm2393, %v8226, 0
        %v8524 = vsel %vm2393, %v8229, 0
        %v8526 = vsel %vm2393, %v8231, 0
        %v8528 = vsel %vm2393, %v8234, 0
        %v8530 = vsel %vm2393, %v8236, 0
        %v8532 = vsel %vm2393, %v8239, 0
        %v8534 = vsel %vm2393, %v8241, 0
        %v8536 = vsel %vm2393, %v8244, 0
        %v8538 = vsel %vm2393, %v8246, 0
        %v8540 = vsel %vm2393, %v8249, 0
        %v8542 = vsel %vm2393, %v8251, 0
        %v8544 = vsel %vm2393, %v8254, 0
        %v8546 = vsel %vm2393, %v8256, 0
        %v8548 = vsel %vm2393, %v8259, 0
        %v8550 = vsel %vm2393, %v8261, 0
        %v8552 = vsel %vm2393, %v8264, 0
        %v8554 = vsel %vm2393, %v8266, 0
        %v8556 = vsel %vm2393, %v8269, 0
        %v8558 = vsel %vm2393, %v8271, 0
        %v8560 = vsel %vm2393, %v8274, 0
        %v8562 = vsel %vm2393, %v8276, 0
        %v8564 = vsel %vm2393, %v8279, 0
        %v8566 = vsel %vm2393, %v8281, 0
        %v8568 = vsel %vm2393, %v8284, 0
        %v8570 = vsel %vm2393, %v8286, 0
        %v8572 = vsel %vm2393, %v8289, 0
        %v8574 = vsel %vm2393, %v8291, 0
        %v8576 = vsel %vm2393, %v8294, 0
        %v8578 = vsel %vm2393, %v8296, 0
        %8580 = vmatprep.subr.mxu0 %v8394
        %8581 = vmatpush1.msra.mxu0 %v8393
        %8582 = vmatprep.subr.mxu0 %v8396
        %8583 = vmatpush1.msra.mxu0 %v8395
        %8584 = vmatprep.subr.mxu0 %v8398
        %8585 = vmatpush1.msra.mxu0 %v8397
        %8586 = vmatprep.subr.mxu0 %v8400
        %8587 = vmatpush1.msra.mxu0 %v8399
        %8588 = vmatprep.subr.mxu0 %v8402
        %8589 = vmatpush1.msra.mxu0 %v8401
        %8590 = vmatprep.subr.mxu0 %v8404
        %8591 = vmatpush1.msra.mxu0 %v8403
        %8592 = vmatprep.subr.mxu0 %v8406
        %8593 = vmatpush1.msra.mxu0 %v8405
        %8594 = vmatprep.subr.mxu0 %v8408
        %8595 = vmatpush1.msra.mxu0 %v8407
        %8596 = vmatprep.subr.mxu0 %v8410
        %8597 = vmatpush1.msra.mxu0 %v8409
        %8598 = vmatprep.subr.mxu0 %v8412
        %8599 = vmatpush1.msra.mxu0 %v8411
        %8600 = vmatprep.subr.mxu0 %v8414
        %8601 = vmatpush1.msra.mxu0 %v8413
        %8602 = vmatprep.subr.mxu0 %v8416
        %8603 = vmatpush1.msra.mxu0 %v8415
        %8604 = vmatprep.subr.mxu0 %v8418
        %8605 = vmatpush1.msra.mxu0 %v8417
        %8606 = vmatprep.subr.mxu0 %v8420
        %8607 = vmatpush1.msra.mxu0 %v8419
        %8608 = vmatprep.subr.mxu0 %v8422
        %8609 = vmatpush1.msra.mxu0 %v8421
        %8610 = vmatprep.subr.mxu0 %v8424
        %8611 = vmatpush1.msra.mxu0 %v8423
        %8612 = vmatprep.subr.mxu0 %v8426
        %8613 = vmatpush1.msra.mxu0 %v8425
        %8614 = vmatprep.subr.mxu0 %v8428
        %8615 = vmatpush1.msra.mxu0 %v8427
        %8616 = vmatprep.subr.mxu0 %v8430
        %8617 = vmatpush1.msra.mxu0 %v8429
        %8618 = vmatprep.subr.mxu0 %v8432
        %8619 = vmatpush1.msra.mxu0 %v8431
        %8620 = vmatprep.subr.mxu0 %v8434
        %8621 = vmatpush1.msra.mxu0 %v8433
        %8622 = vmatprep.subr.mxu0 %v8436
        %8623 = vmatpush1.msra.mxu0 %v8435
        %8624 = vmatprep.subr.mxu0 %v8438
        %8625 = vmatpush1.msra.mxu0 %v8437
        %8626 = vmatprep.subr.mxu0 %v8440
        %8627 = vmatpush1.msra.mxu0 %v8439
        %8628 = vmatprep.subr.mxu0 %v8442
        %8629 = vmatpush1.msra.mxu0 %v8441
        %8630 = vmatprep.subr.mxu0 %v8444
        %8631 = vmatpush1.msra.mxu0 %v8443
        %8632 = vmatprep.subr.mxu0 %v8446
        %8633 = vmatpush1.msra.mxu0 %v8445
        %8634 = vmatprep.subr.mxu0 %v8448
        %8635 = vmatpush1.msra.mxu0 %v8447
        %8636 = vmatprep.subr.mxu0 %v8450
        %8637 = vmatpush1.msra.mxu0 %v8449
        %8638 = vmatprep.subr.mxu0 %v8452
        %8639 = vmatpush1.msra.mxu0 %v8451
        %8640 = vmatprep.subr.mxu0 %v8454
        %8641 = vmatpush1.msra.mxu0 %v8453
        %8642 = vmatprep.subr.mxu0 %v8456
        %8643 = vmatpush1.msra.mxu0 %v8455
        %8644 = vmatprep.mubr.f32.mxu0 %v8329
        %8645 = vmatmul.mubr.f32.gmra.mrb[0].mxu0 %v8297
        %v8646 = vpop.f32.mrb[0].mxu0
        %v8647 = vadd.f32 %v8509, %v8646
        %v8648 = vpop.f32.mrb[0].mxu0
        %v8649 = vadd.f32 %v8513, %v8648
        %8650 = vmatprep.mubr.f32.mxu0 %v8330
        %8651 = vmatmul.mubr.f32.gmra.mrb[0].mxu0 %v8298
        %v8652 = vpop.f32.mrb[0].mxu0
        %v8653 = vadd.f32 %v8509, %v8652
        %v8654 = vpop.f32.mrb[0].mxu0
        %v8655 = vadd.f32 %v8513, %v8654
        %8656 = vmatprep.mubr.f32.mxu0 %v8331
        %8657 = vmatmul.mubr.f32.gmra.mrb[0].mxu0 %v8299
        %v8658 = vpop.f32.mrb[0].mxu0
        %v8659 = vadd.f32 %v8509, %v8658
        %v8660 = vpop.f32.mrb[0].mxu0
        %v8661 = vadd.f32 %v8513, %v8660
        %8662 = vmatprep.mubr.f32.mxu0 %v8332
        %8663 = vmatmul.mubr.f32.gmra.mrb[0].mxu0 %v8300
        %v8664 = vpop.f32.mrb[0].mxu0
        %v8665 = vadd.f32 %v8509, %v8664
        %v8666 = vpop.f32.mrb[0].mxu0
        %v8667 = vadd.f32 %v8513, %v8666
        %8668 = vmatprep.mubr.f32.mxu0 %v8333
        %8669 = vmatmul.mubr.f32.gmra.mrb[0].mxu0 %v8301
        %v8670 = vpop.f32.mrb[0].mxu0
        %v8671 = vadd.f32 %v8509, %v8670
        %v8672 = vpop.f32.mrb[0].mxu0
        %v8673 = vadd.f32 %v8513, %v8672
        %8674 = vmatprep.mubr.f32.mxu0 %v8334
        %8675 = vmatmul.mubr.f32.gmra.mrb[0].mxu0 %v8302
        %v8676 = vpop.f32.mrb[0].mxu0
        %v8677 = vadd.f32 %v8509, %v8676
        %v8678 = vpop.f32.mrb[0].mxu0
        %v8679 = vadd.f32 %v8513, %v8678
        %8680 = vmatprep.mubr.f32.mxu0 %v8335
        %8681 = vmatmul.mubr.f32.gmra.mrb[0].mxu0 %v8303
        %v8682 = vpop.f32.mrb[0].mxu0
        %v8683 = vadd.f32 %v8509, %v8682
        %v8684 = vpop.f32.mrb[0].mxu0
        %v8685 = vadd.f32 %v8513, %v8684
        %8686 = vmatprep.mubr.f32.mxu0 %v8336
        %8687 = vmatmul.mubr.f32.gmra.mrb[0].mxu0 %v8304
        %v8688 = vpop.f32.mrb[0].mxu0
        %v8689 = vadd.f32 %v8509, %v8688
        %v8690 = vpop.f32.mrb[0].mxu0
        %v8691 = vadd.f32 %v8513, %v8690
        %8692 = vmatprep.mubr.f32.mxu0 %v8337
        %8693 = vmatmul.mubr.f32.gmra.mrb[0].mxu0 %v8305
        %v8694 = vpop.f32.mrb[0].mxu0
        %v8695 = vadd.f32 %v8509, %v8694
        %v8696 = vpop.f32.mrb[0].mxu0
        %v8697 = vadd.f32 %v8513, %v8696
        %8698 = vmatprep.mubr.f32.mxu0 %v8338
        %8699 = vmatmul.mubr.f32.gmra.mrb[0].mxu0 %v8306
        %v8700 = vpop.f32.mrb[0].mxu0
        %v8701 = vadd.f32 %v8509, %v8700
        %v8702 = vpop.f32.mrb[0].mxu0
        %v8703 = vadd.f32 %v8513, %v8702
        %8704 = vmatprep.mubr.f32.mxu0 %v8339
        %8705 = vmatmul.mubr.f32.gmra.mrb[0].mxu0 %v8307
        %v8706 = vpop.f32.mrb[0].mxu0
        %v8707 = vadd.f32 %v8509, %v8706
        %v8708 = vpop.f32.mrb[0].mxu0
        %v8709 = vadd.f32 %v8513, %v8708
        %8710 = vmatprep.mubr.f32.mxu0 %v8340
        %8711 = vmatmul.mubr.f32.gmra.mrb[0].mxu0 %v8308
        %v8712 = vpop.f32.mrb[0].mxu0
        %v8713 = vadd.f32 %v8509, %v8712
        %v8714 = vpop.f32.mrb[0].mxu0
        %v8715 = vadd.f32 %v8513, %v8714
        %8716 = vmatprep.mubr.f32.mxu0 %v8341
        %8717 = vmatmul.mubr.f32.gmra.mrb[0].mxu0 %v8309
        %v8718 = vpop.f32.mrb[0].mxu0
        %v8719 = vadd.f32 %v8509, %v8718
        %v8720 = vpop.f32.mrb[0].mxu0
        %v8721 = vadd.f32 %v8513, %v8720
        %8722 = vmatprep.mubr.f32.mxu0 %v8342
        %8723 = vmatmul.mubr.f32.gmra.mrb[0].mxu0 %v8310
        %v8724 = vpop.f32.mrb[0].mxu0
        %v8725 = vadd.f32 %v8509, %v8724
        %v8726 = vpop.f32.mrb[0].mxu0
        %v8727 = vadd.f32 %v8513, %v8726
        %8728 = vmatprep.mubr.f32.mxu0 %v8343
        %8729 = vmatmul.mubr.f32.gmra.mrb[0].mxu0 %v8311
        %v8730 = vpop.f32.mrb[0].mxu0
        %v8731 = vadd.f32 %v8509, %v8730
        %v8732 = vpop.f32.mrb[0].mxu0
        %v8733 = vadd.f32 %v8513, %v8732
        %8734 = vmatprep.mubr.f32.mxu0 %v8344
        %8735 = vmatmul.mubr.f32.gmra.mrb[0].mxu0 %v8312
        %v8736 = vpop.f32.mrb[0].mxu0
        %v8737 = vadd.f32 %v8509, %v8736
        %v8738 = vpop.f32.mrb[0].mxu0
        %v8739 = vadd.f32 %v8513, %v8738
        %8740 = vmatprep.mubr.f32.mxu0 %v8345
        %8741 = vmatmul.mubr.f32.gmra.mrb[0].mxu0 %v8313
        %v8742 = vpop.f32.mrb[0].mxu0
        %v8743 = vadd.f32 %v8509, %v8742
        %v8744 = vpop.f32.mrb[0].mxu0
        %v8745 = vadd.f32 %v8513, %v8744
        %8746 = vmatprep.mubr.f32.mxu0 %v8346
        %8747 = vmatmul.mubr.f32.gmra.mrb[0].mxu0 %v8314
        %v8748 = vpop.f32.mrb[0].mxu0
        %v8749 = vadd.f32 %v8509, %v8748
        %v8750 = vpop.f32.mrb[0].mxu0
        %v8751 = vadd.f32 %v8513, %v8750
        %8752 = vmatprep.mubr.f32.mxu0 %v8347
        %8753 = vmatmul.mubr.f32.gmra.mrb[0].mxu0 %v8315
        %v8754 = vpop.f32.mrb[0].mxu0
        %v8755 = vadd.f32 %v8509, %v8754
        %v8756 = vpop.f32.mrb[0].mxu0
        %v8757 = vadd.f32 %v8513, %v8756
        %8758 = vmatprep.mubr.f32.mxu0 %v8348
        %8759 = vmatmul.mubr.f32.gmra.mrb[0].mxu0 %v8316
        %v8760 = vpop.f32.mrb[0].mxu0
        %v8761 = vadd.f32 %v8509, %v8760
        %v8762 = vpop.f32.mrb[0].mxu0
        %v8763 = vadd.f32 %v8513, %v8762
        %8764 = vmatprep.mubr.f32.mxu0 %v8349
        %8765 = vmatmul.mubr.f32.gmra.mrb[0].mxu0 %v8317
        %v8766 = vpop.f32.mrb[0].mxu0
        %v8767 = vadd.f32 %v8509, %v8766
        %v8768 = vpop.f32.mrb[0].mxu0
        %v8769 = vadd.f32 %v8513, %v8768
        %8770 = vmatprep.mubr.f32.mxu0 %v8350
        %8771 = vmatmul.mubr.f32.gmra.mrb[0].mxu0 %v8318
        %v8772 = vpop.f32.mrb[0].mxu0
        %v8773 = vadd.f32 %v8509, %v8772
        %v8774 = vpop.f32.mrb[0].mxu0
        %v8775 = vadd.f32 %v8513, %v8774
        %8776 = vmatprep.mubr.f32.mxu0 %v8351
        %8777 = vmatmul.mubr.f32.gmra.mrb[0].mxu0 %v8319
        %v8778 = vpop.f32.mrb[0].mxu0
        %v8779 = vadd.f32 %v8509, %v8778
        %v8780 = vpop.f32.mrb[0].mxu0
        %v8781 = vadd.f32 %v8513, %v8780
        %8782 = vmatprep.mubr.f32.mxu0 %v8352
        %8783 = vmatmul.mubr.f32.gmra.mrb[0].mxu0 %v8320
        %v8784 = vpop.f32.mrb[0].mxu0
        %v8785 = vadd.f32 %v8509, %v8784
        %v8786 = vpop.f32.mrb[0].mxu0
        %v8787 = vadd.f32 %v8513, %v8786
        %8788 = vmatprep.mubr.f32.mxu0 %v8353
        %8789 = vmatmul.mubr.f32.gmra.mrb[0].mxu0 %v8321
        %v8790 = vpop.f32.mrb[0].mxu0
        %v8791 = vadd.f32 %v8509, %v8790
        %v8792 = vpop.f32.mrb[0].mxu0
        %v8793 = vadd.f32 %v8513, %v8792
        %8794 = vmatprep.mubr.f32.mxu0 %v8354
        %8795 = vmatmul.mubr.f32.gmra.mrb[0].mxu0 %v8322
        %v8796 = vpop.f32.mrb[0].mxu0
        %v8797 = vadd.f32 %v8509, %v8796
        %v8798 = vpop.f32.mrb[0].mxu0
        %v8799 = vadd.f32 %v8513, %v8798
        %8800 = vmatprep.mubr.f32.mxu0 %v8355
        %8801 = vmatmul.mubr.f32.gmra.mrb[0].mxu0 %v8323
        %v8802 = vpop.f32.mrb[0].mxu0
        %v8803 = vadd.f32 %v8509, %v8802
        %v8804 = vpop.f32.mrb[0].mxu0
        %v8805 = vadd.f32 %v8513, %v8804
        %8806 = vmatprep.mubr.f32.mxu0 %v8356
        %8807 = vmatmul.mubr.f32.gmra.mrb[0].mxu0 %v8324
        %v8808 = vpop.f32.mrb[0].mxu0
        %v8809 = vadd.f32 %v8509, %v8808
        %v8810 = vpop.f32.mrb[0].mxu0
        %v8811 = vadd.f32 %v8513, %v8810
        %8812 = vmatprep.mubr.f32.mxu0 %v8357
        %8813 = vmatmul.mubr.f32.gmra.mrb[0].mxu0 %v8325
        %v8814 = vpop.f32.mrb[0].mxu0
        %v8815 = vadd.f32 %v8509, %v8814
        %v8816 = vpop.f32.mrb[0].mxu0
        %v8817 = vadd.f32 %v8513, %v8816
        %8818 = vmatprep.mubr.f32.mxu0 %v8358
        %8819 = vmatmul.mubr.f32.gmra.mrb[0].mxu0 %v8326
        %v8820 = vpop.f32.mrb[0].mxu0
        %v8821 = vadd.f32 %v8509, %v8820
        %v8822 = vpop.f32.mrb[0].mxu0
        %v8823 = vadd.f32 %v8513, %v8822
        %8824 = vmatprep.mubr.f32.mxu0 %v8359
        %8825 = vmatmul.mubr.f32.gmra.mrb[0].mxu0 %v8327
        %v8826 = vpop.f32.mrb[0].mxu0
        %v8827 = vadd.f32 %v8509, %v8826
        %v8828 = vpop.f32.mrb[0].mxu0
        %v8829 = vadd.f32 %v8513, %v8828
        %8830 = vmatprep.mubr.f32.mxu0 %v8360
        %8831 = vmatmul.mubr.f32.gmra.mrb[0].mxu0 %v8328
        %v8832 = vpop.f32.mrb[0].mxu0
        %v8833 = vadd.f32 %v8509, %v8832
        %v8834 = vpop.f32.mrb[0].mxu0
        %v8835 = vadd.f32 %v8513, %v8834
        %8836 = vdwg.mxu0
        %8837 = vmatprep.subr.mxu0 %v8458
        %8838 = vmatpush1.msra.mxu0 %v8457
        %8839 = vmatprep.subr.mxu0 %v8460
        %8840 = vmatpush1.msra.mxu0 %v8459
        %8841 = vmatprep.subr.mxu0 %v8462
        %8842 = vmatpush1.msra.mxu0 %v8461
        %8843 = vmatprep.subr.mxu0 %v8464
        %8844 = vmatpush1.msra.mxu0 %v8463
        %8845 = vmatprep.subr.mxu0 %v8466
        %8846 = vmatpush1.msra.mxu0 %v8465
        %8847 = vmatprep.subr.mxu0 %v8468
        %8848 = vmatpush1.msra.mxu0 %v8467
        %8849 = vmatprep.subr.mxu0 %v8470
        %8850 = vmatpush1.msra.mxu0 %v8469
        %8851 = vmatprep.subr.mxu0 %v8472
        %8852 = vmatpush1.msra.mxu0 %v8471
        %8853 = vmatprep.subr.mxu0 %v8474
        %8854 = vmatpush1.msra.mxu0 %v8473
        %8855 = vmatprep.subr.mxu0 %v8476
        %8856 = vmatpush1.msra.mxu0 %v8475
        %8857 = vmatprep.subr.mxu0 %v8478
        %8858 = vmatpush1.msra.mxu0 %v8477
        %8859 = vmatprep.subr.mxu0 %v8480
        %8860 = vmatpush1.msra.mxu0 %v8479
        %8861 = vmatprep.subr.mxu0 %v8482
        %8862 = vmatpush1.msra.mxu0 %v8481
        %8863 = vmatprep.subr.mxu0 %v8484
        %8864 = vmatpush1.msra.mxu0 %v8483
        %8865 = vmatprep.subr.mxu0 %v8486
        %8866 = vmatpush1.msra.mxu0 %v8485
        %8867 = vmatprep.subr.mxu0 %v8488
        %8868 = vmatpush1.msra.mxu0 %v8487
        %8869 = vmatprep.subr.mxu0 %v8490
        %8870 = vmatpush1.msra.mxu0 %v8489
        %8871 = vmatprep.subr.mxu0 %v8492
        %8872 = vmatpush1.msra.mxu0 %v8491
        %8873 = vmatprep.subr.mxu0 %v8494
        %8874 = vmatpush1.msra.mxu0 %v8493
        %8875 = vmatprep.subr.mxu0 %v8496
        %8876 = vmatpush1.msra.mxu0 %v8495
        %8877 = vmatprep.subr.mxu0 %v8498
        %8878 = vmatpush1.msra.mxu0 %v8497
        %8879 = vmatprep.subr.mxu0 %v8500
        %8880 = vmatpush1.msra.mxu0 %v8499
        %8881 = vmatprep.subr.mxu0 %v8502
        %8882 = vmatpush1.msra.mxu0 %v8501
        %8883 = vmatprep.subr.mxu0 %v8504
        %8884 = vmatpush1.msra.mxu0 %v8503
        %8885 = vmatprep.subr.mxu0 0.0
        %8886 = vmatpush1.msra.mxu0 0.0
        %8887 = vmatprep.subr.mxu0 0.0
        %8888 = vmatpush1.msra.mxu0 0.0
        %8889 = vmatprep.subr.mxu0 0.0
        %8890 = vmatpush1.msra.mxu0 0.0
        %8891 = vmatprep.subr.mxu0 0.0
        %8892 = vmatpush1.msra.mxu0 0.0
        %8893 = vmatprep.subr.mxu0 0.0
        %8894 = vmatpush1.msra.mxu0 0.0
        %8895 = vmatprep.subr.mxu0 0.0
        %8896 = vmatpush1.msra.mxu0 0.0
        %8897 = vmatprep.subr.mxu0 0.0
        %8898 = vmatpush1.msra.mxu0 0.0
        %8899 = vmatprep.subr.mxu0 0.0
        %8900 = vmatpush1.msra.mxu0 0.0
        %8901 = vmatprep.mubr.f32.mxu0 %v8516
        %8902 = vmatmul.mubr.f32.gmra.mrb[0].mxu0 %v8361
        %v8903 = vpop.f32.mrb[0].mxu0
        %v8904 = vadd.f32 %v8647, %v8903
        %v8905 = vpop.f32.mrb[0].mxu0
        %v8906 = vadd.f32 %v8649, %v8905
        %8907 = vmatprep.mubr.f32.mxu0 %v8518
        %8908 = vmatmul.mubr.f32.gmra.mrb[0].mxu0 %v8362
        %v8909 = vpop.f32.mrb[0].mxu0
        %v8910 = vadd.f32 %v8653, %v8909
        %v8911 = vpop.f32.mrb[0].mxu0
        %v8912 = vadd.f32 %v8655, %v8911
        %8913 = vmatprep.mubr.f32.mxu0 %v8520
        %8914 = vmatmul.mubr.f32.gmra.mrb[0].mxu0 %v8363
        %v8915 = vpop.f32.mrb[0].mxu0
        %v8916 = vadd.f32 %v8659, %v8915
        %v8917 = vpop.f32.mrb[0].mxu0
        %v8918 = vadd.f32 %v8661, %v8917
        %8919 = vmatprep.mubr.f32.mxu0 %v8522
        %8920 = vmatmul.mubr.f32.gmra.mrb[0].mxu0 %v8364
        %v8921 = vpop.f32.mrb[0].mxu0
        %v8922 = vadd.f32 %v8665, %v8921
        %v8923 = vpop.f32.mrb[0].mxu0
        %v8924 = vadd.f32 %v8667, %v8923
        %8925 = vmatprep.mubr.f32.mxu0 %v8524
        %8926 = vmatmul.mubr.f32.gmra.mrb[0].mxu0 %v8365
        %v8927 = vpop.f32.mrb[0].mxu0
        %v8928 = vadd.f32 %v8671, %v8927
        %v8929 = vpop.f32.mrb[0].mxu0
        %v8930 = vadd.f32 %v8673, %v8929
        %8931 = vmatprep.mubr.f32.mxu0 %v8526
        %8932 = vmatmul.mubr.f32.gmra.mrb[0].mxu0 %v8366
        %v8933 = vpop.f32.mrb[0].mxu0
        %v8934 = vadd.f32 %v8677, %v8933
        %v8935 = vpop.f32.mrb[0].mxu0
        %v8936 = vadd.f32 %v8679, %v8935
        %8937 = vmatprep.mubr.f32.mxu0 %v8528
        %8938 = vmatmul.mubr.f32.gmra.mrb[0].mxu0 %v8367
        %v8939 = vpop.f32.mrb[0].mxu0
        %v8940 = vadd.f32 %v8683, %v8939
        %v8941 = vpop.f32.mrb[0].mxu0
        %v8942 = vadd.f32 %v8685, %v8941
        %8943 = vmatprep.mubr.f32.mxu0 %v8530
        %8944 = vmatmul.mubr.f32.gmra.mrb[0].mxu0 %v8368
        %v8945 = vpop.f32.mrb[0].mxu0
        %v8946 = vadd.f32 %v8689, %v8945
        %v8947 = vpop.f32.mrb[0].mxu0
        %v8948 = vadd.f32 %v8691, %v8947
        %8949 = vmatprep.mubr.f32.mxu0 %v8532
        %8950 = vmatmul.mubr.f32.gmra.mrb[0].mxu0 %v8369
        %v8951 = vpop.f32.mrb[0].mxu0
        %v8952 = vadd.f32 %v8695, %v8951
        %v8953 = vpop.f32.mrb[0].mxu0
        %v8954 = vadd.f32 %v8697, %v8953
        %8955 = vmatprep.mubr.f32.mxu0 %v8534
        %8956 = vmatmul.mubr.f32.gmra.mrb[0].mxu0 %v8370
        %v8957 = vpop.f32.mrb[0].mxu0
        %v8958 = vadd.f32 %v8701, %v8957
        %v8959 = vpop.f32.mrb[0].mxu0
        %v8960 = vadd.f32 %v8703, %v8959
        %8961 = vmatprep.mubr.f32.mxu0 %v8536
        %8962 = vmatmul.mubr.f32.gmra.mrb[0].mxu0 %v8371
        %v8963 = vpop.f32.mrb[0].mxu0
        %v8964 = vadd.f32 %v8707, %v8963
        %v8965 = vpop.f32.mrb[0].mxu0
        %v8966 = vadd.f32 %v8709, %v8965
        %8967 = vmatprep.mubr.f32.mxu0 %v8538
        %8968 = vmatmul.mubr.f32.gmra.mrb[0].mxu0 %v8372
        %v8969 = vpop.f32.mrb[0].mxu0
        %v8970 = vadd.f32 %v8713, %v8969
        %v8971 = vpop.f32.mrb[0].mxu0
        %v8972 = vadd.f32 %v8715, %v8971
        %8973 = vmatprep.mubr.f32.mxu0 %v8540
        %8974 = vmatmul.mubr.f32.gmra.mrb[0].mxu0 %v8373
        %v8975 = vpop.f32.mrb[0].mxu0
        %v8976 = vadd.f32 %v8719, %v8975
        %v8977 = vpop.f32.mrb[0].mxu0
        %v8978 = vadd.f32 %v8721, %v8977
        %8979 = vmatprep.mubr.f32.mxu0 %v8542
        %8980 = vmatmul.mubr.f32.gmra.mrb[0].mxu0 %v8374
        %v8981 = vpop.f32.mrb[0].mxu0
        %v8982 = vadd.f32 %v8725, %v8981
        %v8983 = vpop.f32.mrb[0].mxu0
        %v8984 = vadd.f32 %v8727, %v8983
        %8985 = vmatprep.mubr.f32.mxu0 %v8544
        %8986 = vmatmul.mubr.f32.gmra.mrb[0].mxu0 %v8375
        %v8987 = vpop.f32.mrb[0].mxu0
        %v8988 = vadd.f32 %v8731, %v8987
        %v8989 = vpop.f32.mrb[0].mxu0
        %v8990 = vadd.f32 %v8733, %v8989
        %8991 = vmatprep.mubr.f32.mxu0 %v8546
        %8992 = vmatmul.mubr.f32.gmra.mrb[0].mxu0 %v8376
        %v8993 = vpop.f32.mrb[0].mxu0
        %v8994 = vadd.f32 %v8737, %v8993
        %v8995 = vpop.f32.mrb[0].mxu0
        %v8996 = vadd.f32 %v8739, %v8995
        %8997 = vmatprep.mubr.f32.mxu0 %v8548
        %8998 = vmatmul.mubr.f32.gmra.mrb[0].mxu0 %v8377
        %v8999 = vpop.f32.mrb[0].mxu0
        %v9000 = vadd.f32 %v8743, %v8999
        %v9001 = vpop.f32.mrb[0].mxu0
        %v9002 = vadd.f32 %v8745, %v9001
        %9003 = vmatprep.mubr.f32.mxu0 %v8550
        %9004 = vmatmul.mubr.f32.gmra.mrb[0].mxu0 %v8378
        %v9005 = vpop.f32.mrb[0].mxu0
        %v9006 = vadd.f32 %v8749, %v9005
        %v9007 = vpop.f32.mrb[0].mxu0
        %v9008 = vadd.f32 %v8751, %v9007
        %9009 = vmatprep.mubr.f32.mxu0 %v8552
        %9010 = vmatmul.mubr.f32.gmra.mrb[0].mxu0 %v8379
        %v9011 = vpop.f32.mrb[0].mxu0
        %v9012 = vadd.f32 %v8755, %v9011
        %v9013 = vpop.f32.mrb[0].mxu0
        %v9014 = vadd.f32 %v8757, %v9013
        %9015 = vmatprep.mubr.f32.mxu0 %v8554
        %9016 = vmatmul.mubr.f32.gmra.mrb[0].mxu0 %v8380
        %v9017 = vpop.f32.mrb[0].mxu0
        %v9018 = vadd.f32 %v8761, %v9017
        %v9019 = vpop.f32.mrb[0].mxu0
        %v9020 = vadd.f32 %v8763, %v9019
        %9021 = vmatprep.mubr.f32.mxu0 %v8556
        %9022 = vmatmul.mubr.f32.gmra.mrb[0].mxu0 %v8381
        %v9023 = vpop.f32.mrb[0].mxu0
        %v9024 = vadd.f32 %v8767, %v9023
        %v9025 = vpop.f32.mrb[0].mxu0
        %v9026 = vadd.f32 %v8769, %v9025
        %9027 = vmatprep.mubr.f32.mxu0 %v8558
        %9028 = vmatmul.mubr.f32.gmra.mrb[0].mxu0 %v8382
        %v9029 = vpop.f32.mrb[0].mxu0
        %v9030 = vadd.f32 %v8773, %v9029
        %v9031 = vpop.f32.mrb[0].mxu0
        %v9032 = vadd.f32 %v8775, %v9031
        %9033 = vmatprep.mubr.f32.mxu0 %v8560
        %9034 = vmatmul.mubr.f32.gmra.mrb[0].mxu0 %v8383
        %v9035 = vpop.f32.mrb[0].mxu0
        %v9036 = vadd.f32 %v8779, %v9035
        %v9037 = vpop.f32.mrb[0].mxu0
        %v9038 = vadd.f32 %v8781, %v9037
        %9039 = vmatprep.mubr.f32.mxu0 %v8562
        %9040 = vmatmul.mubr.f32.gmra.mrb[0].mxu0 %v8384
        %v9041 = vpop.f32.mrb[0].mxu0
        %v9042 = vadd.f32 %v8785, %v9041
        %v9043 = vpop.f32.mrb[0].mxu0
        %v9044 = vadd.f32 %v8787, %v9043
        %9045 = vmatprep.mubr.f32.mxu0 %v8564
        %9046 = vmatmul.mubr.f32.gmra.mrb[0].mxu0 %v8385
        %v9047 = vpop.f32.mrb[0].mxu0
        %v9048 = vadd.f32 %v8791, %v9047
        %v9049 = vpop.f32.mrb[0].mxu0
        %v9050 = vadd.f32 %v8793, %v9049
        %9051 = vmatprep.mubr.f32.mxu0 %v8566
        %9052 = vmatmul.mubr.f32.gmra.mrb[0].mxu0 %v8386
        %v9053 = vpop.f32.mrb[0].mxu0
        %v9054 = vadd.f32 %v8797, %v9053
        %v9055 = vpop.f32.mrb[0].mxu0
        %v9056 = vadd.f32 %v8799, %v9055
        %9057 = vmatprep.mubr.f32.mxu0 %v8568
        %9058 = vmatmul.mubr.f32.gmra.mrb[0].mxu0 %v8387
        %v9059 = vpop.f32.mrb[0].mxu0
        %v9060 = vadd.f32 %v8803, %v9059
        %v9061 = vpop.f32.mrb[0].mxu0
        %v9062 = vadd.f32 %v8805, %v9061
        %9063 = vmatprep.mubr.f32.mxu0 %v8570
        %9064 = vmatmul.mubr.f32.gmra.mrb[0].mxu0 %v8388
        %v9065 = vpop.f32.mrb[0].mxu0
        %v9066 = vadd.f32 %v8809, %v9065
        %v9067 = vpop.f32.mrb[0].mxu0
        %v9068 = vadd.f32 %v8811, %v9067
        %9069 = vmatprep.mubr.f32.mxu0 %v8572
        %9070 = vmatmul.mubr.f32.gmra.mrb[0].mxu0 %v8389
        %v9071 = vpop.f32.mrb[0].mxu0
        %v9072 = vadd.f32 %v8815, %v9071
        %v9073 = vpop.f32.mrb[0].mxu0
        %v9074 = vadd.f32 %v8817, %v9073
        %9075 = vmatprep.mubr.f32.mxu0 %v8574
        %9076 = vmatmul.mubr.f32.gmra.mrb[0].mxu0 %v8390
        %v9077 = vpop.f32.mrb[0].mxu0
        %v9078 = vadd.f32 %v8821, %v9077
        %v9079 = vpop.f32.mrb[0].mxu0
        %v9080 = vadd.f32 %v8823, %v9079
        %9081 = vmatprep.mubr.f32.mxu0 %v8576
        %9082 = vmatmul.mubr.f32.gmra.mrb[0].mxu0 %v8391
        %v9083 = vpop.f32.mrb[0].mxu0
        %v9084 = vadd.f32 %v8827, %v9083
        %v9085 = vpop.f32.mrb[0].mxu0
        %v9086 = vadd.f32 %v8829, %v9085
        %9087 = vmatprep.mubr.f32.mxu0 %v8578
        %9088 = vmatmul.mubr.f32.gmra.mrb[0].mxu0 %v8392
        %v9089 = vpop.f32.mrb[0].mxu0
        %v9090 = vadd.f32 %v8833, %v9089
        %v9091 = vpop.f32.mrb[0].mxu0
        %v9092 = vadd.f32 %v8835, %v9091
        %9093 = vdwg.mxu0
        %v9094 = vmax.f32 %v8904, 0.0
        %v9095 = vmax.f32 %v8906, 0.0
        %v9096 = vmax.f32 %v8910, 0.0
        %v9097 = vmax.f32 %v8912, 0.0
        %v9098 = vmax.f32 %v8916, 0.0
        %v9099 = vmax.f32 %v8918, 0.0
        %v9100 = vmax.f32 %v8922, 0.0
        %v9101 = vmax.f32 %v8924, 0.0
        %v9102 = vmax.f32 %v8928, 0.0
        %v9103 = vmax.f32 %v8930, 0.0
        %v9104 = vmax.f32 %v8934, 0.0
        %v9105 = vmax.f32 %v8936, 0.0
        %v9106 = vmax.f32 %v8940, 0.0
        %v9107 = vmax.f32 %v8942, 0.0
        %v9108 = vmax.f32 %v8946, 0.0
        %v9109 = vmax.f32 %v8948, 0.0
        %v9110 = vmax.f32 %v8952, 0.0
        %v9111 = vmax.f32 %v8954, 0.0
        %v9112 = vmax.f32 %v8958, 0.0
        %v9113 = vmax.f32 %v8960, 0.0
        %v9114 = vmax.f32 %v8964, 0.0
        %v9115 = vmax.f32 %v8966, 0.0
        %v9116 = vmax.f32 %v8970, 0.0
        %v9117 = vmax.f32 %v8972, 0.0
        %v9118 = vmax.f32 %v8976, 0.0
        %v9119 = vmax.f32 %v8978, 0.0
        %v9120 = vmax.f32 %v8982, 0.0
        %v9121 = vmax.f32 %v8984, 0.0
        %v9122 = vmax.f32 %v8988, 0.0
        %v9123 = vmax.f32 %v8990, 0.0
        %v9124 = vmax.f32 %v8994, 0.0
        %v9125 = vmax.f32 %v8996, 0.0
        %v9126 = vmax.f32 %v9000, 0.0
        %v9127 = vmax.f32 %v9002, 0.0
        %v9128 = vmax.f32 %v9006, 0.0
        %v9129 = vmax.f32 %v9008, 0.0
        %v9130 = vmax.f32 %v9012, 0.0
        %v9131 = vmax.f32 %v9014, 0.0
        %v9132 = vmax.f32 %v9018, 0.0
        %v9133 = vmax.f32 %v9020, 0.0
        %v9134 = vmax.f32 %v9024, 0.0
        %v9135 = vmax.f32 %v9026, 0.0
        %v9136 = vmax.f32 %v9030, 0.0
        %v9137 = vmax.f32 %v9032, 0.0
        %v9138 = vmax.f32 %v9036, 0.0
        %v9139 = vmax.f32 %v9038, 0.0
        %v9140 = vmax.f32 %v9042, 0.0
        %v9141 = vmax.f32 %v9044, 0.0
        %v9142 = vmax.f32 %v9048, 0.0
        %v9143 = vmax.f32 %v9050, 0.0
        %v9144 = vmax.f32 %v9054, 0.0
        %v9145 = vmax.f32 %v9056, 0.0
        %v9146 = vmax.f32 %v9060, 0.0
        %v9147 = vmax.f32 %v9062, 0.0
        %v9148 = vmax.f32 %v9066, 0.0
        %v9149 = vmax.f32 %v9068, 0.0
        %v9150 = vmax.f32 %v9072, 0.0
        %v9151 = vmax.f32 %v9074, 0.0
        %v9152 = vmax.f32 %v9078, 0.0
        %v9153 = vmax.f32 %v9080, 0.0
        %v9154 = vmax.f32 %v9084, 0.0
        %v9155 = vmax.f32 %v9086, 0.0
        %v9156 = vmax.f32 %v9090, 0.0
        %v9157 = vmax.f32 %v9092, 0.0
        %v9158 = vadd.f32 %v412, 0.0
        %v9159 = vadd.f32 %v413, 0.0
        %v9160 = vadd.f32 %v415, 0.0
        %v9161 = vadd.f32 %v416, 0.0
        %v9162 = vadd.f32 %v418, 0.0
        %v9163 = vadd.f32 %v419, 0.0
        %v9164 = vadd.f32 %v421, 0.0
        %v9165 = vadd.f32 %v422, 0.0
        %v9166 = vadd.f32 %v424, 0.0
        %v9167 = vadd.f32 %v425, 0.0
        %v9168 = vadd.f32 %v427, 0.0
        %v9169 = vadd.f32 %v428, 0.0
        %v9170 = vadd.f32 %v430, 0.0
        %v9171 = vadd.f32 %v431, 0.0
        %v9172 = vadd.f32 %v433, 0.0
        %v9173 = vadd.f32 %v434, 0.0
        %v9174 = vadd.f32 %v436, 0.0
        %v9175 = vadd.f32 %v437, 0.0
        %v9176 = vadd.f32 %v439, 0.0
        %v9177 = vadd.f32 %v440, 0.0
        %v9178 = vadd.f32 %v442, 0.0
        %v9179 = vadd.f32 %v443, 0.0
        %v9180 = vadd.f32 %v445, 0.0
        %v9181 = vadd.f32 %v446, 0.0
        %v9182 = vadd.f32 %v448, 0.0
        %v9183 = vadd.f32 %v449, 0.0
        %v9184 = vadd.f32 %v451, 0.0
        %v9185 = vadd.f32 %v452, 0.0
        %v9186 = vadd.f32 %v454, 0.0
        %v9187 = vadd.f32 %v455, 0.0
        %v9188 = vadd.f32 %v457, 0.0
        %v9189 = vadd.f32 %v458, 0.0
        %v9193 = vrot.slane %v412, 1
        %v9194 = vrot.slane %v413, 1
        %v9195 = vsel %vm543, %v9193, %v9194
        %v9196 = vrot.slane %v414, 1
        %v9197 = vsel %vm543, %v9194, %v9196
        %v9230 = vadd.f32 %v9158, %v9195
        %v9231 = vadd.f32 %v9159, %v9197
        %v9232 = vadd.f32 %v9160, %v546
        %v9233 = vadd.f32 %v9161, %v548
        %v9234 = vadd.f32 %v9162, %v551
        %v9235 = vadd.f32 %v9163, %v553
        %v9236 = vadd.f32 %v9164, %v556
        %v9237 = vadd.f32 %v9165, %v558
        %v9238 = vadd.f32 %v9166, %v561
        %v9239 = vadd.f32 %v9167, %v563
        %v9240 = vadd.f32 %v9168, %v566
        %v9241 = vadd.f32 %v9169, %v568
        %v9242 = vadd.f32 %v9170, %v571
        %v9243 = vadd.f32 %v9171, %v573
        %v9244 = vadd.f32 %v9172, %v576
        %v9245 = vadd.f32 %v9173, %v578
        %v9246 = vadd.f32 %v9174, %v581
        %v9247 = vadd.f32 %v9175, %v583
        %v9248 = vadd.f32 %v9176, %v586
        %v9249 = vadd.f32 %v9177, %v588
        %v9250 = vadd.f32 %v9178, %v591
        %v9251 = vadd.f32 %v9179, %v593
        %v9252 = vadd.f32 %v9180, %v596
        %v9253 = vadd.f32 %v9181, %v598
        %v9254 = vadd.f32 %v9182, %v601
        %v9255 = vadd.f32 %v9183, %v603
        %v9256 = vadd.f32 %v9184, %v606
        %v9257 = vadd.f32 %v9185, %v608
        %v9258 = vadd.f32 %v9186, %v611
        %v9259 = vadd.f32 %v9187, %v613
        %v9260 = vadd.f32 %v9188, %v616
        %v9261 = vadd.f32 %v9189, %v618
        %v9262 = vrot.slane %v412, 2
        %v9263 = vrot.slane %v413, 2
        %v9264 = vsel %vm1733, %v9262, %v9263
        %v9265 = vrot.slane %v414, 2
        %v9266 = vsel %vm1733, %v9263, %v9265
        %v9267 = vrot.slane %v415, 2
        %v9268 = vrot.slane %v416, 2
        %v9269 = vsel %vm1733, %v9267, %v9268
        %v9270 = vrot.slane %v417, 2
        %v9271 = vsel %vm1733, %v9268, %v9270
        %v9272 = vrot.slane %v418, 2
        %v9273 = vrot.slane %v419, 2
        %v9274 = vsel %vm1733, %v9272, %v9273
        %v9275 = vrot.slane %v420, 2
        %v9276 = vsel %vm1733, %v9273, %v9275
        %v9277 = vrot.slane %v421, 2
        %v9278 = vrot.slane %v422, 2
        %v9279 = vsel %vm1733, %v9277, %v9278
        %v9280 = vrot.slane %v423, 2
        %v9281 = vsel %vm1733, %v9278, %v9280
        %v9282 = vrot.slane %v424, 2
        %v9283 = vrot.slane %v425, 2
        %v9284 = vsel %vm1733, %v9282, %v9283
        %v9285 = vrot.slane %v426, 2
        %v9286 = vsel %vm1733, %v9283, %v9285
        %v9287 = vrot.slane %v427, 2
        %v9288 = vrot.slane %v428, 2
        %v9289 = vsel %vm1733, %v9287, %v9288
        %v9290 = vrot.slane %v429, 2
        %v9291 = vsel %vm1733, %v9288, %v9290
        %v9292 = vrot.slane %v430, 2
        %v9293 = vrot.slane %v431, 2
        %v9294 = vsel %vm1733, %v9292, %v9293
        %v9295 = vrot.slane %v432, 2
        %v9296 = vsel %vm1733, %v9293, %v9295
        %v9297 = vrot.slane %v433, 2
        %v9298 = vrot.slane %v434, 2
        %v9299 = vsel %vm1733, %v9297, %v9298
        %v9300 = vrot.slane %v435, 2
        %v9301 = vsel %vm1733, %v9298, %v9300
        %v9302 = vrot.slane %v436, 2
        %v9303 = vrot.slane %v437, 2
        %v9304 = vsel %vm1733, %v9302, %v9303
        %v9305 = vrot.slane %v438, 2
        %v9306 = vsel %vm1733, %v9303, %v9305
        %v9307 = vrot.slane %v439, 2
        %v9308 = vrot.slane %v440, 2
        %v9309 = vsel %vm1733, %v9307, %v9308
        %v9310 = vrot.slane %v441, 2
        %v9311 = vsel %vm1733, %v9308, %v9310
        %v9312 = vrot.slane %v442, 2
        %v9313 = vrot.slane %v443, 2
        %v9314 = vsel %vm1733, %v9312, %v9313
        %v9315 = vrot.slane %v444, 2
        %v9316 = vsel %vm1733, %v9313, %v9315
        %v9317 = vrot.slane %v445, 2
        %v9318 = vrot.slane %v446, 2
        %v9319 = vsel %vm1733, %v9317, %v9318
        %v9320 = vrot.slane %v447, 2
        %v9321 = vsel %vm1733, %v9318, %v9320
        %v9322 = vrot.slane %v448, 2
        %v9323 = vrot.slane %v449, 2
        %v9324 = vsel %vm1733, %v9322, %v9323
        %v9325 = vrot.slane %v450, 2
        %v9326 = vsel %vm1733, %v9323, %v9325
        %v9327 = vrot.slane %v451, 2
        %v9328 = vrot.slane %v452, 2
        %v9329 = vsel %vm1733, %v9327, %v9328
        %v9330 = vrot.slane %v453, 2
        %v9331 = vsel %vm1733, %v9328, %v9330
        %v9332 = vrot.slane %v454, 2
        %v9333 = vrot.slane %v455, 2
        %v9334 = vsel %vm1733, %v9332, %v9333
        %v9335 = vrot.slane %v456, 2
        %v9336 = vsel %vm1733, %v9333, %v9335
        %v9337 = vrot.slane %v457, 2
        %v9338 = vrot.slane %v458, 2
        %v9339 = vsel %vm1733, %v9337, %v9338
        %v9340 = vrot.slane %v459, 2
        %v9341 = vsel %vm1733, %v9338, %v9340
        %v9374 = vadd.f32 %v9230, %v9264
        %v9375 = vadd.f32 %v9231, %v9266
        %v9376 = vadd.f32 %v9232, %v9269
        %v9377 = vadd.f32 %v9233, %v9271
        %v9378 = vadd.f32 %v9234, %v9274
        %v9379 = vadd.f32 %v9235, %v9276
        %v9380 = vadd.f32 %v9236, %v9279
        %v9381 = vadd.f32 %v9237, %v9281
        %v9382 = vadd.f32 %v9238, %v9284
        %v9383 = vadd.f32 %v9239, %v9286
        %v9384 = vadd.f32 %v9240, %v9289
        %v9385 = vadd.f32 %v9241, %v9291
        %v9386 = vadd.f32 %v9242, %v9294
        %v9387 = vadd.f32 %v9243, %v9296
        %v9388 = vadd.f32 %v9244, %v9299
        %v9389 = vadd.f32 %v9245, %v9301
        %v9390 = vadd.f32 %v9246, %v9304
        %v9391 = vadd.f32 %v9247, %v9306
        %v9392 = vadd.f32 %v9248, %v9309
        %v9393 = vadd.f32 %v9249, %v9311
        %v9394 = vadd.f32 %v9250, %v9314
        %v9395 = vadd.f32 %v9251, %v9316
        %v9396 = vadd.f32 %v9252, %v9319
        %v9397 = vadd.f32 %v9253, %v9321
        %v9398 = vadd.f32 %v9254, %v9324
        %v9399 = vadd.f32 %v9255, %v9326
        %v9400 = vadd.f32 %v9256, %v9329
        %v9401 = vadd.f32 %v9257, %v9331
        %v9402 = vadd.f32 %v9258, %v9334
        %v9403 = vadd.f32 %v9259, %v9336
        %v9404 = vadd.f32 %v9260, %v9339
        %v9405 = vadd.f32 %v9261, %v9341
        %v9406 = vadd.f32 %v9374, %v415
        %v9407 = vadd.f32 %v9375, %v416
        %v9408 = vadd.f32 %v9376, %v418
        %v9409 = vadd.f32 %v9377, %v419
        %v9410 = vadd.f32 %v9378, %v421
        %v9411 = vadd.f32 %v9379, %v422
        %v9412 = vadd.f32 %v9380, %v424
        %v9413 = vadd.f32 %v9381, %v425
        %v9414 = vadd.f32 %v9382, %v427
        %v9415 = vadd.f32 %v9383, %v428
        %v9416 = vadd.f32 %v9384, %v430
        %v9417 = vadd.f32 %v9385, %v431
        %v9418 = vadd.f32 %v9386, %v433
        %v9419 = vadd.f32 %v9387, %v434
        %v9420 = vadd.f32 %v9388, %v436
        %v9421 = vadd.f32 %v9389, %v437
        %v9422 = vadd.f32 %v9390, %v439
        %v9423 = vadd.f32 %v9391, %v440
        %v9424 = vadd.f32 %v9392, %v442
        %v9425 = vadd.f32 %v9393, %v443
        %v9426 = vadd.f32 %v9394, %v445
        %v9427 = vadd.f32 %v9395, %v446
        %v9428 = vadd.f32 %v9396, %v448
        %v9429 = vadd.f32 %v9397, %v449
        %v9430 = vadd.f32 %v9398, %v451
        %v9431 = vadd.f32 %v9399, %v452
        %v9432 = vadd.f32 %v9400, %v454
        %v9433 = vadd.f32 %v9401, %v455
        %v9434 = vadd.f32 %v9402, %v457
        %v9435 = vadd.f32 %v9403, %v458
        %v9436 = vadd.f32 %v9404, %v460
        %v9437 = vadd.f32 %v9405, %v461
        %v9440 = vadd.f32 %v9406, %v546
        %v9441 = vadd.f32 %v9407, %v548
        %v9442 = vadd.f32 %v9408, %v551
        %v9443 = vadd.f32 %v9409, %v553
        %v9444 = vadd.f32 %v9410, %v556
        %v9445 = vadd.f32 %v9411, %v558
        %v9446 = vadd.f32 %v9412, %v561
        %v9447 = vadd.f32 %v9413, %v563
        %v9448 = vadd.f32 %v9414, %v566
        %v9449 = vadd.f32 %v9415, %v568
        %v9450 = vadd.f32 %v9416, %v571
        %v9451 = vadd.f32 %v9417, %v573
        %v9452 = vadd.f32 %v9418, %v576
        %v9453 = vadd.f32 %v9419, %v578
        %v9454 = vadd.f32 %v9420, %v581
        %v9455 = vadd.f32 %v9421, %v583
        %v9456 = vadd.f32 %v9422, %v586
        %v9457 = vadd.f32 %v9423, %v588
        %v9458 = vadd.f32 %v9424, %v591
        %v9459 = vadd.f32 %v9425, %v593
        %v9460 = vadd.f32 %v9426, %v596
        %v9461 = vadd.f32 %v9427, %v598
        %v9462 = vadd.f32 %v9428, %v601
        %v9463 = vadd.f32 %v9429, %v603
        %v9464 = vadd.f32 %v9430, %v606
        %v9465 = vadd.f32 %v9431, %v608
        %v9466 = vadd.f32 %v9432, %v611
        %v9467 = vadd.f32 %v9433, %v613
        %v9468 = vadd.f32 %v9434, %v616
        %v9469 = vadd.f32 %v9435, %v618
        %v9470 = vadd.f32 %v9436, %v621
        %v9471 = vadd.f32 %v9437, %v623
        %v9472 = vrot.slane %v460, 2
        %v9473 = vrot.slane %v461, 2
        %v9474 = vsel %vm1733, %v9472, %v9473
        %v9475 = vrot.slane %v462, 2
        %v9476 = vsel %vm1733, %v9473, %v9475
        %v9479 = vadd.f32 %v9440, %v9269
        %v9480 = vadd.f32 %v9441, %v9271
        %v9481 = vadd.f32 %v9442, %v9274
        %v9482 = vadd.f32 %v9443, %v9276
        %v9483 = vadd.f32 %v9444, %v9279
        %v9484 = vadd.f32 %v9445, %v9281
        %v9485 = vadd.f32 %v9446, %v9284
        %v9486 = vadd.f32 %v9447, %v9286
        %v9487 = vadd.f32 %v9448, %v9289
        %v9488 = vadd.f32 %v9449, %v9291
        %v9489 = vadd.f32 %v9450, %v9294
        %v9490 = vadd.f32 %v9451, %v9296
        %v9491 = vadd.f32 %v9452, %v9299
        %v9492 = vadd.f32 %v9453, %v9301
        %v9493 = vadd.f32 %v9454, %v9304
        %v9494 = vadd.f32 %v9455, %v9306
        %v9495 = vadd.f32 %v9456, %v9309
        %v9496 = vadd.f32 %v9457, %v9311
        %v9497 = vadd.f32 %v9458, %v9314
        %v9498 = vadd.f32 %v9459, %v9316
        %v9499 = vadd.f32 %v9460, %v9319
        %v9500 = vadd.f32 %v9461, %v9321
        %v9501 = vadd.f32 %v9462, %v9324
        %v9502 = vadd.f32 %v9463, %v9326
        %v9503 = vadd.f32 %v9464, %v9329
        %v9504 = vadd.f32 %v9465, %v9331
        %v9505 = vadd.f32 %v9466, %v9334
        %v9506 = vadd.f32 %v9467, %v9336
        %v9507 = vadd.f32 %v9468, %v9339
        %v9508 = vadd.f32 %v9469, %v9341
        %v9509 = vadd.f32 %v9470, %v9474
        %v9510 = vadd.f32 %v9471, %v9476
        %v9511 = vadd.f32 %v9479, %v418
        %v9512 = vadd.f32 %v9480, %v419
        %v9513 = vadd.f32 %v9481, %v421
        %v9514 = vadd.f32 %v9482, %v422
        %v9515 = vadd.f32 %v9483, %v424
        %v9516 = vadd.f32 %v9484, %v425
        %v9517 = vadd.f32 %v9485, %v427
        %v9518 = vadd.f32 %v9486, %v428
        %v9519 = vadd.f32 %v9487, %v430
        %v9520 = vadd.f32 %v9488, %v431
        %v9521 = vadd.f32 %v9489, %v433
        %v9522 = vadd.f32 %v9490, %v434
        %v9523 = vadd.f32 %v9491, %v436
        %v9524 = vadd.f32 %v9492, %v437
        %v9525 = vadd.f32 %v9493, %v439
        %v9526 = vadd.f32 %v9494, %v440
        %v9527 = vadd.f32 %v9495, %v442
        %v9528 = vadd.f32 %v9496, %v443
        %v9529 = vadd.f32 %v9497, %v445
        %v9530 = vadd.f32 %v9498, %v446
        %v9531 = vadd.f32 %v9499, %v448
        %v9532 = vadd.f32 %v9500, %v449
        %v9533 = vadd.f32 %v9501, %v451
        %v9534 = vadd.f32 %v9502, %v452
        %v9535 = vadd.f32 %v9503, %v454
        %v9536 = vadd.f32 %v9504, %v455
        %v9537 = vadd.f32 %v9505, %v457
        %v9538 = vadd.f32 %v9506, %v458
        %v9539 = vadd.f32 %v9507, %v460
        %v9540 = vadd.f32 %v9508, %v461
        %v9541 = vadd.f32 %v9509, %v463
        %v9542 = vadd.f32 %v9510, %v464
        %v9546 = vrot.slane %v463, 1
        %v9547 = vrot.slane %v464, 1
        %v9548 = vsel %vm543, %v9546, %v9547
        %v9549 = vrot.slane %v465, 1
        %v9550 = vsel %vm543, %v9547, %v9549
        %v9553 = vadd.f32 %v9511, %v551
        %v9554 = vadd.f32 %v9512, %v553
        %v9555 = vadd.f32 %v9513, %v556
        %v9556 = vadd.f32 %v9514, %v558
        %v9557 = vadd.f32 %v9515, %v561
        %v9558 = vadd.f32 %v9516, %v563
        %v9559 = vadd.f32 %v9517, %v566
        %v9560 = vadd.f32 %v9518, %v568
        %v9561 = vadd.f32 %v9519, %v571
        %v9562 = vadd.f32 %v9520, %v573
        %v9563 = vadd.f32 %v9521, %v576
        %v9564 = vadd.f32 %v9522, %v578
        %v9565 = vadd.f32 %v9523, %v581
        %v9566 = vadd.f32 %v9524, %v583
        %v9567 = vadd.f32 %v9525, %v586
        %v9568 = vadd.f32 %v9526, %v588
        %v9569 = vadd.f32 %v9527, %v591
        %v9570 = vadd.f32 %v9528, %v593
        %v9571 = vadd.f32 %v9529, %v596
        %v9572 = vadd.f32 %v9530, %v598
        %v9573 = vadd.f32 %v9531, %v601
        %v9574 = vadd.f32 %v9532, %v603
        %v9575 = vadd.f32 %v9533, %v606
        %v9576 = vadd.f32 %v9534, %v608
        %v9577 = vadd.f32 %v9535, %v611
        %v9578 = vadd.f32 %v9536, %v613
        %v9579 = vadd.f32 %v9537, %v616
        %v9580 = vadd.f32 %v9538, %v618
        %v9581 = vadd.f32 %v9539, %v621
        %v9582 = vadd.f32 %v9540, %v623
        %v9583 = vadd.f32 %v9541, %v9548
        %v9584 = vadd.f32 %v9542, %v9550
        %v9585 = vrot.slane %v463, 2
        %v9586 = vrot.slane %v464, 2
        %v9587 = vsel %vm1733, %v9585, %v9586
        %v9588 = vrot.slane %v465, 2
        %v9589 = vsel %vm1733, %v9586, %v9588
        %v9592 = vadd.f32 %v9553, %v9274
        %v9593 = vadd.f32 %v9554, %v9276
        %v9594 = vadd.f32 %v9555, %v9279
        %v9595 = vadd.f32 %v9556, %v9281
        %v9596 = vadd.f32 %v9557, %v9284
        %v9597 = vadd.f32 %v9558, %v9286
        %v9598 = vadd.f32 %v9559, %v9289
        %v9599 = vadd.f32 %v9560, %v9291
        %v9600 = vadd.f32 %v9561, %v9294
        %v9601 = vadd.f32 %v9562, %v9296
        %v9602 = vadd.f32 %v9563, %v9299
        %v9603 = vadd.f32 %v9564, %v9301
        %v9604 = vadd.f32 %v9565, %v9304
        %v9605 = vadd.f32 %v9566, %v9306
        %v9606 = vadd.f32 %v9567, %v9309
        %v9607 = vadd.f32 %v9568, %v9311
        %v9608 = vadd.f32 %v9569, %v9314
        %v9609 = vadd.f32 %v9570, %v9316
        %v9610 = vadd.f32 %v9571, %v9319
        %v9611 = vadd.f32 %v9572, %v9321
        %v9612 = vadd.f32 %v9573, %v9324
        %v9613 = vadd.f32 %v9574, %v9326
        %v9614 = vadd.f32 %v9575, %v9329
        %v9615 = vadd.f32 %v9576, %v9331
        %v9616 = vadd.f32 %v9577, %v9334
        %v9617 = vadd.f32 %v9578, %v9336
        %v9618 = vadd.f32 %v9579, %v9339
        %v9619 = vadd.f32 %v9580, %v9341
        %v9620 = vadd.f32 %v9581, %v9474
        %v9621 = vadd.f32 %v9582, %v9476
        %v9622 = vadd.f32 %v9583, %v9587
        %v9623 = vadd.f32 %v9584, %v9589
        %v9624 = vmul.f32 %v9592, 0.11111111
        %v9625 = vmul.f32 %v9593, 0.11111111
        %v9626 = vmul.f32 %v9594, 0.11111111
        %v9627 = vmul.f32 %v9595, 0.11111111
        %v9628 = vmul.f32 %v9596, 0.11111111
        %v9629 = vmul.f32 %v9597, 0.11111111
        %v9630 = vmul.f32 %v9598, 0.11111111
        %v9631 = vmul.f32 %v9599, 0.11111111
        %v9632 = vmul.f32 %v9600, 0.11111111
        %v9633 = vmul.f32 %v9601, 0.11111111
        %v9634 = vmul.f32 %v9602, 0.11111111
        %v9635 = vmul.f32 %v9603, 0.11111111
        %v9636 = vmul.f32 %v9604, 0.11111111
        %v9637 = vmul.f32 %v9605, 0.11111111
        %v9638 = vmul.f32 %v9606, 0.11111111
        %v9639 = vmul.f32 %v9607, 0.11111111
        %v9640 = vmul.f32 %v9608, 0.11111111
        %v9641 = vmul.f32 %v9609, 0.11111111
        %v9642 = vmul.f32 %v9610, 0.11111111
        %v9643 = vmul.f32 %v9611, 0.11111111
        %v9644 = vmul.f32 %v9612, 0.11111111
        %v9645 = vmul.f32 %v9613, 0.11111111
        %v9646 = vmul.f32 %v9614, 0.11111111
        %v9647 = vmul.f32 %v9615, 0.11111111
        %v9648 = vmul.f32 %v9616, 0.11111111
        %v9649 = vmul.f32 %v9617, 0.11111111
        %v9650 = vmul.f32 %v9618, 0.11111111
        %v9651 = vmul.f32 %v9619, 0.11111111
        %v9652 = vmul.f32 %v9620, 0.11111111
        %v9653 = vmul.f32 %v9621, 0.11111111
        %v9654 = vmul.f32 %v9622, 0.11111111
        %v9655 = vmul.f32 %v9623, 0.11111111
        %v9656 = vld [vmem:[%s9] sm:$0xff]
        %v9657 = vld [vmem:[%s9 + $0x8] sm:$0xff]
        %v9658 = vld [vmem:[%s9 + $0x10] sm:$0xff]
        %v9659 = vld [vmem:[%s9 + $0x18] sm:$0xff]
        %v9660 = vld [vmem:[%s9 + $0x20] sm:$0xff]
        %v9661 = vld [vmem:[%s9 + $0x28] sm:$0xff]
        %v9662 = vld [vmem:[%s9 + $0x30] sm:$0xff]
        %v9663 = vld [vmem:[%s9 + $0x38] sm:$0xff]
        %s9664 = scalar_lea.vmem %s11, 4
        %v9665 = vld [vmem:[%s9664] sm:$0x3]
        %v9667 = vlaneseq
        %v9668 = vshrl.u32 %v9667, 7
        %v9669 = vsub.s32 0, %v9668
        %v9670 = vrot.slane %v9665, %v9669
        %v9671 = vlaneseq
        %v9672 = vshrl.u32 %v9671, 7
        %v9673 = vsub.s32 1, %v9672
        %v9674 = vrot.slane %v9665, %v9673
        %v9678 = vsel %vm624, %v9624, 0
        %v9681 = vsel %vm624, %v9625, 0
        %v9684 = vsel %vm624, %v9626, 0
        %v9687 = vsel %vm624, %v9627, 0
        %v9690 = vsel %vm624, %v9628, 0
        %v9693 = vsel %vm624, %v9629, 0
        %v9696 = vsel %vm624, %v9630, 0
        %v9699 = vsel %vm624, %v9631, 0
        %v9702 = vsel %vm624, %v9632, 0
        %v9705 = vsel %vm624, %v9633, 0
        %v9708 = vsel %vm624, %v9634, 0
        %v9711 = vsel %vm624, %v9635, 0
        %v9714 = vsel %vm624, %v9636, 0
        %v9717 = vsel %vm624, %v9637, 0
        %v9720 = vsel %vm624, %v9638, 0
        %v9723 = vsel %vm624, %v9639, 0
        %v9726 = vsel %vm624, %v9640, 0
        %v9729 = vsel %vm624, %v9641, 0
        %v9732 = vsel %vm624, %v9642, 0
        %v9735 = vsel %vm624, %v9643, 0
        %v9738 = vsel %vm624, %v9644, 0
        %v9741 = vsel %vm624, %v9645, 0
        %v9744 = vsel %vm624, %v9646, 0
        %v9747 = vsel %vm624, %v9647, 0
        %v9750 = vsel %vm624, %v9648, 0
        %v9753 = vsel %vm624, %v9649, 0
        %v9756 = vsel %vm624, %v9650, 0
        %v9759 = vsel %vm624, %v9651, 0
        %v9762 = vsel %vm624, %v9652, 0
        %v9765 = vsel %vm624, %v9653, 0
        %v9768 = vsel %vm624, %v9654, 0
        %v9771 = vsel %vm624, %v9655, 0
        %9773 = vmatprep.subr.mxu0 %v9657
        %9774 = vmatpush1.msra.mxu0 %v9656
        %9775 = vmatprep.subr.mxu0 %v9659
        %9776 = vmatpush1.msra.mxu0 %v9658
        %9777 = vmatprep.subr.mxu0 %v9661
        %9778 = vmatpush1.msra.mxu0 %v9660
        %9779 = vmatprep.subr.mxu0 %v9663
        %9780 = vmatpush1.msra.mxu0 %v9662
        %9781 = vmatprep.subr.mxu0 0.0
        %9782 = vmatpush1.msra.mxu0 0.0
        %9783 = vmatprep.subr.mxu0 0.0
        %9784 = vmatpush1.msra.mxu0 0.0
        %9785 = vmatprep.subr.mxu0 0.0
        %9786 = vmatpush1.msra.mxu0 0.0
        %9787 = vmatprep.subr.mxu0 0.0
        %9788 = vmatpush1.msra.mxu0 0.0
        %9789 = vmatprep.subr.mxu0 0.0
        %9790 = vmatpush1.msra.mxu0 0.0
        %9791 = vmatprep.subr.mxu0 0.0
        %9792 = vmatpush1.msra.mxu0 0.0
        %9793 = vmatprep.subr.mxu0 0.0
        %9794 = vmatpush1.msra.mxu0 0.0
        %9795 = vmatprep.subr.mxu0 0.0
        %9796 = vmatpush1.msra.mxu0 0.0
        %9797 = vmatprep.subr.mxu0 0.0
        %9798 = vmatpush1.msra.mxu0 0.0
        %9799 = vmatprep.subr.mxu0 0.0
        %9800 = vmatpush1.msra.mxu0 0.0
        %9801 = vmatprep.subr.mxu0 0.0
        %9802 = vmatpush1.msra.mxu0 0.0
        %9803 = vmatprep.subr.mxu0 0.0
        %9804 = vmatpush1.msra.mxu0 0.0
        %9805 = vmatprep.subr.mxu0 0.0
        %9806 = vmatpush1.msra.mxu0 0.0
        %9807 = vmatprep.subr.mxu0 0.0
        %9808 = vmatpush1.msra.mxu0 0.0
        %9809 = vmatprep.subr.mxu0 0.0
        %9810 = vmatpush1.msra.mxu0 0.0
        %9811 = vmatprep.subr.mxu0 0.0
        %9812 = vmatpush1.msra.mxu0 0.0
        %9813 = vmatprep.subr.mxu0 0.0
        %9814 = vmatpush1.msra.mxu0 0.0
        %9815 = vmatprep.subr.mxu0 0.0
        %9816 = vmatpush1.msra.mxu0 0.0
        %9817 = vmatprep.subr.mxu0 0.0
        %9818 = vmatpush1.msra.mxu0 0.0
        %9819 = vmatprep.subr.mxu0 0.0
        %9820 = vmatpush1.msra.mxu0 0.0
        %9821 = vmatprep.subr.mxu0 0.0
        %9822 = vmatpush1.msra.mxu0 0.0
        %9823 = vmatprep.subr.mxu0 0.0
        %9824 = vmatpush1.msra.mxu0 0.0
        %9825 = vmatprep.subr.mxu0 0.0
        %9826 = vmatpush1.msra.mxu0 0.0
        %9827 = vmatprep.subr.mxu0 0.0
        %9828 = vmatpush1.msra.mxu0 0.0
        %9829 = vmatprep.subr.mxu0 0.0
        %9830 = vmatpush1.msra.mxu0 0.0
        %9831 = vmatprep.subr.mxu0 0.0
        %9832 = vmatpush1.msra.mxu0 0.0
        %9833 = vmatprep.subr.mxu0 0.0
        %9834 = vmatpush1.msra.mxu0 0.0
        %9835 = vmatprep.subr.mxu0 0.0
        %9836 = vmatpush1.msra.mxu0 0.0
        %9837 = vmatprep.mubr.f32.mxu0 0.0
        %9838 = vmatmul.mubr.f32.gmra.mrb[0].mxu0 %v9678
        %v9839 = vpop.f32.mrb[0].mxu0
        %v9840 = vadd.f32 %v9670, %v9839
        %v9841 = vpop.f32.mrb[0].mxu0
        %v9842 = vadd.f32 %v9674, %v9841
        %9843 = vmatprep.mubr.f32.mxu0 0.0
        %9844 = vmatmul.mubr.f32.gmra.mrb[0].mxu0 %v9681
        %v9845 = vpop.f32.mrb[0].mxu0
        %v9846 = vadd.f32 %v9670, %v9845
        %v9847 = vpop.f32.mrb[0].mxu0
        %v9848 = vadd.f32 %v9674, %v9847
        %9849 = vmatprep.mubr.f32.mxu0 0.0
        %9850 = vmatmul.mubr.f32.gmra.mrb[0].mxu0 %v9684
        %v9851 = vpop.f32.mrb[0].mxu0
        %v9852 = vadd.f32 %v9670, %v9851
        %v9853 = vpop.f32.mrb[0].mxu0
        %v9854 = vadd.f32 %v9674, %v9853
        %9855 = vmatprep.mubr.f32.mxu0 0.0
        %9856 = vmatmul.mubr.f32.gmra.mrb[0].mxu0 %v9687
        %v9857 = vpop.f32.mrb[0].mxu0
        %v9858 = vadd.f32 %v9670, %v9857
        %v9859 = vpop.f32.mrb[0].mxu0
        %v9860 = vadd.f32 %v9674, %v9859
        %9861 = vmatprep.mubr.f32.mxu0 0.0
        %9862 = vmatmul.mubr.f32.gmra.mrb[0].mxu0 %v9690
        %v9863 = vpop.f32.mrb[0].mxu0
        %v9864 = vadd.f32 %v9670, %v9863
        %v9865 = vpop.f32.mrb[0].mxu0
        %v9866 = vadd.f32 %v9674, %v9865
        %9867 = vmatprep.mubr.f32.mxu0 0.0
        %9868 = vmatmul.mubr.f32.gmra.mrb[0].mxu0 %v9693
        %v9869 = vpop.f32.mrb[0].mxu0
        %v9870 = vadd.f32 %v9670, %v9869
        %v9871 = vpop.f32.mrb[0].mxu0
        %v9872 = vadd.f32 %v9674, %v9871
        %9873 = vmatprep.mubr.f32.mxu0 0.0
        %9874 = vmatmul.mubr.f32.gmra.mrb[0].mxu0 %v9696
        %v9875 = vpop.f32.mrb[0].mxu0
        %v9876 = vadd.f32 %v9670, %v9875
        %v9877 = vpop.f32.mrb[0].mxu0
        %v9878 = vadd.f32 %v9674, %v9877
        %9879 = vmatprep.mubr.f32.mxu0 0.0
        %9880 = vmatmul.mubr.f32.gmra.mrb[0].mxu0 %v9699
        %v9881 = vpop.f32.mrb[0].mxu0
        %v9882 = vadd.f32 %v9670, %v9881
        %v9883 = vpop.f32.mrb[0].mxu0
        %v9884 = vadd.f32 %v9674, %v9883
        %9885 = vmatprep.mubr.f32.mxu0 0.0
        %9886 = vmatmul.mubr.f32.gmra.mrb[0].mxu0 %v9702
        %v9887 = vpop.f32.mrb[0].mxu0
        %v9888 = vadd.f32 %v9670, %v9887
        %v9889 = vpop.f32.mrb[0].mxu0
        %v9890 = vadd.f32 %v9674, %v9889
        %9891 = vmatprep.mubr.f32.mxu0 0.0
        %9892 = vmatmul.mubr.f32.gmra.mrb[0].mxu0 %v9705
        %v9893 = vpop.f32.mrb[0].mxu0
        %v9894 = vadd.f32 %v9670, %v9893
        %v9895 = vpop.f32.mrb[0].mxu0
        %v9896 = vadd.f32 %v9674, %v9895
        %9897 = vmatprep.mubr.f32.mxu0 0.0
        %9898 = vmatmul.mubr.f32.gmra.mrb[0].mxu0 %v9708
        %v9899 = vpop.f32.mrb[0].mxu0
        %v9900 = vadd.f32 %v9670, %v9899
        %v9901 = vpop.f32.mrb[0].mxu0
        %v9902 = vadd.f32 %v9674, %v9901
        %9903 = vmatprep.mubr.f32.mxu0 0.0
        %9904 = vmatmul.mubr.f32.gmra.mrb[0].mxu0 %v9711
        %v9905 = vpop.f32.mrb[0].mxu0
        %v9906 = vadd.f32 %v9670, %v9905
        %v9907 = vpop.f32.mrb[0].mxu0
        %v9908 = vadd.f32 %v9674, %v9907
        %9909 = vmatprep.mubr.f32.mxu0 0.0
        %9910 = vmatmul.mubr.f32.gmra.mrb[0].mxu0 %v9714
        %v9911 = vpop.f32.mrb[0].mxu0
        %v9912 = vadd.f32 %v9670, %v9911
        %v9913 = vpop.f32.mrb[0].mxu0
        %v9914 = vadd.f32 %v9674, %v9913
        %9915 = vmatprep.mubr.f32.mxu0 0.0
        %9916 = vmatmul.mubr.f32.gmra.mrb[0].mxu0 %v9717
        %v9917 = vpop.f32.mrb[0].mxu0
        %v9918 = vadd.f32 %v9670, %v9917
        %v9919 = vpop.f32.mrb[0].mxu0
        %v9920 = vadd.f32 %v9674, %v9919
        %9921 = vmatprep.mubr.f32.mxu0 0.0
        %9922 = vmatmul.mubr.f32.gmra.mrb[0].mxu0 %v9720
        %v9923 = vpop.f32.mrb[0].mxu0
        %v9924 = vadd.f32 %v9670, %v9923
        %v9925 = vpop.f32.mrb[0].mxu0
        %v9926 = vadd.f32 %v9674, %v9925
        %9927 = vmatprep.mubr.f32.mxu0 0.0
        %9928 = vmatmul.mubr.f32.gmra.mrb[0].mxu0 %v9723
        %v9929 = vpop.f32.mrb[0].mxu0
        %v9930 = vadd.f32 %v9670, %v9929
        %v9931 = vpop.f32.mrb[0].mxu0
        %v9932 = vadd.f32 %v9674, %v9931
        %9933 = vmatprep.mubr.f32.mxu0 0.0
        %9934 = vmatmul.mubr.f32.gmra.mrb[0].mxu0 %v9726
        %v9935 = vpop.f32.mrb[0].mxu0
        %v9936 = vadd.f32 %v9670, %v9935
        %v9937 = vpop.f32.mrb[0].mxu0
        %v9938 = vadd.f32 %v9674, %v9937
        %9939 = vmatprep.mubr.f32.mxu0 0.0
        %9940 = vmatmul.mubr.f32.gmra.mrb[0].mxu0 %v9729
        %v9941 = vpop.f32.mrb[0].mxu0
        %v9942 = vadd.f32 %v9670, %v9941
        %v9943 = vpop.f32.mrb[0].mxu0
        %v9944 = vadd.f32 %v9674, %v9943
        %9945 = vmatprep.mubr.f32.mxu0 0.0
        %9946 = vmatmul.mubr.f32.gmra.mrb[0].mxu0 %v9732
        %v9947 = vpop.f32.mrb[0].mxu0
        %v9948 = vadd.f32 %v9670, %v9947
        %v9949 = vpop.f32.mrb[0].mxu0
        %v9950 = vadd.f32 %v9674, %v9949
        %9951 = vmatprep.mubr.f32.mxu0 0.0
        %9952 = vmatmul.mubr.f32.gmra.mrb[0].mxu0 %v9735
        %v9953 = vpop.f32.mrb[0].mxu0
        %v9954 = vadd.f32 %v9670, %v9953
        %v9955 = vpop.f32.mrb[0].mxu0
        %v9956 = vadd.f32 %v9674, %v9955
        %9957 = vmatprep.mubr.f32.mxu0 0.0
        %9958 = vmatmul.mubr.f32.gmra.mrb[0].mxu0 %v9738
        %v9959 = vpop.f32.mrb[0].mxu0
        %v9960 = vadd.f32 %v9670, %v9959
        %v9961 = vpop.f32.mrb[0].mxu0
        %v9962 = vadd.f32 %v9674, %v9961
        %9963 = vmatprep.mubr.f32.mxu0 0.0
        %9964 = vmatmul.mubr.f32.gmra.mrb[0].mxu0 %v9741
        %v9965 = vpop.f32.mrb[0].mxu0
        %v9966 = vadd.f32 %v9670, %v9965
        %v9967 = vpop.f32.mrb[0].mxu0
        %v9968 = vadd.f32 %v9674, %v9967
        %9969 = vmatprep.mubr.f32.mxu0 0.0
        %9970 = vmatmul.mubr.f32.gmra.mrb[0].mxu0 %v9744
        %v9971 = vpop.f32.mrb[0].mxu0
        %v9972 = vadd.f32 %v9670, %v9971
        %v9973 = vpop.f32.mrb[0].mxu0
        %v9974 = vadd.f32 %v9674, %v9973
        %9975 = vmatprep.mubr.f32.mxu0 0.0
        %9976 = vmatmul.mubr.f32.gmra.mrb[0].mxu0 %v9747
        %v9977 = vpop.f32.mrb[0].mxu0
        %v9978 = vadd.f32 %v9670, %v9977
        %v9979 = vpop.f32.mrb[0].mxu0
        %v9980 = vadd.f32 %v9674, %v9979
        %9981 = vmatprep.mubr.f32.mxu0 0.0
        %9982 = vmatmul.mubr.f32.gmra.mrb[0].mxu0 %v9750
        %v9983 = vpop.f32.mrb[0].mxu0
        %v9984 = vadd.f32 %v9670, %v9983
        %v9985 = vpop.f32.mrb[0].mxu0
        %v9986 = vadd.f32 %v9674, %v9985
        %9987 = vmatprep.mubr.f32.mxu0 0.0
        %9988 = vmatmul.mubr.f32.gmra.mrb[0].mxu0 %v9753
        %v9989 = vpop.f32.mrb[0].mxu0
        %v9990 = vadd.f32 %v9670, %v9989
        %v9991 = vpop.f32.mrb[0].mxu0
        %v9992 = vadd.f32 %v9674, %v9991
        %9993 = vmatprep.mubr.f32.mxu0 0.0
        %9994 = vmatmul.mubr.f32.gmra.mrb[0].mxu0 %v9756
        %v9995 = vpop.f32.mrb[0].mxu0
        %v9996 = vadd.f32 %v9670, %v9995
        %v9997 = vpop.f32.mrb[0].mxu0
        %v9998 = vadd.f32 %v9674, %v9997
        %9999 = vmatprep.mubr.f32.mxu0 0.0
        %10000 = vmatmul.mubr.f32.gmra.mrb[0].mxu0 %v9759
        %v10001 = vpop.f32.mrb[0].mxu0
        %v10002 = vadd.f32 %v9670, %v10001
        %v10003 = vpop.f32.mrb[0].mxu0
        %v10004 = vadd.f32 %v9674, %v10003
        %10005 = vmatprep.mubr.f32.mxu0 0.0
        %10006 = vmatmul.mubr.f32.gmra.mrb[0].mxu0 %v9762
        %v10007 = vpop.f32.mrb[0].mxu0
        %v10008 = vadd.f32 %v9670, %v10007
        %v10009 = vpop.f32.mrb[0].mxu0
        %v10010 = vadd.f32 %v9674, %v10009
        %10011 = vmatprep.mubr.f32.mxu0 0.0
        %10012 = vmatmul.mubr.f32.gmra.mrb[0].mxu0 %v9765
        %v10013 = vpop.f32.mrb[0].mxu0
        %v10014 = vadd.f32 %v9670, %v10013
        %v10015 = vpop.f32.mrb[0].mxu0
        %v10016 = vadd.f32 %v9674, %v10015
        %10017 = vmatprep.mubr.f32.mxu0 0.0
        %10018 = vmatmul.mubr.f32.gmra.mrb[0].mxu0 %v9768
        %v10019 = vpop.f32.mrb[0].mxu0
        %v10020 = vadd.f32 %v9670, %v10019
        %v10021 = vpop.f32.mrb[0].mxu0
        %v10022 = vadd.f32 %v9674, %v10021
        %10023 = vmatprep.mubr.f32.mxu0 0.0
        %10024 = vmatmul.mubr.f32.gmra.mrb[0].mxu0 %v9771
        %v10025 = vpop.f32.mrb[0].mxu0
        %v10026 = vadd.f32 %v9670, %v10025
        %v10027 = vpop.f32.mrb[0].mxu0
        %v10028 = vadd.f32 %v9674, %v10027
        %10029 = vdwg.mxu0
        %v10030 = vmax.f32 %v9840, 0.0
        %v10031 = vmax.f32 %v9842, 0.0
        %v10032 = vmax.f32 %v9846, 0.0
        %v10033 = vmax.f32 %v9848, 0.0
        %v10034 = vmax.f32 %v9852, 0.0
        %v10035 = vmax.f32 %v9854, 0.0
        %v10036 = vmax.f32 %v9858, 0.0
        %v10037 = vmax.f32 %v9860, 0.0
        %v10038 = vmax.f32 %v9864, 0.0
        %v10039 = vmax.f32 %v9866, 0.0
        %v10040 = vmax.f32 %v9870, 0.0
        %v10041 = vmax.f32 %v9872, 0.0
        %v10042 = vmax.f32 %v9876, 0.0
        %v10043 = vmax.f32 %v9878, 0.0
        %v10044 = vmax.f32 %v9882, 0.0
        %v10045 = vmax.f32 %v9884, 0.0
        %v10046 = vmax.f32 %v9888, 0.0
        %v10047 = vmax.f32 %v9890, 0.0
        %v10048 = vmax.f32 %v9894, 0.0
        %v10049 = vmax.f32 %v9896, 0.0
        %v10050 = vmax.f32 %v9900, 0.0
        %v10051 = vmax.f32 %v9902, 0.0
        %v10052 = vmax.f32 %v9906, 0.0
        %v10053 = vmax.f32 %v9908, 0.0
        %v10054 = vmax.f32 %v9912, 0.0
        %v10055 = vmax.f32 %v9914, 0.0
        %v10056 = vmax.f32 %v9918, 0.0
        %v10057 = vmax.f32 %v9920, 0.0
        %v10058 = vmax.f32 %v9924, 0.0
        %v10059 = vmax.f32 %v9926, 0.0
        %v10060 = vmax.f32 %v9930, 0.0
        %v10061 = vmax.f32 %v9932, 0.0
        %v10062 = vmax.f32 %v9936, 0.0
        %v10063 = vmax.f32 %v9938, 0.0
        %v10064 = vmax.f32 %v9942, 0.0
        %v10065 = vmax.f32 %v9944, 0.0
        %v10066 = vmax.f32 %v9948, 0.0
        %v10067 = vmax.f32 %v9950, 0.0
        %v10068 = vmax.f32 %v9954, 0.0
        %v10069 = vmax.f32 %v9956, 0.0
        %v10070 = vmax.f32 %v9960, 0.0
        %v10071 = vmax.f32 %v9962, 0.0
        %v10072 = vmax.f32 %v9966, 0.0
        %v10073 = vmax.f32 %v9968, 0.0
        %v10074 = vmax.f32 %v9972, 0.0
        %v10075 = vmax.f32 %v9974, 0.0
        %v10076 = vmax.f32 %v9978, 0.0
        %v10077 = vmax.f32 %v9980, 0.0
        %v10078 = vmax.f32 %v9984, 0.0
        %v10079 = vmax.f32 %v9986, 0.0
        %v10080 = vmax.f32 %v9990, 0.0
        %v10081 = vmax.f32 %v9992, 0.0
        %v10082 = vmax.f32 %v9996, 0.0
        %v10083 = vmax.f32 %v9998, 0.0
        %v10084 = vmax.f32 %v10002, 0.0
        %v10085 = vmax.f32 %v10004, 0.0
        %v10086 = vmax.f32 %v10008, 0.0
        %v10087 = vmax.f32 %v10010, 0.0
        %v10088 = vmax.f32 %v10014, 0.0
        %v10089 = vmax.f32 %v10016, 0.0
        %v10090 = vmax.f32 %v10020, 0.0
        %v10091 = vmax.f32 %v10022, 0.0
        %v10092 = vmax.f32 %v10026, 0.0
        %v10093 = vmax.f32 %v10028, 0.0
        %10158 = vrot.lane.b32.xlu0 %v3957, 64
        %v10159 = vpop.permute.xlu0 %10158
        %10160 = vrot.lane.b32.xlu0 %v3958, 64
        %v10161 = vpop.permute.xlu0 %10160
        %10162 = vrot.lane.b32.xlu0 %v3959, 64
        %v10163 = vpop.permute.xlu0 %10162
        %10164 = vrot.lane.b32.xlu0 %v3960, 64
        %v10165 = vpop.permute.xlu0 %10164
        %10166 = vrot.lane.b32.xlu0 %v3961, 64
        %v10167 = vpop.permute.xlu0 %10166
        %10168 = vrot.lane.b32.xlu0 %v3962, 64
        %v10169 = vpop.permute.xlu0 %10168
        %10170 = vrot.lane.b32.xlu0 %v3963, 64
        %v10171 = vpop.permute.xlu0 %10170
        %10172 = vrot.lane.b32.xlu0 %v3964, 64
        %v10173 = vpop.permute.xlu0 %10172
        %10174 = vrot.lane.b32.xlu0 %v3965, 64
        %v10175 = vpop.permute.xlu0 %10174
        %10176 = vrot.lane.b32.xlu0 %v3966, 64
        %v10177 = vpop.permute.xlu0 %10176
        %10178 = vrot.lane.b32.xlu0 %v3967, 64
        %v10179 = vpop.permute.xlu0 %10178
        %10180 = vrot.lane.b32.xlu0 %v3968, 64
        %v10181 = vpop.permute.xlu0 %10180
        %10182 = vrot.lane.b32.xlu0 %v3969, 64
        %v10183 = vpop.permute.xlu0 %10182
        %10184 = vrot.lane.b32.xlu0 %v3970, 64
        %v10185 = vpop.permute.xlu0 %10184
        %10186 = vrot.lane.b32.xlu0 %v3971, 64
        %v10187 = vpop.permute.xlu0 %10186
        %10188 = vrot.lane.b32.xlu0 %v3972, 64
        %v10189 = vpop.permute.xlu0 %10188
        %10190 = vrot.lane.b32.xlu0 %v3973, 64
        %v10191 = vpop.permute.xlu0 %10190
        %10192 = vrot.lane.b32.xlu0 %v3974, 64
        %v10193 = vpop.permute.xlu0 %10192
        %10194 = vrot.lane.b32.xlu0 %v3975, 64
        %v10195 = vpop.permute.xlu0 %10194
        %10196 = vrot.lane.b32.xlu0 %v3976, 64
        %v10197 = vpop.permute.xlu0 %10196
        %10198 = vrot.lane.b32.xlu0 %v3977, 64
        %v10199 = vpop.permute.xlu0 %10198
        %10200 = vrot.lane.b32.xlu0 %v3978, 64
        %v10201 = vpop.permute.xlu0 %10200
        %10202 = vrot.lane.b32.xlu0 %v3979, 64
        %v10203 = vpop.permute.xlu0 %10202
        %10204 = vrot.lane.b32.xlu0 %v3980, 64
        %v10205 = vpop.permute.xlu0 %10204
        %10206 = vrot.lane.b32.xlu0 %v3981, 64
        %v10207 = vpop.permute.xlu0 %10206
        %10208 = vrot.lane.b32.xlu0 %v3982, 64
        %v10209 = vpop.permute.xlu0 %10208
        %10210 = vrot.lane.b32.xlu0 %v3983, 64
        %v10211 = vpop.permute.xlu0 %10210
        %10212 = vrot.lane.b32.xlu0 %v3984, 64
        %v10213 = vpop.permute.xlu0 %10212
        %10214 = vrot.lane.b32.xlu0 %v3985, 64
        %v10215 = vpop.permute.xlu0 %10214
        %10216 = vrot.lane.b32.xlu0 %v3986, 64
        %v10217 = vpop.permute.xlu0 %10216
        %10218 = vrot.lane.b32.xlu0 %v3987, 64
        %v10219 = vpop.permute.xlu0 %10218
        %10220 = vrot.lane.b32.xlu0 %v3988, 64
        %v10221 = vpop.permute.xlu0 %10220
        %10222 = vrot.lane.b32.xlu0 %v3989, 64
        %v10223 = vpop.permute.xlu0 %10222
        %10224 = vrot.lane.b32.xlu0 %v3990, 64
        %v10225 = vpop.permute.xlu0 %10224
        %10226 = vrot.lane.b32.xlu0 %v3991, 64
        %v10227 = vpop.permute.xlu0 %10226
        %10228 = vrot.lane.b32.xlu0 %v3992, 64
        %v10229 = vpop.permute.xlu0 %10228
        %10230 = vrot.lane.b32.xlu0 %v3993, 64
        %v10231 = vpop.permute.xlu0 %10230
        %10232 = vrot.lane.b32.xlu0 %v3994, 64
        %v10233 = vpop.permute.xlu0 %10232
        %10234 = vrot.lane.b32.xlu0 %v3995, 64
        %v10235 = vpop.permute.xlu0 %10234
        %10236 = vrot.lane.b32.xlu0 %v3996, 64
        %v10237 = vpop.permute.xlu0 %10236
        %10238 = vrot.lane.b32.xlu0 %v3997, 64
        %v10239 = vpop.permute.xlu0 %10238
        %10240 = vrot.lane.b32.xlu0 %v3998, 64
        %v10241 = vpop.permute.xlu0 %10240
        %10242 = vrot.lane.b32.xlu0 %v3999, 64
        %v10243 = vpop.permute.xlu0 %10242
        %10244 = vrot.lane.b32.xlu0 %v4000, 64
        %v10245 = vpop.permute.xlu0 %10244
        %10246 = vrot.lane.b32.xlu0 %v4001, 64
        %v10247 = vpop.permute.xlu0 %10246
        %10248 = vrot.lane.b32.xlu0 %v4002, 64
        %v10249 = vpop.permute.xlu0 %10248
        %10250 = vrot.lane.b32.xlu0 %v4003, 64
        %v10251 = vpop.permute.xlu0 %10250
        %10252 = vrot.lane.b32.xlu0 %v4004, 64
        %v10253 = vpop.permute.xlu0 %10252
        %10254 = vrot.lane.b32.xlu0 %v4005, 64
        %v10255 = vpop.permute.xlu0 %10254
        %10256 = vrot.lane.b32.xlu0 %v4006, 64
        %v10257 = vpop.permute.xlu0 %10256
        %10258 = vrot.lane.b32.xlu0 %v4007, 64
        %v10259 = vpop.permute.xlu0 %10258
        %10260 = vrot.lane.b32.xlu0 %v4008, 64
        %v10261 = vpop.permute.xlu0 %10260
        %10262 = vrot.lane.b32.xlu0 %v4009, 64
        %v10263 = vpop.permute.xlu0 %10262
        %10264 = vrot.lane.b32.xlu0 %v4010, 64
        %v10265 = vpop.permute.xlu0 %10264
        %10266 = vrot.lane.b32.xlu0 %v4011, 64
        %v10267 = vpop.permute.xlu0 %10266
        %10268 = vrot.lane.b32.xlu0 %v4012, 64
        %v10269 = vpop.permute.xlu0 %10268
        %10270 = vrot.lane.b32.xlu0 %v4013, 64
        %v10271 = vpop.permute.xlu0 %10270
        %10272 = vrot.lane.b32.xlu0 %v4014, 64
        %v10273 = vpop.permute.xlu0 %10272
        %10274 = vrot.lane.b32.xlu0 %v4015, 64
        %v10275 = vpop.permute.xlu0 %10274
        %10276 = vrot.lane.b32.xlu0 %v4016, 64
        %v10277 = vpop.permute.xlu0 %10276
        %10278 = vrot.lane.b32.xlu0 %v4017, 64
        %v10279 = vpop.permute.xlu0 %10278
        %10280 = vrot.lane.b32.xlu0 %v4018, 64
        %v10281 = vpop.permute.xlu0 %10280
        %10282 = vrot.lane.b32.xlu0 %v4019, 64
        %v10283 = vpop.permute.xlu0 %10282
        %10284 = vrot.lane.b32.xlu0 %v4020, 64
        %v10285 = vpop.permute.xlu0 %10284
        %v10286 = vsel %vm2393, %v10159, %v10161
        %v10287 = vsel %vm2393, %v10163, %v10165
        %v10288 = vsel %vm2393, %v10167, %v10169
        %v10289 = vsel %vm2393, %v10171, %v10173
        %v10290 = vsel %vm2393, %v10175, %v10177
        %v10291 = vsel %vm2393, %v10179, %v10181
        %v10292 = vsel %vm2393, %v10183, %v10185
        %v10293 = vsel %vm2393, %v10187, %v10189
        %v10294 = vsel %vm2393, %v10191, %v10193
        %v10295 = vsel %vm2393, %v10195, %v10197
        %v10296 = vsel %vm2393, %v10199, %v10201
        %v10297 = vsel %vm2393, %v10203, %v10205
        %v10298 = vsel %vm2393, %v10207, %v10209
        %v10299 = vsel %vm2393, %v10211, %v10213
        %v10300 = vsel %vm2393, %v10215, %v10217
        %v10301 = vsel %vm2393, %v10219, %v10221
        %v10302 = vsel %vm2393, %v10223, %v10225
        %v10303 = vsel %vm2393, %v10227, %v10229
        %v10304 = vsel %vm2393, %v10231, %v10233
        %v10305 = vsel %vm2393, %v10235, %v10237
        %v10306 = vsel %vm2393, %v10239, %v10241
        %v10307 = vsel %vm2393, %v10243, %v10245
        %v10308 = vsel %vm2393, %v10247, %v10249
        %v10309 = vsel %vm2393, %v10251, %v10253
        %v10310 = vsel %vm2393, %v10255, %v10257
        %v10311 = vsel %vm2393, %v10259, %v10261
        %v10312 = vsel %vm2393, %v10263, %v10265
        %v10313 = vsel %vm2393, %v10267, %v10269
        %v10314 = vsel %vm2393, %v10271, %v10273
        %v10315 = vsel %vm2393, %v10275, %v10277
        %v10316 = vsel %vm2393, %v10279, %v10281
        %v10317 = vsel %vm2393, %v10283, %v10285
        %10446 = vrot.lane.b32.xlu0 %v10030, 64
        %v10447 = vpop.permute.xlu0 %10446
        %10448 = vrot.lane.b32.xlu0 %v10031, 64
        %v10449 = vpop.permute.xlu0 %10448
        %10450 = vrot.lane.b32.xlu0 %v10032, 64
        %v10451 = vpop.permute.xlu0 %10450
        %10452 = vrot.lane.b32.xlu0 %v10033, 64
        %v10453 = vpop.permute.xlu0 %10452
        %10454 = vrot.lane.b32.xlu0 %v10034, 64
        %v10455 = vpop.permute.xlu0 %10454
        %10456 = vrot.lane.b32.xlu0 %v10035, 64
        %v10457 = vpop.permute.xlu0 %10456
        %10458 = vrot.lane.b32.xlu0 %v10036, 64
        %v10459 = vpop.permute.xlu0 %10458
        %10460 = vrot.lane.b32.xlu0 %v10037, 64
        %v10461 = vpop.permute.xlu0 %10460
        %10462 = vrot.lane.b32.xlu0 %v10038, 64
        %v10463 = vpop.permute.xlu0 %10462
        %10464 = vrot.lane.b32.xlu0 %v10039, 64
        %v10465 = vpop.permute.xlu0 %10464
        %10466 = vrot.lane.b32.xlu0 %v10040, 64
        %v10467 = vpop.permute.xlu0 %10466
        %10468 = vrot.lane.b32.xlu0 %v10041, 64
        %v10469 = vpop.permute.xlu0 %10468
        %10470 = vrot.lane.b32.xlu0 %v10042, 64
        %v10471 = vpop.permute.xlu0 %10470
        %10472 = vrot.lane.b32.xlu0 %v10043, 64
        %v10473 = vpop.permute.xlu0 %10472
        %10474 = vrot.lane.b32.xlu0 %v10044, 64
        %v10475 = vpop.permute.xlu0 %10474
        %10476 = vrot.lane.b32.xlu0 %v10045, 64
        %v10477 = vpop.permute.xlu0 %10476
        %10478 = vrot.lane.b32.xlu0 %v10046, 64
        %v10479 = vpop.permute.xlu0 %10478
        %10480 = vrot.lane.b32.xlu0 %v10047, 64
        %v10481 = vpop.permute.xlu0 %10480
        %10482 = vrot.lane.b32.xlu0 %v10048, 64
        %v10483 = vpop.permute.xlu0 %10482
        %10484 = vrot.lane.b32.xlu0 %v10049, 64
        %v10485 = vpop.permute.xlu0 %10484
        %10486 = vrot.lane.b32.xlu0 %v10050, 64
        %v10487 = vpop.permute.xlu0 %10486
        %10488 = vrot.lane.b32.xlu0 %v10051, 64
        %v10489 = vpop.permute.xlu0 %10488
        %10490 = vrot.lane.b32.xlu0 %v10052, 64
        %v10491 = vpop.permute.xlu0 %10490
        %10492 = vrot.lane.b32.xlu0 %v10053, 64
        %v10493 = vpop.permute.xlu0 %10492
        %10494 = vrot.lane.b32.xlu0 %v10054, 64
        %v10495 = vpop.permute.xlu0 %10494
        %10496 = vrot.lane.b32.xlu0 %v10055, 64
        %v10497 = vpop.permute.xlu0 %10496
        %10498 = vrot.lane.b32.xlu0 %v10056, 64
        %v10499 = vpop.permute.xlu0 %10498
        %10500 = vrot.lane.b32.xlu0 %v10057, 64
        %v10501 = vpop.permute.xlu0 %10500
        %10502 = vrot.lane.b32.xlu0 %v10058, 64
        %v10503 = vpop.permute.xlu0 %10502
        %10504 = vrot.lane.b32.xlu0 %v10059, 64
        %v10505 = vpop.permute.xlu0 %10504
        %10506 = vrot.lane.b32.xlu0 %v10060, 64
        %v10507 = vpop.permute.xlu0 %10506
        %10508 = vrot.lane.b32.xlu0 %v10061, 64
        %v10509 = vpop.permute.xlu0 %10508
        %10510 = vrot.lane.b32.xlu0 %v10062, 64
        %v10511 = vpop.permute.xlu0 %10510
        %10512 = vrot.lane.b32.xlu0 %v10063, 64
        %v10513 = vpop.permute.xlu0 %10512
        %10514 = vrot.lane.b32.xlu0 %v10064, 64
        %v10515 = vpop.permute.xlu0 %10514
        %10516 = vrot.lane.b32.xlu0 %v10065, 64
        %v10517 = vpop.permute.xlu0 %10516
        %10518 = vrot.lane.b32.xlu0 %v10066, 64
        %v10519 = vpop.permute.xlu0 %10518
        %10520 = vrot.lane.b32.xlu0 %v10067, 64
        %v10521 = vpop.permute.xlu0 %10520
        %10522 = vrot.lane.b32.xlu0 %v10068, 64
        %v10523 = vpop.permute.xlu0 %10522
        %10524 = vrot.lane.b32.xlu0 %v10069, 64
        %v10525 = vpop.permute.xlu0 %10524
        %10526 = vrot.lane.b32.xlu0 %v10070, 64
        %v10527 = vpop.permute.xlu0 %10526
        %10528 = vrot.lane.b32.xlu0 %v10071, 64
        %v10529 = vpop.permute.xlu0 %10528
        %10530 = vrot.lane.b32.xlu0 %v10072, 64
        %v10531 = vpop.permute.xlu0 %10530
        %10532 = vrot.lane.b32.xlu0 %v10073, 64
        %v10533 = vpop.permute.xlu0 %10532
        %10534 = vrot.lane.b32.xlu0 %v10074, 64
        %v10535 = vpop.permute.xlu0 %10534
        %10536 = vrot.lane.b32.xlu0 %v10075, 64
        %v10537 = vpop.permute.xlu0 %10536
        %10538 = vrot.lane.b32.xlu0 %v10076, 64
        %v10539 = vpop.permute.xlu0 %10538
        %10540 = vrot.lane.b32.xlu0 %v10077, 64
        %v10541 = vpop.permute.xlu0 %10540
        %10542 = vrot.lane.b32.xlu0 %v10078, 64
        %v10543 = vpop.permute.xlu0 %10542
        %10544 = vrot.lane.b32.xlu0 %v10079, 64
        %v10545 = vpop.permute.xlu0 %10544
        %10546 = vrot.lane.b32.xlu0 %v10080, 64
        %v10547 = vpop.permute.xlu0 %10546
        %10548 = vrot.lane.b32.xlu0 %v10081, 64
        %v10549 = vpop.permute.xlu0 %10548
        %10550 = vrot.lane.b32.xlu0 %v10082, 64
        %v10551 = vpop.permute.xlu0 %10550
        %10552 = vrot.lane.b32.xlu0 %v10083, 64
        %v10553 = vpop.permute.xlu0 %10552
        %10554 = vrot.lane.b32.xlu0 %v10084, 64
        %v10555 = vpop.permute.xlu0 %10554
        %10556 = vrot.lane.b32.xlu0 %v10085, 64
        %v10557 = vpop.permute.xlu0 %10556
        %10558 = vrot.lane.b32.xlu0 %v10086, 64
        %v10559 = vpop.permute.xlu0 %10558
        %10560 = vrot.lane.b32.xlu0 %v10087, 64
        %v10561 = vpop.permute.xlu0 %10560
        %10562 = vrot.lane.b32.xlu0 %v10088, 64
        %v10563 = vpop.permute.xlu0 %10562
        %10564 = vrot.lane.b32.xlu0 %v10089, 64
        %v10565 = vpop.permute.xlu0 %10564
        %10566 = vrot.lane.b32.xlu0 %v10090, 64
        %v10567 = vpop.permute.xlu0 %10566
        %10568 = vrot.lane.b32.xlu0 %v10091, 64
        %v10569 = vpop.permute.xlu0 %10568
        %10570 = vrot.lane.b32.xlu0 %v10092, 64
        %v10571 = vpop.permute.xlu0 %10570
        %10572 = vrot.lane.b32.xlu0 %v10093, 64
        %v10573 = vpop.permute.xlu0 %10572
        %v10574 = vsel %vm2393, %v10447, %v10449
        %v10575 = vsel %vm2393, %v10451, %v10453
        %v10576 = vsel %vm2393, %v10455, %v10457
        %v10577 = vsel %vm2393, %v10459, %v10461
        %v10578 = vsel %vm2393, %v10463, %v10465
        %v10579 = vsel %vm2393, %v10467, %v10469
        %v10580 = vsel %vm2393, %v10471, %v10473
        %v10581 = vsel %vm2393, %v10475, %v10477
        %v10582 = vsel %vm2393, %v10479, %v10481
        %v10583 = vsel %vm2393, %v10483, %v10485
        %v10584 = vsel %vm2393, %v10487, %v10489
        %v10585 = vsel %vm2393, %v10491, %v10493
        %v10586 = vsel %vm2393, %v10495, %v10497
        %v10587 = vsel %vm2393, %v10499, %v10501
        %v10588 = vsel %vm2393, %v10503, %v10505
        %v10589 = vsel %vm2393, %v10507, %v10509
        %v10590 = vsel %vm2393, %v10511, %v10513
        %v10591 = vsel %vm2393, %v10515, %v10517
        %v10592 = vsel %vm2393, %v10519, %v10521
        %v10593 = vsel %vm2393, %v10523, %v10525
        %v10594 = vsel %vm2393, %v10527, %v10529
        %v10595 = vsel %vm2393, %v10531, %v10533
        %v10596 = vsel %vm2393, %v10535, %v10537
        %v10597 = vsel %vm2393, %v10539, %v10541
        %v10598 = vsel %vm2393, %v10543, %v10545
        %v10599 = vsel %vm2393, %v10547, %v10549
        %v10600 = vsel %vm2393, %v10551, %v10553
        %v10601 = vsel %vm2393, %v10555, %v10557
        %v10602 = vsel %vm2393, %v10559, %v10561
        %v10603 = vsel %vm2393, %v10563, %v10565
        %v10604 = vsel %vm2393, %v10567, %v10569
        %v10605 = vsel %vm2393, %v10571, %v10573
        %v10670 = vsel %vm2393, %v1172, %v10159
        %v10671 = vsel %vm2393, %v1175, %v10163
        %v10672 = vsel %vm2393, %v1178, %v10167
        %v10673 = vsel %vm2393, %v1181, %v10171
        %v10674 = vsel %vm2393, %v1184, %v10175
        %v10675 = vsel %vm2393, %v1187, %v10179
        %v10676 = vsel %vm2393, %v1190, %v10183
        %v10677 = vsel %vm2393, %v1193, %v10187
        %v10678 = vsel %vm2393, %v1196, %v10191
        %v10679 = vsel %vm2393, %v1199, %v10195
        %v10680 = vsel %vm2393, %v1202, %v10199
        %v10681 = vsel %vm2393, %v1205, %v10203
        %v10682 = vsel %vm2393, %v1208, %v10207
        %v10683 = vsel %vm2393, %v1211, %v10211
        %v10684 = vsel %vm2393, %v1214, %v10215
        %v10685 = vsel %vm2393, %v1217, %v10219
        %v10686 = vsel %vm2393, %v1220, %v10223
        %v10687 = vsel %vm2393, %v1223, %v10227
        %v10688 = vsel %vm2393, %v1226, %v10231
        %v10689 = vsel %vm2393, %v1229, %v10235
        %v10690 = vsel %vm2393, %v1232, %v10239
        %v10691 = vsel %vm2393, %v1235, %v10243
        %v10692 = vsel %vm2393, %v1238, %v10247
        %v10693 = vsel %vm2393, %v1241, %v10251
        %v10694 = vsel %vm2393, %v1244, %v10255
        %v10695 = vsel %vm2393, %v1247, %v10259
        %v10696 = vsel %vm2393, %v1250, %v10263
        %v10697 = vsel %vm2393, %v1253, %v10267
        %v10698 = vsel %vm2393, %v1256, %v10271
        %v10699 = vsel %vm2393, %v1259, %v10275
        %v10700 = vsel %vm2393, %v1262, %v10279
        %v10701 = vsel %vm2393, %v1265, %v10283
        %v10702 = vsel %vm2393, %v9095, %v10447
        %v10703 = vsel %vm2393, %v9097, %v10451
        %v10704 = vsel %vm2393, %v9099, %v10455
        %v10705 = vsel %vm2393, %v9101, %v10459
        %v10706 = vsel %vm2393, %v9103, %v10463
        %v10707 = vsel %vm2393, %v9105, %v10467
        %v10708 = vsel %vm2393, %v9107, %v10471
        %v10709 = vsel %vm2393, %v9109, %v10475
        %v10710 = vsel %vm2393, %v9111, %v10479
        %v10711 = vsel %vm2393, %v9113, %v10483
        %v10712 = vsel %vm2393, %v9115, %v10487
        %v10713 = vsel %vm2393, %v9117, %v10491
        %v10714 = vsel %vm2393, %v9119, %v10495
        %v10715 = vsel %vm2393, %v9121, %v10499
        %v10716 = vsel %vm2393, %v9123, %v10503
        %v10717 = vsel %vm2393, %v9125, %v10507
        %v10718 = vsel %vm2393, %v9127, %v10511
        %v10719 = vsel %vm2393, %v9129, %v10515
        %v10720 = vsel %vm2393, %v9131, %v10519
        %v10721 = vsel %vm2393, %v9133, %v10523
        %v10722 = vsel %vm2393, %v9135, %v10527
        %v10723 = vsel %vm2393, %v9137, %v10531
        %v10724 = vsel %vm2393, %v9139, %v10535
        %v10725 = vsel %vm2393, %v9141, %v10539
        %v10726 = vsel %vm2393, %v9143, %v10543
        %v10727 = vsel %vm2393, %v9145, %v10547
        %v10728 = vsel %vm2393, %v9147, %v10551
        %v10729 = vsel %vm2393, %v9149, %v10555
        %v10730 = vsel %vm2393, %v9151, %v10559
        %v10731 = vsel %vm2393, %v9153, %v10563
        %v10732 = vsel %vm2393, %v9155, %v10567
        %v10733 = vsel %vm2393, %v9157, %v10571
        %10734 = vst [vmem:[%s406] sm:$0xff] %v1171
        %10735 = vst [vmem:[%s406 + $0x8] sm:$0xff] %v10670
        %10736 = vst [vmem:[%s406 + $0x10] sm:$0xff] %v10286
        %10737 = vst [vmem:[%s406 + $0x18] sm:$0xff] %v9094
        %10738 = vst [vmem:[%s406 + $0x20] sm:$0xff] %v10702
        %10739 = vst [vmem:[%s406 + $0x28] sm:$0xff] %v10574
        %10740 = vst [vmem:[%s406 + $0x30] sm:$0xff] %v1174
        %10741 = vst [vmem:[%s406 + $0x38] sm:$0xff] %v10671
        %10742 = vst [vmem:[%s406 + $0x40] sm:$0xff] %v10287
        %10743 = vst [vmem:[%s406 + $0x48] sm:$0xff] %v9096
        %10744 = vst [vmem:[%s406 + $0x50] sm:$0xff] %v10703
        %10745 = vst [vmem:[%s406 + $0x58] sm:$0xff] %v10575
        %10746 = vst [vmem:[%s406 + $0x60] sm:$0xff] %v1177
        %10747 = vst [vmem:[%s406 + $0x68] sm:$0xff] %v10672
        %10748 = vst [vmem:[%s406 + $0x70] sm:$0xff] %v10288
        %10749 = vst [vmem:[%s406 + $0x78] sm:$0xff] %v9098
        %10750 = vst [vmem:[%s406 + $0x80] sm:$0xff] %v10704
        %10751 = vst [vmem:[%s406 + $0x88] sm:$0xff] %v10576
        %10752 = vst [vmem:[%s406 + $0x90] sm:$0xff] %v1180
        %10753 = vst [vmem:[%s406 + $0x98] sm:$0xff] %v10673
        %10754 = vst [vmem:[%s406 + $0xa0] sm:$0xff] %v10289
        %10755 = vst [vmem:[%s406 + $0xa8] sm:$0xff] %v9100
        %10756 = vst [vmem:[%s406 + $0xb0] sm:$0xff] %v10705
        %10757 = vst [vmem:[%s406 + $0xb8] sm:$0xff] %v10577
        %10758 = vst [vmem:[%s406 + $0xc0] sm:$0xff] %v1183
        %10759 = vst [vmem:[%s406 + $0xc8] sm:$0xff] %v10674
        %10760 = vst [vmem:[%s406 + $0xd0] sm:$0xff] %v10290
        %10761 = vst [vmem:[%s406 + $0xd8] sm:$0xff] %v9102
        %10762 = vst [vmem:[%s406 + $0xe0] sm:$0xff] %v10706
        %10763 = vst [vmem:[%s406 + $0xe8] sm:$0xff] %v10578
        %10764 = vst [vmem:[%s406 + $0xf0] sm:$0xff] %v1186
        %10765 = vst [vmem:[%s406 + $0xf8] sm:$0xff] %v10675
        %10766 = vst [vmem:[%s406 + $0x100] sm:$0xff] %v10291
        %10767 = vst [vmem:[%s406 + $0x108] sm:$0xff] %v9104
        %10768 = vst [vmem:[%s406 + $0x110] sm:$0xff] %v10707
        %10769 = vst [vmem:[%s406 + $0x118] sm:$0xff] %v10579
        %10770 = vst [vmem:[%s406 + $0x120] sm:$0xff] %v1189
        %10771 = vst [vmem:[%s406 + $0x128] sm:$0xff] %v10676
        %10772 = vst [vmem:[%s406 + $0x130] sm:$0xff] %v10292
        %10773 = vst [vmem:[%s406 + $0x138] sm:$0xff] %v9106
        %10774 = vst [vmem:[%s406 + $0x140] sm:$0xff] %v10708
        %10775 = vst [vmem:[%s406 + $0x148] sm:$0xff] %v10580
        %10776 = vst [vmem:[%s406 + $0x150] sm:$0xff] %v1192
        %10777 = vst [vmem:[%s406 + $0x158] sm:$0xff] %v10677
        %10778 = vst [vmem:[%s406 + $0x160] sm:$0xff] %v10293
        %10779 = vst [vmem:[%s406 + $0x168] sm:$0xff] %v9108
        %10780 = vst [vmem:[%s406 + $0x170] sm:$0xff] %v10709
        %10781 = vst [vmem:[%s406 + $0x178] sm:$0xff] %v10581
        %10782 = vst [vmem:[%s406 + $0x180] sm:$0xff] %v1195
        %10783 = vst [vmem:[%s406 + $0x188] sm:$0xff] %v10678
        %10784 = vst [vmem:[%s406 + $0x190] sm:$0xff] %v10294
        %10785 = vst [vmem:[%s406 + $0x198] sm:$0xff] %v9110
        %10786 = vst [vmem:[%s406 + $0x1a0] sm:$0xff] %v10710
        %10787 = vst [vmem:[%s406 + $0x1a8] sm:$0xff] %v10582
        %10788 = vst [vmem:[%s406 + $0x1b0] sm:$0xff] %v1198
        %10789 = vst [vmem:[%s406 + $0x1b8] sm:$0xff] %v10679
        %10790 = vst [vmem:[%s406 + $0x1c0] sm:$0xff] %v10295
        %10791 = vst [vmem:[%s406 + $0x1c8] sm:$0xff] %v9112
        %10792 = vst [vmem:[%s406 + $0x1d0] sm:$0xff] %v10711
        %10793 = vst [vmem:[%s406 + $0x1d8] sm:$0xff] %v10583
        %10794 = vst [vmem:[%s406 + $0x1e0] sm:$0xff] %v1201
        %10795 = vst [vmem:[%s406 + $0x1e8] sm:$0xff] %v10680
        %10796 = vst [vmem:[%s406 + $0x1f0] sm:$0xff] %v10296
        %10797 = vst [vmem:[%s406 + $0x1f8] sm:$0xff] %v9114
        %10798 = vst [vmem:[%s406 + $0x200] sm:$0xff] %v10712
        %10799 = vst [vmem:[%s406 + $0x208] sm:$0xff] %v10584
        %10800 = vst [vmem:[%s406 + $0x210] sm:$0xff] %v1204
        %10801 = vst [vmem:[%s406 + $0x218] sm:$0xff] %v10681
        %10802 = vst [vmem:[%s406 + $0x220] sm:$0xff] %v10297
        %10803 = vst [vmem:[%s406 + $0x228] sm:$0xff] %v9116
        %10804 = vst [vmem:[%s406 + $0x230] sm:$0xff] %v10713
        %10805 = vst [vmem:[%s406 + $0x238] sm:$0xff] %v10585
        %10806 = vst [vmem:[%s406 + $0x240] sm:$0xff] %v1207
        %10807 = vst [vmem:[%s406 + $0x248] sm:$0xff] %v10682
        %10808 = vst [vmem:[%s406 + $0x250] sm:$0xff] %v10298
        %10809 = vst [vmem:[%s406 + $0x258] sm:$0xff] %v9118
        %10810 = vst [vmem:[%s406 + $0x260] sm:$0xff] %v10714
        %10811 = vst [vmem:[%s406 + $0x268] sm:$0xff] %v10586
        %10812 = vst [vmem:[%s406 + $0x270] sm:$0xff] %v1210
        %10813 = vst [vmem:[%s406 + $0x278] sm:$0xff] %v10683
        %10814 = vst [vmem:[%s406 + $0x280] sm:$0xff] %v10299
        %10815 = vst [vmem:[%s406 + $0x288] sm:$0xff] %v9120
        %10816 = vst [vmem:[%s406 + $0x290] sm:$0xff] %v10715
        %10817 = vst [vmem:[%s406 + $0x298] sm:$0xff] %v10587
        %10818 = vst [vmem:[%s406 + $0x2a0] sm:$0xff] %v1213
        %10819 = vst [vmem:[%s406 + $0x2a8] sm:$0xff] %v10684
        %10820 = vst [vmem:[%s406 + $0x2b0] sm:$0xff] %v10300
        %10821 = vst [vmem:[%s406 + $0x2b8] sm:$0xff] %v9122
        %10822 = vst [vmem:[%s406 + $0x2c0] sm:$0xff] %v10716
        %10823 = vst [vmem:[%s406 + $0x2c8] sm:$0xff] %v10588
        %10824 = vst [vmem:[%s406 + $0x2d0] sm:$0xff] %v1216
        %10825 = vst [vmem:[%s406 + $0x2d8] sm:$0xff] %v10685
        %10826 = vst [vmem:[%s406 + $0x2e0] sm:$0xff] %v10301
        %10827 = vst [vmem:[%s406 + $0x2e8] sm:$0xff] %v9124
        %10828 = vst [vmem:[%s406 + $0x2f0] sm:$0xff] %v10717
        %10829 = vst [vmem:[%s406 + $0x2f8] sm:$0xff] %v10589
        %10830 = vst [vmem:[%s406 + $0x300] sm:$0xff] %v1219
        %10831 = vst [vmem:[%s406 + $0x308] sm:$0xff] %v10686
        %10832 = vst [vmem:[%s406 + $0x310] sm:$0xff] %v10302
        %10833 = vst [vmem:[%s406 + $0x318] sm:$0xff] %v9126
        %10834 = vst [vmem:[%s406 + $0x320] sm:$0xff] %v10718
        %10835 = vst [vmem:[%s406 + $0x328] sm:$0xff] %v10590
        %10836 = vst [vmem:[%s406 + $0x330] sm:$0xff] %v1222
        %10837 = vst [vmem:[%s406 + $0x338] sm:$0xff] %v10687
        %10838 = vst [vmem:[%s406 + $0x340] sm:$0xff] %v10303
        %10839 = vst [vmem:[%s406 + $0x348] sm:$0xff] %v9128
        %10840 = vst [vmem:[%s406 + $0x350] sm:$0xff] %v10719
        %10841 = vst [vmem:[%s406 + $0x358] sm:$0xff] %v10591
        %10842 = vst [vmem:[%s406 + $0x360] sm:$0xff] %v1225
        %10843 = vst [vmem:[%s406 + $0x368] sm:$0xff] %v10688
        %10844 = vst [vmem:[%s406 + $0x370] sm:$0xff] %v10304
        %10845 = vst [vmem:[%s406 + $0x378] sm:$0xff] %v9130
        %10846 = vst [vmem:[%s406 + $0x380] sm:$0xff] %v10720
        %10847 = vst [vmem:[%s406 + $0x388] sm:$0xff] %v10592
        %10848 = vst [vmem:[%s406 + $0x390] sm:$0xff] %v1228
        %10849 = vst [vmem:[%s406 + $0x398] sm:$0xff] %v10689
        %10850 = vst [vmem:[%s406 + $0x3a0] sm:$0xff] %v10305
        %10851 = vst [vmem:[%s406 + $0x3a8] sm:$0xff] %v9132
        %10852 = vst [vmem:[%s406 + $0x3b0] sm:$0xff] %v10721
        %10853 = vst [vmem:[%s406 + $0x3b8] sm:$0xff] %v10593
        %10854 = vst [vmem:[%s406 + $0x3c0] sm:$0xff] %v1231
        %10855 = vst [vmem:[%s406 + $0x3c8] sm:$0xff] %v10690
        %10856 = vst [vmem:[%s406 + $0x3d0] sm:$0xff] %v10306
        %10857 = vst [vmem:[%s406 + $0x3d8] sm:$0xff] %v9134
        %10858 = vst [vmem:[%s406 + $0x3e0] sm:$0xff] %v10722
        %10859 = vst [vmem:[%s406 + $0x3e8] sm:$0xff] %v10594
        %10860 = vst [vmem:[%s406 + $0x3f0] sm:$0xff] %v1234
        %10861 = vst [vmem:[%s406 + $0x3f8] sm:$0xff] %v10691
        %10862 = vst [vmem:[%s406 + $0x400] sm:$0xff] %v10307
        %10863 = vst [vmem:[%s406 + $0x408] sm:$0xff] %v9136
        %10864 = vst [vmem:[%s406 + $0x410] sm:$0xff] %v10723
        %10865 = vst [vmem:[%s406 + $0x418] sm:$0xff] %v10595
        %10866 = vst [vmem:[%s406 + $0x420] sm:$0xff] %v1237
        %10867 = vst [vmem:[%s406 + $0x428] sm:$0xff] %v10692
        %10868 = vst [vmem:[%s406 + $0x430] sm:$0xff] %v10308
        %10869 = vst [vmem:[%s406 + $0x438] sm:$0xff] %v9138
        %10870 = vst [vmem:[%s406 + $0x440] sm:$0xff] %v10724
        %10871 = vst [vmem:[%s406 + $0x448] sm:$0xff] %v10596
        %10872 = vst [vmem:[%s406 + $0x450] sm:$0xff] %v1240
        %10873 = vst [vmem:[%s406 + $0x458] sm:$0xff] %v10693
        %10874 = vst [vmem:[%s406 + $0x460] sm:$0xff] %v10309
        %10875 = vst [vmem:[%s406 + $0x468] sm:$0xff] %v9140
        %10876 = vst [vmem:[%s406 + $0x470] sm:$0xff] %v10725
        %10877 = vst [vmem:[%s406 + $0x478] sm:$0xff] %v10597
        %10878 = vst [vmem:[%s406 + $0x480] sm:$0xff] %v1243
        %10879 = vst [vmem:[%s406 + $0x488] sm:$0xff] %v10694
        %10880 = vst [vmem:[%s406 + $0x490] sm:$0xff] %v10310
        %10881 = vst [vmem:[%s406 + $0x498] sm:$0xff] %v9142
        %10882 = vst [vmem:[%s406 + $0x4a0] sm:$0xff] %v10726
        %10883 = vst [vmem:[%s406 + $0x4a8] sm:$0xff] %v10598
        %10884 = vst [vmem:[%s406 + $0x4b0] sm:$0xff] %v1246
        %10885 = vst [vmem:[%s406 + $0x4b8] sm:$0xff] %v10695
        %10886 = vst [vmem:[%s406 + $0x4c0] sm:$0xff] %v10311
        %10887 = vst [vmem:[%s406 + $0x4c8] sm:$0xff] %v9144
        %10888 = vst [vmem:[%s406 + $0x4d0] sm:$0xff] %v10727
        %10889 = vst [vmem:[%s406 + $0x4d8] sm:$0xff] %v10599
        %10890 = vst [vmem:[%s406 + $0x4e0] sm:$0xff] %v1249
        %10891 = vst [vmem:[%s406 + $0x4e8] sm:$0xff] %v10696
        %10892 = vst [vmem:[%s406 + $0x4f0] sm:$0xff] %v10312
        %10893 = vst [vmem:[%s406 + $0x4f8] sm:$0xff] %v9146
        %10894 = vst [vmem:[%s406 + $0x500] sm:$0xff] %v10728
        %10895 = vst [vmem:[%s406 + $0x508] sm:$0xff] %v10600
        %10896 = vst [vmem:[%s406 + $0x510] sm:$0xff] %v1252
        %10897 = vst [vmem:[%s406 + $0x518] sm:$0xff] %v10697
        %10898 = vst [vmem:[%s406 + $0x520] sm:$0xff] %v10313
        %10899 = vst [vmem:[%s406 + $0x528] sm:$0xff] %v9148
        %10900 = vst [vmem:[%s406 + $0x530] sm:$0xff] %v10729
        %10901 = vst [vmem:[%s406 + $0x538] sm:$0xff] %v10601
        %10902 = vst [vmem:[%s406 + $0x540] sm:$0xff] %v1255
        %10903 = vst [vmem:[%s406 + $0x548] sm:$0xff] %v10698
        %10904 = vst [vmem:[%s406 + $0x550] sm:$0xff] %v10314
        %10905 = vst [vmem:[%s406 + $0x558] sm:$0xff] %v9150
        %10906 = vst [vmem:[%s406 + $0x560] sm:$0xff] %v10730
        %10907 = vst [vmem:[%s406 + $0x568] sm:$0xff] %v10602
        %10908 = vst [vmem:[%s406 + $0x570] sm:$0xff] %v1258
        %10909 = vst [vmem:[%s406 + $0x578] sm:$0xff] %v10699
        %10910 = vst [vmem:[%s406 + $0x580] sm:$0xff] %v10315
        %10911 = vst [vmem:[%s406 + $0x588] sm:$0xff] %v9152
        %10912 = vst [vmem:[%s406 + $0x590] sm:$0xff] %v10731
        %10913 = vst [vmem:[%s406 + $0x598] sm:$0xff] %v10603
        %10914 = vst [vmem:[%s406 + $0x5a0] sm:$0xff] %v1261
        %10915 = vst [vmem:[%s406 + $0x5a8] sm:$0xff] %v10700
        %10916 = vst [vmem:[%s406 + $0x5b0] sm:$0xff] %v10316
        %10917 = vst [vmem:[%s406 + $0x5b8] sm:$0xff] %v9154
        %10918 = vst [vmem:[%s406 + $0x5c0] sm:$0xff] %v10732
        %10919 = vst [vmem:[%s406 + $0x5c8] sm:$0xff] %v10604
        %10920 = vst [vmem:[%s406 + $0x5d0] sm:$0xff] %v1264
        %10921 = vst [vmem:[%s406 + $0x5d8] sm:$0xff] %v10701
        %10922 = vst [vmem:[%s406 + $0x5e0] sm:$0xff] %v10317
        %10923 = vst [vmem:[%s406 + $0x5e8] sm:$0xff] %v9156
        %10924 = vst [vmem:[%s406 + $0x5f0] sm:$0xff] %v10733
        %10925 = vst [vmem:[%s406 + $0x5f8] sm:$0xff] %v10605
        %s10926 = sand.u32 %s291, 1
        %s10927 = scalar_lea.sflag [#allocation3], %s10926
        %s10928 = sand.u32 %s291, 1
        %s10929 = smul.addr %s10928, 1536
        %s10930 = scalar_lea.vmem [#allocation2], %s10929
        // Predicated region
        $region69: #{tpu_custom_call.1} parent=67 // pred_check
          %p10931 = pneg %p301
        $region70: #{tpu_custom_call.1} parent=67 // pred_check_branch
          %10933 = sbr.rel (%p10931) target = $region72
        $region71: #{tpu_custom_call.1} parent=67 // pred_region
          %s10935 = ssub.s32 24576, 24576
          %10936 = vsyncadd %s10927, %s10935
          %s10937 = smul.addr %s26, 192
          %s10938 = smul.addr %s10937, 128
          %s10939 = scalar_lea.hbm %s12, %s10938
          %s10940 = sshll.u32 %s10930, 4
          %s10941 = int_to_ptr.vmem [resolvable:$true] %s10940
          %10946 = dma.vmem_to_hbm [thread:$0]  %s10941, 24576, %s10939, %s10927, 768, 768, 48
        $region72: #{tpu_custom_call.1} parent=67 // pred_fallthru
          _
      $region68: #{tpu_custom_call.1} parent=5 // pred_fallthru
        _
      %p10947 = scmp.le.s32.totalorder 2, %s21
      // Predicated region
      $region73: #{tpu_custom_call.1} parent=5 // pred_check
        %p10948 = pneg %p10947
      $region74: #{tpu_custom_call.1} parent=5 // pred_check_branch
        %10950 = sbr.rel (%p10948) target = $region76
      $region75: #{tpu_custom_call.1} parent=5 // pred_region
        %s10951 = ssub.s32 %s21, 2
        // Predicated region
        $region77: #{tpu_custom_call.1} parent=75 // pred_check
          %p10952 = pneg %p307
        $region78: #{tpu_custom_call.1} parent=75 // pred_check_branch
          %10954 = sbr.rel (%p10952) target = $region80
        $region79: #{tpu_custom_call.1} parent=75 // pred_region
          %s10955 = sand.u32 %s292, 1
          %s10956 = scalar_lea.sflag [#allocation3], %s10955
          %s10957 = sand.u32 %s292, 1
          %s10958 = smul.addr %s10957, 1536
          %s10959 = scalar_lea.vmem [#allocation2], %s10958
          %10960 = dma.done %s10956, 24576
        $region80: #{tpu_custom_call.1} parent=75 // pred_fallthru
          _
      $region76: #{tpu_custom_call.1} parent=5 // pred_fallthru
        _
    $region6: #{tpu_custom_call.1} parent=1 // loop_footer
      %s25 = sadd.s32 1, %s21
    $region7: #{tpu_custom_call.1} parent=1 // loop_footer_branch
      %20 = sbr.rel target = $region3
    $region8: #{tpu_custom_call.1} parent=1 // loop_exit
      _
    %10961 = vsyncpa [#allocation3], 1
    %s10962 = scalar_lea.sflag [#allocation3], 1
    %10963 = vsyncpa %s10962, 1

</llo_original>
